<compile_context>
chip_gen: v7x
topology: tpu7x:2x2x1
jax: 0.10.0
libtpu: 0.0.40
codegen_flags: <defaults>
</compile_context>

<pallas_src>
import jax
import jax.numpy as jnp
import numpy as np
from jax import lax
from jax.experimental import pallas as pl
from jax.experimental.pallas import tpu as pltpu

N_SUBSTEPS = 8  # fixed RK4 substeps per integration interval


def _elu(x):
    # Clamp the negative-branch argument so exp never overflows on the discarded side.
    return jnp.where(x > 0.0, x, jnp.exp(jnp.minimum(x, 0.0)) - 1.0)


def _ode_kernel(times_ref,                                    # scalar prefetch: [T] f32 (SMEM)
                z0_ref,                                       # [2, B, D] f32  (z0[0]=x0, z0[1]=v0)
                wx_ref, wv_ref, b1_ref,                       # fc1 split: [D,H] bf16 x2, [1,H] f32
                w2_ref, b2_ref,                               # [H,H] bf16, [1,H] f32
                w3_ref, b3_ref,                               # [H,D] bf16, [1,D] f32
                x_out_ref, v_out_ref):                        # [T, B, D] f32 each (VMEM-resident)
    T, B, D = x_out_ref.shape
    H = w2_ref.shape[0]

    # Hoist weights / biases once; they stay loop-invariant vreg/VMEM residents.
    wx = wx_ref[...]
    wv = wv_ref[...]
    w2 = w2_ref[...]
    w3 = w3_ref[...]
    b1 = jnp.broadcast_to(b1_ref[...], (B, H))
    b2 = jnp.broadcast_to(b2_ref[...], (B, H))
    b3 = jnp.broadcast_to(b3_ref[...], (B, D))

    def odefunc(x, v):
        # dz/dt for z=[x; v]:  (dx/dt, dv/dt) = (v, fc3(elu(fc2(elu(x@Wx + v@Wv + b1)))))
        h = (jnp.dot(x.astype(jnp.bfloat16), wx, preferred_element_type=jnp.float32)
             + jnp.dot(v.astype(jnp.bfloat16), wv, preferred_element_type=jnp.float32)
             + b1)
        h = _elu(h)
        h = jnp.dot(h.astype(jnp.bfloat16), w2, preferred_element_type=jnp.float32) + b2
        h = _elu(h)
        a = jnp.dot(h.astype(jnp.bfloat16), w3, preferred_element_type=jnp.float32) + b3
        return v, a

    x0 = z0_ref[0]
    v0 = z0_ref[1]
    x_out_ref[0] = x0
    v_out_ref[0] = v0

    def time_step(t, carry):
        x, v = carry
        dt = (times_ref[t] - times_ref[t - 1]) / N_SUBSTEPS

        def rk4_step(_, xv):
            xs, vs = xv
            k1x, k1v = odefunc(xs, vs)
            k2x, k2v = odefunc(xs + 0.5 * dt * k1x, vs + 0.5 * dt * k1v)
            k3x, k3v = odefunc(xs + 0.5 * dt * k2x, vs + 0.5 * dt * k2v)
            k4x, k4v = odefunc(xs + dt * k3x, vs + dt * k3v)
            xs = xs + (dt / 6.0) * (k1x + 2.0 * k2x + 2.0 * k3x + k4x)
            vs = vs + (dt / 6.0) * (k1v + 2.0 * k2v + 2.0 * k3v + k4v)
            return xs, vs

        # Short fixed trip count -> unroll for scheduler visibility.
        x, v = lax.fori_loop(0, N_SUBSTEPS, rk4_step, (x, v), unroll=True)
        x_out_ref[t] = x
        v_out_ref[t] = v
        return x, v

    lax.fori_loop(1, T, time_step, (x0, v0))


def ode_block_forward(z0, integration_times, indices, params):
    """Pallas ODEBlock.forward: odeint(odefunc, z0, times) then gather(dim=1, indices)."""
    w1, b1, w2, b2, w3, b3 = params
    T = integration_times.shape[0]
    B2, D = z0.shape
    B = B2 // 2
    H = w2.shape[0]

    # One-time prep outside the kernel: split state / fc1 weight, bf16 MXU operands.
    z0_split = z0.reshape(2, B, D)
    wx = w1[:D].astype(jnp.bfloat16)
    wv = w1[D:].astype(jnp.bfloat16)
    w2b = w2.astype(jnp.bfloat16)
    w3b = w3.astype(jnp.bfloat16)

    grid_spec = pltpu.PrefetchScalarGridSpec(
        num_scalar_prefetch=1,
        grid=(1,),                                     # single invocation; time loop is in-kernel
        in_specs=[
            pl.BlockSpec((2, B, D), lambda i, ts: (0, 0, 0)),
            pl.BlockSpec((D, H), lambda i, ts: (0, 0)),
            pl.BlockSpec((D, H), lambda i, ts: (0, 0)),
            pl.BlockSpec((1, H), lambda i, ts: (0, 0)),
            pl.BlockSpec((H, H), lambda i, ts: (0, 0)),
            pl.BlockSpec((1, H), lambda i, ts: (0, 0)),
            pl.BlockSpec((H, D), lambda i, ts: (0, 0)),
            pl.BlockSpec((1, D), lambda i, ts: (0, 0)),
        ],
        out_specs=(
            pl.BlockSpec((T, B, D), lambda i, ts: (0, 0, 0)),
            pl.BlockSpec((T, B, D), lambda i, ts: (0, 0, 0)),
        ),
    )

    x_traj, v_traj = pl.pallas_call(
        _ode_kernel,
        grid_spec=grid_spec,
        out_shape=(jax.ShapeDtypeStruct((T, B, D), jnp.float32),
                   jax.ShapeDtypeStruct((T, B, D), jnp.float32)),
        compiler_params=pltpu.CompilerParams(dimension_semantics=("arbitrary",)),
    )(integration_times, z0_split, wx, wv, b1, w2b, b2, w3b, b3)

    # Reassemble z = [x; v] along dim 0 of the state, then torch's out.gather(1, indices).
    traj = jnp.concatenate([x_traj, v_traj], axis=1)   # [T, 2B, D]
    return jnp.take_along_axis(traj, indices, axis=1)


def _ref_forward(z0, times, indices, params):
    """Pure-JAX reference (same fixed-step RK4 / bf16 matmul operands) for validation."""
    w1, b1, w2, b2, w3, b3 = params
    B = z0.shape[0] // 2
    D = z0.shape[1]
    wx = w1[:D].astype(jnp.bfloat16)
    wv = w1[D:].astype(jnp.bfloat16)
    w2b = w2.astype(jnp.bfloat16)
    w3b = w3.astype(jnp.bfloat16)

    def odefunc(x, v):
        h = (jnp.dot(x.astype(jnp.bfloat16), wx, preferred_element_type=jnp.float32)
             + jnp.dot(v.astype(jnp.bfloat16), wv, preferred_element_type=jnp.float32)
             + b1)
        h = _elu(h)
        h = jnp.dot(h.astype(jnp.bfloat16), w2b, preferred_element_type=jnp.float32) + b2
        h = _elu(h)
        a = jnp.dot(h.astype(jnp.bfloat16), w3b, preferred_element_type=jnp.float32) + b3
        return v, a

    x, v = z0[:B], z0[B:]
    xs, vs = [x], [v]
    for i in range(1, times.shape[0]):
        dt = (times[i] - times[i - 1]) / N_SUBSTEPS
        for _ in range(N_SUBSTEPS):
            k1x, k1v = odefunc(x, v)
            k2x, k2v = odefunc(x + 0.5 * dt * k1x, v + 0.5 * dt * k1v)
            k3x, k3v = odefunc(x + 0.5 * dt * k2x, v + 0.5 * dt * k2v)
            k4x, k4v = odefunc(x + dt * k3x, v + dt * k3v)
            x = x + (dt / 6.0) * (k1x + 2.0 * k2x + 2.0 * k3x + k4x)
            v = v + (dt / 6.0) * (k1v + 2.0 * k2v + 2.0 * k3v + k4v)
        xs.append(x)
        vs.append(v)
    traj = jnp.concatenate([jnp.stack(xs, axis=0), jnp.stack(vs, axis=0)], axis=1)
    return jnp.take_along_axis(traj, indices, axis=1)


if __name__ == "__main__":
    # Small shapes consistent with the SONODE extrapolation setup (second-order state).
    B = 4          # number of trajectories (position rows); state has 2B rows (x and v)
    D = 4          # data dimension
    H = 32         # hidden width of the odefunc MLP
    T = 8          # number of integration times

    key = jax.random.PRNGKey(0)
    k_z, k_w1, k_b1, k_w2, k_b2, k_w3, k_b3 = jax.random.split(key, 7)

    z0 = jax.random.normal(k_z, (2 * B, D), dtype=jnp.float32)          # [x0; v0]
    integration_times = jnp.linspace(0.0, 1.0, T, dtype=jnp.float32)

    # fc1: 2D -> H, fc2: H -> H, fc3: H -> D  (stored [in, out]; biases as [1, out])
    s = 0.3
    params = (
        (s * jax.random.normal(k_w1, (2 * D, H))).astype(jnp.float32),
        (s * jax.random.normal(k_b1, (1, H))).astype(jnp.float32),
        (s * jax.random.normal(k_w2, (H, H))).astype(jnp.float32),
        (s * jax.random.normal(k_b2, (1, H))).astype(jnp.float32),
        (s * jax.random.normal(k_w3, (H, D))).astype(jnp.float32),
        (s * jax.random.normal(k_b3, (1, D))).astype(jnp.float32),
    )

    # indices: pick the position (x) half of the state at every time step, as in the
    # original script's out.gather(1, self.indices).
    indices = jnp.broadcast_to(jnp.arange(B, dtype=jnp.int32)[None, :, None], (T, B, D))

    out = ode_block_forward(z0, integration_times, indices, params)
    out = jax.block_until_ready(out)

    ref = jax.block_until_ready(_ref_forward(z0, integration_times, indices, params))
    np.testing.assert_allclose(np.asarray(out), np.asarray(ref), rtol=5e-3, atol=5e-3)
    assert out.shape == (T, B, D) and out.dtype == jnp.float32

    print("KERNEL_OK")
</pallas_src>

<mosaic_0001>
module attributes {stable_mosaic.version = 11 : i64} {
  func.func @_ode_kernel(%arg0: i32, %arg1: memref<8xf32, #tpu.memory_space<smem>>, %arg2: memref<2x4x4xf32, #tpu.memory_space<vmem>>, %arg3: memref<4x32xbf16, #tpu.memory_space<vmem>>, %arg4: memref<4x32xbf16, #tpu.memory_space<vmem>>, %arg5: memref<1x32xf32, #tpu.memory_space<vmem>>, %arg6: memref<32x32xbf16, #tpu.memory_space<vmem>>, %arg7: memref<1x32xf32, #tpu.memory_space<vmem>>, %arg8: memref<32x4xbf16, #tpu.memory_space<vmem>>, %arg9: memref<1x4xf32, #tpu.memory_space<vmem>>, %arg10: memref<8x4x4xf32, #tpu.memory_space<vmem>>, %arg11: memref<8x4x4xf32, #tpu.memory_space<vmem>>) attributes {dimension_semantics = [#tpu.dimension_semantics<arbitrary>], iteration_bounds = array<i64: 1>, scalar_prefetch = 1 : i64, scratch_operands = 0 : i64, tpu.core_type = #tpu.core_type<tc>, window_params = [{pipeline_mode = #tpu.pipeline_mode<synchronous>, transform_indices = @transform_0, window_bounds = array<i64: 2, 4, 4>}, {pipeline_mode = #tpu.pipeline_mode<synchronous>, transform_indices = @transform_1, window_bounds = array<i64: 4, 32>}, {pipeline_mode = #tpu.pipeline_mode<synchronous>, transform_indices = @transform_2, window_bounds = array<i64: 4, 32>}, {pipeline_mode = #tpu.pipeline_mode<synchronous>, transform_indices = @transform_3, window_bounds = array<i64: 1, 32>}, {pipeline_mode = #tpu.pipeline_mode<synchronous>, transform_indices = @transform_4, window_bounds = array<i64: 32, 32>}, {pipeline_mode = #tpu.pipeline_mode<synchronous>, transform_indices = @transform_5, window_bounds = array<i64: 1, 32>}, {pipeline_mode = #tpu.pipeline_mode<synchronous>, transform_indices = @transform_6, window_bounds = array<i64: 32, 4>}, {pipeline_mode = #tpu.pipeline_mode<synchronous>, transform_indices = @transform_7, window_bounds = array<i64: 1, 4>}, {pipeline_mode = #tpu.pipeline_mode<synchronous>, transform_indices = @transform_8, window_bounds = array<i64: 8, 4, 4>}, {pipeline_mode = #tpu.pipeline_mode<synchronous>, transform_indices = @transform_9, window_bounds = array<i64: 8, 4, 4>}]} {
    %c0 = arith.constant 0 : index
    %c0_0 = arith.constant 0 : index
    %0 = vector.load %arg3[%c0, %c0_0] : memref<4x32xbf16, #tpu.memory_space<vmem>>, vector<4x32xbf16>
    %c0_1 = arith.constant 0 : index
    %c0_2 = arith.constant 0 : index
    %1 = vector.load %arg4[%c0_1, %c0_2] : memref<4x32xbf16, #tpu.memory_space<vmem>>, vector<4x32xbf16>
    %c0_3 = arith.constant 0 : index
    %c0_4 = arith.constant 0 : index
    %2 = vector.load %arg6[%c0_3, %c0_4] : memref<32x32xbf16, #tpu.memory_space<vmem>>, vector<32x32xbf16>
    %c0_5 = arith.constant 0 : index
    %c0_6 = arith.constant 0 : index
    %3 = vector.load %arg8[%c0_5, %c0_6] : memref<32x4xbf16, #tpu.memory_space<vmem>>, vector<32x4xbf16>
    %c0_7 = arith.constant 0 : index
    %c0_8 = arith.constant 0 : index
    %4 = vector.load %arg5[%c0_7, %c0_8] : memref<1x32xf32, #tpu.memory_space<vmem>>, vector<1x32xf32>
    %5 = vector.shape_cast %4 : vector<1x32xf32> to vector<1x32xf32>
    %6 = vector.broadcast %5 : vector<1x32xf32> to vector<4x32xf32>
    %c0_9 = arith.constant 0 : index
    %c0_10 = arith.constant 0 : index
    %7 = vector.load %arg7[%c0_9, %c0_10] : memref<1x32xf32, #tpu.memory_space<vmem>>, vector<1x32xf32>
    %8 = vector.shape_cast %7 : vector<1x32xf32> to vector<1x32xf32>
    %9 = vector.broadcast %8 : vector<1x32xf32> to vector<4x32xf32>
    %c0_11 = arith.constant 0 : index
    %c0_12 = arith.constant 0 : index
    %10 = vector.load %arg9[%c0_11, %c0_12] : memref<1x4xf32, #tpu.memory_space<vmem>>, vector<1x4xf32>
    %11 = vector.shape_cast %10 : vector<1x4xf32> to vector<1x4xf32>
    %12 = vector.broadcast %11 : vector<1x4xf32> to vector<4x4xf32>
    %c0_13 = arith.constant 0 : index
    %c0_14 = arith.constant 0 : index
    %c0_15 = arith.constant 0 : index
    %13 = vector.load %arg2[%c0_13, %c0_14, %c0_15] : memref<2x4x4xf32, #tpu.memory_space<vmem>>, vector<1x4x4xf32>
    %14 = vector.shape_cast %13 : vector<1x4x4xf32> to vector<4x4xf32>
    %c1 = arith.constant 1 : index
    %c0_16 = arith.constant 0 : index
    %c0_17 = arith.constant 0 : index
    %15 = vector.load %arg2[%c1, %c0_16, %c0_17] : memref<2x4x4xf32, #tpu.memory_space<vmem>>, vector<1x4x4xf32>
    %16 = vector.shape_cast %15 : vector<1x4x4xf32> to vector<4x4xf32>
    %c0_18 = arith.constant 0 : index
    %c0_19 = arith.constant 0 : index
    %c0_20 = arith.constant 0 : index
    %17 = vector.load %arg10[%c0_18, %c0_19, %c0_20] : memref<8x4x4xf32, #tpu.memory_space<vmem>>, vector<1x4x4xf32>
    %18 = vector.shape_cast %17 : vector<1x4x4xf32> to vector<4x4xf32>
    %19 = vector.shape_cast %14 : vector<4x4xf32> to vector<1x4x4xf32>
    tpu.vector_store %arg10[%c0_18, %c0_19, %c0_20], %19 {strides = array<i32>} : memref<8x4x4xf32, #tpu.memory_space<vmem>>, vector<1x4x4xf32>,
    %c0_21 = arith.constant 0 : index
    %c0_22 = arith.constant 0 : index
    %c0_23 = arith.constant 0 : index
    %20 = vector.load %arg11[%c0_21, %c0_22, %c0_23] : memref<8x4x4xf32, #tpu.memory_space<vmem>>, vector<1x4x4xf32>
    %21 = vector.shape_cast %20 : vector<1x4x4xf32> to vector<4x4xf32>
    %22 = vector.shape_cast %16 : vector<4x4xf32> to vector<1x4x4xf32>
    tpu.vector_store %arg11[%c0_21, %c0_22, %c0_23], %22 {strides = array<i32>} : memref<8x4x4xf32, #tpu.memory_space<vmem>>, vector<1x4x4xf32>,
    %c1_i32 = arith.constant 1 : i32
    %c7_i32 = arith.constant 7 : i32
    %23 = arith.addi %c1_i32, %c7_i32 : i32
    %c1_i32_24 = arith.constant 1 : i32
    %24:2 = scf.for %arg12 = %c1_i32 to %23 step %c1_i32_24 iter_args(%arg13 = %14, %arg14 = %16) -> (vector<4x4xf32>, vector<4x4xf32>)  : i32 {
      %25 = arith.index_cast %arg12 : i32 to index
      %26 = memref.load %arg1[%25] : memref<8xf32, #tpu.memory_space<smem>>
      %c1_i32_26 = arith.constant 1 : i32
      %27 = arith.subi %arg12, %c1_i32_26 : i32
      %28 = arith.index_cast %27 : i32 to index
      %29 = memref.load %arg1[%28] : memref<8xf32, #tpu.memory_space<smem>>
      %30 = arith.subf %26, %29 : f32
      %cst = arith.constant 8.000000e+00 : f32
      %31 = arith.divf %30, %cst : f32
      %c0_i32 = arith.constant 0 : i32
      %32 = arith.truncf %arg13 : vector<4x4xf32> to vector<4x4xbf16>
      %cst_27 = arith.constant dense<0.000000e+00> : vector<4x32xf32>
      %33 = tpu.matmul %32, %0, %cst_27 {dimension_numbers = #tpu.dot_dimension_numbers<[1], [0], [0], [1], [0, 0, 1, 1], [], []>} : vector<4x4xbf16>, vector<4x32xbf16>, vector<4x32xf32> -> vector<4x32xf32>
      %34 = arith.truncf %arg14 : vector<4x4xf32> to vector<4x4xbf16>
      %cst_28 = arith.constant dense<0.000000e+00> : vector<4x32xf32>
      %35 = tpu.matmul %34, %1, %cst_28 {dimension_numbers = #tpu.dot_dimension_numbers<[1], [0], [0], [1], [0, 0, 1, 1], [], []>} : vector<4x4xbf16>, vector<4x32xbf16>, vector<4x32xf32> -> vector<4x32xf32>
      %36 = arith.addf %33, %35 : vector<4x32xf32>
      %37 = arith.addf %36, %6 : vector<4x32xf32>
      %cst_29 = arith.constant 0.000000e+00 : f32
      %38 = vector.broadcast %cst_29 : f32 to vector<4x32xf32>
      %39 = arith.cmpf ogt, %37, %38 : vector<4x32xf32>
      %cst_30 = arith.constant 0.000000e+00 : f32
      %40 = vector.broadcast %cst_30 : f32 to vector<4x32xf32>
      %41 = arith.minimumf %37, %40 : vector<4x32xf32>
      %42 = math.exp %41 : vector<4x32xf32>
      %cst_31 = arith.constant 1.000000e+00 : f32
      %43 = vector.broadcast %cst_31 : f32 to vector<4x32xf32>
      %44 = arith.subf %42, %43 : vector<4x32xf32>
      %45 = arith.select %39, %37, %44 : vector<4x32xi1>, vector<4x32xf32>
      %46 = arith.truncf %45 : vector<4x32xf32> to vector<4x32xbf16>
      %cst_32 = arith.constant dense<0.000000e+00> : vector<4x32xf32>
      %47 = tpu.matmul %46, %2, %cst_32 {dimension_numbers = #tpu.dot_dimension_numbers<[1], [0], [0], [1], [0, 0, 1, 1], [], []>} : vector<4x32xbf16>, vector<32x32xbf16>, vector<4x32xf32> -> vector<4x32xf32>
      %48 = arith.addf %47, %9 : vector<4x32xf32>
      %cst_33 = arith.constant 0.000000e+00 : f32
      %49 = vector.broadcast %cst_33 : f32 to vector<4x32xf32>
      %50 = arith.cmpf ogt, %48, %49 : vector<4x32xf32>
      %cst_34 = arith.constant 0.000000e+00 : f32
      %51 = vector.broadcast %cst_34 : f32 to vector<4x32xf32>
      %52 = arith.minimumf %48, %51 : vector<4x32xf32>
      %53 = math.exp %52 : vector<4x32xf32>
      %cst_35 = arith.constant 1.000000e+00 : f32
      %54 = vector.broadcast %cst_35 : f32 to vector<4x32xf32>
      %55 = arith.subf %53, %54 : vector<4x32xf32>
      %56 = arith.select %50, %48, %55 : vector<4x32xi1>, vector<4x32xf32>
      %57 = arith.truncf %56 : vector<4x32xf32> to vector<4x32xbf16>
      %cst_36 = arith.constant dense<0.000000e+00> : vector<4x4xf32>
      %58 = tpu.matmul %57, %3, %cst_36 {dimension_numbers = #tpu.dot_dimension_numbers<[1], [0], [0], [1], [0, 0, 1, 1], [], []>} : vector<4x32xbf16>, vector<32x4xbf16>, vector<4x4xf32> -> vector<4x4xf32>
      %59 = arith.addf %58, %12 : vector<4x4xf32>
      %cst_37 = arith.constant 5.000000e-01 : f32
      %60 = arith.mulf %cst_37, %31 : f32
      %61 = vector.broadcast %60 : f32 to vector<4x4xf32>
      %62 = arith.mulf %61, %arg14 : vector<4x4xf32>
      %63 = arith.addf %arg13, %62 : vector<4x4xf32>
      %cst_38 = arith.constant 5.000000e-01 : f32
      %64 = arith.mulf %cst_38, %31 : f32
      %65 = vector.broadcast %64 : f32 to vector<4x4xf32>
      %66 = arith.mulf %65, %59 : vector<4x4xf32>
      %67 = arith.addf %arg14, %66 : vector<4x4xf32>
      %68 = arith.truncf %63 : vector<4x4xf32> to vector<4x4xbf16>
      %cst_39 = arith.constant dense<0.000000e+00> : vector<4x32xf32>
      %69 = tpu.matmul %68, %0, %cst_39 {dimension_numbers = #tpu.dot_dimension_numbers<[1], [0], [0], [1], [0, 0, 1, 1], [], []>} : vector<4x4xbf16>, vector<4x32xbf16>, vector<4x32xf32> -> vector<4x32xf32>
      %70 = arith.truncf %67 : vector<4x4xf32> to vector<4x4xbf16>
      %cst_40 = arith.constant dense<0.000000e+00> : vector<4x32xf32>
      %71 = tpu.matmul %70, %1, %cst_40 {dimension_numbers = #tpu.dot_dimension_numbers<[1], [0], [0], [1], [0, 0, 1, 1], [], []>} : vector<4x4xbf16>, vector<4x32xbf16>, vector<4x32xf32> -> vector<4x32xf32>
      %72 = arith.addf %69, %71 : vector<4x32xf32>
      %73 = arith.addf %72, %6 : vector<4x32xf32>
      %cst_41 = arith.constant 0.000000e+00 : f32
      %74 = vector.broadcast %cst_41 : f32 to vector<4x32xf32>
      %75 = arith.cmpf ogt, %73, %74 : vector<4x32xf32>
      %cst_42 = arith.constant 0.000000e+00 : f32
      %76 = vector.broadcast %cst_42 : f32 to vector<4x32xf32>
      %77 = arith.minimumf %73, %76 : vector<4x32xf32>
      %78 = math.exp %77 : vector<4x32xf32>
      %cst_43 = arith.constant 1.000000e+00 : f32
      %79 = vector.broadcast %cst_43 : f32 to vector<4x32xf32>
      %80 = arith.subf %78, %79 : vector<4x32xf32>
      %81 = arith.select %75, %73, %80 : vector<4x32xi1>, vector<4x32xf32>
      %82 = arith.truncf %81 : vector<4x32xf32> to vector<4x32xbf16>
      %cst_44 = arith.constant dense<0.000000e+00> : vector<4x32xf32>
      %83 = tpu.matmul %82, %2, %cst_44 {dimension_numbers = #tpu.dot_dimension_numbers<[1], [0], [0], [1], [0, 0, 1, 1], [], []>} : vector<4x32xbf16>, vector<32x32xbf16>, vector<4x32xf32> -> vector<4x32xf32>
      %84 = arith.addf %83, %9 : vector<4x32xf32>
      %cst_45 = arith.constant 0.000000e+00 : f32
      %85 = vector.broadcast %cst_45 : f32 to vector<4x32xf32>
      %86 = arith.cmpf ogt, %84, %85 : vector<4x32xf32>
      %cst_46 = arith.constant 0.000000e+00 : f32
      %87 = vector.broadcast %cst_46 : f32 to vector<4x32xf32>
      %88 = arith.minimumf %84, %87 : vector<4x32xf32>
      %89 = math.exp %88 : vector<4x32xf32>
      %cst_47 = arith.constant 1.000000e+00 : f32
      %90 = vector.broadcast %cst_47 : f32 to vector<4x32xf32>
      %91 = arith.subf %89, %90 : vector<4x32xf32>
      %92 = arith.select %86, %84, %91 : vector<4x32xi1>, vector<4x32xf32>
      %93 = arith.truncf %92 : vector<4x32xf32> to vector<4x32xbf16>
      %cst_48 = arith.constant dense<0.000000e+00> : vector<4x4xf32>
      %94 = tpu.matmul %93, %3, %cst_48 {dimension_numbers = #tpu.dot_dimension_numbers<[1], [0], [0], [1], [0, 0, 1, 1], [], []>} : vector<4x32xbf16>, vector<32x4xbf16>, vector<4x4xf32> -> vector<4x4xf32>
      %95 = arith.addf %94, %12 : vector<4x4xf32>
      %cst_49 = arith.constant 5.000000e-01 : f32
      %96 = arith.mulf %cst_49, %31 : f32
      %97 = vector.broadcast %96 : f32 to vector<4x4xf32>
      %98 = arith.mulf %97, %67 : vector<4x4xf32>
      %99 = arith.addf %arg13, %98 : vector<4x4xf32>
      %cst_50 = arith.constant 5.000000e-01 : f32
      %100 = arith.mulf %cst_50, %31 : f32
      %101 = vector.broadcast %100 : f32 to vector<4x4xf32>
      %102 = arith.mulf %101, %95 : vector<4x4xf32>
      %103 = arith.addf %arg14, %102 : vector<4x4xf32>
      %104 = arith.truncf %99 : vector<4x4xf32> to vector<4x4xbf16>
      %cst_51 = arith.constant dense<0.000000e+00> : vector<4x32xf32>
      %105 = tpu.matmul %104, %0, %cst_51 {dimension_numbers = #tpu.dot_dimension_numbers<[1], [0], [0], [1], [0, 0, 1, 1], [], []>} : vector<4x4xbf16>, vector<4x32xbf16>, vector<4x32xf32> -> vector<4x32xf32>
      %106 = arith.truncf %103 : vector<4x4xf32> to vector<4x4xbf16>
      %cst_52 = arith.constant dense<0.000000e+00> : vector<4x32xf32>
      %107 = tpu.matmul %106, %1, %cst_52 {dimension_numbers = #tpu.dot_dimension_numbers<[1], [0], [0], [1], [0, 0, 1, 1], [], []>} : vector<4x4xbf16>, vector<4x32xbf16>, vector<4x32xf32> -> vector<4x32xf32>
      %108 = arith.addf %105, %107 : vector<4x32xf32>
      %109 = arith.addf %108, %6 : vector<4x32xf32>
      %cst_53 = arith.constant 0.000000e+00 : f32
      %110 = vector.broadcast %cst_53 : f32 to vector<4x32xf32>
      %111 = arith.cmpf ogt, %109, %110 : vector<4x32xf32>
      %cst_54 = arith.constant 0.000000e+00 : f32
      %112 = vector.broadcast %cst_54 : f32 to vector<4x32xf32>
      %113 = arith.minimumf %109, %112 : vector<4x32xf32>
      %114 = math.exp %113 : vector<4x32xf32>
      %cst_55 = arith.constant 1.000000e+00 : f32
      %115 = vector.broadcast %cst_55 : f32 to vector<4x32xf32>
      %116 = arith.subf %114, %115 : vector<4x32xf32>
      %117 = arith.select %111, %109, %116 : vector<4x32xi1>, vector<4x32xf32>
      %118 = arith.truncf %117 : vector<4x32xf32> to vector<4x32xbf16>
      %cst_56 = arith.constant dense<0.000000e+00> : vector<4x32xf32>
      %119 = tpu.matmul %118, %2, %cst_56 {dimension_numbers = #tpu.dot_dimension_numbers<[1], [0], [0], [1], [0, 0, 1, 1], [], []>} : vector<4x32xbf16>, vector<32x32xbf16>, vector<4x32xf32> -> vector<4x32xf32>
      %120 = arith.addf %119, %9 : vector<4x32xf32>
      %cst_57 = arith.constant 0.000000e+00 : f32
      %121 = vector.broadcast %cst_57 : f32 to vector<4x32xf32>
      %122 = arith.cmpf ogt, %120, %121 : vector<4x32xf32>
      %cst_58 = arith.constant 0.000000e+00 : f32
      %123 = vector.broadcast %cst_58 : f32 to vector<4x32xf32>
      %124 = arith.minimumf %120, %123 : vector<4x32xf32>
      %125 = math.exp %124 : vector<4x32xf32>
      %cst_59 = arith.constant 1.000000e+00 : f32
      %126 = vector.broadcast %cst_59 : f32 to vector<4x32xf32>
      %127 = arith.subf %125, %126 : vector<4x32xf32>
      %128 = arith.select %122, %120, %127 : vector<4x32xi1>, vector<4x32xf32>
      %129 = arith.truncf %128 : vector<4x32xf32> to vector<4x32xbf16>
      %cst_60 = arith.constant dense<0.000000e+00> : vector<4x4xf32>
      %130 = tpu.matmul %129, %3, %cst_60 {dimension_numbers = #tpu.dot_dimension_numbers<[1], [0], [0], [1], [0, 0, 1, 1], [], []>} : vector<4x32xbf16>, vector<32x4xbf16>, vector<4x4xf32> -> vector<4x4xf32>
      %131 = arith.addf %130, %12 : vector<4x4xf32>
      %132 = vector.broadcast %31 : f32 to vector<4x4xf32>
      %133 = arith.mulf %132, %103 : vector<4x4xf32>
      %134 = arith.addf %arg13, %133 : vector<4x4xf32>
      %135 = vector.broadcast %31 : f32 to vector<4x4xf32>
      %136 = arith.mulf %135, %131 : vector<4x4xf32>
      %137 = arith.addf %arg14, %136 : vector<4x4xf32>
      %138 = arith.truncf %134 : vector<4x4xf32> to vector<4x4xbf16>
      %cst_61 = arith.constant dense<0.000000e+00> : vector<4x32xf32>
      %139 = tpu.matmul %138, %0, %cst_61 {dimension_numbers = #tpu.dot_dimension_numbers<[1], [0], [0], [1], [0, 0, 1, 1], [], []>} : vector<4x4xbf16>, vector<4x32xbf16>, vector<4x32xf32> -> vector<4x32xf32>
      %140 = arith.truncf %137 : vector<4x4xf32> to vector<4x4xbf16>
      %cst_62 = arith.constant dense<0.000000e+00> : vector<4x32xf32>
      %141 = tpu.matmul %140, %1, %cst_62 {dimension_numbers = #tpu.dot_dimension_numbers<[1], [0], [0], [1], [0, 0, 1, 1], [], []>} : vector<4x4xbf16>, vector<4x32xbf16>, vector<4x32xf32> -> vector<4x32xf32>
      %142 = arith.addf %139, %141 : vector<4x32xf32>
      %143 = arith.addf %142, %6 : vector<4x32xf32>
      %cst_63 = arith.constant 0.000000e+00 : f32
      %144 = vector.broadcast %cst_63 : f32 to vector<4x32xf32>
      %145 = arith.cmpf ogt, %143, %144 : vector<4x32xf32>
      %cst_64 = arith.constant 0.000000e+00 : f32
      %146 = vector.broadcast %cst_64 : f32 to vector<4x32xf32>
      %147 = arith.minimumf %143, %146 : vector<4x32xf32>
      %148 = math.exp %147 : vector<4x32xf32>
      %cst_65 = arith.constant 1.000000e+00 : f32
      %149 = vector.broadcast %cst_65 : f32 to vector<4x32xf32>
      %150 = arith.subf %148, %149 : vector<4x32xf32>
      %151 = arith.select %145, %143, %150 : vector<4x32xi1>, vector<4x32xf32>
      %152 = arith.truncf %151 : vector<4x32xf32> to vector<4x32xbf16>
      %cst_66 = arith.constant dense<0.000000e+00> : vector<4x32xf32>
      %153 = tpu.matmul %152, %2, %cst_66 {dimension_numbers = #tpu.dot_dimension_numbers<[1], [0], [0], [1], [0, 0, 1, 1], [], []>} : vector<4x32xbf16>, vector<32x32xbf16>, vector<4x32xf32> -> vector<4x32xf32>
      %154 = arith.addf %153, %9 : vector<4x32xf32>
      %cst_67 = arith.constant 0.000000e+00 : f32
      %155 = vector.broadcast %cst_67 : f32 to vector<4x32xf32>
      %156 = arith.cmpf ogt, %154, %155 : vector<4x32xf32>
      %cst_68 = arith.constant 0.000000e+00 : f32
      %157 = vector.broadcast %cst_68 : f32 to vector<4x32xf32>
      %158 = arith.minimumf %154, %157 : vector<4x32xf32>
      %159 = math.exp %158 : vector<4x32xf32>
      %cst_69 = arith.constant 1.000000e+00 : f32
      %160 = vector.broadcast %cst_69 : f32 to vector<4x32xf32>
      %161 = arith.subf %159, %160 : vector<4x32xf32>
      %162 = arith.select %156, %154, %161 : vector<4x32xi1>, vector<4x32xf32>
      %163 = arith.truncf %162 : vector<4x32xf32> to vector<4x32xbf16>
      %cst_70 = arith.constant dense<0.000000e+00> : vector<4x4xf32>
      %164 = tpu.matmul %163, %3, %cst_70 {dimension_numbers = #tpu.dot_dimension_numbers<[1], [0], [0], [1], [0, 0, 1, 1], [], []>} : vector<4x32xbf16>, vector<32x4xbf16>, vector<4x4xf32> -> vector<4x4xf32>
      %165 = arith.addf %164, %12 : vector<4x4xf32>
      %cst_71 = arith.constant 6.000000e+00 : f32
      %166 = arith.divf %31, %cst_71 : f32
      %cst_72 = arith.constant 2.000000e+00 : f32
      %167 = vector.broadcast %cst_72 : f32 to vector<4x4xf32>
      %168 = arith.mulf %167, %67 : vector<4x4xf32>
      %169 = arith.addf %arg14, %168 : vector<4x4xf32>
      %cst_73 = arith.constant 2.000000e+00 : f32
      %170 = vector.broadcast %cst_73 : f32 to vector<4x4xf32>
      %171 = arith.mulf %170, %103 : vector<4x4xf32>
      %172 = arith.addf %169, %171 : vector<4x4xf32>
      %173 = arith.addf %172, %137 : vector<4x4xf32>
      %174 = vector.broadcast %166 : f32 to vector<4x4xf32>
      %175 = arith.mulf %174, %173 : vector<4x4xf32>
      %176 = arith.addf %arg13, %175 : vector<4x4xf32>
      %cst_74 = arith.constant 6.000000e+00 : f32
      %177 = arith.divf %31, %cst_74 : f32
      %cst_75 = arith.constant 2.000000e+00 : f32
      %178 = vector.broadcast %cst_75 : f32 to vector<4x4xf32>
      %179 = arith.mulf %178, %95 : vector<4x4xf32>
      %180 = arith.addf %59, %179 : vector<4x4xf32>
      %cst_76 = arith.constant 2.000000e+00 : f32
      %181 = vector.broadcast %cst_76 : f32 to vector<4x4xf32>
      %182 = arith.mulf %181, %131 : vector<4x4xf32>
      %183 = arith.addf %180, %182 : vector<4x4xf32>
      %184 = arith.addf %183, %165 : vector<4x4xf32>
      %185 = vector.broadcast %177 : f32 to vector<4x4xf32>
      %186 = arith.mulf %185, %184 : vector<4x4xf32>
      %187 = arith.addf %arg14, %186 : vector<4x4xf32>
      %c1_i32_77 = arith.constant 1 : i32
      %188 = arith.truncf %176 : vector<4x4xf32> to vector<4x4xbf16>
      %cst_78 = arith.constant dense<0.000000e+00> : vector<4x32xf32>
      %189 = tpu.matmul %188, %0, %cst_78 {dimension_numbers = #tpu.dot_dimension_numbers<[1], [0], [0], [1], [0, 0, 1, 1], [], []>} : vector<4x4xbf16>, vector<4x32xbf16>, vector<4x32xf32> -> vector<4x32xf32>
      %190 = arith.truncf %187 : vector<4x4xf32> to vector<4x4xbf16>
      %cst_79 = arith.constant dense<0.000000e+00> : vector<4x32xf32>
      %191 = tpu.matmul %190, %1, %cst_79 {dimension_numbers = #tpu.dot_dimension_numbers<[1], [0], [0], [1], [0, 0, 1, 1], [], []>} : vector<4x4xbf16>, vector<4x32xbf16>, vector<4x32xf32> -> vector<4x32xf32>
      %192 = arith.addf %189, %191 : vector<4x32xf32>
      %193 = arith.addf %192, %6 : vector<4x32xf32>
      %cst_80 = arith.constant 0.000000e+00 : f32
      %194 = vector.broadcast %cst_80 : f32 to vector<4x32xf32>
      %195 = arith.cmpf ogt, %193, %194 : vector<4x32xf32>
      %cst_81 = arith.constant 0.000000e+00 : f32
      %196 = vector.broadcast %cst_81 : f32 to vector<4x32xf32>
      %197 = arith.minimumf %193, %196 : vector<4x32xf32>
      %198 = math.exp %197 : vector<4x32xf32>
      %cst_82 = arith.constant 1.000000e+00 : f32
      %199 = vector.broadcast %cst_82 : f32 to vector<4x32xf32>
      %200 = arith.subf %198, %199 : vector<4x32xf32>
      %201 = arith.select %195, %193, %200 : vector<4x32xi1>, vector<4x32xf32>
      %202 = arith.truncf %201 : vector<4x32xf32> to vector<4x32xbf16>
      %cst_83 = arith.constant dense<0.000000e+00> : vector<4x32xf32>
      %203 = tpu.matmul %202, %2, %cst_83 {dimension_numbers = #tpu.dot_dimension_numbers<[1], [0], [0], [1], [0, 0, 1, 1], [], []>} : vector<4x32xbf16>, vector<32x32xbf16>, vector<4x32xf32> -> vector<4x32xf32>
      %204 = arith.addf %203, %9 : vector<4x32xf32>
      %cst_84 = arith.constant 0.000000e+00 : f32
      %205 = vector.broadcast %cst_84 : f32 to vector<4x32xf32>
      %206 = arith.cmpf ogt, %204, %205 : vector<4x32xf32>
      %cst_85 = arith.constant 0.000000e+00 : f32
      %207 = vector.broadcast %cst_85 : f32 to vector<4x32xf32>
      %208 = arith.minimumf %204, %207 : vector<4x32xf32>
      %209 = math.exp %208 : vector<4x32xf32>
      %cst_86 = arith.constant 1.000000e+00 : f32
      %210 = vector.broadcast %cst_86 : f32 to vector<4x32xf32>
      %211 = arith.subf %209, %210 : vector<4x32xf32>
      %212 = arith.select %206, %204, %211 : vector<4x32xi1>, vector<4x32xf32>
      %213 = arith.truncf %212 : vector<4x32xf32> to vector<4x32xbf16>
      %cst_87 = arith.constant dense<0.000000e+00> : vector<4x4xf32>
      %214 = tpu.matmul %213, %3, %cst_87 {dimension_numbers = #tpu.dot_dimension_numbers<[1], [0], [0], [1], [0, 0, 1, 1], [], []>} : vector<4x32xbf16>, vector<32x4xbf16>, vector<4x4xf32> -> vector<4x4xf32>
      %215 = arith.addf %214, %12 : vector<4x4xf32>
      %cst_88 = arith.constant 5.000000e-01 : f32
      %216 = arith.mulf %cst_88, %31 : f32
      %217 = vector.broadcast %216 : f32 to vector<4x4xf32>
      %218 = arith.mulf %217, %187 : vector<4x4xf32>
      %219 = arith.addf %176, %218 : vector<4x4xf32>
      %cst_89 = arith.constant 5.000000e-01 : f32
      %220 = arith.mulf %cst_89, %31 : f32
      %221 = vector.broadcast %220 : f32 to vector<4x4xf32>
      %222 = arith.mulf %221, %215 : vector<4x4xf32>
      %223 = arith.addf %187, %222 : vector<4x4xf32>
      %224 = arith.truncf %219 : vector<4x4xf32> to vector<4x4xbf16>
      %cst_90 = arith.constant dense<0.000000e+00> : vector<4x32xf32>
      %225 = tpu.matmul %224, %0, %cst_90 {dimension_numbers = #tpu.dot_dimension_numbers<[1], [0], [0], [1], [0, 0, 1, 1], [], []>} : vector<4x4xbf16>, vector<4x32xbf16>, vector<4x32xf32> -> vector<4x32xf32>
      %226 = arith.truncf %223 : vector<4x4xf32> to vector<4x4xbf16>
      %cst_91 = arith.constant dense<0.000000e+00> : vector<4x32xf32>
      %227 = tpu.matmul %226, %1, %cst_91 {dimension_numbers = #tpu.dot_dimension_numbers<[1], [0], [0], [1], [0, 0, 1, 1], [], []>} : vector<4x4xbf16>, vector<4x32xbf16>, vector<4x32xf32> -> vector<4x32xf32>
      %228 = arith.addf %225, %227 : vector<4x32xf32>
      %229 = arith.addf %228, %6 : vector<4x32xf32>
      %cst_92 = arith.constant 0.000000e+00 : f32
      %230 = vector.broadcast %cst_92 : f32 to vector<4x32xf32>
      %231 = arith.cmpf ogt, %229, %230 : vector<4x32xf32>
      %cst_93 = arith.constant 0.000000e+00 : f32
      %232 = vector.broadcast %cst_93 : f32 to vector<4x32xf32>
      %233 = arith.minimumf %229, %232 : vector<4x32xf32>
      %234 = math.exp %233 : vector<4x32xf32>
      %cst_94 = arith.constant 1.000000e+00 : f32
      %235 = vector.broadcast %cst_94 : f32 to vector<4x32xf32>
      %236 = arith.subf %234, %235 : vector<4x32xf32>
      %237 = arith.select %231, %229, %236 : vector<4x32xi1>, vector<4x32xf32>
      %238 = arith.truncf %237 : vector<4x32xf32> to vector<4x32xbf16>
      %cst_95 = arith.constant dense<0.000000e+00> : vector<4x32xf32>
      %239 = tpu.matmul %238, %2, %cst_95 {dimension_numbers = #tpu.dot_dimension_numbers<[1], [0], [0], [1], [0, 0, 1, 1], [], []>} : vector<4x32xbf16>, vector<32x32xbf16>, vector<4x32xf32> -> vector<4x32xf32>
      %240 = arith.addf %239, %9 : vector<4x32xf32>
      %cst_96 = arith.constant 0.000000e+00 : f32
      %241 = vector.broadcast %cst_96 : f32 to vector<4x32xf32>
      %242 = arith.cmpf ogt, %240, %241 : vector<4x32xf32>
      %cst_97 = arith.constant 0.000000e+00 : f32
      %243 = vector.broadcast %cst_97 : f32 to vector<4x32xf32>
      %244 = arith.minimumf %240, %243 : vector<4x32xf32>
      %245 = math.exp %244 : vector<4x32xf32>
      %cst_98 = arith.constant 1.000000e+00 : f32
      %246 = vector.broadcast %cst_98 : f32 to vector<4x32xf32>
      %247 = arith.subf %245, %246 : vector<4x32xf32>
      %248 = arith.select %242, %240, %247 : vector<4x32xi1>, vector<4x32xf32>
      %249 = arith.truncf %248 : vector<4x32xf32> to vector<4x32xbf16>
      %cst_99 = arith.constant dense<0.000000e+00> : vector<4x4xf32>
      %250 = tpu.matmul %249, %3, %cst_99 {dimension_numbers = #tpu.dot_dimension_numbers<[1], [0], [0], [1], [0, 0, 1, 1], [], []>} : vector<4x32xbf16>, vector<32x4xbf16>, vector<4x4xf32> -> vector<4x4xf32>
      %251 = arith.addf %250, %12 : vector<4x4xf32>
      %cst_100 = arith.constant 5.000000e-01 : f32
      %252 = arith.mulf %cst_100, %31 : f32
      %253 = vector.broadcast %252 : f32 to vector<4x4xf32>
      %254 = arith.mulf %253, %223 : vector<4x4xf32>
      %255 = arith.addf %176, %254 : vector<4x4xf32>
      %cst_101 = arith.constant 5.000000e-01 : f32
      %256 = arith.mulf %cst_101, %31 : f32
      %257 = vector.broadcast %256 : f32 to vector<4x4xf32>
      %258 = arith.mulf %257, %251 : vector<4x4xf32>
      %259 = arith.addf %187, %258 : vector<4x4xf32>
      %260 = arith.truncf %255 : vector<4x4xf32> to vector<4x4xbf16>
      %cst_102 = arith.constant dense<0.000000e+00> : vector<4x32xf32>
      %261 = tpu.matmul %260, %0, %cst_102 {dimension_numbers = #tpu.dot_dimension_numbers<[1], [0], [0], [1], [0, 0, 1, 1], [], []>} : vector<4x4xbf16>, vector<4x32xbf16>, vector<4x32xf32> -> vector<4x32xf32>
      %262 = arith.truncf %259 : vector<4x4xf32> to vector<4x4xbf16>
      %cst_103 = arith.constant dense<0.000000e+00> : vector<4x32xf32>
      %263 = tpu.matmul %262, %1, %cst_103 {dimension_numbers = #tpu.dot_dimension_numbers<[1], [0], [0], [1], [0, 0, 1, 1], [], []>} : vector<4x4xbf16>, vector<4x32xbf16>, vector<4x32xf32> -> vector<4x32xf32>
      %264 = arith.addf %261, %263 : vector<4x32xf32>
      %265 = arith.addf %264, %6 : vector<4x32xf32>
      %cst_104 = arith.constant 0.000000e+00 : f32
      %266 = vector.broadcast %cst_104 : f32 to vector<4x32xf32>
      %267 = arith.cmpf ogt, %265, %266 : vector<4x32xf32>
      %cst_105 = arith.constant 0.000000e+00 : f32
      %268 = vector.broadcast %cst_105 : f32 to vector<4x32xf32>
      %269 = arith.minimumf %265, %268 : vector<4x32xf32>
      %270 = math.exp %269 : vector<4x32xf32>
      %cst_106 = arith.constant 1.000000e+00 : f32
      %271 = vector.broadcast %cst_106 : f32 to vector<4x32xf32>
      %272 = arith.subf %270, %271 : vector<4x32xf32>
      %273 = arith.select %267, %265, %272 : vector<4x32xi1>, vector<4x32xf32>
      %274 = arith.truncf %273 : vector<4x32xf32> to vector<4x32xbf16>
      %cst_107 = arith.constant dense<0.000000e+00> : vector<4x32xf32>
      %275 = tpu.matmul %274, %2, %cst_107 {dimension_numbers = #tpu.dot_dimension_numbers<[1], [0], [0], [1], [0, 0, 1, 1], [], []>} : vector<4x32xbf16>, vector<32x32xbf16>, vector<4x32xf32> -> vector<4x32xf32>
      %276 = arith.addf %275, %9 : vector<4x32xf32>
      %cst_108 = arith.constant 0.000000e+00 : f32
      %277 = vector.broadcast %cst_108 : f32 to vector<4x32xf32>
      %278 = arith.cmpf ogt, %276, %277 : vector<4x32xf32>
      %cst_109 = arith.constant 0.000000e+00 : f32
      %279 = vector.broadcast %cst_109 : f32 to vector<4x32xf32>
      %280 = arith.minimumf %276, %279 : vector<4x32xf32>
      %281 = math.exp %280 : vector<4x32xf32>
      %cst_110 = arith.constant 1.000000e+00 : f32
      %282 = vector.broadcast %cst_110 : f32 to vector<4x32xf32>
      %283 = arith.subf %281, %282 : vector<4x32xf32>
      %284 = arith.select %278, %276, %283 : vector<4x32xi1>, vector<4x32xf32>
      %285 = arith.truncf %284 : vector<4x32xf32> to vector<4x32xbf16>
      %cst_111 = arith.constant dense<0.000000e+00> : vector<4x4xf32>
      %286 = tpu.matmul %285, %3, %cst_111 {dimension_numbers = #tpu.dot_dimension_numbers<[1], [0], [0], [1], [0, 0, 1, 1], [], []>} : vector<4x32xbf16>, vector<32x4xbf16>, vector<4x4xf32> -> vector<4x4xf32>
      %287 = arith.addf %286, %12 : vector<4x4xf32>
      %288 = vector.broadcast %31 : f32 to vector<4x4xf32>
      %289 = arith.mulf %288, %259 : vector<4x4xf32>
      %290 = arith.addf %176, %289 : vector<4x4xf32>
      %291 = vector.broadcast %31 : f32 to vector<4x4xf32>
      %292 = arith.mulf %291, %287 : vector<4x4xf32>
      %293 = arith.addf %187, %292 : vector<4x4xf32>
      %294 = arith.truncf %290 : vector<4x4xf32> to vector<4x4xbf16>
      %cst_112 = arith.constant dense<0.000000e+00> : vector<4x32xf32>
      %295 = tpu.matmul %294, %0, %cst_112 {dimension_numbers = #tpu.dot_dimension_numbers<[1], [0], [0], [1], [0, 0, 1, 1], [], []>} : vector<4x4xbf16>, vector<4x32xbf16>, vector<4x32xf32> -> vector<4x32xf32>
      %296 = arith.truncf %293 : vector<4x4xf32> to vector<4x4xbf16>
      %cst_113 = arith.constant dense<0.000000e+00> : vector<4x32xf32>
      %297 = tpu.matmul %296, %1, %cst_113 {dimension_numbers = #tpu.dot_dimension_numbers<[1], [0], [0], [1], [0, 0, 1, 1], [], []>} : vector<4x4xbf16>, vector<4x32xbf16>, vector<4x32xf32> -> vector<4x32xf32>
      %298 = arith.addf %295, %297 : vector<4x32xf32>
      %299 = arith.addf %298, %6 : vector<4x32xf32>
      %cst_114 = arith.constant 0.000000e+00 : f32
      %300 = vector.broadcast %cst_114 : f32 to vector<4x32xf32>
      %301 = arith.cmpf ogt, %299, %300 : vector<4x32xf32>
      %cst_115 = arith.constant 0.000000e+00 : f32
      %302 = vector.broadcast %cst_115 : f32 to vector<4x32xf32>
      %303 = arith.minimumf %299, %302 : vector<4x32xf32>
      %304 = math.exp %303 : vector<4x32xf32>
      %cst_116 = arith.constant 1.000000e+00 : f32
      %305 = vector.broadcast %cst_116 : f32 to vector<4x32xf32>
      %306 = arith.subf %304, %305 : vector<4x32xf32>
      %307 = arith.select %301, %299, %306 : vector<4x32xi1>, vector<4x32xf32>
      %308 = arith.truncf %307 : vector<4x32xf32> to vector<4x32xbf16>
      %cst_117 = arith.constant dense<0.000000e+00> : vector<4x32xf32>
      %309 = tpu.matmul %308, %2, %cst_117 {dimension_numbers = #tpu.dot_dimension_numbers<[1], [0], [0], [1], [0, 0, 1, 1], [], []>} : vector<4x32xbf16>, vector<32x32xbf16>, vector<4x32xf32> -> vector<4x32xf32>
      %310 = arith.addf %309, %9 : vector<4x32xf32>
      %cst_118 = arith.constant 0.000000e+00 : f32
      %311 = vector.broadcast %cst_118 : f32 to vector<4x32xf32>
      %312 = arith.cmpf ogt, %310, %311 : vector<4x32xf32>
      %cst_119 = arith.constant 0.000000e+00 : f32
      %313 = vector.broadcast %cst_119 : f32 to vector<4x32xf32>
      %314 = arith.minimumf %310, %313 : vector<4x32xf32>
      %315 = math.exp %314 : vector<4x32xf32>
      %cst_120 = arith.constant 1.000000e+00 : f32
      %316 = vector.broadcast %cst_120 : f32 to vector<4x32xf32>
      %317 = arith.subf %315, %316 : vector<4x32xf32>
      %318 = arith.select %312, %310, %317 : vector<4x32xi1>, vector<4x32xf32>
      %319 = arith.truncf %318 : vector<4x32xf32> to vector<4x32xbf16>
      %cst_121 = arith.constant dense<0.000000e+00> : vector<4x4xf32>
      %320 = tpu.matmul %319, %3, %cst_121 {dimension_numbers = #tpu.dot_dimension_numbers<[1], [0], [0], [1], [0, 0, 1, 1], [], []>} : vector<4x32xbf16>, vector<32x4xbf16>, vector<4x4xf32> -> vector<4x4xf32>
      %321 = arith.addf %320, %12 : vector<4x4xf32>
      %cst_122 = arith.constant 6.000000e+00 : f32
      %322 = arith.divf %31, %cst_122 : f32
      %cst_123 = arith.constant 2.000000e+00 : f32
      %323 = vector.broadcast %cst_123 : f32 to vector<4x4xf32>
      %324 = arith.mulf %323, %223 : vector<4x4xf32>
      %325 = arith.addf %187, %324 : vector<4x4xf32>
      %cst_124 = arith.constant 2.000000e+00 : f32
      %326 = vector.broadcast %cst_124 : f32 to vector<4x4xf32>
      %327 = arith.mulf %326, %259 : vector<4x4xf32>
      %328 = arith.addf %325, %327 : vector<4x4xf32>
      %329 = arith.addf %328, %293 : vector<4x4xf32>
      %330 = vector.broadcast %322 : f32 to vector<4x4xf32>
      %331 = arith.mulf %330, %329 : vector<4x4xf32>
      %332 = arith.addf %176, %331 : vector<4x4xf32>
      %cst_125 = arith.constant 6.000000e+00 : f32
      %333 = arith.divf %31, %cst_125 : f32
      %cst_126 = arith.constant 2.000000e+00 : f32
      %334 = vector.broadcast %cst_126 : f32 to vector<4x4xf32>
      %335 = arith.mulf %334, %251 : vector<4x4xf32>
      %336 = arith.addf %215, %335 : vector<4x4xf32>
      %cst_127 = arith.constant 2.000000e+00 : f32
      %337 = vector.broadcast %cst_127 : f32 to vector<4x4xf32>
      %338 = arith.mulf %337, %287 : vector<4x4xf32>
      %339 = arith.addf %336, %338 : vector<4x4xf32>
      %340 = arith.addf %339, %321 : vector<4x4xf32>
      %341 = vector.broadcast %333 : f32 to vector<4x4xf32>
      %342 = arith.mulf %341, %340 : vector<4x4xf32>
      %343 = arith.addf %187, %342 : vector<4x4xf32>
      %c2_i32 = arith.constant 2 : i32
      %344 = arith.truncf %332 : vector<4x4xf32> to vector<4x4xbf16>
      %cst_128 = arith.constant dense<0.000000e+00> : vector<4x32xf32>
      %345 = tpu.matmul %344, %0, %cst_128 {dimension_numbers = #tpu.dot_dimension_numbers<[1], [0], [0], [1], [0, 0, 1, 1], [], []>} : vector<4x4xbf16>, vector<4x32xbf16>, vector<4x32xf32> -> vector<4x32xf32>
      %346 = arith.truncf %343 : vector<4x4xf32> to vector<4x4xbf16>
      %cst_129 = arith.constant dense<0.000000e+00> : vector<4x32xf32>
      %347 = tpu.matmul %346, %1, %cst_129 {dimension_numbers = #tpu.dot_dimension_numbers<[1], [0], [0], [1], [0, 0, 1, 1], [], []>} : vector<4x4xbf16>, vector<4x32xbf16>, vector<4x32xf32> -> vector<4x32xf32>
      %348 = arith.addf %345, %347 : vector<4x32xf32>
      %349 = arith.addf %348, %6 : vector<4x32xf32>
      %cst_130 = arith.constant 0.000000e+00 : f32
      %350 = vector.broadcast %cst_130 : f32 to vector<4x32xf32>
      %351 = arith.cmpf ogt, %349, %350 : vector<4x32xf32>
      %cst_131 = arith.constant 0.000000e+00 : f32
      %352 = vector.broadcast %cst_131 : f32 to vector<4x32xf32>
      %353 = arith.minimumf %349, %352 : vector<4x32xf32>
      %354 = math.exp %353 : vector<4x32xf32>
      %cst_132 = arith.constant 1.000000e+00 : f32
      %355 = vector.broadcast %cst_132 : f32 to vector<4x32xf32>
      %356 = arith.subf %354, %355 : vector<4x32xf32>
      %357 = arith.select %351, %349, %356 : vector<4x32xi1>, vector<4x32xf32>
      %358 = arith.truncf %357 : vector<4x32xf32> to vector<4x32xbf16>
      %cst_133 = arith.constant dense<0.000000e+00> : vector<4x32xf32>
      %359 = tpu.matmul %358, %2, %cst_133 {dimension_numbers = #tpu.dot_dimension_numbers<[1], [0], [0], [1], [0, 0, 1, 1], [], []>} : vector<4x32xbf16>, vector<32x32xbf16>, vector<4x32xf32> -> vector<4x32xf32>
      %360 = arith.addf %359, %9 : vector<4x32xf32>
      %cst_134 = arith.constant 0.000000e+00 : f32
      %361 = vector.broadcast %cst_134 : f32 to vector<4x32xf32>
      %362 = arith.cmpf ogt, %360, %361 : vector<4x32xf32>
      %cst_135 = arith.constant 0.000000e+00 : f32
      %363 = vector.broadcast %cst_135 : f32 to vector<4x32xf32>
      %364 = arith.minimumf %360, %363 : vector<4x32xf32>
      %365 = math.exp %364 : vector<4x32xf32>
      %cst_136 = arith.constant 1.000000e+00 : f32
      %366 = vector.broadcast %cst_136 : f32 to vector<4x32xf32>
      %367 = arith.subf %365, %366 : vector<4x32xf32>
      %368 = arith.select %362, %360, %367 : vector<4x32xi1>, vector<4x32xf32>
      %369 = arith.truncf %368 : vector<4x32xf32> to vector<4x32xbf16>
      %cst_137 = arith.constant dense<0.000000e+00> : vector<4x4xf32>
      %370 = tpu.matmul %369, %3, %cst_137 {dimension_numbers = #tpu.dot_dimension_numbers<[1], [0], [0], [1], [0, 0, 1, 1], [], []>} : vector<4x32xbf16>, vector<32x4xbf16>, vector<4x4xf32> -> vector<4x4xf32>
      %371 = arith.addf %370, %12 : vector<4x4xf32>
      %cst_138 = arith.constant 5.000000e-01 : f32
      %372 = arith.mulf %cst_138, %31 : f32
      %373 = vector.broadcast %372 : f32 to vector<4x4xf32>
      %374 = arith.mulf %373, %343 : vector<4x4xf32>
      %375 = arith.addf %332, %374 : vector<4x4xf32>
      %cst_139 = arith.constant 5.000000e-01 : f32
      %376 = arith.mulf %cst_139, %31 : f32
      %377 = vector.broadcast %376 : f32 to vector<4x4xf32>
      %378 = arith.mulf %377, %371 : vector<4x4xf32>
      %379 = arith.addf %343, %378 : vector<4x4xf32>
      %380 = arith.truncf %375 : vector<4x4xf32> to vector<4x4xbf16>
      %cst_140 = arith.constant dense<0.000000e+00> : vector<4x32xf32>
      %381 = tpu.matmul %380, %0, %cst_140 {dimension_numbers = #tpu.dot_dimension_numbers<[1], [0], [0], [1], [0, 0, 1, 1], [], []>} : vector<4x4xbf16>, vector<4x32xbf16>, vector<4x32xf32> -> vector<4x32xf32>
      %382 = arith.truncf %379 : vector<4x4xf32> to vector<4x4xbf16>
      %cst_141 = arith.constant dense<0.000000e+00> : vector<4x32xf32>
      %383 = tpu.matmul %382, %1, %cst_141 {dimension_numbers = #tpu.dot_dimension_numbers<[1], [0], [0], [1], [0, 0, 1, 1], [], []>} : vector<4x4xbf16>, vector<4x32xbf16>, vector<4x32xf32> -> vector<4x32xf32>
      %384 = arith.addf %381, %383 : vector<4x32xf32>
      %385 = arith.addf %384, %6 : vector<4x32xf32>
      %cst_142 = arith.constant 0.000000e+00 : f32
      %386 = vector.broadcast %cst_142 : f32 to vector<4x32xf32>
      %387 = arith.cmpf ogt, %385, %386 : vector<4x32xf32>
      %cst_143 = arith.constant 0.000000e+00 : f32
      %388 = vector.broadcast %cst_143 : f32 to vector<4x32xf32>
      %389 = arith.minimumf %385, %388 : vector<4x32xf32>
      %390 = math.exp %389 : vector<4x32xf32>
      %cst_144 = arith.constant 1.000000e+00 : f32
      %391 = vector.broadcast %cst_144 : f32 to vector<4x32xf32>
      %392 = arith.subf %390, %391 : vector<4x32xf32>
      %393 = arith.select %387, %385, %392 : vector<4x32xi1>, vector<4x32xf32>
      %394 = arith.truncf %393 : vector<4x32xf32> to vector<4x32xbf16>
      %cst_145 = arith.constant dense<0.000000e+00> : vector<4x32xf32>
      %395 = tpu.matmul %394, %2, %cst_145 {dimension_numbers = #tpu.dot_dimension_numbers<[1], [0], [0], [1], [0, 0, 1, 1], [], []>} : vector<4x32xbf16>, vector<32x32xbf16>, vector<4x32xf32> -> vector<4x32xf32>
      %396 = arith.addf %395, %9 : vector<4x32xf32>
      %cst_146 = arith.constant 0.000000e+00 : f32
      %397 = vector.broadcast %cst_146 : f32 to vector<4x32xf32>
      %398 = arith.cmpf ogt, %396, %397 : vector<4x32xf32>
      %cst_147 = arith.constant 0.000000e+00 : f32
      %399 = vector.broadcast %cst_147 : f32 to vector<4x32xf32>
      %400 = arith.minimumf %396, %399 : vector<4x32xf32>
      %401 = math.exp %400 : vector<4x32xf32>
      %cst_148 = arith.constant 1.000000e+00 : f32
      %402 = vector.broadcast %cst_148 : f32 to vector<4x32xf32>
      %403 = arith.subf %401, %402 : vector<4x32xf32>
      %404 = arith.select %398, %396, %403 : vector<4x32xi1>, vector<4x32xf32>
      %405 = arith.truncf %404 : vector<4x32xf32> to vector<4x32xbf16>
      %cst_149 = arith.constant dense<0.000000e+00> : vector<4x4xf32>
      %406 = tpu.matmul %405, %3, %cst_149 {dimension_numbers = #tpu.dot_dimension_numbers<[1], [0], [0], [1], [0, 0, 1, 1], [], []>} : vector<4x32xbf16>, vector<32x4xbf16>, vector<4x4xf32> -> vector<4x4xf32>
      %407 = arith.addf %406, %12 : vector<4x4xf32>
      %cst_150 = arith.constant 5.000000e-01 : f32
      %408 = arith.mulf %cst_150, %31 : f32
      %409 = vector.broadcast %408 : f32 to vector<4x4xf32>
      %410 = arith.mulf %409, %379 : vector<4x4xf32>
      %411 = arith.addf %332, %410 : vector<4x4xf32>
      %cst_151 = arith.constant 5.000000e-01 : f32
      %412 = arith.mulf %cst_151, %31 : f32
      %413 = vector.broadcast %412 : f32 to vector<4x4xf32>
      %414 = arith.mulf %413, %407 : vector<4x4xf32>
      %415 = arith.addf %343, %414 : vector<4x4xf32>
      %416 = arith.truncf %411 : vector<4x4xf32> to vector<4x4xbf16>
      %cst_152 = arith.constant dense<0.000000e+00> : vector<4x32xf32>
      %417 = tpu.matmul %416, %0, %cst_152 {dimension_numbers = #tpu.dot_dimension_numbers<[1], [0], [0], [1], [0, 0, 1, 1], [], []>} : vector<4x4xbf16>, vector<4x32xbf16>, vector<4x32xf32> -> vector<4x32xf32>
      %418 = arith.truncf %415 : vector<4x4xf32> to vector<4x4xbf16>
      %cst_153 = arith.constant dense<0.000000e+00> : vector<4x32xf32>
      %419 = tpu.matmul %418, %1, %cst_153 {dimension_numbers = #tpu.dot_dimension_numbers<[1], [0], [0], [1], [0, 0, 1, 1], [], []>} : vector<4x4xbf16>, vector<4x32xbf16>, vector<4x32xf32> -> vector<4x32xf32>
      %420 = arith.addf %417, %419 : vector<4x32xf32>
      %421 = arith.addf %420, %6 : vector<4x32xf32>
      %cst_154 = arith.constant 0.000000e+00 : f32
      %422 = vector.broadcast %cst_154 : f32 to vector<4x32xf32>
      %423 = arith.cmpf ogt, %421, %422 : vector<4x32xf32>
      %cst_155 = arith.constant 0.000000e+00 : f32
      %424 = vector.broadcast %cst_155 : f32 to vector<4x32xf32>
      %425 = arith.minimumf %421, %424 : vector<4x32xf32>
      %426 = math.exp %425 : vector<4x32xf32>
      %cst_156 = arith.constant 1.000000e+00 : f32
      %427 = vector.broadcast %cst_156 : f32 to vector<4x32xf32>
      %428 = arith.subf %426, %427 : vector<4x32xf32>
      %429 = arith.select %423, %421, %428 : vector<4x32xi1>, vector<4x32xf32>
      %430 = arith.truncf %429 : vector<4x32xf32> to vector<4x32xbf16>
      %cst_157 = arith.constant dense<0.000000e+00> : vector<4x32xf32>
      %431 = tpu.matmul %430, %2, %cst_157 {dimension_numbers = #tpu.dot_dimension_numbers<[1], [0], [0], [1], [0, 0, 1, 1], [], []>} : vector<4x32xbf16>, vector<32x32xbf16>, vector<4x32xf32> -> vector<4x32xf32>
      %432 = arith.addf %431, %9 : vector<4x32xf32>
      %cst_158 = arith.constant 0.000000e+00 : f32
      %433 = vector.broadcast %cst_158 : f32 to vector<4x32xf32>
      %434 = arith.cmpf ogt, %432, %433 : vector<4x32xf32>
      %cst_159 = arith.constant 0.000000e+00 : f32
      %435 = vector.broadcast %cst_159 : f32 to vector<4x32xf32>
      %436 = arith.minimumf %432, %435 : vector<4x32xf32>
      %437 = math.exp %436 : vector<4x32xf32>
      %cst_160 = arith.constant 1.000000e+00 : f32
      %438 = vector.broadcast %cst_160 : f32 to vector<4x32xf32>
      %439 = arith.subf %437, %438 : vector<4x32xf32>
      %440 = arith.select %434, %432, %439 : vector<4x32xi1>, vector<4x32xf32>
      %441 = arith.truncf %440 : vector<4x32xf32> to vector<4x32xbf16>
      %cst_161 = arith.constant dense<0.000000e+00> : vector<4x4xf32>
      %442 = tpu.matmul %441, %3, %cst_161 {dimension_numbers = #tpu.dot_dimension_numbers<[1], [0], [0], [1], [0, 0, 1, 1], [], []>} : vector<4x32xbf16>, vector<32x4xbf16>, vector<4x4xf32> -> vector<4x4xf32>
      %443 = arith.addf %442, %12 : vector<4x4xf32>
      %444 = vector.broadcast %31 : f32 to vector<4x4xf32>
      %445 = arith.mulf %444, %415 : vector<4x4xf32>
      %446 = arith.addf %332, %445 : vector<4x4xf32>
      %447 = vector.broadcast %31 : f32 to vector<4x4xf32>
      %448 = arith.mulf %447, %443 : vector<4x4xf32>
      %449 = arith.addf %343, %448 : vector<4x4xf32>
      %450 = arith.truncf %446 : vector<4x4xf32> to vector<4x4xbf16>
      %cst_162 = arith.constant dense<0.000000e+00> : vector<4x32xf32>
      %451 = tpu.matmul %450, %0, %cst_162 {dimension_numbers = #tpu.dot_dimension_numbers<[1], [0], [0], [1], [0, 0, 1, 1], [], []>} : vector<4x4xbf16>, vector<4x32xbf16>, vector<4x32xf32> -> vector<4x32xf32>
      %452 = arith.truncf %449 : vector<4x4xf32> to vector<4x4xbf16>
      %cst_163 = arith.constant dense<0.000000e+00> : vector<4x32xf32>
      %453 = tpu.matmul %452, %1, %cst_163 {dimension_numbers = #tpu.dot_dimension_numbers<[1], [0], [0], [1], [0, 0, 1, 1], [], []>} : vector<4x4xbf16>, vector<4x32xbf16>, vector<4x32xf32> -> vector<4x32xf32>
      %454 = arith.addf %451, %453 : vector<4x32xf32>
      %455 = arith.addf %454, %6 : vector<4x32xf32>
      %cst_164 = arith.constant 0.000000e+00 : f32
      %456 = vector.broadcast %cst_164 : f32 to vector<4x32xf32>
      %457 = arith.cmpf ogt, %455, %456 : vector<4x32xf32>
      %cst_165 = arith.constant 0.000000e+00 : f32
      %458 = vector.broadcast %cst_165 : f32 to vector<4x32xf32>
      %459 = arith.minimumf %455, %458 : vector<4x32xf32>
      %460 = math.exp %459 : vector<4x32xf32>
      %cst_166 = arith.constant 1.000000e+00 : f32
      %461 = vector.broadcast %cst_166 : f32 to vector<4x32xf32>
      %462 = arith.subf %460, %461 : vector<4x32xf32>
      %463 = arith.select %457, %455, %462 : vector<4x32xi1>, vector<4x32xf32>
      %464 = arith.truncf %463 : vector<4x32xf32> to vector<4x32xbf16>
      %cst_167 = arith.constant dense<0.000000e+00> : vector<4x32xf32>
      %465 = tpu.matmul %464, %2, %cst_167 {dimension_numbers = #tpu.dot_dimension_numbers<[1], [0], [0], [1], [0, 0, 1, 1], [], []>} : vector<4x32xbf16>, vector<32x32xbf16>, vector<4x32xf32> -> vector<4x32xf32>
      %466 = arith.addf %465, %9 : vector<4x32xf32>
      %cst_168 = arith.constant 0.000000e+00 : f32
      %467 = vector.broadcast %cst_168 : f32 to vector<4x32xf32>
      %468 = arith.cmpf ogt, %466, %467 : vector<4x32xf32>
      %cst_169 = arith.constant 0.000000e+00 : f32
      %469 = vector.broadcast %cst_169 : f32 to vector<4x32xf32>
      %470 = arith.minimumf %466, %469 : vector<4x32xf32>
      %471 = math.exp %470 : vector<4x32xf32>
      %cst_170 = arith.constant 1.000000e+00 : f32
      %472 = vector.broadcast %cst_170 : f32 to vector<4x32xf32>
      %473 = arith.subf %471, %472 : vector<4x32xf32>
      %474 = arith.select %468, %466, %473 : vector<4x32xi1>, vector<4x32xf32>
      %475 = arith.truncf %474 : vector<4x32xf32> to vector<4x32xbf16>
      %cst_171 = arith.constant dense<0.000000e+00> : vector<4x4xf32>
      %476 = tpu.matmul %475, %3, %cst_171 {dimension_numbers = #tpu.dot_dimension_numbers<[1], [0], [0], [1], [0, 0, 1, 1], [], []>} : vector<4x32xbf16>, vector<32x4xbf16>, vector<4x4xf32> -> vector<4x4xf32>
      %477 = arith.addf %476, %12 : vector<4x4xf32>
      %cst_172 = arith.constant 6.000000e+00 : f32
      %478 = arith.divf %31, %cst_172 : f32
      %cst_173 = arith.constant 2.000000e+00 : f32
      %479 = vector.broadcast %cst_173 : f32 to vector<4x4xf32>
      %480 = arith.mulf %479, %379 : vector<4x4xf32>
      %481 = arith.addf %343, %480 : vector<4x4xf32>
      %cst_174 = arith.constant 2.000000e+00 : f32
      %482 = vector.broadcast %cst_174 : f32 to vector<4x4xf32>
      %483 = arith.mulf %482, %415 : vector<4x4xf32>
      %484 = arith.addf %481, %483 : vector<4x4xf32>
      %485 = arith.addf %484, %449 : vector<4x4xf32>
      %486 = vector.broadcast %478 : f32 to vector<4x4xf32>
      %487 = arith.mulf %486, %485 : vector<4x4xf32>
      %488 = arith.addf %332, %487 : vector<4x4xf32>
      %cst_175 = arith.constant 6.000000e+00 : f32
      %489 = arith.divf %31, %cst_175 : f32
      %cst_176 = arith.constant 2.000000e+00 : f32
      %490 = vector.broadcast %cst_176 : f32 to vector<4x4xf32>
      %491 = arith.mulf %490, %407 : vector<4x4xf32>
      %492 = arith.addf %371, %491 : vector<4x4xf32>
      %cst_177 = arith.constant 2.000000e+00 : f32
      %493 = vector.broadcast %cst_177 : f32 to vector<4x4xf32>
      %494 = arith.mulf %493, %443 : vector<4x4xf32>
      %495 = arith.addf %492, %494 : vector<4x4xf32>
      %496 = arith.addf %495, %477 : vector<4x4xf32>
      %497 = vector.broadcast %489 : f32 to vector<4x4xf32>
      %498 = arith.mulf %497, %496 : vector<4x4xf32>
      %499 = arith.addf %343, %498 : vector<4x4xf32>
      %c3_i32 = arith.constant 3 : i32
      %500 = arith.truncf %488 : vector<4x4xf32> to vector<4x4xbf16>
      %cst_178 = arith.constant dense<0.000000e+00> : vector<4x32xf32>
      %501 = tpu.matmul %500, %0, %cst_178 {dimension_numbers = #tpu.dot_dimension_numbers<[1], [0], [0], [1], [0, 0, 1, 1], [], []>} : vector<4x4xbf16>, vector<4x32xbf16>, vector<4x32xf32> -> vector<4x32xf32>
      %502 = arith.truncf %499 : vector<4x4xf32> to vector<4x4xbf16>
      %cst_179 = arith.constant dense<0.000000e+00> : vector<4x32xf32>
      %503 = tpu.matmul %502, %1, %cst_179 {dimension_numbers = #tpu.dot_dimension_numbers<[1], [0], [0], [1], [0, 0, 1, 1], [], []>} : vector<4x4xbf16>, vector<4x32xbf16>, vector<4x32xf32> -> vector<4x32xf32>
      %504 = arith.addf %501, %503 : vector<4x32xf32>
      %505 = arith.addf %504, %6 : vector<4x32xf32>
      %cst_180 = arith.constant 0.000000e+00 : f32
      %506 = vector.broadcast %cst_180 : f32 to vector<4x32xf32>
      %507 = arith.cmpf ogt, %505, %506 : vector<4x32xf32>
      %cst_181 = arith.constant 0.000000e+00 : f32
      %508 = vector.broadcast %cst_181 : f32 to vector<4x32xf32>
      %509 = arith.minimumf %505, %508 : vector<4x32xf32>
      %510 = math.exp %509 : vector<4x32xf32>
      %cst_182 = arith.constant 1.000000e+00 : f32
      %511 = vector.broadcast %cst_182 : f32 to vector<4x32xf32>
      %512 = arith.subf %510, %511 : vector<4x32xf32>
      %513 = arith.select %507, %505, %512 : vector<4x32xi1>, vector<4x32xf32>
      %514 = arith.truncf %513 : vector<4x32xf32> to vector<4x32xbf16>
      %cst_183 = arith.constant dense<0.000000e+00> : vector<4x32xf32>
      %515 = tpu.matmul %514, %2, %cst_183 {dimension_numbers = #tpu.dot_dimension_numbers<[1], [0], [0], [1], [0, 0, 1, 1], [], []>} : vector<4x32xbf16>, vector<32x32xbf16>, vector<4x32xf32> -> vector<4x32xf32>
      %516 = arith.addf %515, %9 : vector<4x32xf32>
      %cst_184 = arith.constant 0.000000e+00 : f32
      %517 = vector.broadcast %cst_184 : f32 to vector<4x32xf32>
      %518 = arith.cmpf ogt, %516, %517 : vector<4x32xf32>
      %cst_185 = arith.constant 0.000000e+00 : f32
      %519 = vector.broadcast %cst_185 : f32 to vector<4x32xf32>
      %520 = arith.minimumf %516, %519 : vector<4x32xf32>
      %521 = math.exp %520 : vector<4x32xf32>
      %cst_186 = arith.constant 1.000000e+00 : f32
      %522 = vector.broadcast %cst_186 : f32 to vector<4x32xf32>
      %523 = arith.subf %521, %522 : vector<4x32xf32>
      %524 = arith.select %518, %516, %523 : vector<4x32xi1>, vector<4x32xf32>
      %525 = arith.truncf %524 : vector<4x32xf32> to vector<4x32xbf16>
      %cst_187 = arith.constant dense<0.000000e+00> : vector<4x4xf32>
      %526 = tpu.matmul %525, %3, %cst_187 {dimension_numbers = #tpu.dot_dimension_numbers<[1], [0], [0], [1], [0, 0, 1, 1], [], []>} : vector<4x32xbf16>, vector<32x4xbf16>, vector<4x4xf32> -> vector<4x4xf32>
      %527 = arith.addf %526, %12 : vector<4x4xf32>
      %cst_188 = arith.constant 5.000000e-01 : f32
      %528 = arith.mulf %cst_188, %31 : f32
      %529 = vector.broadcast %528 : f32 to vector<4x4xf32>
      %530 = arith.mulf %529, %499 : vector<4x4xf32>
      %531 = arith.addf %488, %530 : vector<4x4xf32>
      %cst_189 = arith.constant 5.000000e-01 : f32
      %532 = arith.mulf %cst_189, %31 : f32
      %533 = vector.broadcast %532 : f32 to vector<4x4xf32>
      %534 = arith.mulf %533, %527 : vector<4x4xf32>
      %535 = arith.addf %499, %534 : vector<4x4xf32>
      %536 = arith.truncf %531 : vector<4x4xf32> to vector<4x4xbf16>
      %cst_190 = arith.constant dense<0.000000e+00> : vector<4x32xf32>
      %537 = tpu.matmul %536, %0, %cst_190 {dimension_numbers = #tpu.dot_dimension_numbers<[1], [0], [0], [1], [0, 0, 1, 1], [], []>} : vector<4x4xbf16>, vector<4x32xbf16>, vector<4x32xf32> -> vector<4x32xf32>
      %538 = arith.truncf %535 : vector<4x4xf32> to vector<4x4xbf16>
      %cst_191 = arith.constant dense<0.000000e+00> : vector<4x32xf32>
      %539 = tpu.matmul %538, %1, %cst_191 {dimension_numbers = #tpu.dot_dimension_numbers<[1], [0], [0], [1], [0, 0, 1, 1], [], []>} : vector<4x4xbf16>, vector<4x32xbf16>, vector<4x32xf32> -> vector<4x32xf32>
      %540 = arith.addf %537, %539 : vector<4x32xf32>
      %541 = arith.addf %540, %6 : vector<4x32xf32>
      %cst_192 = arith.constant 0.000000e+00 : f32
      %542 = vector.broadcast %cst_192 : f32 to vector<4x32xf32>
      %543 = arith.cmpf ogt, %541, %542 : vector<4x32xf32>
      %cst_193 = arith.constant 0.000000e+00 : f32
      %544 = vector.broadcast %cst_193 : f32 to vector<4x32xf32>
      %545 = arith.minimumf %541, %544 : vector<4x32xf32>
      %546 = math.exp %545 : vector<4x32xf32>
      %cst_194 = arith.constant 1.000000e+00 : f32
      %547 = vector.broadcast %cst_194 : f32 to vector<4x32xf32>
      %548 = arith.subf %546, %547 : vector<4x32xf32>
      %549 = arith.select %543, %541, %548 : vector<4x32xi1>, vector<4x32xf32>
      %550 = arith.truncf %549 : vector<4x32xf32> to vector<4x32xbf16>
      %cst_195 = arith.constant dense<0.000000e+00> : vector<4x32xf32>
      %551 = tpu.matmul %550, %2, %cst_195 {dimension_numbers = #tpu.dot_dimension_numbers<[1], [0], [0], [1], [0, 0, 1, 1], [], []>} : vector<4x32xbf16>, vector<32x32xbf16>, vector<4x32xf32> -> vector<4x32xf32>
      %552 = arith.addf %551, %9 : vector<4x32xf32>
      %cst_196 = arith.constant 0.000000e+00 : f32
      %553 = vector.broadcast %cst_196 : f32 to vector<4x32xf32>
      %554 = arith.cmpf ogt, %552, %553 : vector<4x32xf32>
      %cst_197 = arith.constant 0.000000e+00 : f32
      %555 = vector.broadcast %cst_197 : f32 to vector<4x32xf32>
      %556 = arith.minimumf %552, %555 : vector<4x32xf32>
      %557 = math.exp %556 : vector<4x32xf32>
      %cst_198 = arith.constant 1.000000e+00 : f32
      %558 = vector.broadcast %cst_198 : f32 to vector<4x32xf32>
      %559 = arith.subf %557, %558 : vector<4x32xf32>
      %560 = arith.select %554, %552, %559 : vector<4x32xi1>, vector<4x32xf32>
      %561 = arith.truncf %560 : vector<4x32xf32> to vector<4x32xbf16>
      %cst_199 = arith.constant dense<0.000000e+00> : vector<4x4xf32>
      %562 = tpu.matmul %561, %3, %cst_199 {dimension_numbers = #tpu.dot_dimension_numbers<[1], [0], [0], [1], [0, 0, 1, 1], [], []>} : vector<4x32xbf16>, vector<32x4xbf16>, vector<4x4xf32> -> vector<4x4xf32>
      %563 = arith.addf %562, %12 : vector<4x4xf32>
      %cst_200 = arith.constant 5.000000e-01 : f32
      %564 = arith.mulf %cst_200, %31 : f32
      %565 = vector.broadcast %564 : f32 to vector<4x4xf32>
      %566 = arith.mulf %565, %535 : vector<4x4xf32>
      %567 = arith.addf %488, %566 : vector<4x4xf32>
      %cst_201 = arith.constant 5.000000e-01 : f32
      %568 = arith.mulf %cst_201, %31 : f32
      %569 = vector.broadcast %568 : f32 to vector<4x4xf32>
      %570 = arith.mulf %569, %563 : vector<4x4xf32>
      %571 = arith.addf %499, %570 : vector<4x4xf32>
      %572 = arith.truncf %567 : vector<4x4xf32> to vector<4x4xbf16>
      %cst_202 = arith.constant dense<0.000000e+00> : vector<4x32xf32>
      %573 = tpu.matmul %572, %0, %cst_202 {dimension_numbers = #tpu.dot_dimension_numbers<[1], [0], [0], [1], [0, 0, 1, 1], [], []>} : vector<4x4xbf16>, vector<4x32xbf16>, vector<4x32xf32> -> vector<4x32xf32>
      %574 = arith.truncf %571 : vector<4x4xf32> to vector<4x4xbf16>
      %cst_203 = arith.constant dense<0.000000e+00> : vector<4x32xf32>
      %575 = tpu.matmul %574, %1, %cst_203 {dimension_numbers = #tpu.dot_dimension_numbers<[1], [0], [0], [1], [0, 0, 1, 1], [], []>} : vector<4x4xbf16>, vector<4x32xbf16>, vector<4x32xf32> -> vector<4x32xf32>
      %576 = arith.addf %573, %575 : vector<4x32xf32>
      %577 = arith.addf %576, %6 : vector<4x32xf32>
      %cst_204 = arith.constant 0.000000e+00 : f32
      %578 = vector.broadcast %cst_204 : f32 to vector<4x32xf32>
      %579 = arith.cmpf ogt, %577, %578 : vector<4x32xf32>
      %cst_205 = arith.constant 0.000000e+00 : f32
      %580 = vector.broadcast %cst_205 : f32 to vector<4x32xf32>
      %581 = arith.minimumf %577, %580 : vector<4x32xf32>
      %582 = math.exp %581 : vector<4x32xf32>
      %cst_206 = arith.constant 1.000000e+00 : f32
      %583 = vector.broadcast %cst_206 : f32 to vector<4x32xf32>
      %584 = arith.subf %582, %583 : vector<4x32xf32>
      %585 = arith.select %579, %577, %584 : vector<4x32xi1>, vector<4x32xf32>
      %586 = arith.truncf %585 : vector<4x32xf32> to vector<4x32xbf16>
      %cst_207 = arith.constant dense<0.000000e+00> : vector<4x32xf32>
      %587 = tpu.matmul %586, %2, %cst_207 {dimension_numbers = #tpu.dot_dimension_numbers<[1], [0], [0], [1], [0, 0, 1, 1], [], []>} : vector<4x32xbf16>, vector<32x32xbf16>, vector<4x32xf32> -> vector<4x32xf32>
      %588 = arith.addf %587, %9 : vector<4x32xf32>
      %cst_208 = arith.constant 0.000000e+00 : f32
      %589 = vector.broadcast %cst_208 : f32 to vector<4x32xf32>
      %590 = arith.cmpf ogt, %588, %589 : vector<4x32xf32>
      %cst_209 = arith.constant 0.000000e+00 : f32
      %591 = vector.broadcast %cst_209 : f32 to vector<4x32xf32>
      %592 = arith.minimumf %588, %591 : vector<4x32xf32>
      %593 = math.exp %592 : vector<4x32xf32>
      %cst_210 = arith.constant 1.000000e+00 : f32
      %594 = vector.broadcast %cst_210 : f32 to vector<4x32xf32>
      %595 = arith.subf %593, %594 : vector<4x32xf32>
      %596 = arith.select %590, %588, %595 : vector<4x32xi1>, vector<4x32xf32>
      %597 = arith.truncf %596 : vector<4x32xf32> to vector<4x32xbf16>
      %cst_211 = arith.constant dense<0.000000e+00> : vector<4x4xf32>
      %598 = tpu.matmul %597, %3, %cst_211 {dimension_numbers = #tpu.dot_dimension_numbers<[1], [0], [0], [1], [0, 0, 1, 1], [], []>} : vector<4x32xbf16>, vector<32x4xbf16>, vector<4x4xf32> -> vector<4x4xf32>
      %599 = arith.addf %598, %12 : vector<4x4xf32>
      %600 = vector.broadcast %31 : f32 to vector<4x4xf32>
      %601 = arith.mulf %600, %571 : vector<4x4xf32>
      %602 = arith.addf %488, %601 : vector<4x4xf32>
      %603 = vector.broadcast %31 : f32 to vector<4x4xf32>
      %604 = arith.mulf %603, %599 : vector<4x4xf32>
      %605 = arith.addf %499, %604 : vector<4x4xf32>
      %606 = arith.truncf %602 : vector<4x4xf32> to vector<4x4xbf16>
      %cst_212 = arith.constant dense<0.000000e+00> : vector<4x32xf32>
      %607 = tpu.matmul %606, %0, %cst_212 {dimension_numbers = #tpu.dot_dimension_numbers<[1], [0], [0], [1], [0, 0, 1, 1], [], []>} : vector<4x4xbf16>, vector<4x32xbf16>, vector<4x32xf32> -> vector<4x32xf32>
      %608 = arith.truncf %605 : vector<4x4xf32> to vector<4x4xbf16>
      %cst_213 = arith.constant dense<0.000000e+00> : vector<4x32xf32>
      %609 = tpu.matmul %608, %1, %cst_213 {dimension_numbers = #tpu.dot_dimension_numbers<[1], [0], [0], [1], [0, 0, 1, 1], [], []>} : vector<4x4xbf16>, vector<4x32xbf16>, vector<4x32xf32> -> vector<4x32xf32>
      %610 = arith.addf %607, %609 : vector<4x32xf32>
      %611 = arith.addf %610, %6 : vector<4x32xf32>
      %cst_214 = arith.constant 0.000000e+00 : f32
      %612 = vector.broadcast %cst_214 : f32 to vector<4x32xf32>
      %613 = arith.cmpf ogt, %611, %612 : vector<4x32xf32>
      %cst_215 = arith.constant 0.000000e+00 : f32
      %614 = vector.broadcast %cst_215 : f32 to vector<4x32xf32>
      %615 = arith.minimumf %611, %614 : vector<4x32xf32>
      %616 = math.exp %615 : vector<4x32xf32>
      %cst_216 = arith.constant 1.000000e+00 : f32
      %617 = vector.broadcast %cst_216 : f32 to vector<4x32xf32>
      %618 = arith.subf %616, %617 : vector<4x32xf32>
      %619 = arith.select %613, %611, %618 : vector<4x32xi1>, vector<4x32xf32>
      %620 = arith.truncf %619 : vector<4x32xf32> to vector<4x32xbf16>
      %cst_217 = arith.constant dense<0.000000e+00> : vector<4x32xf32>
      %621 = tpu.matmul %620, %2, %cst_217 {dimension_numbers = #tpu.dot_dimension_numbers<[1], [0], [0], [1], [0, 0, 1, 1], [], []>} : vector<4x32xbf16>, vector<32x32xbf16>, vector<4x32xf32> -> vector<4x32xf32>
      %622 = arith.addf %621, %9 : vector<4x32xf32>
      %cst_218 = arith.constant 0.000000e+00 : f32
      %623 = vector.broadcast %cst_218 : f32 to vector<4x32xf32>
      %624 = arith.cmpf ogt, %622, %623 : vector<4x32xf32>
      %cst_219 = arith.constant 0.000000e+00 : f32
      %625 = vector.broadcast %cst_219 : f32 to vector<4x32xf32>
      %626 = arith.minimumf %622, %625 : vector<4x32xf32>
      %627 = math.exp %626 : vector<4x32xf32>
      %cst_220 = arith.constant 1.000000e+00 : f32
      %628 = vector.broadcast %cst_220 : f32 to vector<4x32xf32>
      %629 = arith.subf %627, %628 : vector<4x32xf32>
      %630 = arith.select %624, %622, %629 : vector<4x32xi1>, vector<4x32xf32>
      %631 = arith.truncf %630 : vector<4x32xf32> to vector<4x32xbf16>
      %cst_221 = arith.constant dense<0.000000e+00> : vector<4x4xf32>
      %632 = tpu.matmul %631, %3, %cst_221 {dimension_numbers = #tpu.dot_dimension_numbers<[1], [0], [0], [1], [0, 0, 1, 1], [], []>} : vector<4x32xbf16>, vector<32x4xbf16>, vector<4x4xf32> -> vector<4x4xf32>
      %633 = arith.addf %632, %12 : vector<4x4xf32>
      %cst_222 = arith.constant 6.000000e+00 : f32
      %634 = arith.divf %31, %cst_222 : f32
      %cst_223 = arith.constant 2.000000e+00 : f32
      %635 = vector.broadcast %cst_223 : f32 to vector<4x4xf32>
      %636 = arith.mulf %635, %535 : vector<4x4xf32>
      %637 = arith.addf %499, %636 : vector<4x4xf32>
      %cst_224 = arith.constant 2.000000e+00 : f32
      %638 = vector.broadcast %cst_224 : f32 to vector<4x4xf32>
      %639 = arith.mulf %638, %571 : vector<4x4xf32>
      %640 = arith.addf %637, %639 : vector<4x4xf32>
      %641 = arith.addf %640, %605 : vector<4x4xf32>
      %642 = vector.broadcast %634 : f32 to vector<4x4xf32>
      %643 = arith.mulf %642, %641 : vector<4x4xf32>
      %644 = arith.addf %488, %643 : vector<4x4xf32>
      %cst_225 = arith.constant 6.000000e+00 : f32
      %645 = arith.divf %31, %cst_225 : f32
      %cst_226 = arith.constant 2.000000e+00 : f32
      %646 = vector.broadcast %cst_226 : f32 to vector<4x4xf32>
      %647 = arith.mulf %646, %563 : vector<4x4xf32>
      %648 = arith.addf %527, %647 : vector<4x4xf32>
      %cst_227 = arith.constant 2.000000e+00 : f32
      %649 = vector.broadcast %cst_227 : f32 to vector<4x4xf32>
      %650 = arith.mulf %649, %599 : vector<4x4xf32>
      %651 = arith.addf %648, %650 : vector<4x4xf32>
      %652 = arith.addf %651, %633 : vector<4x4xf32>
      %653 = vector.broadcast %645 : f32 to vector<4x4xf32>
      %654 = arith.mulf %653, %652 : vector<4x4xf32>
      %655 = arith.addf %499, %654 : vector<4x4xf32>
      %c4_i32 = arith.constant 4 : i32
      %656 = arith.truncf %644 : vector<4x4xf32> to vector<4x4xbf16>
      %cst_228 = arith.constant dense<0.000000e+00> : vector<4x32xf32>
      %657 = tpu.matmul %656, %0, %cst_228 {dimension_numbers = #tpu.dot_dimension_numbers<[1], [0], [0], [1], [0, 0, 1, 1], [], []>} : vector<4x4xbf16>, vector<4x32xbf16>, vector<4x32xf32> -> vector<4x32xf32>
      %658 = arith.truncf %655 : vector<4x4xf32> to vector<4x4xbf16>
      %cst_229 = arith.constant dense<0.000000e+00> : vector<4x32xf32>
      %659 = tpu.matmul %658, %1, %cst_229 {dimension_numbers = #tpu.dot_dimension_numbers<[1], [0], [0], [1], [0, 0, 1, 1], [], []>} : vector<4x4xbf16>, vector<4x32xbf16>, vector<4x32xf32> -> vector<4x32xf32>
      %660 = arith.addf %657, %659 : vector<4x32xf32>
      %661 = arith.addf %660, %6 : vector<4x32xf32>
      %cst_230 = arith.constant 0.000000e+00 : f32
      %662 = vector.broadcast %cst_230 : f32 to vector<4x32xf32>
      %663 = arith.cmpf ogt, %661, %662 : vector<4x32xf32>
      %cst_231 = arith.constant 0.000000e+00 : f32
      %664 = vector.broadcast %cst_231 : f32 to vector<4x32xf32>
      %665 = arith.minimumf %661, %664 : vector<4x32xf32>
      %666 = math.exp %665 : vector<4x32xf32>
      %cst_232 = arith.constant 1.000000e+00 : f32
      %667 = vector.broadcast %cst_232 : f32 to vector<4x32xf32>
      %668 = arith.subf %666, %667 : vector<4x32xf32>
      %669 = arith.select %663, %661, %668 : vector<4x32xi1>, vector<4x32xf32>
      %670 = arith.truncf %669 : vector<4x32xf32> to vector<4x32xbf16>
      %cst_233 = arith.constant dense<0.000000e+00> : vector<4x32xf32>
      %671 = tpu.matmul %670, %2, %cst_233 {dimension_numbers = #tpu.dot_dimension_numbers<[1], [0], [0], [1], [0, 0, 1, 1], [], []>} : vector<4x32xbf16>, vector<32x32xbf16>, vector<4x32xf32> -> vector<4x32xf32>
      %672 = arith.addf %671, %9 : vector<4x32xf32>
      %cst_234 = arith.constant 0.000000e+00 : f32
      %673 = vector.broadcast %cst_234 : f32 to vector<4x32xf32>
      %674 = arith.cmpf ogt, %672, %673 : vector<4x32xf32>
      %cst_235 = arith.constant 0.000000e+00 : f32
      %675 = vector.broadcast %cst_235 : f32 to vector<4x32xf32>
      %676 = arith.minimumf %672, %675 : vector<4x32xf32>
      %677 = math.exp %676 : vector<4x32xf32>
      %cst_236 = arith.constant 1.000000e+00 : f32
      %678 = vector.broadcast %cst_236 : f32 to vector<4x32xf32>
      %679 = arith.subf %677, %678 : vector<4x32xf32>
      %680 = arith.select %674, %672, %679 : vector<4x32xi1>, vector<4x32xf32>
      %681 = arith.truncf %680 : vector<4x32xf32> to vector<4x32xbf16>
      %cst_237 = arith.constant dense<0.000000e+00> : vector<4x4xf32>
      %682 = tpu.matmul %681, %3, %cst_237 {dimension_numbers = #tpu.dot_dimension_numbers<[1], [0], [0], [1], [0, 0, 1, 1], [], []>} : vector<4x32xbf16>, vector<32x4xbf16>, vector<4x4xf32> -> vector<4x4xf32>
      %683 = arith.addf %682, %12 : vector<4x4xf32>
      %cst_238 = arith.constant 5.000000e-01 : f32
      %684 = arith.mulf %cst_238, %31 : f32
      %685 = vector.broadcast %684 : f32 to vector<4x4xf32>
      %686 = arith.mulf %685, %655 : vector<4x4xf32>
      %687 = arith.addf %644, %686 : vector<4x4xf32>
      %cst_239 = arith.constant 5.000000e-01 : f32
      %688 = arith.mulf %cst_239, %31 : f32
      %689 = vector.broadcast %688 : f32 to vector<4x4xf32>
      %690 = arith.mulf %689, %683 : vector<4x4xf32>
      %691 = arith.addf %655, %690 : vector<4x4xf32>
      %692 = arith.truncf %687 : vector<4x4xf32> to vector<4x4xbf16>
      %cst_240 = arith.constant dense<0.000000e+00> : vector<4x32xf32>
      %693 = tpu.matmul %692, %0, %cst_240 {dimension_numbers = #tpu.dot_dimension_numbers<[1], [0], [0], [1], [0, 0, 1, 1], [], []>} : vector<4x4xbf16>, vector<4x32xbf16>, vector<4x32xf32> -> vector<4x32xf32>
      %694 = arith.truncf %691 : vector<4x4xf32> to vector<4x4xbf16>
      %cst_241 = arith.constant dense<0.000000e+00> : vector<4x32xf32>
      %695 = tpu.matmul %694, %1, %cst_241 {dimension_numbers = #tpu.dot_dimension_numbers<[1], [0], [0], [1], [0, 0, 1, 1], [], []>} : vector<4x4xbf16>, vector<4x32xbf16>, vector<4x32xf32> -> vector<4x32xf32>
      %696 = arith.addf %693, %695 : vector<4x32xf32>
      %697 = arith.addf %696, %6 : vector<4x32xf32>
      %cst_242 = arith.constant 0.000000e+00 : f32
      %698 = vector.broadcast %cst_242 : f32 to vector<4x32xf32>
      %699 = arith.cmpf ogt, %697, %698 : vector<4x32xf32>
      %cst_243 = arith.constant 0.000000e+00 : f32
      %700 = vector.broadcast %cst_243 : f32 to vector<4x32xf32>
      %701 = arith.minimumf %697, %700 : vector<4x32xf32>
      %702 = math.exp %701 : vector<4x32xf32>
      %cst_244 = arith.constant 1.000000e+00 : f32
      %703 = vector.broadcast %cst_244 : f32 to vector<4x32xf32>
      %704 = arith.subf %702, %703 : vector<4x32xf32>
      %705 = arith.select %699, %697, %704 : vector<4x32xi1>, vector<4x32xf32>
      %706 = arith.truncf %705 : vector<4x32xf32> to vector<4x32xbf16>
      %cst_245 = arith.constant dense<0.000000e+00> : vector<4x32xf32>
      %707 = tpu.matmul %706, %2, %cst_245 {dimension_numbers = #tpu.dot_dimension_numbers<[1], [0], [0], [1], [0, 0, 1, 1], [], []>} : vector<4x32xbf16>, vector<32x32xbf16>, vector<4x32xf32> -> vector<4x32xf32>
      %708 = arith.addf %707, %9 : vector<4x32xf32>
      %cst_246 = arith.constant 0.000000e+00 : f32
      %709 = vector.broadcast %cst_246 : f32 to vector<4x32xf32>
      %710 = arith.cmpf ogt, %708, %709 : vector<4x32xf32>
      %cst_247 = arith.constant 0.000000e+00 : f32
      %711 = vector.broadcast %cst_247 : f32 to vector<4x32xf32>
      %712 = arith.minimumf %708, %711 : vector<4x32xf32>
      %713 = math.exp %712 : vector<4x32xf32>
      %cst_248 = arith.constant 1.000000e+00 : f32
      %714 = vector.broadcast %cst_248 : f32 to vector<4x32xf32>
      %715 = arith.subf %713, %714 : vector<4x32xf32>
      %716 = arith.select %710, %708, %715 : vector<4x32xi1>, vector<4x32xf32>
      %717 = arith.truncf %716 : vector<4x32xf32> to vector<4x32xbf16>
      %cst_249 = arith.constant dense<0.000000e+00> : vector<4x4xf32>
      %718 = tpu.matmul %717, %3, %cst_249 {dimension_numbers = #tpu.dot_dimension_numbers<[1], [0], [0], [1], [0, 0, 1, 1], [], []>} : vector<4x32xbf16>, vector<32x4xbf16>, vector<4x4xf32> -> vector<4x4xf32>
      %719 = arith.addf %718, %12 : vector<4x4xf32>
      %cst_250 = arith.constant 5.000000e-01 : f32
      %720 = arith.mulf %cst_250, %31 : f32
      %721 = vector.broadcast %720 : f32 to vector<4x4xf32>
      %722 = arith.mulf %721, %691 : vector<4x4xf32>
      %723 = arith.addf %644, %722 : vector<4x4xf32>
      %cst_251 = arith.constant 5.000000e-01 : f32
      %724 = arith.mulf %cst_251, %31 : f32
      %725 = vector.broadcast %724 : f32 to vector<4x4xf32>
      %726 = arith.mulf %725, %719 : vector<4x4xf32>
      %727 = arith.addf %655, %726 : vector<4x4xf32>
      %728 = arith.truncf %723 : vector<4x4xf32> to vector<4x4xbf16>
      %cst_252 = arith.constant dense<0.000000e+00> : vector<4x32xf32>
      %729 = tpu.matmul %728, %0, %cst_252 {dimension_numbers = #tpu.dot_dimension_numbers<[1], [0], [0], [1], [0, 0, 1, 1], [], []>} : vector<4x4xbf16>, vector<4x32xbf16>, vector<4x32xf32> -> vector<4x32xf32>
      %730 = arith.truncf %727 : vector<4x4xf32> to vector<4x4xbf16>
      %cst_253 = arith.constant dense<0.000000e+00> : vector<4x32xf32>
      %731 = tpu.matmul %730, %1, %cst_253 {dimension_numbers = #tpu.dot_dimension_numbers<[1], [0], [0], [1], [0, 0, 1, 1], [], []>} : vector<4x4xbf16>, vector<4x32xbf16>, vector<4x32xf32> -> vector<4x32xf32>
      %732 = arith.addf %729, %731 : vector<4x32xf32>
      %733 = arith.addf %732, %6 : vector<4x32xf32>
      %cst_254 = arith.constant 0.000000e+00 : f32
      %734 = vector.broadcast %cst_254 : f32 to vector<4x32xf32>
      %735 = arith.cmpf ogt, %733, %734 : vector<4x32xf32>
      %cst_255 = arith.constant 0.000000e+00 : f32
      %736 = vector.broadcast %cst_255 : f32 to vector<4x32xf32>
      %737 = arith.minimumf %733, %736 : vector<4x32xf32>
      %738 = math.exp %737 : vector<4x32xf32>
      %cst_256 = arith.constant 1.000000e+00 : f32
      %739 = vector.broadcast %cst_256 : f32 to vector<4x32xf32>
      %740 = arith.subf %738, %739 : vector<4x32xf32>
      %741 = arith.select %735, %733, %740 : vector<4x32xi1>, vector<4x32xf32>
      %742 = arith.truncf %741 : vector<4x32xf32> to vector<4x32xbf16>
      %cst_257 = arith.constant dense<0.000000e+00> : vector<4x32xf32>
      %743 = tpu.matmul %742, %2, %cst_257 {dimension_numbers = #tpu.dot_dimension_numbers<[1], [0], [0], [1], [0, 0, 1, 1], [], []>} : vector<4x32xbf16>, vector<32x32xbf16>, vector<4x32xf32> -> vector<4x32xf32>
      %744 = arith.addf %743, %9 : vector<4x32xf32>
      %cst_258 = arith.constant 0.000000e+00 : f32
      %745 = vector.broadcast %cst_258 : f32 to vector<4x32xf32>
      %746 = arith.cmpf ogt, %744, %745 : vector<4x32xf32>
      %cst_259 = arith.constant 0.000000e+00 : f32
      %747 = vector.broadcast %cst_259 : f32 to vector<4x32xf32>
      %748 = arith.minimumf %744, %747 : vector<4x32xf32>
      %749 = math.exp %748 : vector<4x32xf32>
      %cst_260 = arith.constant 1.000000e+00 : f32
      %750 = vector.broadcast %cst_260 : f32 to vector<4x32xf32>
      %751 = arith.subf %749, %750 : vector<4x32xf32>
      %752 = arith.select %746, %744, %751 : vector<4x32xi1>, vector<4x32xf32>
      %753 = arith.truncf %752 : vector<4x32xf32> to vector<4x32xbf16>
      %cst_261 = arith.constant dense<0.000000e+00> : vector<4x4xf32>
      %754 = tpu.matmul %753, %3, %cst_261 {dimension_numbers = #tpu.dot_dimension_numbers<[1], [0], [0], [1], [0, 0, 1, 1], [], []>} : vector<4x32xbf16>, vector<32x4xbf16>, vector<4x4xf32> -> vector<4x4xf32>
      %755 = arith.addf %754, %12 : vector<4x4xf32>
      %756 = vector.broadcast %31 : f32 to vector<4x4xf32>
      %757 = arith.mulf %756, %727 : vector<4x4xf32>
      %758 = arith.addf %644, %757 : vector<4x4xf32>
      %759 = vector.broadcast %31 : f32 to vector<4x4xf32>
      %760 = arith.mulf %759, %755 : vector<4x4xf32>
      %761 = arith.addf %655, %760 : vector<4x4xf32>
      %762 = arith.truncf %758 : vector<4x4xf32> to vector<4x4xbf16>
      %cst_262 = arith.constant dense<0.000000e+00> : vector<4x32xf32>
      %763 = tpu.matmul %762, %0, %cst_262 {dimension_numbers = #tpu.dot_dimension_numbers<[1], [0], [0], [1], [0, 0, 1, 1], [], []>} : vector<4x4xbf16>, vector<4x32xbf16>, vector<4x32xf32> -> vector<4x32xf32>
      %764 = arith.truncf %761 : vector<4x4xf32> to vector<4x4xbf16>
      %cst_263 = arith.constant dense<0.000000e+00> : vector<4x32xf32>
      %765 = tpu.matmul %764, %1, %cst_263 {dimension_numbers = #tpu.dot_dimension_numbers<[1], [0], [0], [1], [0, 0, 1, 1], [], []>} : vector<4x4xbf16>, vector<4x32xbf16>, vector<4x32xf32> -> vector<4x32xf32>
      %766 = arith.addf %763, %765 : vector<4x32xf32>
      %767 = arith.addf %766, %6 : vector<4x32xf32>
      %cst_264 = arith.constant 0.000000e+00 : f32
      %768 = vector.broadcast %cst_264 : f32 to vector<4x32xf32>
      %769 = arith.cmpf ogt, %767, %768 : vector<4x32xf32>
      %cst_265 = arith.constant 0.000000e+00 : f32
      %770 = vector.broadcast %cst_265 : f32 to vector<4x32xf32>
      %771 = arith.minimumf %767, %770 : vector<4x32xf32>
      %772 = math.exp %771 : vector<4x32xf32>
      %cst_266 = arith.constant 1.000000e+00 : f32
      %773 = vector.broadcast %cst_266 : f32 to vector<4x32xf32>
      %774 = arith.subf %772, %773 : vector<4x32xf32>
      %775 = arith.select %769, %767, %774 : vector<4x32xi1>, vector<4x32xf32>
      %776 = arith.truncf %775 : vector<4x32xf32> to vector<4x32xbf16>
      %cst_267 = arith.constant dense<0.000000e+00> : vector<4x32xf32>
      %777 = tpu.matmul %776, %2, %cst_267 {dimension_numbers = #tpu.dot_dimension_numbers<[1], [0], [0], [1], [0, 0, 1, 1], [], []>} : vector<4x32xbf16>, vector<32x32xbf16>, vector<4x32xf32> -> vector<4x32xf32>
      %778 = arith.addf %777, %9 : vector<4x32xf32>
      %cst_268 = arith.constant 0.000000e+00 : f32
      %779 = vector.broadcast %cst_268 : f32 to vector<4x32xf32>
      %780 = arith.cmpf ogt, %778, %779 : vector<4x32xf32>
      %cst_269 = arith.constant 0.000000e+00 : f32
      %781 = vector.broadcast %cst_269 : f32 to vector<4x32xf32>
      %782 = arith.minimumf %778, %781 : vector<4x32xf32>
      %783 = math.exp %782 : vector<4x32xf32>
      %cst_270 = arith.constant 1.000000e+00 : f32
      %784 = vector.broadcast %cst_270 : f32 to vector<4x32xf32>
      %785 = arith.subf %783, %784 : vector<4x32xf32>
      %786 = arith.select %780, %778, %785 : vector<4x32xi1>, vector<4x32xf32>
      %787 = arith.truncf %786 : vector<4x32xf32> to vector<4x32xbf16>
      %cst_271 = arith.constant dense<0.000000e+00> : vector<4x4xf32>
      %788 = tpu.matmul %787, %3, %cst_271 {dimension_numbers = #tpu.dot_dimension_numbers<[1], [0], [0], [1], [0, 0, 1, 1], [], []>} : vector<4x32xbf16>, vector<32x4xbf16>, vector<4x4xf32> -> vector<4x4xf32>
      %789 = arith.addf %788, %12 : vector<4x4xf32>
      %cst_272 = arith.constant 6.000000e+00 : f32
      %790 = arith.divf %31, %cst_272 : f32
      %cst_273 = arith.constant 2.000000e+00 : f32
      %791 = vector.broadcast %cst_273 : f32 to vector<4x4xf32>
      %792 = arith.mulf %791, %691 : vector<4x4xf32>
      %793 = arith.addf %655, %792 : vector<4x4xf32>
      %cst_274 = arith.constant 2.000000e+00 : f32
      %794 = vector.broadcast %cst_274 : f32 to vector<4x4xf32>
      %795 = arith.mulf %794, %727 : vector<4x4xf32>
      %796 = arith.addf %793, %795 : vector<4x4xf32>
      %797 = arith.addf %796, %761 : vector<4x4xf32>
      %798 = vector.broadcast %790 : f32 to vector<4x4xf32>
      %799 = arith.mulf %798, %797 : vector<4x4xf32>
      %800 = arith.addf %644, %799 : vector<4x4xf32>
      %cst_275 = arith.constant 6.000000e+00 : f32
      %801 = arith.divf %31, %cst_275 : f32
      %cst_276 = arith.constant 2.000000e+00 : f32
      %802 = vector.broadcast %cst_276 : f32 to vector<4x4xf32>
      %803 = arith.mulf %802, %719 : vector<4x4xf32>
      %804 = arith.addf %683, %803 : vector<4x4xf32>
      %cst_277 = arith.constant 2.000000e+00 : f32
      %805 = vector.broadcast %cst_277 : f32 to vector<4x4xf32>
      %806 = arith.mulf %805, %755 : vector<4x4xf32>
      %807 = arith.addf %804, %806 : vector<4x4xf32>
      %808 = arith.addf %807, %789 : vector<4x4xf32>
      %809 = vector.broadcast %801 : f32 to vector<4x4xf32>
      %810 = arith.mulf %809, %808 : vector<4x4xf32>
      %811 = arith.addf %655, %810 : vector<4x4xf32>
      %c5_i32 = arith.constant 5 : i32
      %812 = arith.truncf %800 : vector<4x4xf32> to vector<4x4xbf16>
      %cst_278 = arith.constant dense<0.000000e+00> : vector<4x32xf32>
      %813 = tpu.matmul %812, %0, %cst_278 {dimension_numbers = #tpu.dot_dimension_numbers<[1], [0], [0], [1], [0, 0, 1, 1], [], []>} : vector<4x4xbf16>, vector<4x32xbf16>, vector<4x32xf32> -> vector<4x32xf32>
      %814 = arith.truncf %811 : vector<4x4xf32> to vector<4x4xbf16>
      %cst_279 = arith.constant dense<0.000000e+00> : vector<4x32xf32>
      %815 = tpu.matmul %814, %1, %cst_279 {dimension_numbers = #tpu.dot_dimension_numbers<[1], [0], [0], [1], [0, 0, 1, 1], [], []>} : vector<4x4xbf16>, vector<4x32xbf16>, vector<4x32xf32> -> vector<4x32xf32>
      %816 = arith.addf %813, %815 : vector<4x32xf32>
      %817 = arith.addf %816, %6 : vector<4x32xf32>
      %cst_280 = arith.constant 0.000000e+00 : f32
      %818 = vector.broadcast %cst_280 : f32 to vector<4x32xf32>
      %819 = arith.cmpf ogt, %817, %818 : vector<4x32xf32>
      %cst_281 = arith.constant 0.000000e+00 : f32
      %820 = vector.broadcast %cst_281 : f32 to vector<4x32xf32>
      %821 = arith.minimumf %817, %820 : vector<4x32xf32>
      %822 = math.exp %821 : vector<4x32xf32>
      %cst_282 = arith.constant 1.000000e+00 : f32
      %823 = vector.broadcast %cst_282 : f32 to vector<4x32xf32>
      %824 = arith.subf %822, %823 : vector<4x32xf32>
      %825 = arith.select %819, %817, %824 : vector<4x32xi1>, vector<4x32xf32>
      %826 = arith.truncf %825 : vector<4x32xf32> to vector<4x32xbf16>
      %cst_283 = arith.constant dense<0.000000e+00> : vector<4x32xf32>
      %827 = tpu.matmul %826, %2, %cst_283 {dimension_numbers = #tpu.dot_dimension_numbers<[1], [0], [0], [1], [0, 0, 1, 1], [], []>} : vector<4x32xbf16>, vector<32x32xbf16>, vector<4x32xf32> -> vector<4x32xf32>
      %828 = arith.addf %827, %9 : vector<4x32xf32>
      %cst_284 = arith.constant 0.000000e+00 : f32
      %829 = vector.broadcast %cst_284 : f32 to vector<4x32xf32>
      %830 = arith.cmpf ogt, %828, %829 : vector<4x32xf32>
      %cst_285 = arith.constant 0.000000e+00 : f32
      %831 = vector.broadcast %cst_285 : f32 to vector<4x32xf32>
      %832 = arith.minimumf %828, %831 : vector<4x32xf32>
      %833 = math.exp %832 : vector<4x32xf32>
      %cst_286 = arith.constant 1.000000e+00 : f32
      %834 = vector.broadcast %cst_286 : f32 to vector<4x32xf32>
      %835 = arith.subf %833, %834 : vector<4x32xf32>
      %836 = arith.select %830, %828, %835 : vector<4x32xi1>, vector<4x32xf32>
      %837 = arith.truncf %836 : vector<4x32xf32> to vector<4x32xbf16>
      %cst_287 = arith.constant dense<0.000000e+00> : vector<4x4xf32>
      %838 = tpu.matmul %837, %3, %cst_287 {dimension_numbers = #tpu.dot_dimension_numbers<[1], [0], [0], [1], [0, 0, 1, 1], [], []>} : vector<4x32xbf16>, vector<32x4xbf16>, vector<4x4xf32> -> vector<4x4xf32>
      %839 = arith.addf %838, %12 : vector<4x4xf32>
      %cst_288 = arith.constant 5.000000e-01 : f32
      %840 = arith.mulf %cst_288, %31 : f32
      %841 = vector.broadcast %840 : f32 to vector<4x4xf32>
      %842 = arith.mulf %841, %811 : vector<4x4xf32>
      %843 = arith.addf %800, %842 : vector<4x4xf32>
      %cst_289 = arith.constant 5.000000e-01 : f32
      %844 = arith.mulf %cst_289, %31 : f32
      %845 = vector.broadcast %844 : f32 to vector<4x4xf32>
      %846 = arith.mulf %845, %839 : vector<4x4xf32>
      %847 = arith.addf %811, %846 : vector<4x4xf32>
      %848 = arith.truncf %843 : vector<4x4xf32> to vector<4x4xbf16>
      %cst_290 = arith.constant dense<0.000000e+00> : vector<4x32xf32>
      %849 = tpu.matmul %848, %0, %cst_290 {dimension_numbers = #tpu.dot_dimension_numbers<[1], [0], [0], [1], [0, 0, 1, 1], [], []>} : vector<4x4xbf16>, vector<4x32xbf16>, vector<4x32xf32> -> vector<4x32xf32>
      %850 = arith.truncf %847 : vector<4x4xf32> to vector<4x4xbf16>
      %cst_291 = arith.constant dense<0.000000e+00> : vector<4x32xf32>
      %851 = tpu.matmul %850, %1, %cst_291 {dimension_numbers = #tpu.dot_dimension_numbers<[1], [0], [0], [1], [0, 0, 1, 1], [], []>} : vector<4x4xbf16>, vector<4x32xbf16>, vector<4x32xf32> -> vector<4x32xf32>
      %852 = arith.addf %849, %851 : vector<4x32xf32>
      %853 = arith.addf %852, %6 : vector<4x32xf32>
      %cst_292 = arith.constant 0.000000e+00 : f32
      %854 = vector.broadcast %cst_292 : f32 to vector<4x32xf32>
      %855 = arith.cmpf ogt, %853, %854 : vector<4x32xf32>
      %cst_293 = arith.constant 0.000000e+00 : f32
      %856 = vector.broadcast %cst_293 : f32 to vector<4x32xf32>
      %857 = arith.minimumf %853, %856 : vector<4x32xf32>
      %858 = math.exp %857 : vector<4x32xf32>
      %cst_294 = arith.constant 1.000000e+00 : f32
      %859 = vector.broadcast %cst_294 : f32 to vector<4x32xf32>
      %860 = arith.subf %858, %859 : vector<4x32xf32>
      %861 = arith.select %855, %853, %860 : vector<4x32xi1>, vector<4x32xf32>
      %862 = arith.truncf %861 : vector<4x32xf32> to vector<4x32xbf16>
      %cst_295 = arith.constant dense<0.000000e+00> : vector<4x32xf32>
      %863 = tpu.matmul %862, %2, %cst_295 {dimension_numbers = #tpu.dot_dimension_numbers<[1], [0], [0], [1], [0, 0, 1, 1], [], []>} : vector<4x32xbf16>, vector<32x32xbf16>, vector<4x32xf32> -> vector<4x32xf32>
      %864 = arith.addf %863, %9 : vector<4x32xf32>
      %cst_296 = arith.constant 0.000000e+00 : f32
      %865 = vector.broadcast %cst_296 : f32 to vector<4x32xf32>
      %866 = arith.cmpf ogt, %864, %865 : vector<4x32xf32>
      %cst_297 = arith.constant 0.000000e+00 : f32
      %867 = vector.broadcast %cst_297 : f32 to vector<4x32xf32>
      %868 = arith.minimumf %864, %867 : vector<4x32xf32>
      %869 = math.exp %868 : vector<4x32xf32>
      %cst_298 = arith.constant 1.000000e+00 : f32
      %870 = vector.broadcast %cst_298 : f32 to vector<4x32xf32>
      %871 = arith.subf %869, %870 : vector<4x32xf32>
      %872 = arith.select %866, %864, %871 : vector<4x32xi1>, vector<4x32xf32>
      %873 = arith.truncf %872 : vector<4x32xf32> to vector<4x32xbf16>
      %cst_299 = arith.constant dense<0.000000e+00> : vector<4x4xf32>
      %874 = tpu.matmul %873, %3, %cst_299 {dimension_numbers = #tpu.dot_dimension_numbers<[1], [0], [0], [1], [0, 0, 1, 1], [], []>} : vector<4x32xbf16>, vector<32x4xbf16>, vector<4x4xf32> -> vector<4x4xf32>
      %875 = arith.addf %874, %12 : vector<4x4xf32>
      %cst_300 = arith.constant 5.000000e-01 : f32
      %876 = arith.mulf %cst_300, %31 : f32
      %877 = vector.broadcast %876 : f32 to vector<4x4xf32>
      %878 = arith.mulf %877, %847 : vector<4x4xf32>
      %879 = arith.addf %800, %878 : vector<4x4xf32>
      %cst_301 = arith.constant 5.000000e-01 : f32
      %880 = arith.mulf %cst_301, %31 : f32
      %881 = vector.broadcast %880 : f32 to vector<4x4xf32>
      %882 = arith.mulf %881, %875 : vector<4x4xf32>
      %883 = arith.addf %811, %882 : vector<4x4xf32>
      %884 = arith.truncf %879 : vector<4x4xf32> to vector<4x4xbf16>
      %cst_302 = arith.constant dense<0.000000e+00> : vector<4x32xf32>
      %885 = tpu.matmul %884, %0, %cst_302 {dimension_numbers = #tpu.dot_dimension_numbers<[1], [0], [0], [1], [0, 0, 1, 1], [], []>} : vector<4x4xbf16>, vector<4x32xbf16>, vector<4x32xf32> -> vector<4x32xf32>
      %886 = arith.truncf %883 : vector<4x4xf32> to vector<4x4xbf16>
      %cst_303 = arith.constant dense<0.000000e+00> : vector<4x32xf32>
      %887 = tpu.matmul %886, %1, %cst_303 {dimension_numbers = #tpu.dot_dimension_numbers<[1], [0], [0], [1], [0, 0, 1, 1], [], []>} : vector<4x4xbf16>, vector<4x32xbf16>, vector<4x32xf32> -> vector<4x32xf32>
      %888 = arith.addf %885, %887 : vector<4x32xf32>
      %889 = arith.addf %888, %6 : vector<4x32xf32>
      %cst_304 = arith.constant 0.000000e+00 : f32
      %890 = vector.broadcast %cst_304 : f32 to vector<4x32xf32>
      %891 = arith.cmpf ogt, %889, %890 : vector<4x32xf32>
      %cst_305 = arith.constant 0.000000e+00 : f32
      %892 = vector.broadcast %cst_305 : f32 to vector<4x32xf32>
      %893 = arith.minimumf %889, %892 : vector<4x32xf32>
      %894 = math.exp %893 : vector<4x32xf32>
      %cst_306 = arith.constant 1.000000e+00 : f32
      %895 = vector.broadcast %cst_306 : f32 to vector<4x32xf32>
      %896 = arith.subf %894, %895 : vector<4x32xf32>
      %897 = arith.select %891, %889, %896 : vector<4x32xi1>, vector<4x32xf32>
      %898 = arith.truncf %897 : vector<4x32xf32> to vector<4x32xbf16>
      %cst_307 = arith.constant dense<0.000000e+00> : vector<4x32xf32>
      %899 = tpu.matmul %898, %2, %cst_307 {dimension_numbers = #tpu.dot_dimension_numbers<[1], [0], [0], [1], [0, 0, 1, 1], [], []>} : vector<4x32xbf16>, vector<32x32xbf16>, vector<4x32xf32> -> vector<4x32xf32>
      %900 = arith.addf %899, %9 : vector<4x32xf32>
      %cst_308 = arith.constant 0.000000e+00 : f32
      %901 = vector.broadcast %cst_308 : f32 to vector<4x32xf32>
      %902 = arith.cmpf ogt, %900, %901 : vector<4x32xf32>
      %cst_309 = arith.constant 0.000000e+00 : f32
      %903 = vector.broadcast %cst_309 : f32 to vector<4x32xf32>
      %904 = arith.minimumf %900, %903 : vector<4x32xf32>
      %905 = math.exp %904 : vector<4x32xf32>
      %cst_310 = arith.constant 1.000000e+00 : f32
      %906 = vector.broadcast %cst_310 : f32 to vector<4x32xf32>
      %907 = arith.subf %905, %906 : vector<4x32xf32>
      %908 = arith.select %902, %900, %907 : vector<4x32xi1>, vector<4x32xf32>
      %909 = arith.truncf %908 : vector<4x32xf32> to vector<4x32xbf16>
      %cst_311 = arith.constant dense<0.000000e+00> : vector<4x4xf32>
      %910 = tpu.matmul %909, %3, %cst_311 {dimension_numbers = #tpu.dot_dimension_numbers<[1], [0], [0], [1], [0, 0, 1, 1], [], []>} : vector<4x32xbf16>, vector<32x4xbf16>, vector<4x4xf32> -> vector<4x4xf32>
      %911 = arith.addf %910, %12 : vector<4x4xf32>
      %912 = vector.broadcast %31 : f32 to vector<4x4xf32>
      %913 = arith.mulf %912, %883 : vector<4x4xf32>
      %914 = arith.addf %800, %913 : vector<4x4xf32>
      %915 = vector.broadcast %31 : f32 to vector<4x4xf32>
      %916 = arith.mulf %915, %911 : vector<4x4xf32>
      %917 = arith.addf %811, %916 : vector<4x4xf32>
      %918 = arith.truncf %914 : vector<4x4xf32> to vector<4x4xbf16>
      %cst_312 = arith.constant dense<0.000000e+00> : vector<4x32xf32>
      %919 = tpu.matmul %918, %0, %cst_312 {dimension_numbers = #tpu.dot_dimension_numbers<[1], [0], [0], [1], [0, 0, 1, 1], [], []>} : vector<4x4xbf16>, vector<4x32xbf16>, vector<4x32xf32> -> vector<4x32xf32>
      %920 = arith.truncf %917 : vector<4x4xf32> to vector<4x4xbf16>
      %cst_313 = arith.constant dense<0.000000e+00> : vector<4x32xf32>
      %921 = tpu.matmul %920, %1, %cst_313 {dimension_numbers = #tpu.dot_dimension_numbers<[1], [0], [0], [1], [0, 0, 1, 1], [], []>} : vector<4x4xbf16>, vector<4x32xbf16>, vector<4x32xf32> -> vector<4x32xf32>
      %922 = arith.addf %919, %921 : vector<4x32xf32>
      %923 = arith.addf %922, %6 : vector<4x32xf32>
      %cst_314 = arith.constant 0.000000e+00 : f32
      %924 = vector.broadcast %cst_314 : f32 to vector<4x32xf32>
      %925 = arith.cmpf ogt, %923, %924 : vector<4x32xf32>
      %cst_315 = arith.constant 0.000000e+00 : f32
      %926 = vector.broadcast %cst_315 : f32 to vector<4x32xf32>
      %927 = arith.minimumf %923, %926 : vector<4x32xf32>
      %928 = math.exp %927 : vector<4x32xf32>
      %cst_316 = arith.constant 1.000000e+00 : f32
      %929 = vector.broadcast %cst_316 : f32 to vector<4x32xf32>
      %930 = arith.subf %928, %929 : vector<4x32xf32>
      %931 = arith.select %925, %923, %930 : vector<4x32xi1>, vector<4x32xf32>
      %932 = arith.truncf %931 : vector<4x32xf32> to vector<4x32xbf16>
      %cst_317 = arith.constant dense<0.000000e+00> : vector<4x32xf32>
      %933 = tpu.matmul %932, %2, %cst_317 {dimension_numbers = #tpu.dot_dimension_numbers<[1], [0], [0], [1], [0, 0, 1, 1], [], []>} : vector<4x32xbf16>, vector<32x32xbf16>, vector<4x32xf32> -> vector<4x32xf32>
      %934 = arith.addf %933, %9 : vector<4x32xf32>
      %cst_318 = arith.constant 0.000000e+00 : f32
      %935 = vector.broadcast %cst_318 : f32 to vector<4x32xf32>
      %936 = arith.cmpf ogt, %934, %935 : vector<4x32xf32>
      %cst_319 = arith.constant 0.000000e+00 : f32
      %937 = vector.broadcast %cst_319 : f32 to vector<4x32xf32>
      %938 = arith.minimumf %934, %937 : vector<4x32xf32>
      %939 = math.exp %938 : vector<4x32xf32>
      %cst_320 = arith.constant 1.000000e+00 : f32
      %940 = vector.broadcast %cst_320 : f32 to vector<4x32xf32>
      %941 = arith.subf %939, %940 : vector<4x32xf32>
      %942 = arith.select %936, %934, %941 : vector<4x32xi1>, vector<4x32xf32>
      %943 = arith.truncf %942 : vector<4x32xf32> to vector<4x32xbf16>
      %cst_321 = arith.constant dense<0.000000e+00> : vector<4x4xf32>
      %944 = tpu.matmul %943, %3, %cst_321 {dimension_numbers = #tpu.dot_dimension_numbers<[1], [0], [0], [1], [0, 0, 1, 1], [], []>} : vector<4x32xbf16>, vector<32x4xbf16>, vector<4x4xf32> -> vector<4x4xf32>
      %945 = arith.addf %944, %12 : vector<4x4xf32>
      %cst_322 = arith.constant 6.000000e+00 : f32
      %946 = arith.divf %31, %cst_322 : f32
      %cst_323 = arith.constant 2.000000e+00 : f32
      %947 = vector.broadcast %cst_323 : f32 to vector<4x4xf32>
      %948 = arith.mulf %947, %847 : vector<4x4xf32>
      %949 = arith.addf %811, %948 : vector<4x4xf32>
      %cst_324 = arith.constant 2.000000e+00 : f32
      %950 = vector.broadcast %cst_324 : f32 to vector<4x4xf32>
      %951 = arith.mulf %950, %883 : vector<4x4xf32>
      %952 = arith.addf %949, %951 : vector<4x4xf32>
      %953 = arith.addf %952, %917 : vector<4x4xf32>
      %954 = vector.broadcast %946 : f32 to vector<4x4xf32>
      %955 = arith.mulf %954, %953 : vector<4x4xf32>
      %956 = arith.addf %800, %955 : vector<4x4xf32>
      %cst_325 = arith.constant 6.000000e+00 : f32
      %957 = arith.divf %31, %cst_325 : f32
      %cst_326 = arith.constant 2.000000e+00 : f32
      %958 = vector.broadcast %cst_326 : f32 to vector<4x4xf32>
      %959 = arith.mulf %958, %875 : vector<4x4xf32>
      %960 = arith.addf %839, %959 : vector<4x4xf32>
      %cst_327 = arith.constant 2.000000e+00 : f32
      %961 = vector.broadcast %cst_327 : f32 to vector<4x4xf32>
      %962 = arith.mulf %961, %911 : vector<4x4xf32>
      %963 = arith.addf %960, %962 : vector<4x4xf32>
      %964 = arith.addf %963, %945 : vector<4x4xf32>
      %965 = vector.broadcast %957 : f32 to vector<4x4xf32>
      %966 = arith.mulf %965, %964 : vector<4x4xf32>
      %967 = arith.addf %811, %966 : vector<4x4xf32>
      %c6_i32 = arith.constant 6 : i32
      %968 = arith.truncf %956 : vector<4x4xf32> to vector<4x4xbf16>
      %cst_328 = arith.constant dense<0.000000e+00> : vector<4x32xf32>
      %969 = tpu.matmul %968, %0, %cst_328 {dimension_numbers = #tpu.dot_dimension_numbers<[1], [0], [0], [1], [0, 0, 1, 1], [], []>} : vector<4x4xbf16>, vector<4x32xbf16>, vector<4x32xf32> -> vector<4x32xf32>
      %970 = arith.truncf %967 : vector<4x4xf32> to vector<4x4xbf16>
      %cst_329 = arith.constant dense<0.000000e+00> : vector<4x32xf32>
      %971 = tpu.matmul %970, %1, %cst_329 {dimension_numbers = #tpu.dot_dimension_numbers<[1], [0], [0], [1], [0, 0, 1, 1], [], []>} : vector<4x4xbf16>, vector<4x32xbf16>, vector<4x32xf32> -> vector<4x32xf32>
      %972 = arith.addf %969, %971 : vector<4x32xf32>
      %973 = arith.addf %972, %6 : vector<4x32xf32>
      %cst_330 = arith.constant 0.000000e+00 : f32
      %974 = vector.broadcast %cst_330 : f32 to vector<4x32xf32>
      %975 = arith.cmpf ogt, %973, %974 : vector<4x32xf32>
      %cst_331 = arith.constant 0.000000e+00 : f32
      %976 = vector.broadcast %cst_331 : f32 to vector<4x32xf32>
      %977 = arith.minimumf %973, %976 : vector<4x32xf32>
      %978 = math.exp %977 : vector<4x32xf32>
      %cst_332 = arith.constant 1.000000e+00 : f32
      %979 = vector.broadcast %cst_332 : f32 to vector<4x32xf32>
      %980 = arith.subf %978, %979 : vector<4x32xf32>
      %981 = arith.select %975, %973, %980 : vector<4x32xi1>, vector<4x32xf32>
      %982 = arith.truncf %981 : vector<4x32xf32> to vector<4x32xbf16>
      %cst_333 = arith.constant dense<0.000000e+00> : vector<4x32xf32>
      %983 = tpu.matmul %982, %2, %cst_333 {dimension_numbers = #tpu.dot_dimension_numbers<[1], [0], [0], [1], [0, 0, 1, 1], [], []>} : vector<4x32xbf16>, vector<32x32xbf16>, vector<4x32xf32> -> vector<4x32xf32>
      %984 = arith.addf %983, %9 : vector<4x32xf32>
      %cst_334 = arith.constant 0.000000e+00 : f32
      %985 = vector.broadcast %cst_334 : f32 to vector<4x32xf32>
      %986 = arith.cmpf ogt, %984, %985 : vector<4x32xf32>
      %cst_335 = arith.constant 0.000000e+00 : f32
      %987 = vector.broadcast %cst_335 : f32 to vector<4x32xf32>
      %988 = arith.minimumf %984, %987 : vector<4x32xf32>
      %989 = math.exp %988 : vector<4x32xf32>
      %cst_336 = arith.constant 1.000000e+00 : f32
      %990 = vector.broadcast %cst_336 : f32 to vector<4x32xf32>
      %991 = arith.subf %989, %990 : vector<4x32xf32>
      %992 = arith.select %986, %984, %991 : vector<4x32xi1>, vector<4x32xf32>
      %993 = arith.truncf %992 : vector<4x32xf32> to vector<4x32xbf16>
      %cst_337 = arith.constant dense<0.000000e+00> : vector<4x4xf32>
      %994 = tpu.matmul %993, %3, %cst_337 {dimension_numbers = #tpu.dot_dimension_numbers<[1], [0], [0], [1], [0, 0, 1, 1], [], []>} : vector<4x32xbf16>, vector<32x4xbf16>, vector<4x4xf32> -> vector<4x4xf32>
      %995 = arith.addf %994, %12 : vector<4x4xf32>
      %cst_338 = arith.constant 5.000000e-01 : f32
      %996 = arith.mulf %cst_338, %31 : f32
      %997 = vector.broadcast %996 : f32 to vector<4x4xf32>
      %998 = arith.mulf %997, %967 : vector<4x4xf32>
      %999 = arith.addf %956, %998 : vector<4x4xf32>
      %cst_339 = arith.constant 5.000000e-01 : f32
      %1000 = arith.mulf %cst_339, %31 : f32
      %1001 = vector.broadcast %1000 : f32 to vector<4x4xf32>
      %1002 = arith.mulf %1001, %995 : vector<4x4xf32>
      %1003 = arith.addf %967, %1002 : vector<4x4xf32>
      %1004 = arith.truncf %999 : vector<4x4xf32> to vector<4x4xbf16>
      %cst_340 = arith.constant dense<0.000000e+00> : vector<4x32xf32>
      %1005 = tpu.matmul %1004, %0, %cst_340 {dimension_numbers = #tpu.dot_dimension_numbers<[1], [0], [0], [1], [0, 0, 1, 1], [], []>} : vector<4x4xbf16>, vector<4x32xbf16>, vector<4x32xf32> -> vector<4x32xf32>
      %1006 = arith.truncf %1003 : vector<4x4xf32> to vector<4x4xbf16>
      %cst_341 = arith.constant dense<0.000000e+00> : vector<4x32xf32>
      %1007 = tpu.matmul %1006, %1, %cst_341 {dimension_numbers = #tpu.dot_dimension_numbers<[1], [0], [0], [1], [0, 0, 1, 1], [], []>} : vector<4x4xbf16>, vector<4x32xbf16>, vector<4x32xf32> -> vector<4x32xf32>
      %1008 = arith.addf %1005, %1007 : vector<4x32xf32>
      %1009 = arith.addf %1008, %6 : vector<4x32xf32>
      %cst_342 = arith.constant 0.000000e+00 : f32
      %1010 = vector.broadcast %cst_342 : f32 to vector<4x32xf32>
      %1011 = arith.cmpf ogt, %1009, %1010 : vector<4x32xf32>
      %cst_343 = arith.constant 0.000000e+00 : f32
      %1012 = vector.broadcast %cst_343 : f32 to vector<4x32xf32>
      %1013 = arith.minimumf %1009, %1012 : vector<4x32xf32>
      %1014 = math.exp %1013 : vector<4x32xf32>
      %cst_344 = arith.constant 1.000000e+00 : f32
      %1015 = vector.broadcast %cst_344 : f32 to vector<4x32xf32>
      %1016 = arith.subf %1014, %1015 : vector<4x32xf32>
      %1017 = arith.select %1011, %1009, %1016 : vector<4x32xi1>, vector<4x32xf32>
      %1018 = arith.truncf %1017 : vector<4x32xf32> to vector<4x32xbf16>
      %cst_345 = arith.constant dense<0.000000e+00> : vector<4x32xf32>
      %1019 = tpu.matmul %1018, %2, %cst_345 {dimension_numbers = #tpu.dot_dimension_numbers<[1], [0], [0], [1], [0, 0, 1, 1], [], []>} : vector<4x32xbf16>, vector<32x32xbf16>, vector<4x32xf32> -> vector<4x32xf32>
      %1020 = arith.addf %1019, %9 : vector<4x32xf32>
      %cst_346 = arith.constant 0.000000e+00 : f32
      %1021 = vector.broadcast %cst_346 : f32 to vector<4x32xf32>
      %1022 = arith.cmpf ogt, %1020, %1021 : vector<4x32xf32>
      %cst_347 = arith.constant 0.000000e+00 : f32
      %1023 = vector.broadcast %cst_347 : f32 to vector<4x32xf32>
      %1024 = arith.minimumf %1020, %1023 : vector<4x32xf32>
      %1025 = math.exp %1024 : vector<4x32xf32>
      %cst_348 = arith.constant 1.000000e+00 : f32
      %1026 = vector.broadcast %cst_348 : f32 to vector<4x32xf32>
      %1027 = arith.subf %1025, %1026 : vector<4x32xf32>
      %1028 = arith.select %1022, %1020, %1027 : vector<4x32xi1>, vector<4x32xf32>
      %1029 = arith.truncf %1028 : vector<4x32xf32> to vector<4x32xbf16>
      %cst_349 = arith.constant dense<0.000000e+00> : vector<4x4xf32>
      %1030 = tpu.matmul %1029, %3, %cst_349 {dimension_numbers = #tpu.dot_dimension_numbers<[1], [0], [0], [1], [0, 0, 1, 1], [], []>} : vector<4x32xbf16>, vector<32x4xbf16>, vector<4x4xf32> -> vector<4x4xf32>
      %1031 = arith.addf %1030, %12 : vector<4x4xf32>
      %cst_350 = arith.constant 5.000000e-01 : f32
      %1032 = arith.mulf %cst_350, %31 : f32
      %1033 = vector.broadcast %1032 : f32 to vector<4x4xf32>
      %1034 = arith.mulf %1033, %1003 : vector<4x4xf32>
      %1035 = arith.addf %956, %1034 : vector<4x4xf32>
      %cst_351 = arith.constant 5.000000e-01 : f32
      %1036 = arith.mulf %cst_351, %31 : f32
      %1037 = vector.broadcast %1036 : f32 to vector<4x4xf32>
      %1038 = arith.mulf %1037, %1031 : vector<4x4xf32>
      %1039 = arith.addf %967, %1038 : vector<4x4xf32>
      %1040 = arith.truncf %1035 : vector<4x4xf32> to vector<4x4xbf16>
      %cst_352 = arith.constant dense<0.000000e+00> : vector<4x32xf32>
      %1041 = tpu.matmul %1040, %0, %cst_352 {dimension_numbers = #tpu.dot_dimension_numbers<[1], [0], [0], [1], [0, 0, 1, 1], [], []>} : vector<4x4xbf16>, vector<4x32xbf16>, vector<4x32xf32> -> vector<4x32xf32>
      %1042 = arith.truncf %1039 : vector<4x4xf32> to vector<4x4xbf16>
      %cst_353 = arith.constant dense<0.000000e+00> : vector<4x32xf32>
      %1043 = tpu.matmul %1042, %1, %cst_353 {dimension_numbers = #tpu.dot_dimension_numbers<[1], [0], [0], [1], [0, 0, 1, 1], [], []>} : vector<4x4xbf16>, vector<4x32xbf16>, vector<4x32xf32> -> vector<4x32xf32>
      %1044 = arith.addf %1041, %1043 : vector<4x32xf32>
      %1045 = arith.addf %1044, %6 : vector<4x32xf32>
      %cst_354 = arith.constant 0.000000e+00 : f32
      %1046 = vector.broadcast %cst_354 : f32 to vector<4x32xf32>
      %1047 = arith.cmpf ogt, %1045, %1046 : vector<4x32xf32>
      %cst_355 = arith.constant 0.000000e+00 : f32
      %1048 = vector.broadcast %cst_355 : f32 to vector<4x32xf32>
      %1049 = arith.minimumf %1045, %1048 : vector<4x32xf32>
      %1050 = math.exp %1049 : vector<4x32xf32>
      %cst_356 = arith.constant 1.000000e+00 : f32
      %1051 = vector.broadcast %cst_356 : f32 to vector<4x32xf32>
      %1052 = arith.subf %1050, %1051 : vector<4x32xf32>
      %1053 = arith.select %1047, %1045, %1052 : vector<4x32xi1>, vector<4x32xf32>
      %1054 = arith.truncf %1053 : vector<4x32xf32> to vector<4x32xbf16>
      %cst_357 = arith.constant dense<0.000000e+00> : vector<4x32xf32>
      %1055 = tpu.matmul %1054, %2, %cst_357 {dimension_numbers = #tpu.dot_dimension_numbers<[1], [0], [0], [1], [0, 0, 1, 1], [], []>} : vector<4x32xbf16>, vector<32x32xbf16>, vector<4x32xf32> -> vector<4x32xf32>
      %1056 = arith.addf %1055, %9 : vector<4x32xf32>
      %cst_358 = arith.constant 0.000000e+00 : f32
      %1057 = vector.broadcast %cst_358 : f32 to vector<4x32xf32>
      %1058 = arith.cmpf ogt, %1056, %1057 : vector<4x32xf32>
      %cst_359 = arith.constant 0.000000e+00 : f32
      %1059 = vector.broadcast %cst_359 : f32 to vector<4x32xf32>
      %1060 = arith.minimumf %1056, %1059 : vector<4x32xf32>
      %1061 = math.exp %1060 : vector<4x32xf32>
      %cst_360 = arith.constant 1.000000e+00 : f32
      %1062 = vector.broadcast %cst_360 : f32 to vector<4x32xf32>
      %1063 = arith.subf %1061, %1062 : vector<4x32xf32>
      %1064 = arith.select %1058, %1056, %1063 : vector<4x32xi1>, vector<4x32xf32>
      %1065 = arith.truncf %1064 : vector<4x32xf32> to vector<4x32xbf16>
      %cst_361 = arith.constant dense<0.000000e+00> : vector<4x4xf32>
      %1066 = tpu.matmul %1065, %3, %cst_361 {dimension_numbers = #tpu.dot_dimension_numbers<[1], [0], [0], [1], [0, 0, 1, 1], [], []>} : vector<4x32xbf16>, vector<32x4xbf16>, vector<4x4xf32> -> vector<4x4xf32>
      %1067 = arith.addf %1066, %12 : vector<4x4xf32>
      %1068 = vector.broadcast %31 : f32 to vector<4x4xf32>
      %1069 = arith.mulf %1068, %1039 : vector<4x4xf32>
      %1070 = arith.addf %956, %1069 : vector<4x4xf32>
      %1071 = vector.broadcast %31 : f32 to vector<4x4xf32>
      %1072 = arith.mulf %1071, %1067 : vector<4x4xf32>
      %1073 = arith.addf %967, %1072 : vector<4x4xf32>
      %1074 = arith.truncf %1070 : vector<4x4xf32> to vector<4x4xbf16>
      %cst_362 = arith.constant dense<0.000000e+00> : vector<4x32xf32>
      %1075 = tpu.matmul %1074, %0, %cst_362 {dimension_numbers = #tpu.dot_dimension_numbers<[1], [0], [0], [1], [0, 0, 1, 1], [], []>} : vector<4x4xbf16>, vector<4x32xbf16>, vector<4x32xf32> -> vector<4x32xf32>
      %1076 = arith.truncf %1073 : vector<4x4xf32> to vector<4x4xbf16>
      %cst_363 = arith.constant dense<0.000000e+00> : vector<4x32xf32>
      %1077 = tpu.matmul %1076, %1, %cst_363 {dimension_numbers = #tpu.dot_dimension_numbers<[1], [0], [0], [1], [0, 0, 1, 1], [], []>} : vector<4x4xbf16>, vector<4x32xbf16>, vector<4x32xf32> -> vector<4x32xf32>
      %1078 = arith.addf %1075, %1077 : vector<4x32xf32>
      %1079 = arith.addf %1078, %6 : vector<4x32xf32>
      %cst_364 = arith.constant 0.000000e+00 : f32
      %1080 = vector.broadcast %cst_364 : f32 to vector<4x32xf32>
      %1081 = arith.cmpf ogt, %1079, %1080 : vector<4x32xf32>
      %cst_365 = arith.constant 0.000000e+00 : f32
      %1082 = vector.broadcast %cst_365 : f32 to vector<4x32xf32>
      %1083 = arith.minimumf %1079, %1082 : vector<4x32xf32>
      %1084 = math.exp %1083 : vector<4x32xf32>
      %cst_366 = arith.constant 1.000000e+00 : f32
      %1085 = vector.broadcast %cst_366 : f32 to vector<4x32xf32>
      %1086 = arith.subf %1084, %1085 : vector<4x32xf32>
      %1087 = arith.select %1081, %1079, %1086 : vector<4x32xi1>, vector<4x32xf32>
      %1088 = arith.truncf %1087 : vector<4x32xf32> to vector<4x32xbf16>
      %cst_367 = arith.constant dense<0.000000e+00> : vector<4x32xf32>
      %1089 = tpu.matmul %1088, %2, %cst_367 {dimension_numbers = #tpu.dot_dimension_numbers<[1], [0], [0], [1], [0, 0, 1, 1], [], []>} : vector<4x32xbf16>, vector<32x32xbf16>, vector<4x32xf32> -> vector<4x32xf32>
      %1090 = arith.addf %1089, %9 : vector<4x32xf32>
      %cst_368 = arith.constant 0.000000e+00 : f32
      %1091 = vector.broadcast %cst_368 : f32 to vector<4x32xf32>
      %1092 = arith.cmpf ogt, %1090, %1091 : vector<4x32xf32>
      %cst_369 = arith.constant 0.000000e+00 : f32
      %1093 = vector.broadcast %cst_369 : f32 to vector<4x32xf32>
      %1094 = arith.minimumf %1090, %1093 : vector<4x32xf32>
      %1095 = math.exp %1094 : vector<4x32xf32>
      %cst_370 = arith.constant 1.000000e+00 : f32
      %1096 = vector.broadcast %cst_370 : f32 to vector<4x32xf32>
      %1097 = arith.subf %1095, %1096 : vector<4x32xf32>
      %1098 = arith.select %1092, %1090, %1097 : vector<4x32xi1>, vector<4x32xf32>
      %1099 = arith.truncf %1098 : vector<4x32xf32> to vector<4x32xbf16>
      %cst_371 = arith.constant dense<0.000000e+00> : vector<4x4xf32>
      %1100 = tpu.matmul %1099, %3, %cst_371 {dimension_numbers = #tpu.dot_dimension_numbers<[1], [0], [0], [1], [0, 0, 1, 1], [], []>} : vector<4x32xbf16>, vector<32x4xbf16>, vector<4x4xf32> -> vector<4x4xf32>
      %1101 = arith.addf %1100, %12 : vector<4x4xf32>
      %cst_372 = arith.constant 6.000000e+00 : f32
      %1102 = arith.divf %31, %cst_372 : f32
      %cst_373 = arith.constant 2.000000e+00 : f32
      %1103 = vector.broadcast %cst_373 : f32 to vector<4x4xf32>
      %1104 = arith.mulf %1103, %1003 : vector<4x4xf32>
      %1105 = arith.addf %967, %1104 : vector<4x4xf32>
      %cst_374 = arith.constant 2.000000e+00 : f32
      %1106 = vector.broadcast %cst_374 : f32 to vector<4x4xf32>
      %1107 = arith.mulf %1106, %1039 : vector<4x4xf32>
      %1108 = arith.addf %1105, %1107 : vector<4x4xf32>
      %1109 = arith.addf %1108, %1073 : vector<4x4xf32>
      %1110 = vector.broadcast %1102 : f32 to vector<4x4xf32>
      %1111 = arith.mulf %1110, %1109 : vector<4x4xf32>
      %1112 = arith.addf %956, %1111 : vector<4x4xf32>
      %cst_375 = arith.constant 6.000000e+00 : f32
      %1113 = arith.divf %31, %cst_375 : f32
      %cst_376 = arith.constant 2.000000e+00 : f32
      %1114 = vector.broadcast %cst_376 : f32 to vector<4x4xf32>
      %1115 = arith.mulf %1114, %1031 : vector<4x4xf32>
      %1116 = arith.addf %995, %1115 : vector<4x4xf32>
      %cst_377 = arith.constant 2.000000e+00 : f32
      %1117 = vector.broadcast %cst_377 : f32 to vector<4x4xf32>
      %1118 = arith.mulf %1117, %1067 : vector<4x4xf32>
      %1119 = arith.addf %1116, %1118 : vector<4x4xf32>
      %1120 = arith.addf %1119, %1101 : vector<4x4xf32>
      %1121 = vector.broadcast %1113 : f32 to vector<4x4xf32>
      %1122 = arith.mulf %1121, %1120 : vector<4x4xf32>
      %1123 = arith.addf %967, %1122 : vector<4x4xf32>
      %c7_i32_378 = arith.constant 7 : i32
      %1124 = arith.truncf %1112 : vector<4x4xf32> to vector<4x4xbf16>
      %cst_379 = arith.constant dense<0.000000e+00> : vector<4x32xf32>
      %1125 = tpu.matmul %1124, %0, %cst_379 {dimension_numbers = #tpu.dot_dimension_numbers<[1], [0], [0], [1], [0, 0, 1, 1], [], []>} : vector<4x4xbf16>, vector<4x32xbf16>, vector<4x32xf32> -> vector<4x32xf32>
      %1126 = arith.truncf %1123 : vector<4x4xf32> to vector<4x4xbf16>
      %cst_380 = arith.constant dense<0.000000e+00> : vector<4x32xf32>
      %1127 = tpu.matmul %1126, %1, %cst_380 {dimension_numbers = #tpu.dot_dimension_numbers<[1], [0], [0], [1], [0, 0, 1, 1], [], []>} : vector<4x4xbf16>, vector<4x32xbf16>, vector<4x32xf32> -> vector<4x32xf32>
      %1128 = arith.addf %1125, %1127 : vector<4x32xf32>
      %1129 = arith.addf %1128, %6 : vector<4x32xf32>
      %cst_381 = arith.constant 0.000000e+00 : f32
      %1130 = vector.broadcast %cst_381 : f32 to vector<4x32xf32>
      %1131 = arith.cmpf ogt, %1129, %1130 : vector<4x32xf32>
      %cst_382 = arith.constant 0.000000e+00 : f32
      %1132 = vector.broadcast %cst_382 : f32 to vector<4x32xf32>
      %1133 = arith.minimumf %1129, %1132 : vector<4x32xf32>
      %1134 = math.exp %1133 : vector<4x32xf32>
      %cst_383 = arith.constant 1.000000e+00 : f32
      %1135 = vector.broadcast %cst_383 : f32 to vector<4x32xf32>
      %1136 = arith.subf %1134, %1135 : vector<4x32xf32>
      %1137 = arith.select %1131, %1129, %1136 : vector<4x32xi1>, vector<4x32xf32>
      %1138 = arith.truncf %1137 : vector<4x32xf32> to vector<4x32xbf16>
      %cst_384 = arith.constant dense<0.000000e+00> : vector<4x32xf32>
      %1139 = tpu.matmul %1138, %2, %cst_384 {dimension_numbers = #tpu.dot_dimension_numbers<[1], [0], [0], [1], [0, 0, 1, 1], [], []>} : vector<4x32xbf16>, vector<32x32xbf16>, vector<4x32xf32> -> vector<4x32xf32>
      %1140 = arith.addf %1139, %9 : vector<4x32xf32>
      %cst_385 = arith.constant 0.000000e+00 : f32
      %1141 = vector.broadcast %cst_385 : f32 to vector<4x32xf32>
      %1142 = arith.cmpf ogt, %1140, %1141 : vector<4x32xf32>
      %cst_386 = arith.constant 0.000000e+00 : f32
      %1143 = vector.broadcast %cst_386 : f32 to vector<4x32xf32>
      %1144 = arith.minimumf %1140, %1143 : vector<4x32xf32>
      %1145 = math.exp %1144 : vector<4x32xf32>
      %cst_387 = arith.constant 1.000000e+00 : f32
      %1146 = vector.broadcast %cst_387 : f32 to vector<4x32xf32>
      %1147 = arith.subf %1145, %1146 : vector<4x32xf32>
      %1148 = arith.select %1142, %1140, %1147 : vector<4x32xi1>, vector<4x32xf32>
      %1149 = arith.truncf %1148 : vector<4x32xf32> to vector<4x32xbf16>
      %cst_388 = arith.constant dense<0.000000e+00> : vector<4x4xf32>
      %1150 = tpu.matmul %1149, %3, %cst_388 {dimension_numbers = #tpu.dot_dimension_numbers<[1], [0], [0], [1], [0, 0, 1, 1], [], []>} : vector<4x32xbf16>, vector<32x4xbf16>, vector<4x4xf32> -> vector<4x4xf32>
      %1151 = arith.addf %1150, %12 : vector<4x4xf32>
      %cst_389 = arith.constant 5.000000e-01 : f32
      %1152 = arith.mulf %cst_389, %31 : f32
      %1153 = vector.broadcast %1152 : f32 to vector<4x4xf32>
      %1154 = arith.mulf %1153, %1123 : vector<4x4xf32>
      %1155 = arith.addf %1112, %1154 : vector<4x4xf32>
      %cst_390 = arith.constant 5.000000e-01 : f32
      %1156 = arith.mulf %cst_390, %31 : f32
      %1157 = vector.broadcast %1156 : f32 to vector<4x4xf32>
      %1158 = arith.mulf %1157, %1151 : vector<4x4xf32>
      %1159 = arith.addf %1123, %1158 : vector<4x4xf32>
      %1160 = arith.truncf %1155 : vector<4x4xf32> to vector<4x4xbf16>
      %cst_391 = arith.constant dense<0.000000e+00> : vector<4x32xf32>
      %1161 = tpu.matmul %1160, %0, %cst_391 {dimension_numbers = #tpu.dot_dimension_numbers<[1], [0], [0], [1], [0, 0, 1, 1], [], []>} : vector<4x4xbf16>, vector<4x32xbf16>, vector<4x32xf32> -> vector<4x32xf32>
      %1162 = arith.truncf %1159 : vector<4x4xf32> to vector<4x4xbf16>
      %cst_392 = arith.constant dense<0.000000e+00> : vector<4x32xf32>
      %1163 = tpu.matmul %1162, %1, %cst_392 {dimension_numbers = #tpu.dot_dimension_numbers<[1], [0], [0], [1], [0, 0, 1, 1], [], []>} : vector<4x4xbf16>, vector<4x32xbf16>, vector<4x32xf32> -> vector<4x32xf32>
      %1164 = arith.addf %1161, %1163 : vector<4x32xf32>
      %1165 = arith.addf %1164, %6 : vector<4x32xf32>
      %cst_393 = arith.constant 0.000000e+00 : f32
      %1166 = vector.broadcast %cst_393 : f32 to vector<4x32xf32>
      %1167 = arith.cmpf ogt, %1165, %1166 : vector<4x32xf32>
      %cst_394 = arith.constant 0.000000e+00 : f32
      %1168 = vector.broadcast %cst_394 : f32 to vector<4x32xf32>
      %1169 = arith.minimumf %1165, %1168 : vector<4x32xf32>
      %1170 = math.exp %1169 : vector<4x32xf32>
      %cst_395 = arith.constant 1.000000e+00 : f32
      %1171 = vector.broadcast %cst_395 : f32 to vector<4x32xf32>
      %1172 = arith.subf %1170, %1171 : vector<4x32xf32>
      %1173 = arith.select %1167, %1165, %1172 : vector<4x32xi1>, vector<4x32xf32>
      %1174 = arith.truncf %1173 : vector<4x32xf32> to vector<4x32xbf16>
      %cst_396 = arith.constant dense<0.000000e+00> : vector<4x32xf32>
      %1175 = tpu.matmul %1174, %2, %cst_396 {dimension_numbers = #tpu.dot_dimension_numbers<[1], [0], [0], [1], [0, 0, 1, 1], [], []>} : vector<4x32xbf16>, vector<32x32xbf16>, vector<4x32xf32> -> vector<4x32xf32>
      %1176 = arith.addf %1175, %9 : vector<4x32xf32>
      %cst_397 = arith.constant 0.000000e+00 : f32
      %1177 = vector.broadcast %cst_397 : f32 to vector<4x32xf32>
      %1178 = arith.cmpf ogt, %1176, %1177 : vector<4x32xf32>
      %cst_398 = arith.constant 0.000000e+00 : f32
      %1179 = vector.broadcast %cst_398 : f32 to vector<4x32xf32>
      %1180 = arith.minimumf %1176, %1179 : vector<4x32xf32>
      %1181 = math.exp %1180 : vector<4x32xf32>
      %cst_399 = arith.constant 1.000000e+00 : f32
      %1182 = vector.broadcast %cst_399 : f32 to vector<4x32xf32>
      %1183 = arith.subf %1181, %1182 : vector<4x32xf32>
      %1184 = arith.select %1178, %1176, %1183 : vector<4x32xi1>, vector<4x32xf32>
      %1185 = arith.truncf %1184 : vector<4x32xf32> to vector<4x32xbf16>
      %cst_400 = arith.constant dense<0.000000e+00> : vector<4x4xf32>
      %1186 = tpu.matmul %1185, %3, %cst_400 {dimension_numbers = #tpu.dot_dimension_numbers<[1], [0], [0], [1], [0, 0, 1, 1], [], []>} : vector<4x32xbf16>, vector<32x4xbf16>, vector<4x4xf32> -> vector<4x4xf32>
      %1187 = arith.addf %1186, %12 : vector<4x4xf32>
      %cst_401 = arith.constant 5.000000e-01 : f32
      %1188 = arith.mulf %cst_401, %31 : f32
      %1189 = vector.broadcast %1188 : f32 to vector<4x4xf32>
      %1190 = arith.mulf %1189, %1159 : vector<4x4xf32>
      %1191 = arith.addf %1112, %1190 : vector<4x4xf32>
      %cst_402 = arith.constant 5.000000e-01 : f32
      %1192 = arith.mulf %cst_402, %31 : f32
      %1193 = vector.broadcast %1192 : f32 to vector<4x4xf32>
      %1194 = arith.mulf %1193, %1187 : vector<4x4xf32>
      %1195 = arith.addf %1123, %1194 : vector<4x4xf32>
      %1196 = arith.truncf %1191 : vector<4x4xf32> to vector<4x4xbf16>
      %cst_403 = arith.constant dense<0.000000e+00> : vector<4x32xf32>
      %1197 = tpu.matmul %1196, %0, %cst_403 {dimension_numbers = #tpu.dot_dimension_numbers<[1], [0], [0], [1], [0, 0, 1, 1], [], []>} : vector<4x4xbf16>, vector<4x32xbf16>, vector<4x32xf32> -> vector<4x32xf32>
      %1198 = arith.truncf %1195 : vector<4x4xf32> to vector<4x4xbf16>
      %cst_404 = arith.constant dense<0.000000e+00> : vector<4x32xf32>
      %1199 = tpu.matmul %1198, %1, %cst_404 {dimension_numbers = #tpu.dot_dimension_numbers<[1], [0], [0], [1], [0, 0, 1, 1], [], []>} : vector<4x4xbf16>, vector<4x32xbf16>, vector<4x32xf32> -> vector<4x32xf32>
      %1200 = arith.addf %1197, %1199 : vector<4x32xf32>
      %1201 = arith.addf %1200, %6 : vector<4x32xf32>
      %cst_405 = arith.constant 0.000000e+00 : f32
      %1202 = vector.broadcast %cst_405 : f32 to vector<4x32xf32>
      %1203 = arith.cmpf ogt, %1201, %1202 : vector<4x32xf32>
      %cst_406 = arith.constant 0.000000e+00 : f32
      %1204 = vector.broadcast %cst_406 : f32 to vector<4x32xf32>
      %1205 = arith.minimumf %1201, %1204 : vector<4x32xf32>
      %1206 = math.exp %1205 : vector<4x32xf32>
      %cst_407 = arith.constant 1.000000e+00 : f32
      %1207 = vector.broadcast %cst_407 : f32 to vector<4x32xf32>
      %1208 = arith.subf %1206, %1207 : vector<4x32xf32>
      %1209 = arith.select %1203, %1201, %1208 : vector<4x32xi1>, vector<4x32xf32>
      %1210 = arith.truncf %1209 : vector<4x32xf32> to vector<4x32xbf16>
      %cst_408 = arith.constant dense<0.000000e+00> : vector<4x32xf32>
      %1211 = tpu.matmul %1210, %2, %cst_408 {dimension_numbers = #tpu.dot_dimension_numbers<[1], [0], [0], [1], [0, 0, 1, 1], [], []>} : vector<4x32xbf16>, vector<32x32xbf16>, vector<4x32xf32> -> vector<4x32xf32>
      %1212 = arith.addf %1211, %9 : vector<4x32xf32>
      %cst_409 = arith.constant 0.000000e+00 : f32
      %1213 = vector.broadcast %cst_409 : f32 to vector<4x32xf32>
      %1214 = arith.cmpf ogt, %1212, %1213 : vector<4x32xf32>
      %cst_410 = arith.constant 0.000000e+00 : f32
      %1215 = vector.broadcast %cst_410 : f32 to vector<4x32xf32>
      %1216 = arith.minimumf %1212, %1215 : vector<4x32xf32>
      %1217 = math.exp %1216 : vector<4x32xf32>
      %cst_411 = arith.constant 1.000000e+00 : f32
      %1218 = vector.broadcast %cst_411 : f32 to vector<4x32xf32>
      %1219 = arith.subf %1217, %1218 : vector<4x32xf32>
      %1220 = arith.select %1214, %1212, %1219 : vector<4x32xi1>, vector<4x32xf32>
      %1221 = arith.truncf %1220 : vector<4x32xf32> to vector<4x32xbf16>
      %cst_412 = arith.constant dense<0.000000e+00> : vector<4x4xf32>
      %1222 = tpu.matmul %1221, %3, %cst_412 {dimension_numbers = #tpu.dot_dimension_numbers<[1], [0], [0], [1], [0, 0, 1, 1], [], []>} : vector<4x32xbf16>, vector<32x4xbf16>, vector<4x4xf32> -> vector<4x4xf32>
      %1223 = arith.addf %1222, %12 : vector<4x4xf32>
      %1224 = vector.broadcast %31 : f32 to vector<4x4xf32>
      %1225 = arith.mulf %1224, %1195 : vector<4x4xf32>
      %1226 = arith.addf %1112, %1225 : vector<4x4xf32>
      %1227 = vector.broadcast %31 : f32 to vector<4x4xf32>
      %1228 = arith.mulf %1227, %1223 : vector<4x4xf32>
      %1229 = arith.addf %1123, %1228 : vector<4x4xf32>
      %1230 = arith.truncf %1226 : vector<4x4xf32> to vector<4x4xbf16>
      %cst_413 = arith.constant dense<0.000000e+00> : vector<4x32xf32>
      %1231 = tpu.matmul %1230, %0, %cst_413 {dimension_numbers = #tpu.dot_dimension_numbers<[1], [0], [0], [1], [0, 0, 1, 1], [], []>} : vector<4x4xbf16>, vector<4x32xbf16>, vector<4x32xf32> -> vector<4x32xf32>
      %1232 = arith.truncf %1229 : vector<4x4xf32> to vector<4x4xbf16>
      %cst_414 = arith.constant dense<0.000000e+00> : vector<4x32xf32>
      %1233 = tpu.matmul %1232, %1, %cst_414 {dimension_numbers = #tpu.dot_dimension_numbers<[1], [0], [0], [1], [0, 0, 1, 1], [], []>} : vector<4x4xbf16>, vector<4x32xbf16>, vector<4x32xf32> -> vector<4x32xf32>
      %1234 = arith.addf %1231, %1233 : vector<4x32xf32>
      %1235 = arith.addf %1234, %6 : vector<4x32xf32>
      %cst_415 = arith.constant 0.000000e+00 : f32
      %1236 = vector.broadcast %cst_415 : f32 to vector<4x32xf32>
      %1237 = arith.cmpf ogt, %1235, %1236 : vector<4x32xf32>
      %cst_416 = arith.constant 0.000000e+00 : f32
      %1238 = vector.broadcast %cst_416 : f32 to vector<4x32xf32>
      %1239 = arith.minimumf %1235, %1238 : vector<4x32xf32>
      %1240 = math.exp %1239 : vector<4x32xf32>
      %cst_417 = arith.constant 1.000000e+00 : f32
      %1241 = vector.broadcast %cst_417 : f32 to vector<4x32xf32>
      %1242 = arith.subf %1240, %1241 : vector<4x32xf32>
      %1243 = arith.select %1237, %1235, %1242 : vector<4x32xi1>, vector<4x32xf32>
      %1244 = arith.truncf %1243 : vector<4x32xf32> to vector<4x32xbf16>
      %cst_418 = arith.constant dense<0.000000e+00> : vector<4x32xf32>
      %1245 = tpu.matmul %1244, %2, %cst_418 {dimension_numbers = #tpu.dot_dimension_numbers<[1], [0], [0], [1], [0, 0, 1, 1], [], []>} : vector<4x32xbf16>, vector<32x32xbf16>, vector<4x32xf32> -> vector<4x32xf32>
      %1246 = arith.addf %1245, %9 : vector<4x32xf32>
      %cst_419 = arith.constant 0.000000e+00 : f32
      %1247 = vector.broadcast %cst_419 : f32 to vector<4x32xf32>
      %1248 = arith.cmpf ogt, %1246, %1247 : vector<4x32xf32>
      %cst_420 = arith.constant 0.000000e+00 : f32
      %1249 = vector.broadcast %cst_420 : f32 to vector<4x32xf32>
      %1250 = arith.minimumf %1246, %1249 : vector<4x32xf32>
      %1251 = math.exp %1250 : vector<4x32xf32>
      %cst_421 = arith.constant 1.000000e+00 : f32
      %1252 = vector.broadcast %cst_421 : f32 to vector<4x32xf32>
      %1253 = arith.subf %1251, %1252 : vector<4x32xf32>
      %1254 = arith.select %1248, %1246, %1253 : vector<4x32xi1>, vector<4x32xf32>
      %1255 = arith.truncf %1254 : vector<4x32xf32> to vector<4x32xbf16>
      %cst_422 = arith.constant dense<0.000000e+00> : vector<4x4xf32>
      %1256 = tpu.matmul %1255, %3, %cst_422 {dimension_numbers = #tpu.dot_dimension_numbers<[1], [0], [0], [1], [0, 0, 1, 1], [], []>} : vector<4x32xbf16>, vector<32x4xbf16>, vector<4x4xf32> -> vector<4x4xf32>
      %1257 = arith.addf %1256, %12 : vector<4x4xf32>
      %cst_423 = arith.constant 6.000000e+00 : f32
      %1258 = arith.divf %31, %cst_423 : f32
      %cst_424 = arith.constant 2.000000e+00 : f32
      %1259 = vector.broadcast %cst_424 : f32 to vector<4x4xf32>
      %1260 = arith.mulf %1259, %1159 : vector<4x4xf32>
      %1261 = arith.addf %1123, %1260 : vector<4x4xf32>
      %cst_425 = arith.constant 2.000000e+00 : f32
      %1262 = vector.broadcast %cst_425 : f32 to vector<4x4xf32>
      %1263 = arith.mulf %1262, %1195 : vector<4x4xf32>
      %1264 = arith.addf %1261, %1263 : vector<4x4xf32>
      %1265 = arith.addf %1264, %1229 : vector<4x4xf32>
      %1266 = vector.broadcast %1258 : f32 to vector<4x4xf32>
      %1267 = arith.mulf %1266, %1265 : vector<4x4xf32>
      %1268 = arith.addf %1112, %1267 : vector<4x4xf32>
      %cst_426 = arith.constant 6.000000e+00 : f32
      %1269 = arith.divf %31, %cst_426 : f32
      %cst_427 = arith.constant 2.000000e+00 : f32
      %1270 = vector.broadcast %cst_427 : f32 to vector<4x4xf32>
      %1271 = arith.mulf %1270, %1187 : vector<4x4xf32>
      %1272 = arith.addf %1151, %1271 : vector<4x4xf32>
      %cst_428 = arith.constant 2.000000e+00 : f32
      %1273 = vector.broadcast %cst_428 : f32 to vector<4x4xf32>
      %1274 = arith.mulf %1273, %1223 : vector<4x4xf32>
      %1275 = arith.addf %1272, %1274 : vector<4x4xf32>
      %1276 = arith.addf %1275, %1257 : vector<4x4xf32>
      %1277 = vector.broadcast %1269 : f32 to vector<4x4xf32>
      %1278 = arith.mulf %1277, %1276 : vector<4x4xf32>
      %1279 = arith.addf %1123, %1278 : vector<4x4xf32>
      %1280 = arith.index_cast %arg12 : i32 to index
      %c0_429 = arith.constant 0 : index
      %c0_430 = arith.constant 0 : index
      %1281 = vector.load %arg10[%1280, %c0_429, %c0_430] : memref<8x4x4xf32, #tpu.memory_space<vmem>>, vector<1x4x4xf32>
      %1282 = vector.shape_cast %1281 : vector<1x4x4xf32> to vector<4x4xf32>
      %1283 = vector.shape_cast %1268 : vector<4x4xf32> to vector<1x4x4xf32>
      tpu.vector_store %arg10[%1280, %c0_429, %c0_430], %1283 {strides = array<i32>} : memref<8x4x4xf32, #tpu.memory_space<vmem>>, vector<1x4x4xf32>,
      %1284 = arith.index_cast %arg12 : i32 to index
      %c0_431 = arith.constant 0 : index
      %c0_432 = arith.constant 0 : index
      %1285 = vector.load %arg11[%1284, %c0_431, %c0_432] : memref<8x4x4xf32, #tpu.memory_space<vmem>>, vector<1x4x4xf32>
      %1286 = vector.shape_cast %1285 : vector<1x4x4xf32> to vector<4x4xf32>
      %1287 = vector.shape_cast %1279 : vector<4x4xf32> to vector<1x4x4xf32>
      tpu.vector_store %arg11[%1284, %c0_431, %c0_432], %1287 {strides = array<i32>} : memref<8x4x4xf32, #tpu.memory_space<vmem>>, vector<1x4x4xf32>,
      scf.yield %1268, %1279 : vector<4x4xf32>, vector<4x4xf32>
    }
    %c7_i32_25 = arith.constant 7 : i32
    return
  }
  func.func @transform_0(%arg0: i32, %arg1: memref<8xf32, #tpu.memory_space<smem>>) -> (i32, i32, i32) {
    %c0_i32 = arith.constant 0 : i32
    %c0_i32_0 = arith.constant 0 : i32
    %c0_i32_1 = arith.constant 0 : i32
    %c0_i32_2 = arith.constant 0 : i32
    return %c0_i32, %c0_i32_0, %c0_i32_1 : i32, i32, i32
  }
  func.func @transform_1(%arg0: i32, %arg1: memref<8xf32, #tpu.memory_space<smem>>) -> (i32, i32) {
    %c0_i32 = arith.constant 0 : i32
    %c0_i32_0 = arith.constant 0 : i32
    %c0_i32_1 = arith.constant 0 : i32
    return %c0_i32, %c0_i32_0 : i32, i32
  }
  func.func @transform_2(%arg0: i32, %arg1: memref<8xf32, #tpu.memory_space<smem>>) -> (i32, i32) {
    %c0_i32 = arith.constant 0 : i32
    %c0_i32_0 = arith.constant 0 : i32
    %c0_i32_1 = arith.constant 0 : i32
    return %c0_i32, %c0_i32_0 : i32, i32
  }
  func.func @transform_3(%arg0: i32, %arg1: memref<8xf32, #tpu.memory_space<smem>>) -> (i32, i32) {
    %c0_i32 = arith.constant 0 : i32
    %c0_i32_0 = arith.constant 0 : i32
    %c0_i32_1 = arith.constant 0 : i32
    return %c0_i32, %c0_i32_0 : i32, i32
  }
  func.func @transform_4(%arg0: i32, %arg1: memref<8xf32, #tpu.memory_space<smem>>) -> (i32, i32) {
    %c0_i32 = arith.constant 0 : i32
    %c0_i32_0 = arith.constant 0 : i32
    %c0_i32_1 = arith.constant 0 : i32
    return %c0_i32, %c0_i32_0 : i32, i32
  }
  func.func @transform_5(%arg0: i32, %arg1: memref<8xf32, #tpu.memory_space<smem>>) -> (i32, i32) {
    %c0_i32 = arith.constant 0 : i32
    %c0_i32_0 = arith.constant 0 : i32
    %c0_i32_1 = arith.constant 0 : i32
    return %c0_i32, %c0_i32_0 : i32, i32
  }
  func.func @transform_6(%arg0: i32, %arg1: memref<8xf32, #tpu.memory_space<smem>>) -> (i32, i32) {
    %c0_i32 = arith.constant 0 : i32
    %c0_i32_0 = arith.constant 0 : i32
    %c0_i32_1 = arith.constant 0 : i32
    return %c0_i32, %c0_i32_0 : i32, i32
  }
  func.func @transform_7(%arg0: i32, %arg1: memref<8xf32, #tpu.memory_space<smem>>) -> (i32, i32) {
    %c0_i32 = arith.constant 0 : i32
    %c0_i32_0 = arith.constant 0 : i32
    %c0_i32_1 = arith.constant 0 : i32
    return %c0_i32, %c0_i32_0 : i32, i32
  }
  func.func @transform_8(%arg0: i32, %arg1: memref<8xf32, #tpu.memory_space<smem>>) -> (i32, i32, i32) {
    %c0_i32 = arith.constant 0 : i32
    %c0_i32_0 = arith.constant 0 : i32
    %c0_i32_1 = arith.constant 0 : i32
    %c0_i32_2 = arith.constant 0 : i32
    return %c0_i32, %c0_i32_0, %c0_i32_1 : i32, i32, i32
  }
  func.func @transform_9(%arg0: i32, %arg1: memref<8xf32, #tpu.memory_space<smem>>) -> (i32, i32, i32) {
    %c0_i32 = arith.constant 0 : i32
    %c0_i32_0 = arith.constant 0 : i32
    %c0_i32_1 = arith.constant 0 : i32
    %c0_i32_2 = arith.constant 0 : i32
    return %c0_i32, %c0_i32_0, %c0_i32_1 : i32, i32, i32
  }
}

</mosaic_0001>

<llo_original>
// kernel: tpu_custom_call.1
$region0: #{tpu_custom_call.1}
  #allocation0 [shape = 'u32[]', space=smem, size = 0x4, offset = 0x4, fixed_abs, tag = 'smem constant byte address 0x4 - core index']
  #allocation1 [shape = 'u32[144,128]{1,0:T(1,128)}', space=vmem, size = 0x12000, scoped, tag = 'internal scratch']
  #allocation2 [shape = 's32[1]{0}', space=sflag, size = 0x4, scoped, tag = 'scoped memory for tpu_custom_call.1']
  #allocation3 [shape = 'u8[512]{0}', space=smem, size = 0x200, scoped, tag = 'prefetched SMEM operand 0']
  %s0 = inlined_call_operand.vmem [shape: f32[8], index: 0, kind: input, shape index: {}]
  %s1 = inlined_call_operand.vmem [shape: f32[2,4,4], index: 1, kind: input, shape index: {}]
  %s2 = inlined_call_operand.vmem [shape: bf16[4,32], index: 2, kind: input, shape index: {}]
  %s3 = inlined_call_operand.vmem [shape: bf16[4,32], index: 3, kind: input, shape index: {}]
  %s4 = inlined_call_operand.vmem [shape: f32[1,32], index: 4, kind: input, shape index: {}]
  %s5 = inlined_call_operand.vmem [shape: bf16[32,32], index: 5, kind: input, shape index: {}]
  %s6 = inlined_call_operand.vmem [shape: f32[1,32], index: 6, kind: input, shape index: {}]
  %s7 = inlined_call_operand.vmem [shape: bf16[32,4], index: 7, kind: input, shape index: {}]
  %s8 = inlined_call_operand.vmem [shape: f32[1,4], index: 8, kind: input, shape index: {}]
  %s9 = inlined_call_operand.vmem [shape: f32[8,4,4], index: 9, kind: output, shape index: {0}]
  %s10 = inlined_call_operand.vmem [shape: f32[8,4,4], index: 10, kind: output, shape index: {1}]
  %11 = xla_tuple %s9, %s10
  %s12 = sld [smem:[#allocation0]]
  $region57: #{tpu_custom_call.1} parent=0
    _
  %s14 = ssub.s32 1, %s12
  %s15 = scalar_select 0, %s14, %s12
  %s16 = sshll.u32 %s0, 4
  %s17 = int_to_ptr.vmem [resolvable:$true] %s16
  %19 = dma.vmem_to_smem %s17, 16, [#allocation3], [#allocation2]
  %20 = dma.done [#allocation2], 16
  %21 = sfence
  // Predicated region
  $region2: #{tpu_custom_call.1} parent=0 // pred_check
    _
  $region3: #{tpu_custom_call.1} parent=0 // pred_check_branch
    %23 = sbr.rel (0) target = $region5
  $region4: #{tpu_custom_call.1} parent=0 // pred_region
    _
  $region5: #{tpu_custom_call.1} parent=0 // pred_fallthru
    _
  // Predicated region
  $region6: #{tpu_custom_call.1} parent=0 // pred_check
    _
  $region7: #{tpu_custom_call.1} parent=0 // pred_check_branch
    %25 = sbr.rel (0) target = $region9
  $region8: #{tpu_custom_call.1} parent=0 // pred_region
    _
  $region9: #{tpu_custom_call.1} parent=0 // pred_fallthru
    _
  // Predicated region
  $region10: #{tpu_custom_call.1} parent=0 // pred_check
    _
  $region11: #{tpu_custom_call.1} parent=0 // pred_check_branch
    %27 = sbr.rel (0) target = $region13
  $region12: #{tpu_custom_call.1} parent=0 // pred_region
    _
  $region13: #{tpu_custom_call.1} parent=0 // pred_fallthru
    _
  // Predicated region
  $region14: #{tpu_custom_call.1} parent=0 // pred_check
    _
  $region15: #{tpu_custom_call.1} parent=0 // pred_check_branch
    %29 = sbr.rel (0) target = $region17
  $region16: #{tpu_custom_call.1} parent=0 // pred_region
    _
  $region17: #{tpu_custom_call.1} parent=0 // pred_fallthru
    _
  // Predicated region
  $region18: #{tpu_custom_call.1} parent=0 // pred_check
    _
  $region19: #{tpu_custom_call.1} parent=0 // pred_check_branch
    %31 = sbr.rel (0) target = $region21
  $region20: #{tpu_custom_call.1} parent=0 // pred_region
    _
  $region21: #{tpu_custom_call.1} parent=0 // pred_fallthru
    _
  // Predicated region
  $region22: #{tpu_custom_call.1} parent=0 // pred_check
    _
  $region23: #{tpu_custom_call.1} parent=0 // pred_check_branch
    %33 = sbr.rel (0) target = $region25
  $region24: #{tpu_custom_call.1} parent=0 // pred_region
    _
  $region25: #{tpu_custom_call.1} parent=0 // pred_fallthru
    _
  // Predicated region
  $region26: #{tpu_custom_call.1} parent=0 // pred_check
    _
  $region27: #{tpu_custom_call.1} parent=0 // pred_check_branch
    %35 = sbr.rel (0) target = $region29
  $region28: #{tpu_custom_call.1} parent=0 // pred_region
    _
  $region29: #{tpu_custom_call.1} parent=0 // pred_fallthru
    _
  // Predicated region
  $region30: #{tpu_custom_call.1} parent=0 // pred_check
    _
  $region31: #{tpu_custom_call.1} parent=0 // pred_check_branch
    %37 = sbr.rel (0) target = $region33
  $region32: #{tpu_custom_call.1} parent=0 // pred_region
    _
  $region33: #{tpu_custom_call.1} parent=0 // pred_fallthru
    _
  %v39 = vld [vmem:[%s2] sm:$0x3]
  %v40 = vld [vmem:[%s3] sm:$0x3]
  %v41 = vld [vmem:[%s5] sm:$0xf]
  %v42 = vld [vmem:[%s5 + $0x4] sm:$0xf]
  %v43 = vld [vmem:[%s5 + $0x8] sm:$0xf]
  %v44 = vld [vmem:[%s5 + $0xc] sm:$0xf]
  %v45 = vld [vmem:[%s7] sm:$0xf]
  %v46 = vld [vmem:[%s7 + $0x4] sm:$0xf]
  %v47 = vld [vmem:[%s7 + $0x8] sm:$0xf]
  %v48 = vld [vmem:[%s7 + $0xc] sm:$0xf]
  %v49 = vld [vmem:[%s4] sm:$0x1]
  %v51 = vlaneseq
  %v52 = vshrl.u32 %v51, 7
  %v53 = vsub.s32 0, %v52
  %v54 = vrot.slane %v49, %v53
  %v56 = vld [vmem:[%s6] sm:$0x1]
  %v58 = vlaneseq
  %v59 = vshrl.u32 %v58, 7
  %v60 = vsub.s32 0, %v59
  %v61 = vrot.slane %v56, %v60
  %v63 = vld [vmem:[%s8] sm:$0x1]
  %v65 = vlaneseq
  %v66 = vshrl.u32 %v65, 7
  %v67 = vsub.s32 0, %v66
  %v68 = vrot.slane %v63, %v67
  %v70 = vld [vmem:[%s1] sm:$0xf]
  %s71 = scalar_lea.vmem %s1, 4
  %v72 = vld [vmem:[%s71] sm:$0xf]
  %vm73 = vcmask 27648
  %74 = vst.msk [vmem:[%s9] sm:$0xf] %vm73, %v70
  %75 = vst.msk [vmem:[%s10] sm:$0xf] %vm73, %v72
  loop: start=1, step=1, limit=8
  $region34: #{tpu_custom_call.1} parent=0 // loop_pre_header
    _
  $region35: #{tpu_custom_call.1} parent=0 // loop_header
    %s77 = sphi 1, %s81
    %p78 = scmp.ge.s32.totalorder %s77, 8
    %v82 = vphi %v70, %v6379
    %v83 = vphi %v72, %v6386
  $region36: #{tpu_custom_call.1} parent=0 // loop_header_branch
    %80 = sbr.rel (%p78) target = $region40
  $region37: #{tpu_custom_call.1} parent=0 // loop_body
    %s84 = sld [smem:[#allocation3 + %s77]]
    %s85 = ssub.s32 %s77, 1
    %s86 = sld [smem:[#allocation3 + %s85]]
    %s87 = ssub.f32 %s84, %s86
    %v88 = vrcp.pop 8.0
    %s89 = vtos %v88
    %s90 = smul.f32 %s87, %s89
    %v91 = vpack.c.bf16 %v82, %v82
    %v92 = vpack.c.bf16 %v83, %v83
    %vm93 = vcmask 31744
    %v95 = vsel %vm93, %v92, 0
    %vm97 = vcmask 1041408
    %v99 = vsel %vm97, %v40, 0
    %101 = vmatprep.subr.bf16.mxu0 0
    %102 = vmatpush1.bf16.msra.mxu0 %v99
    %103 = vmatprep.subr.bf16.mxu0 0
    %104 = vmatpush1.bf16.msra.mxu0 0
    %105 = vmatprep.subr.bf16.mxu0 0
    %106 = vmatpush1.bf16.msra.mxu0 0
    %107 = vmatprep.subr.bf16.mxu0 0
    %108 = vmatpush1.bf16.msra.mxu0 0
    %109 = vmatprep.subr.bf16.mxu0 0
    %110 = vmatpush1.bf16.msra.mxu0 0
    %111 = vmatprep.subr.bf16.mxu0 0
    %112 = vmatpush1.bf16.msra.mxu0 0
    %113 = vmatprep.subr.bf16.mxu0 0
    %114 = vmatpush1.bf16.msra.mxu0 0
    %115 = vmatprep.subr.bf16.mxu0 0
    %116 = vmatpush1.bf16.msra.mxu0 0
    %117 = vmatprep.subr.bf16.mxu0 0
    %118 = vmatpush1.bf16.msra.mxu0 0
    %119 = vmatprep.subr.bf16.mxu0 0
    %120 = vmatpush1.bf16.msra.mxu0 0
    %121 = vmatprep.subr.bf16.mxu0 0
    %122 = vmatpush1.bf16.msra.mxu0 0
    %123 = vmatprep.subr.bf16.mxu0 0
    %124 = vmatpush1.bf16.msra.mxu0 0
    %125 = vmatprep.subr.bf16.mxu0 0
    %126 = vmatpush1.bf16.msra.mxu0 0
    %127 = vmatprep.subr.bf16.mxu0 0
    %128 = vmatpush1.bf16.msra.mxu0 0
    %129 = vmatprep.subr.bf16.mxu0 0
    %130 = vmatpush1.bf16.msra.mxu0 0
    %131 = vmatprep.subr.bf16.mxu0 0
    %132 = vmatpush1.bf16.msra.mxu0 0
    %133 = vmatprep.mubr.bf16.mxu0 0
    %134 = vmatmul.mubr.bf16.gmra.mrb[0].mxu0 %v95
    %v135 = vpop.f32.mrb[0].mxu0
    %v136 = vadd.f32 0.0, %v135
    %v137 = vpop.f32.mrb[0].mxu0
    %v138 = vpop.f32.mrb[0].mxu0
    %v139 = vpop.f32.mrb[0].mxu0
    %140 = vdwg.mxu0
    %v142 = vsel %vm93, %v91, 0
    %v145 = vsel %vm97, %v39, 0
    %147 = vmatprep.subr.bf16.mxu0 0
    %148 = vmatpush1.bf16.msra.mxu0 %v145
    %149 = vmatprep.subr.bf16.mxu0 0
    %150 = vmatpush1.bf16.msra.mxu0 0
    %151 = vmatprep.subr.bf16.mxu0 0
    %152 = vmatpush1.bf16.msra.mxu0 0
    %153 = vmatprep.subr.bf16.mxu0 0
    %154 = vmatpush1.bf16.msra.mxu0 0
    %155 = vmatprep.subr.bf16.mxu0 0
    %156 = vmatpush1.bf16.msra.mxu0 0
    %157 = vmatprep.subr.bf16.mxu0 0
    %158 = vmatpush1.bf16.msra.mxu0 0
    %159 = vmatprep.subr.bf16.mxu0 0
    %160 = vmatpush1.bf16.msra.mxu0 0
    %161 = vmatprep.subr.bf16.mxu0 0
    %162 = vmatpush1.bf16.msra.mxu0 0
    %163 = vmatprep.subr.bf16.mxu0 0
    %164 = vmatpush1.bf16.msra.mxu0 0
    %165 = vmatprep.subr.bf16.mxu0 0
    %166 = vmatpush1.bf16.msra.mxu0 0
    %167 = vmatprep.subr.bf16.mxu0 0
    %168 = vmatpush1.bf16.msra.mxu0 0
    %169 = vmatprep.subr.bf16.mxu0 0
    %170 = vmatpush1.bf16.msra.mxu0 0
    %171 = vmatprep.subr.bf16.mxu0 0
    %172 = vmatpush1.bf16.msra.mxu0 0
    %173 = vmatprep.subr.bf16.mxu0 0
    %174 = vmatpush1.bf16.msra.mxu0 0
    %175 = vmatprep.subr.bf16.mxu0 0
    %176 = vmatpush1.bf16.msra.mxu0 0
    %177 = vmatprep.subr.bf16.mxu0 0
    %178 = vmatpush1.bf16.msra.mxu0 0
    %179 = vmatprep.mubr.bf16.mxu0 0
    %180 = vmatmul.mubr.bf16.gmra.mrb[0].mxu0 %v142
    %v181 = vpop.f32.mrb[0].mxu0
    %v182 = vadd.f32 %v136, %v181
    %v183 = vpop.f32.mrb[0].mxu0
    %v184 = vpop.f32.mrb[0].mxu0
    %v185 = vpop.f32.mrb[0].mxu0
    %186 = vdwg.mxu0
    %v187 = vadd.f32 %v182, %v54
    %vm188 = vcmp.gt.f32.partialorder %v187, 0.0
    %v189 = vmin.f32 %v187, 0.0
    %v190 = vmul.f32 %v189, 1.442695
    %v191 = vpow.pop %v190
    %v192 = vsub.f32 %v191, 1.0
    %v193 = vsel %vm188, %v187, %v192
    %v194 = vpack.c.bf16 %v193, %v193
    %v199 = vunpack.c.l.b16 %v41
    %v200 = vunpack.c.l.b16 %v42
    %v201 = vunpack.c.l.b16 %v43
    %v202 = vunpack.c.l.b16 %v44
    %v203 = vpack.c.b16 %v200, %v199
    %v204 = vpack.c.b16 %v202, %v201
    %vm207 = vcmask 261120
    %v209 = vsel %vm207, %v194, 0
    %211 = vmatprep.subr.bf16.mxu0 0
    %212 = vmatpush1.bf16.msra.mxu0 %v203
    %213 = vmatprep.subr.bf16.mxu0 0
    %214 = vmatpush1.bf16.msra.mxu0 %v204
    %215 = vmatprep.subr.bf16.mxu0 0
    %216 = vmatpush1.bf16.msra.mxu0 0
    %217 = vmatprep.subr.bf16.mxu0 0
    %218 = vmatpush1.bf16.msra.mxu0 0
    %219 = vmatprep.subr.bf16.mxu0 0
    %220 = vmatpush1.bf16.msra.mxu0 0
    %221 = vmatprep.subr.bf16.mxu0 0
    %222 = vmatpush1.bf16.msra.mxu0 0
    %223 = vmatprep.subr.bf16.mxu0 0
    %224 = vmatpush1.bf16.msra.mxu0 0
    %225 = vmatprep.subr.bf16.mxu0 0
    %226 = vmatpush1.bf16.msra.mxu0 0
    %227 = vmatprep.subr.bf16.mxu0 0
    %228 = vmatpush1.bf16.msra.mxu0 0
    %229 = vmatprep.subr.bf16.mxu0 0
    %230 = vmatpush1.bf16.msra.mxu0 0
    %231 = vmatprep.subr.bf16.mxu0 0
    %232 = vmatpush1.bf16.msra.mxu0 0
    %233 = vmatprep.subr.bf16.mxu0 0
    %234 = vmatpush1.bf16.msra.mxu0 0
    %235 = vmatprep.subr.bf16.mxu0 0
    %236 = vmatpush1.bf16.msra.mxu0 0
    %237 = vmatprep.subr.bf16.mxu0 0
    %238 = vmatpush1.bf16.msra.mxu0 0
    %239 = vmatprep.subr.bf16.mxu0 0
    %240 = vmatpush1.bf16.msra.mxu0 0
    %241 = vmatprep.subr.bf16.mxu0 0
    %242 = vmatpush1.bf16.msra.mxu0 0
    %243 = vmatprep.mubr.bf16.mxu0 0
    %244 = vmatmul.mubr.bf16.gmra.mrb[0].mxu0 %v209
    %v245 = vpop.f32.mrb[0].mxu0
    %v246 = vadd.f32 %v61, %v245
    %v247 = vpop.f32.mrb[0].mxu0
    %v248 = vpop.f32.mrb[0].mxu0
    %v249 = vpop.f32.mrb[0].mxu0
    %250 = vdwg.mxu0
    %vm251 = vcmp.gt.f32.partialorder %v246, 0.0
    %v252 = vmin.f32 %v246, 0.0
    %v253 = vmul.f32 %v252, 1.442695
    %v254 = vpow.pop %v253
    %v255 = vsub.f32 %v254, 1.0
    %v256 = vsel %vm251, %v246, %v255
    %v257 = vpack.c.bf16 %v256, %v256
    %v262 = vunpack.c.l.b16 %v45
    %v263 = vunpack.c.l.b16 %v46
    %v264 = vunpack.c.l.b16 %v47
    %v265 = vunpack.c.l.b16 %v48
    %v266 = vpack.c.b16 %v263, %v262
    %v267 = vpack.c.b16 %v265, %v264
    %v271 = vsel %vm207, %v257, 0
    %273 = vmatprep.subr.bf16.mxu0 0
    %274 = vmatpush1.bf16.msra.mxu0 %v266
    %275 = vmatprep.subr.bf16.mxu0 0
    %276 = vmatpush1.bf16.msra.mxu0 %v267
    %277 = vmatprep.subr.bf16.mxu0 0
    %278 = vmatpush1.bf16.msra.mxu0 0
    %279 = vmatprep.subr.bf16.mxu0 0
    %280 = vmatpush1.bf16.msra.mxu0 0
    %281 = vmatprep.subr.bf16.mxu0 0
    %282 = vmatpush1.bf16.msra.mxu0 0
    %283 = vmatprep.subr.bf16.mxu0 0
    %284 = vmatpush1.bf16.msra.mxu0 0
    %285 = vmatprep.subr.bf16.mxu0 0
    %286 = vmatpush1.bf16.msra.mxu0 0
    %287 = vmatprep.subr.bf16.mxu0 0
    %288 = vmatpush1.bf16.msra.mxu0 0
    %289 = vmatprep.subr.bf16.mxu0 0
    %290 = vmatpush1.bf16.msra.mxu0 0
    %291 = vmatprep.subr.bf16.mxu0 0
    %292 = vmatpush1.bf16.msra.mxu0 0
    %293 = vmatprep.subr.bf16.mxu0 0
    %294 = vmatpush1.bf16.msra.mxu0 0
    %295 = vmatprep.subr.bf16.mxu0 0
    %296 = vmatpush1.bf16.msra.mxu0 0
    %297 = vmatprep.subr.bf16.mxu0 0
    %298 = vmatpush1.bf16.msra.mxu0 0
    %299 = vmatprep.subr.bf16.mxu0 0
    %300 = vmatpush1.bf16.msra.mxu0 0
    %301 = vmatprep.subr.bf16.mxu0 0
    %302 = vmatpush1.bf16.msra.mxu0 0
    %303 = vmatprep.subr.bf16.mxu0 0
    %304 = vmatpush1.bf16.msra.mxu0 0
    %305 = vmatprep.mubr.bf16.mxu0 0
    %306 = vmatmul.mubr.bf16.gmra.mrb[0].mxu0 %v271
    %v307 = vpop.f32.mrb[0].mxu0
    %v308 = vadd.f32 %v68, %v307
    %v309 = vpop.f32.mrb[0].mxu0
    %v310 = vpop.f32.mrb[0].mxu0
    %v311 = vpop.f32.mrb[0].mxu0
    %312 = vdwg.mxu0
    %s313 = smul.f32 %s90, 0.5
    %v314 = vstv %s313
    %v315 = vmul.f32 %v314, %v83
    %v316 = vadd.f32 %v82, %v315
    %v317 = vmul.f32 %v314, %v308
    %v318 = vadd.f32 %v83, %v317
    %v319 = vpack.c.bf16 %v316, %v316
    %v320 = vpack.c.bf16 %v318, %v318
    %v322 = vsel %vm93, %v320, 0
    %324 = vmatprep.subr.bf16.mxu0 0
    %325 = vmatpush1.bf16.msra.mxu0 %v99
    %326 = vmatprep.subr.bf16.mxu0 0
    %327 = vmatpush1.bf16.msra.mxu0 0
    %328 = vmatprep.subr.bf16.mxu0 0
    %329 = vmatpush1.bf16.msra.mxu0 0
    %330 = vmatprep.subr.bf16.mxu0 0
    %331 = vmatpush1.bf16.msra.mxu0 0
    %332 = vmatprep.subr.bf16.mxu0 0
    %333 = vmatpush1.bf16.msra.mxu0 0
    %334 = vmatprep.subr.bf16.mxu0 0
    %335 = vmatpush1.bf16.msra.mxu0 0
    %336 = vmatprep.subr.bf16.mxu0 0
    %337 = vmatpush1.bf16.msra.mxu0 0
    %338 = vmatprep.subr.bf16.mxu0 0
    %339 = vmatpush1.bf16.msra.mxu0 0
    %340 = vmatprep.subr.bf16.mxu0 0
    %341 = vmatpush1.bf16.msra.mxu0 0
    %342 = vmatprep.subr.bf16.mxu0 0
    %343 = vmatpush1.bf16.msra.mxu0 0
    %344 = vmatprep.subr.bf16.mxu0 0
    %345 = vmatpush1.bf16.msra.mxu0 0
    %346 = vmatprep.subr.bf16.mxu0 0
    %347 = vmatpush1.bf16.msra.mxu0 0
    %348 = vmatprep.subr.bf16.mxu0 0
    %349 = vmatpush1.bf16.msra.mxu0 0
    %350 = vmatprep.subr.bf16.mxu0 0
    %351 = vmatpush1.bf16.msra.mxu0 0
    %352 = vmatprep.subr.bf16.mxu0 0
    %353 = vmatpush1.bf16.msra.mxu0 0
    %354 = vmatprep.subr.bf16.mxu0 0
    %355 = vmatpush1.bf16.msra.mxu0 0
    %356 = vmatprep.mubr.bf16.mxu0 0
    %357 = vmatmul.mubr.bf16.gmra.mrb[0].mxu0 %v322
    %v358 = vpop.f32.mrb[0].mxu0
    %v359 = vadd.f32 0.0, %v358
    %v360 = vpop.f32.mrb[0].mxu0
    %v361 = vpop.f32.mrb[0].mxu0
    %v362 = vpop.f32.mrb[0].mxu0
    %363 = vdwg.mxu0
    %v365 = vsel %vm93, %v319, 0
    %367 = vmatprep.subr.bf16.mxu0 0
    %368 = vmatpush1.bf16.msra.mxu0 %v145
    %369 = vmatprep.subr.bf16.mxu0 0
    %370 = vmatpush1.bf16.msra.mxu0 0
    %371 = vmatprep.subr.bf16.mxu0 0
    %372 = vmatpush1.bf16.msra.mxu0 0
    %373 = vmatprep.subr.bf16.mxu0 0
    %374 = vmatpush1.bf16.msra.mxu0 0
    %375 = vmatprep.subr.bf16.mxu0 0
    %376 = vmatpush1.bf16.msra.mxu0 0
    %377 = vmatprep.subr.bf16.mxu0 0
    %378 = vmatpush1.bf16.msra.mxu0 0
    %379 = vmatprep.subr.bf16.mxu0 0
    %380 = vmatpush1.bf16.msra.mxu0 0
    %381 = vmatprep.subr.bf16.mxu0 0
    %382 = vmatpush1.bf16.msra.mxu0 0
    %383 = vmatprep.subr.bf16.mxu0 0
    %384 = vmatpush1.bf16.msra.mxu0 0
    %385 = vmatprep.subr.bf16.mxu0 0
    %386 = vmatpush1.bf16.msra.mxu0 0
    %387 = vmatprep.subr.bf16.mxu0 0
    %388 = vmatpush1.bf16.msra.mxu0 0
    %389 = vmatprep.subr.bf16.mxu0 0
    %390 = vmatpush1.bf16.msra.mxu0 0
    %391 = vmatprep.subr.bf16.mxu0 0
    %392 = vmatpush1.bf16.msra.mxu0 0
    %393 = vmatprep.subr.bf16.mxu0 0
    %394 = vmatpush1.bf16.msra.mxu0 0
    %395 = vmatprep.subr.bf16.mxu0 0
    %396 = vmatpush1.bf16.msra.mxu0 0
    %397 = vmatprep.subr.bf16.mxu0 0
    %398 = vmatpush1.bf16.msra.mxu0 0
    %399 = vmatprep.mubr.bf16.mxu0 0
    %400 = vmatmul.mubr.bf16.gmra.mrb[0].mxu0 %v365
    %v401 = vpop.f32.mrb[0].mxu0
    %v402 = vadd.f32 %v359, %v401
    %v403 = vpop.f32.mrb[0].mxu0
    %v404 = vpop.f32.mrb[0].mxu0
    %v405 = vpop.f32.mrb[0].mxu0
    %406 = vdwg.mxu0
    %v407 = vadd.f32 %v402, %v54
    %vm408 = vcmp.gt.f32.partialorder %v407, 0.0
    %v409 = vmin.f32 %v407, 0.0
    %v410 = vmul.f32 %v409, 1.442695
    %v411 = vpow.pop %v410
    %v412 = vsub.f32 %v411, 1.0
    %v413 = vsel %vm408, %v407, %v412
    %v414 = vpack.c.bf16 %v413, %v413
    %v416 = vsel %vm207, %v414, 0
    %418 = vmatprep.subr.bf16.mxu0 0
    %419 = vmatpush1.bf16.msra.mxu0 %v203
    %420 = vmatprep.subr.bf16.mxu0 0
    %421 = vmatpush1.bf16.msra.mxu0 %v204
    %422 = vmatprep.subr.bf16.mxu0 0
    %423 = vmatpush1.bf16.msra.mxu0 0
    %424 = vmatprep.subr.bf16.mxu0 0
    %425 = vmatpush1.bf16.msra.mxu0 0
    %426 = vmatprep.subr.bf16.mxu0 0
    %427 = vmatpush1.bf16.msra.mxu0 0
    %428 = vmatprep.subr.bf16.mxu0 0
    %429 = vmatpush1.bf16.msra.mxu0 0
    %430 = vmatprep.subr.bf16.mxu0 0
    %431 = vmatpush1.bf16.msra.mxu0 0
    %432 = vmatprep.subr.bf16.mxu0 0
    %433 = vmatpush1.bf16.msra.mxu0 0
    %434 = vmatprep.subr.bf16.mxu0 0
    %435 = vmatpush1.bf16.msra.mxu0 0
    %436 = vmatprep.subr.bf16.mxu0 0
    %437 = vmatpush1.bf16.msra.mxu0 0
    %438 = vmatprep.subr.bf16.mxu0 0
    %439 = vmatpush1.bf16.msra.mxu0 0
    %440 = vmatprep.subr.bf16.mxu0 0
    %441 = vmatpush1.bf16.msra.mxu0 0
    %442 = vmatprep.subr.bf16.mxu0 0
    %443 = vmatpush1.bf16.msra.mxu0 0
    %444 = vmatprep.subr.bf16.mxu0 0
    %445 = vmatpush1.bf16.msra.mxu0 0
    %446 = vmatprep.subr.bf16.mxu0 0
    %447 = vmatpush1.bf16.msra.mxu0 0
    %448 = vmatprep.subr.bf16.mxu0 0
    %449 = vmatpush1.bf16.msra.mxu0 0
    %450 = vmatprep.mubr.bf16.mxu0 0
    %451 = vmatmul.mubr.bf16.gmra.mrb[0].mxu0 %v416
    %v452 = vpop.f32.mrb[0].mxu0
    %v453 = vadd.f32 %v61, %v452
    %v454 = vpop.f32.mrb[0].mxu0
    %v455 = vpop.f32.mrb[0].mxu0
    %v456 = vpop.f32.mrb[0].mxu0
    %457 = vdwg.mxu0
    %vm458 = vcmp.gt.f32.partialorder %v453, 0.0
    %v459 = vmin.f32 %v453, 0.0
    %v460 = vmul.f32 %v459, 1.442695
    %v461 = vpow.pop %v460
    %v462 = vsub.f32 %v461, 1.0
    %v463 = vsel %vm458, %v453, %v462
    %v464 = vpack.c.bf16 %v463, %v463
    %v466 = vsel %vm207, %v464, 0
    %468 = vmatprep.subr.bf16.mxu0 0
    %469 = vmatpush1.bf16.msra.mxu0 %v266
    %470 = vmatprep.subr.bf16.mxu0 0
    %471 = vmatpush1.bf16.msra.mxu0 %v267
    %472 = vmatprep.subr.bf16.mxu0 0
    %473 = vmatpush1.bf16.msra.mxu0 0
    %474 = vmatprep.subr.bf16.mxu0 0
    %475 = vmatpush1.bf16.msra.mxu0 0
    %476 = vmatprep.subr.bf16.mxu0 0
    %477 = vmatpush1.bf16.msra.mxu0 0
    %478 = vmatprep.subr.bf16.mxu0 0
    %479 = vmatpush1.bf16.msra.mxu0 0
    %480 = vmatprep.subr.bf16.mxu0 0
    %481 = vmatpush1.bf16.msra.mxu0 0
    %482 = vmatprep.subr.bf16.mxu0 0
    %483 = vmatpush1.bf16.msra.mxu0 0
    %484 = vmatprep.subr.bf16.mxu0 0
    %485 = vmatpush1.bf16.msra.mxu0 0
    %486 = vmatprep.subr.bf16.mxu0 0
    %487 = vmatpush1.bf16.msra.mxu0 0
    %488 = vmatprep.subr.bf16.mxu0 0
    %489 = vmatpush1.bf16.msra.mxu0 0
    %490 = vmatprep.subr.bf16.mxu0 0
    %491 = vmatpush1.bf16.msra.mxu0 0
    %492 = vmatprep.subr.bf16.mxu0 0
    %493 = vmatpush1.bf16.msra.mxu0 0
    %494 = vmatprep.subr.bf16.mxu0 0
    %495 = vmatpush1.bf16.msra.mxu0 0
    %496 = vmatprep.subr.bf16.mxu0 0
    %497 = vmatpush1.bf16.msra.mxu0 0
    %498 = vmatprep.subr.bf16.mxu0 0
    %499 = vmatpush1.bf16.msra.mxu0 0
    %500 = vmatprep.mubr.bf16.mxu0 0
    %501 = vmatmul.mubr.bf16.gmra.mrb[0].mxu0 %v466
    %v502 = vpop.f32.mrb[0].mxu0
    %v503 = vadd.f32 %v68, %v502
    %v504 = vpop.f32.mrb[0].mxu0
    %v505 = vpop.f32.mrb[0].mxu0
    %v506 = vpop.f32.mrb[0].mxu0
    %507 = vdwg.mxu0
    %v508 = vmul.f32 %v314, %v318
    %v509 = vadd.f32 %v82, %v508
    %v510 = vmul.f32 %v314, %v503
    %v511 = vadd.f32 %v83, %v510
    %v512 = vpack.c.bf16 %v509, %v509
    %v513 = vpack.c.bf16 %v511, %v511
    %v515 = vsel %vm93, %v513, 0
    %517 = vmatprep.subr.bf16.mxu0 0
    %518 = vmatpush1.bf16.msra.mxu0 %v99
    %519 = vmatprep.subr.bf16.mxu0 0
    %520 = vmatpush1.bf16.msra.mxu0 0
    %521 = vmatprep.subr.bf16.mxu0 0
    %522 = vmatpush1.bf16.msra.mxu0 0
    %523 = vmatprep.subr.bf16.mxu0 0
    %524 = vmatpush1.bf16.msra.mxu0 0
    %525 = vmatprep.subr.bf16.mxu0 0
    %526 = vmatpush1.bf16.msra.mxu0 0
    %527 = vmatprep.subr.bf16.mxu0 0
    %528 = vmatpush1.bf16.msra.mxu0 0
    %529 = vmatprep.subr.bf16.mxu0 0
    %530 = vmatpush1.bf16.msra.mxu0 0
    %531 = vmatprep.subr.bf16.mxu0 0
    %532 = vmatpush1.bf16.msra.mxu0 0
    %533 = vmatprep.subr.bf16.mxu0 0
    %534 = vmatpush1.bf16.msra.mxu0 0
    %535 = vmatprep.subr.bf16.mxu0 0
    %536 = vmatpush1.bf16.msra.mxu0 0
    %537 = vmatprep.subr.bf16.mxu0 0
    %538 = vmatpush1.bf16.msra.mxu0 0
    %539 = vmatprep.subr.bf16.mxu0 0
    %540 = vmatpush1.bf16.msra.mxu0 0
    %541 = vmatprep.subr.bf16.mxu0 0
    %542 = vmatpush1.bf16.msra.mxu0 0
    %543 = vmatprep.subr.bf16.mxu0 0
    %544 = vmatpush1.bf16.msra.mxu0 0
    %545 = vmatprep.subr.bf16.mxu0 0
    %546 = vmatpush1.bf16.msra.mxu0 0
    %547 = vmatprep.subr.bf16.mxu0 0
    %548 = vmatpush1.bf16.msra.mxu0 0
    %549 = vmatprep.mubr.bf16.mxu0 0
    %550 = vmatmul.mubr.bf16.gmra.mrb[0].mxu0 %v515
    %v551 = vpop.f32.mrb[0].mxu0
    %v552 = vadd.f32 0.0, %v551
    %v553 = vpop.f32.mrb[0].mxu0
    %v554 = vpop.f32.mrb[0].mxu0
    %v555 = vpop.f32.mrb[0].mxu0
    %556 = vdwg.mxu0
    %v558 = vsel %vm93, %v512, 0
    %560 = vmatprep.subr.bf16.mxu0 0
    %561 = vmatpush1.bf16.msra.mxu0 %v145
    %562 = vmatprep.subr.bf16.mxu0 0
    %563 = vmatpush1.bf16.msra.mxu0 0
    %564 = vmatprep.subr.bf16.mxu0 0
    %565 = vmatpush1.bf16.msra.mxu0 0
    %566 = vmatprep.subr.bf16.mxu0 0
    %567 = vmatpush1.bf16.msra.mxu0 0
    %568 = vmatprep.subr.bf16.mxu0 0
    %569 = vmatpush1.bf16.msra.mxu0 0
    %570 = vmatprep.subr.bf16.mxu0 0
    %571 = vmatpush1.bf16.msra.mxu0 0
    %572 = vmatprep.subr.bf16.mxu0 0
    %573 = vmatpush1.bf16.msra.mxu0 0
    %574 = vmatprep.subr.bf16.mxu0 0
    %575 = vmatpush1.bf16.msra.mxu0 0
    %576 = vmatprep.subr.bf16.mxu0 0
    %577 = vmatpush1.bf16.msra.mxu0 0
    %578 = vmatprep.subr.bf16.mxu0 0
    %579 = vmatpush1.bf16.msra.mxu0 0
    %580 = vmatprep.subr.bf16.mxu0 0
    %581 = vmatpush1.bf16.msra.mxu0 0
    %582 = vmatprep.subr.bf16.mxu0 0
    %583 = vmatpush1.bf16.msra.mxu0 0
    %584 = vmatprep.subr.bf16.mxu0 0
    %585 = vmatpush1.bf16.msra.mxu0 0
    %586 = vmatprep.subr.bf16.mxu0 0
    %587 = vmatpush1.bf16.msra.mxu0 0
    %588 = vmatprep.subr.bf16.mxu0 0
    %589 = vmatpush1.bf16.msra.mxu0 0
    %590 = vmatprep.subr.bf16.mxu0 0
    %591 = vmatpush1.bf16.msra.mxu0 0
    %592 = vmatprep.mubr.bf16.mxu0 0
    %593 = vmatmul.mubr.bf16.gmra.mrb[0].mxu0 %v558
    %v594 = vpop.f32.mrb[0].mxu0
    %v595 = vadd.f32 %v552, %v594
    %v596 = vpop.f32.mrb[0].mxu0
    %v597 = vpop.f32.mrb[0].mxu0
    %v598 = vpop.f32.mrb[0].mxu0
    %599 = vdwg.mxu0
    %v600 = vadd.f32 %v595, %v54
    %vm601 = vcmp.gt.f32.partialorder %v600, 0.0
    %v602 = vmin.f32 %v600, 0.0
    %v603 = vmul.f32 %v602, 1.442695
    %v604 = vpow.pop %v603
    %v605 = vsub.f32 %v604, 1.0
    %v606 = vsel %vm601, %v600, %v605
    %v607 = vpack.c.bf16 %v606, %v606
    %v609 = vsel %vm207, %v607, 0
    %611 = vmatprep.subr.bf16.mxu0 0
    %612 = vmatpush1.bf16.msra.mxu0 %v203
    %613 = vmatprep.subr.bf16.mxu0 0
    %614 = vmatpush1.bf16.msra.mxu0 %v204
    %615 = vmatprep.subr.bf16.mxu0 0
    %616 = vmatpush1.bf16.msra.mxu0 0
    %617 = vmatprep.subr.bf16.mxu0 0
    %618 = vmatpush1.bf16.msra.mxu0 0
    %619 = vmatprep.subr.bf16.mxu0 0
    %620 = vmatpush1.bf16.msra.mxu0 0
    %621 = vmatprep.subr.bf16.mxu0 0
    %622 = vmatpush1.bf16.msra.mxu0 0
    %623 = vmatprep.subr.bf16.mxu0 0
    %624 = vmatpush1.bf16.msra.mxu0 0
    %625 = vmatprep.subr.bf16.mxu0 0
    %626 = vmatpush1.bf16.msra.mxu0 0
    %627 = vmatprep.subr.bf16.mxu0 0
    %628 = vmatpush1.bf16.msra.mxu0 0
    %629 = vmatprep.subr.bf16.mxu0 0
    %630 = vmatpush1.bf16.msra.mxu0 0
    %631 = vmatprep.subr.bf16.mxu0 0
    %632 = vmatpush1.bf16.msra.mxu0 0
    %633 = vmatprep.subr.bf16.mxu0 0
    %634 = vmatpush1.bf16.msra.mxu0 0
    %635 = vmatprep.subr.bf16.mxu0 0
    %636 = vmatpush1.bf16.msra.mxu0 0
    %637 = vmatprep.subr.bf16.mxu0 0
    %638 = vmatpush1.bf16.msra.mxu0 0
    %639 = vmatprep.subr.bf16.mxu0 0
    %640 = vmatpush1.bf16.msra.mxu0 0
    %641 = vmatprep.subr.bf16.mxu0 0
    %642 = vmatpush1.bf16.msra.mxu0 0
    %643 = vmatprep.mubr.bf16.mxu0 0
    %644 = vmatmul.mubr.bf16.gmra.mrb[0].mxu0 %v609
    %v645 = vpop.f32.mrb[0].mxu0
    %v646 = vadd.f32 %v61, %v645
    %v647 = vpop.f32.mrb[0].mxu0
    %v648 = vpop.f32.mrb[0].mxu0
    %v649 = vpop.f32.mrb[0].mxu0
    %650 = vdwg.mxu0
    %vm651 = vcmp.gt.f32.partialorder %v646, 0.0
    %v652 = vmin.f32 %v646, 0.0
    %v653 = vmul.f32 %v652, 1.442695
    %v654 = vpow.pop %v653
    %v655 = vsub.f32 %v654, 1.0
    %v656 = vsel %vm651, %v646, %v655
    %v657 = vpack.c.bf16 %v656, %v656
    %v659 = vsel %vm207, %v657, 0
    %661 = vmatprep.subr.bf16.mxu0 0
    %662 = vmatpush1.bf16.msra.mxu0 %v266
    %663 = vmatprep.subr.bf16.mxu0 0
    %664 = vmatpush1.bf16.msra.mxu0 %v267
    %665 = vmatprep.subr.bf16.mxu0 0
    %666 = vmatpush1.bf16.msra.mxu0 0
    %667 = vmatprep.subr.bf16.mxu0 0
    %668 = vmatpush1.bf16.msra.mxu0 0
    %669 = vmatprep.subr.bf16.mxu0 0
    %670 = vmatpush1.bf16.msra.mxu0 0
    %671 = vmatprep.subr.bf16.mxu0 0
    %672 = vmatpush1.bf16.msra.mxu0 0
    %673 = vmatprep.subr.bf16.mxu0 0
    %674 = vmatpush1.bf16.msra.mxu0 0
    %675 = vmatprep.subr.bf16.mxu0 0
    %676 = vmatpush1.bf16.msra.mxu0 0
    %677 = vmatprep.subr.bf16.mxu0 0
    %678 = vmatpush1.bf16.msra.mxu0 0
    %679 = vmatprep.subr.bf16.mxu0 0
    %680 = vmatpush1.bf16.msra.mxu0 0
    %681 = vmatprep.subr.bf16.mxu0 0
    %682 = vmatpush1.bf16.msra.mxu0 0
    %683 = vmatprep.subr.bf16.mxu0 0
    %684 = vmatpush1.bf16.msra.mxu0 0
    %685 = vmatprep.subr.bf16.mxu0 0
    %686 = vmatpush1.bf16.msra.mxu0 0
    %687 = vmatprep.subr.bf16.mxu0 0
    %688 = vmatpush1.bf16.msra.mxu0 0
    %689 = vmatprep.subr.bf16.mxu0 0
    %690 = vmatpush1.bf16.msra.mxu0 0
    %691 = vmatprep.subr.bf16.mxu0 0
    %692 = vmatpush1.bf16.msra.mxu0 0
    %693 = vmatprep.mubr.bf16.mxu0 0
    %694 = vmatmul.mubr.bf16.gmra.mrb[0].mxu0 %v659
    %v695 = vpop.f32.mrb[0].mxu0
    %v696 = vadd.f32 %v68, %v695
    %v697 = vpop.f32.mrb[0].mxu0
    %v698 = vpop.f32.mrb[0].mxu0
    %v699 = vpop.f32.mrb[0].mxu0
    %700 = vdwg.mxu0
    %v701 = vstv %s90
    %v702 = vmul.f32 %v701, %v511
    %v703 = vadd.f32 %v82, %v702
    %v704 = vmul.f32 %v701, %v696
    %v705 = vadd.f32 %v83, %v704
    %v706 = vpack.c.bf16 %v703, %v703
    %v707 = vpack.c.bf16 %v705, %v705
    %v709 = vsel %vm93, %v707, 0
    %711 = vmatprep.subr.bf16.mxu0 0
    %712 = vmatpush1.bf16.msra.mxu0 %v99
    %713 = vmatprep.subr.bf16.mxu0 0
    %714 = vmatpush1.bf16.msra.mxu0 0
    %715 = vmatprep.subr.bf16.mxu0 0
    %716 = vmatpush1.bf16.msra.mxu0 0
    %717 = vmatprep.subr.bf16.mxu0 0
    %718 = vmatpush1.bf16.msra.mxu0 0
    %719 = vmatprep.subr.bf16.mxu0 0
    %720 = vmatpush1.bf16.msra.mxu0 0
    %721 = vmatprep.subr.bf16.mxu0 0
    %722 = vmatpush1.bf16.msra.mxu0 0
    %723 = vmatprep.subr.bf16.mxu0 0
    %724 = vmatpush1.bf16.msra.mxu0 0
    %725 = vmatprep.subr.bf16.mxu0 0
    %726 = vmatpush1.bf16.msra.mxu0 0
    %727 = vmatprep.subr.bf16.mxu0 0
    %728 = vmatpush1.bf16.msra.mxu0 0
    %729 = vmatprep.subr.bf16.mxu0 0
    %730 = vmatpush1.bf16.msra.mxu0 0
    %731 = vmatprep.subr.bf16.mxu0 0
    %732 = vmatpush1.bf16.msra.mxu0 0
    %733 = vmatprep.subr.bf16.mxu0 0
    %734 = vmatpush1.bf16.msra.mxu0 0
    %735 = vmatprep.subr.bf16.mxu0 0
    %736 = vmatpush1.bf16.msra.mxu0 0
    %737 = vmatprep.subr.bf16.mxu0 0
    %738 = vmatpush1.bf16.msra.mxu0 0
    %739 = vmatprep.subr.bf16.mxu0 0
    %740 = vmatpush1.bf16.msra.mxu0 0
    %741 = vmatprep.subr.bf16.mxu0 0
    %742 = vmatpush1.bf16.msra.mxu0 0
    %743 = vmatprep.mubr.bf16.mxu0 0
    %744 = vmatmul.mubr.bf16.gmra.mrb[0].mxu0 %v709
    %v745 = vpop.f32.mrb[0].mxu0
    %v746 = vadd.f32 0.0, %v745
    %v747 = vpop.f32.mrb[0].mxu0
    %v748 = vpop.f32.mrb[0].mxu0
    %v749 = vpop.f32.mrb[0].mxu0
    %750 = vdwg.mxu0
    %v752 = vsel %vm93, %v706, 0
    %754 = vmatprep.subr.bf16.mxu0 0
    %755 = vmatpush1.bf16.msra.mxu0 %v145
    %756 = vmatprep.subr.bf16.mxu0 0
    %757 = vmatpush1.bf16.msra.mxu0 0
    %758 = vmatprep.subr.bf16.mxu0 0
    %759 = vmatpush1.bf16.msra.mxu0 0
    %760 = vmatprep.subr.bf16.mxu0 0
    %761 = vmatpush1.bf16.msra.mxu0 0
    %762 = vmatprep.subr.bf16.mxu0 0
    %763 = vmatpush1.bf16.msra.mxu0 0
    %764 = vmatprep.subr.bf16.mxu0 0
    %765 = vmatpush1.bf16.msra.mxu0 0
    %766 = vmatprep.subr.bf16.mxu0 0
    %767 = vmatpush1.bf16.msra.mxu0 0
    %768 = vmatprep.subr.bf16.mxu0 0
    %769 = vmatpush1.bf16.msra.mxu0 0
    %770 = vmatprep.subr.bf16.mxu0 0
    %771 = vmatpush1.bf16.msra.mxu0 0
    %772 = vmatprep.subr.bf16.mxu0 0
    %773 = vmatpush1.bf16.msra.mxu0 0
    %774 = vmatprep.subr.bf16.mxu0 0
    %775 = vmatpush1.bf16.msra.mxu0 0
    %776 = vmatprep.subr.bf16.mxu0 0
    %777 = vmatpush1.bf16.msra.mxu0 0
    %778 = vmatprep.subr.bf16.mxu0 0
    %779 = vmatpush1.bf16.msra.mxu0 0
    %780 = vmatprep.subr.bf16.mxu0 0
    %781 = vmatpush1.bf16.msra.mxu0 0
    %782 = vmatprep.subr.bf16.mxu0 0
    %783 = vmatpush1.bf16.msra.mxu0 0
    %784 = vmatprep.subr.bf16.mxu0 0
    %785 = vmatpush1.bf16.msra.mxu0 0
    %786 = vmatprep.mubr.bf16.mxu0 0
    %787 = vmatmul.mubr.bf16.gmra.mrb[0].mxu0 %v752
    %v788 = vpop.f32.mrb[0].mxu0
    %v789 = vadd.f32 %v746, %v788
    %v790 = vpop.f32.mrb[0].mxu0
    %v791 = vpop.f32.mrb[0].mxu0
    %v792 = vpop.f32.mrb[0].mxu0
    %793 = vdwg.mxu0
    %v794 = vadd.f32 %v789, %v54
    %vm795 = vcmp.gt.f32.partialorder %v794, 0.0
    %v796 = vmin.f32 %v794, 0.0
    %v797 = vmul.f32 %v796, 1.442695
    %v798 = vpow.pop %v797
    %v799 = vsub.f32 %v798, 1.0
    %v800 = vsel %vm795, %v794, %v799
    %v801 = vpack.c.bf16 %v800, %v800
    %v803 = vsel %vm207, %v801, 0
    %805 = vmatprep.subr.bf16.mxu0 0
    %806 = vmatpush1.bf16.msra.mxu0 %v203
    %807 = vmatprep.subr.bf16.mxu0 0
    %808 = vmatpush1.bf16.msra.mxu0 %v204
    %809 = vmatprep.subr.bf16.mxu0 0
    %810 = vmatpush1.bf16.msra.mxu0 0
    %811 = vmatprep.subr.bf16.mxu0 0
    %812 = vmatpush1.bf16.msra.mxu0 0
    %813 = vmatprep.subr.bf16.mxu0 0
    %814 = vmatpush1.bf16.msra.mxu0 0
    %815 = vmatprep.subr.bf16.mxu0 0
    %816 = vmatpush1.bf16.msra.mxu0 0
    %817 = vmatprep.subr.bf16.mxu0 0
    %818 = vmatpush1.bf16.msra.mxu0 0
    %819 = vmatprep.subr.bf16.mxu0 0
    %820 = vmatpush1.bf16.msra.mxu0 0
    %821 = vmatprep.subr.bf16.mxu0 0
    %822 = vmatpush1.bf16.msra.mxu0 0
    %823 = vmatprep.subr.bf16.mxu0 0
    %824 = vmatpush1.bf16.msra.mxu0 0
    %825 = vmatprep.subr.bf16.mxu0 0
    %826 = vmatpush1.bf16.msra.mxu0 0
    %827 = vmatprep.subr.bf16.mxu0 0
    %828 = vmatpush1.bf16.msra.mxu0 0
    %829 = vmatprep.subr.bf16.mxu0 0
    %830 = vmatpush1.bf16.msra.mxu0 0
    %831 = vmatprep.subr.bf16.mxu0 0
    %832 = vmatpush1.bf16.msra.mxu0 0
    %833 = vmatprep.subr.bf16.mxu0 0
    %834 = vmatpush1.bf16.msra.mxu0 0
    %835 = vmatprep.subr.bf16.mxu0 0
    %836 = vmatpush1.bf16.msra.mxu0 0
    %837 = vmatprep.mubr.bf16.mxu0 0
    %838 = vmatmul.mubr.bf16.gmra.mrb[0].mxu0 %v803
    %v839 = vpop.f32.mrb[0].mxu0
    %v840 = vadd.f32 %v61, %v839
    %v841 = vpop.f32.mrb[0].mxu0
    %v842 = vpop.f32.mrb[0].mxu0
    %v843 = vpop.f32.mrb[0].mxu0
    %844 = vdwg.mxu0
    %vm845 = vcmp.gt.f32.partialorder %v840, 0.0
    %v846 = vmin.f32 %v840, 0.0
    %v847 = vmul.f32 %v846, 1.442695
    %v848 = vpow.pop %v847
    %v849 = vsub.f32 %v848, 1.0
    %v850 = vsel %vm845, %v840, %v849
    %v851 = vpack.c.bf16 %v850, %v850
    %v853 = vsel %vm207, %v851, 0
    %855 = vmatprep.subr.bf16.mxu0 0
    %856 = vmatpush1.bf16.msra.mxu0 %v266
    %857 = vmatprep.subr.bf16.mxu0 0
    %858 = vmatpush1.bf16.msra.mxu0 %v267
    %859 = vmatprep.subr.bf16.mxu0 0
    %860 = vmatpush1.bf16.msra.mxu0 0
    %861 = vmatprep.subr.bf16.mxu0 0
    %862 = vmatpush1.bf16.msra.mxu0 0
    %863 = vmatprep.subr.bf16.mxu0 0
    %864 = vmatpush1.bf16.msra.mxu0 0
    %865 = vmatprep.subr.bf16.mxu0 0
    %866 = vmatpush1.bf16.msra.mxu0 0
    %867 = vmatprep.subr.bf16.mxu0 0
    %868 = vmatpush1.bf16.msra.mxu0 0
    %869 = vmatprep.subr.bf16.mxu0 0
    %870 = vmatpush1.bf16.msra.mxu0 0
    %871 = vmatprep.subr.bf16.mxu0 0
    %872 = vmatpush1.bf16.msra.mxu0 0
    %873 = vmatprep.subr.bf16.mxu0 0
    %874 = vmatpush1.bf16.msra.mxu0 0
    %875 = vmatprep.subr.bf16.mxu0 0
    %876 = vmatpush1.bf16.msra.mxu0 0
    %877 = vmatprep.subr.bf16.mxu0 0
    %878 = vmatpush1.bf16.msra.mxu0 0
    %879 = vmatprep.subr.bf16.mxu0 0
    %880 = vmatpush1.bf16.msra.mxu0 0
    %881 = vmatprep.subr.bf16.mxu0 0
    %882 = vmatpush1.bf16.msra.mxu0 0
    %883 = vmatprep.subr.bf16.mxu0 0
    %884 = vmatpush1.bf16.msra.mxu0 0
    %885 = vmatprep.subr.bf16.mxu0 0
    %886 = vmatpush1.bf16.msra.mxu0 0
    %887 = vmatprep.mubr.bf16.mxu0 0
    %888 = vmatmul.mubr.bf16.gmra.mrb[0].mxu0 %v853
    %v889 = vpop.f32.mrb[0].mxu0
    %v890 = vadd.f32 %v68, %v889
    %v891 = vpop.f32.mrb[0].mxu0
    %v892 = vpop.f32.mrb[0].mxu0
    %v893 = vpop.f32.mrb[0].mxu0
    %894 = vdwg.mxu0
    %v895 = vrcp.pop 6.0
    %s896 = vtos %v895
    %s897 = smul.f32 %s90, %s896
    %v898 = vmul.f32 %v318, 2.0
    %v899 = vadd.f32 %v83, %v898
    %v900 = vmul.f32 %v511, 2.0
    %v901 = vadd.f32 %v899, %v900
    %v902 = vadd.f32 %v901, %v705
    %v903 = vstv %s897
    %v904 = vmul.f32 %v903, %v902
    %v905 = vadd.f32 %v82, %v904
    %v906 = vmul.f32 %v503, 2.0
    %v907 = vadd.f32 %v308, %v906
    %v908 = vmul.f32 %v696, 2.0
    %v909 = vadd.f32 %v907, %v908
    %v910 = vadd.f32 %v909, %v890
    %v911 = vmul.f32 %v903, %v910
    %v912 = vadd.f32 %v83, %v911
    %v913 = vpack.c.bf16 %v905, %v905
    %v914 = vpack.c.bf16 %v912, %v912
    %v916 = vsel %vm93, %v914, 0
    %918 = vmatprep.subr.bf16.mxu0 0
    %919 = vmatpush1.bf16.msra.mxu0 %v99
    %920 = vmatprep.subr.bf16.mxu0 0
    %921 = vmatpush1.bf16.msra.mxu0 0
    %922 = vmatprep.subr.bf16.mxu0 0
    %923 = vmatpush1.bf16.msra.mxu0 0
    %924 = vmatprep.subr.bf16.mxu0 0
    %925 = vmatpush1.bf16.msra.mxu0 0
    %926 = vmatprep.subr.bf16.mxu0 0
    %927 = vmatpush1.bf16.msra.mxu0 0
    %928 = vmatprep.subr.bf16.mxu0 0
    %929 = vmatpush1.bf16.msra.mxu0 0
    %930 = vmatprep.subr.bf16.mxu0 0
    %931 = vmatpush1.bf16.msra.mxu0 0
    %932 = vmatprep.subr.bf16.mxu0 0
    %933 = vmatpush1.bf16.msra.mxu0 0
    %934 = vmatprep.subr.bf16.mxu0 0
    %935 = vmatpush1.bf16.msra.mxu0 0
    %936 = vmatprep.subr.bf16.mxu0 0
    %937 = vmatpush1.bf16.msra.mxu0 0
    %938 = vmatprep.subr.bf16.mxu0 0
    %939 = vmatpush1.bf16.msra.mxu0 0
    %940 = vmatprep.subr.bf16.mxu0 0
    %941 = vmatpush1.bf16.msra.mxu0 0
    %942 = vmatprep.subr.bf16.mxu0 0
    %943 = vmatpush1.bf16.msra.mxu0 0
    %944 = vmatprep.subr.bf16.mxu0 0
    %945 = vmatpush1.bf16.msra.mxu0 0
    %946 = vmatprep.subr.bf16.mxu0 0
    %947 = vmatpush1.bf16.msra.mxu0 0
    %948 = vmatprep.subr.bf16.mxu0 0
    %949 = vmatpush1.bf16.msra.mxu0 0
    %950 = vmatprep.mubr.bf16.mxu0 0
    %951 = vmatmul.mubr.bf16.gmra.mrb[0].mxu0 %v916
    %v952 = vpop.f32.mrb[0].mxu0
    %v953 = vadd.f32 0.0, %v952
    %v954 = vpop.f32.mrb[0].mxu0
    %v955 = vpop.f32.mrb[0].mxu0
    %v956 = vpop.f32.mrb[0].mxu0
    %957 = vdwg.mxu0
    %v959 = vsel %vm93, %v913, 0
    %961 = vmatprep.subr.bf16.mxu0 0
    %962 = vmatpush1.bf16.msra.mxu0 %v145
    %963 = vmatprep.subr.bf16.mxu0 0
    %964 = vmatpush1.bf16.msra.mxu0 0
    %965 = vmatprep.subr.bf16.mxu0 0
    %966 = vmatpush1.bf16.msra.mxu0 0
    %967 = vmatprep.subr.bf16.mxu0 0
    %968 = vmatpush1.bf16.msra.mxu0 0
    %969 = vmatprep.subr.bf16.mxu0 0
    %970 = vmatpush1.bf16.msra.mxu0 0
    %971 = vmatprep.subr.bf16.mxu0 0
    %972 = vmatpush1.bf16.msra.mxu0 0
    %973 = vmatprep.subr.bf16.mxu0 0
    %974 = vmatpush1.bf16.msra.mxu0 0
    %975 = vmatprep.subr.bf16.mxu0 0
    %976 = vmatpush1.bf16.msra.mxu0 0
    %977 = vmatprep.subr.bf16.mxu0 0
    %978 = vmatpush1.bf16.msra.mxu0 0
    %979 = vmatprep.subr.bf16.mxu0 0
    %980 = vmatpush1.bf16.msra.mxu0 0
    %981 = vmatprep.subr.bf16.mxu0 0
    %982 = vmatpush1.bf16.msra.mxu0 0
    %983 = vmatprep.subr.bf16.mxu0 0
    %984 = vmatpush1.bf16.msra.mxu0 0
    %985 = vmatprep.subr.bf16.mxu0 0
    %986 = vmatpush1.bf16.msra.mxu0 0
    %987 = vmatprep.subr.bf16.mxu0 0
    %988 = vmatpush1.bf16.msra.mxu0 0
    %989 = vmatprep.subr.bf16.mxu0 0
    %990 = vmatpush1.bf16.msra.mxu0 0
    %991 = vmatprep.subr.bf16.mxu0 0
    %992 = vmatpush1.bf16.msra.mxu0 0
    %993 = vmatprep.mubr.bf16.mxu0 0
    %994 = vmatmul.mubr.bf16.gmra.mrb[0].mxu0 %v959
    %v995 = vpop.f32.mrb[0].mxu0
    %v996 = vadd.f32 %v953, %v995
    %v997 = vpop.f32.mrb[0].mxu0
    %v998 = vpop.f32.mrb[0].mxu0
    %v999 = vpop.f32.mrb[0].mxu0
    %1000 = vdwg.mxu0
    %v1001 = vadd.f32 %v996, %v54
    %vm1002 = vcmp.gt.f32.partialorder %v1001, 0.0
    %v1003 = vmin.f32 %v1001, 0.0
    %v1004 = vmul.f32 %v1003, 1.442695
    %v1005 = vpow.pop %v1004
    %v1006 = vsub.f32 %v1005, 1.0
    %v1007 = vsel %vm1002, %v1001, %v1006
    %v1008 = vpack.c.bf16 %v1007, %v1007
    %v1010 = vsel %vm207, %v1008, 0
    %1012 = vmatprep.subr.bf16.mxu0 0
    %1013 = vmatpush1.bf16.msra.mxu0 %v203
    %1014 = vmatprep.subr.bf16.mxu0 0
    %1015 = vmatpush1.bf16.msra.mxu0 %v204
    %1016 = vmatprep.subr.bf16.mxu0 0
    %1017 = vmatpush1.bf16.msra.mxu0 0
    %1018 = vmatprep.subr.bf16.mxu0 0
    %1019 = vmatpush1.bf16.msra.mxu0 0
    %1020 = vmatprep.subr.bf16.mxu0 0
    %1021 = vmatpush1.bf16.msra.mxu0 0
    %1022 = vmatprep.subr.bf16.mxu0 0
    %1023 = vmatpush1.bf16.msra.mxu0 0
    %1024 = vmatprep.subr.bf16.mxu0 0
    %1025 = vmatpush1.bf16.msra.mxu0 0
    %1026 = vmatprep.subr.bf16.mxu0 0
    %1027 = vmatpush1.bf16.msra.mxu0 0
    %1028 = vmatprep.subr.bf16.mxu0 0
    %1029 = vmatpush1.bf16.msra.mxu0 0
    %1030 = vmatprep.subr.bf16.mxu0 0
    %1031 = vmatpush1.bf16.msra.mxu0 0
    %1032 = vmatprep.subr.bf16.mxu0 0
    %1033 = vmatpush1.bf16.msra.mxu0 0
    %1034 = vmatprep.subr.bf16.mxu0 0
    %1035 = vmatpush1.bf16.msra.mxu0 0
    %1036 = vmatprep.subr.bf16.mxu0 0
    %1037 = vmatpush1.bf16.msra.mxu0 0
    %1038 = vmatprep.subr.bf16.mxu0 0
    %1039 = vmatpush1.bf16.msra.mxu0 0
    %1040 = vmatprep.subr.bf16.mxu0 0
    %1041 = vmatpush1.bf16.msra.mxu0 0
    %1042 = vmatprep.subr.bf16.mxu0 0
    %1043 = vmatpush1.bf16.msra.mxu0 0
    %1044 = vmatprep.mubr.bf16.mxu0 0
    %1045 = vmatmul.mubr.bf16.gmra.mrb[0].mxu0 %v1010
    %v1046 = vpop.f32.mrb[0].mxu0
    %v1047 = vadd.f32 %v61, %v1046
    %v1048 = vpop.f32.mrb[0].mxu0
    %v1049 = vpop.f32.mrb[0].mxu0
    %v1050 = vpop.f32.mrb[0].mxu0
    %1051 = vdwg.mxu0
    %vm1052 = vcmp.gt.f32.partialorder %v1047, 0.0
    %v1053 = vmin.f32 %v1047, 0.0
    %v1054 = vmul.f32 %v1053, 1.442695
    %v1055 = vpow.pop %v1054
    %v1056 = vsub.f32 %v1055, 1.0
    %v1057 = vsel %vm1052, %v1047, %v1056
    %v1058 = vpack.c.bf16 %v1057, %v1057
    %v1060 = vsel %vm207, %v1058, 0
    %1062 = vmatprep.subr.bf16.mxu0 0
    %1063 = vmatpush1.bf16.msra.mxu0 %v266
    %1064 = vmatprep.subr.bf16.mxu0 0
    %1065 = vmatpush1.bf16.msra.mxu0 %v267
    %1066 = vmatprep.subr.bf16.mxu0 0
    %1067 = vmatpush1.bf16.msra.mxu0 0
    %1068 = vmatprep.subr.bf16.mxu0 0
    %1069 = vmatpush1.bf16.msra.mxu0 0
    %1070 = vmatprep.subr.bf16.mxu0 0
    %1071 = vmatpush1.bf16.msra.mxu0 0
    %1072 = vmatprep.subr.bf16.mxu0 0
    %1073 = vmatpush1.bf16.msra.mxu0 0
    %1074 = vmatprep.subr.bf16.mxu0 0
    %1075 = vmatpush1.bf16.msra.mxu0 0
    %1076 = vmatprep.subr.bf16.mxu0 0
    %1077 = vmatpush1.bf16.msra.mxu0 0
    %1078 = vmatprep.subr.bf16.mxu0 0
    %1079 = vmatpush1.bf16.msra.mxu0 0
    %1080 = vmatprep.subr.bf16.mxu0 0
    %1081 = vmatpush1.bf16.msra.mxu0 0
    %1082 = vmatprep.subr.bf16.mxu0 0
    %1083 = vmatpush1.bf16.msra.mxu0 0
    %1084 = vmatprep.subr.bf16.mxu0 0
    %1085 = vmatpush1.bf16.msra.mxu0 0
    %1086 = vmatprep.subr.bf16.mxu0 0
    %1087 = vmatpush1.bf16.msra.mxu0 0
    %1088 = vmatprep.subr.bf16.mxu0 0
    %1089 = vmatpush1.bf16.msra.mxu0 0
    %1090 = vmatprep.subr.bf16.mxu0 0
    %1091 = vmatpush1.bf16.msra.mxu0 0
    %1092 = vmatprep.subr.bf16.mxu0 0
    %1093 = vmatpush1.bf16.msra.mxu0 0
    %1094 = vmatprep.mubr.bf16.mxu0 0
    %1095 = vmatmul.mubr.bf16.gmra.mrb[0].mxu0 %v1060
    %v1096 = vpop.f32.mrb[0].mxu0
    %v1097 = vadd.f32 %v68, %v1096
    %v1098 = vpop.f32.mrb[0].mxu0
    %v1099 = vpop.f32.mrb[0].mxu0
    %v1100 = vpop.f32.mrb[0].mxu0
    %1101 = vdwg.mxu0
    %v1102 = vmul.f32 %v314, %v912
    %v1103 = vadd.f32 %v905, %v1102
    %v1104 = vmul.f32 %v314, %v1097
    %v1105 = vadd.f32 %v912, %v1104
    %v1106 = vpack.c.bf16 %v1103, %v1103
    %v1107 = vpack.c.bf16 %v1105, %v1105
    %v1109 = vsel %vm93, %v1107, 0
    %1111 = vmatprep.subr.bf16.mxu0 0
    %1112 = vmatpush1.bf16.msra.mxu0 %v99
    %1113 = vmatprep.subr.bf16.mxu0 0
    %1114 = vmatpush1.bf16.msra.mxu0 0
    %1115 = vmatprep.subr.bf16.mxu0 0
    %1116 = vmatpush1.bf16.msra.mxu0 0
    %1117 = vmatprep.subr.bf16.mxu0 0
    %1118 = vmatpush1.bf16.msra.mxu0 0
    %1119 = vmatprep.subr.bf16.mxu0 0
    %1120 = vmatpush1.bf16.msra.mxu0 0
    %1121 = vmatprep.subr.bf16.mxu0 0
    %1122 = vmatpush1.bf16.msra.mxu0 0
    %1123 = vmatprep.subr.bf16.mxu0 0
    %1124 = vmatpush1.bf16.msra.mxu0 0
    %1125 = vmatprep.subr.bf16.mxu0 0
    %1126 = vmatpush1.bf16.msra.mxu0 0
    %1127 = vmatprep.subr.bf16.mxu0 0
    %1128 = vmatpush1.bf16.msra.mxu0 0
    %1129 = vmatprep.subr.bf16.mxu0 0
    %1130 = vmatpush1.bf16.msra.mxu0 0
    %1131 = vmatprep.subr.bf16.mxu0 0
    %1132 = vmatpush1.bf16.msra.mxu0 0
    %1133 = vmatprep.subr.bf16.mxu0 0
    %1134 = vmatpush1.bf16.msra.mxu0 0
    %1135 = vmatprep.subr.bf16.mxu0 0
    %1136 = vmatpush1.bf16.msra.mxu0 0
    %1137 = vmatprep.subr.bf16.mxu0 0
    %1138 = vmatpush1.bf16.msra.mxu0 0
    %1139 = vmatprep.subr.bf16.mxu0 0
    %1140 = vmatpush1.bf16.msra.mxu0 0
    %1141 = vmatprep.subr.bf16.mxu0 0
    %1142 = vmatpush1.bf16.msra.mxu0 0
    %1143 = vmatprep.mubr.bf16.mxu0 0
    %1144 = vmatmul.mubr.bf16.gmra.mrb[0].mxu0 %v1109
    %v1145 = vpop.f32.mrb[0].mxu0
    %v1146 = vadd.f32 0.0, %v1145
    %v1147 = vpop.f32.mrb[0].mxu0
    %v1148 = vpop.f32.mrb[0].mxu0
    %v1149 = vpop.f32.mrb[0].mxu0
    %1150 = vdwg.mxu0
    %v1152 = vsel %vm93, %v1106, 0
    %1154 = vmatprep.subr.bf16.mxu0 0
    %1155 = vmatpush1.bf16.msra.mxu0 %v145
    %1156 = vmatprep.subr.bf16.mxu0 0
    %1157 = vmatpush1.bf16.msra.mxu0 0
    %1158 = vmatprep.subr.bf16.mxu0 0
    %1159 = vmatpush1.bf16.msra.mxu0 0
    %1160 = vmatprep.subr.bf16.mxu0 0
    %1161 = vmatpush1.bf16.msra.mxu0 0
    %1162 = vmatprep.subr.bf16.mxu0 0
    %1163 = vmatpush1.bf16.msra.mxu0 0
    %1164 = vmatprep.subr.bf16.mxu0 0
    %1165 = vmatpush1.bf16.msra.mxu0 0
    %1166 = vmatprep.subr.bf16.mxu0 0
    %1167 = vmatpush1.bf16.msra.mxu0 0
    %1168 = vmatprep.subr.bf16.mxu0 0
    %1169 = vmatpush1.bf16.msra.mxu0 0
    %1170 = vmatprep.subr.bf16.mxu0 0
    %1171 = vmatpush1.bf16.msra.mxu0 0
    %1172 = vmatprep.subr.bf16.mxu0 0
    %1173 = vmatpush1.bf16.msra.mxu0 0
    %1174 = vmatprep.subr.bf16.mxu0 0
    %1175 = vmatpush1.bf16.msra.mxu0 0
    %1176 = vmatprep.subr.bf16.mxu0 0
    %1177 = vmatpush1.bf16.msra.mxu0 0
    %1178 = vmatprep.subr.bf16.mxu0 0
    %1179 = vmatpush1.bf16.msra.mxu0 0
    %1180 = vmatprep.subr.bf16.mxu0 0
    %1181 = vmatpush1.bf16.msra.mxu0 0
    %1182 = vmatprep.subr.bf16.mxu0 0
    %1183 = vmatpush1.bf16.msra.mxu0 0
    %1184 = vmatprep.subr.bf16.mxu0 0
    %1185 = vmatpush1.bf16.msra.mxu0 0
    %1186 = vmatprep.mubr.bf16.mxu0 0
    %1187 = vmatmul.mubr.bf16.gmra.mrb[0].mxu0 %v1152
    %v1188 = vpop.f32.mrb[0].mxu0
    %v1189 = vadd.f32 %v1146, %v1188
    %v1190 = vpop.f32.mrb[0].mxu0
    %v1191 = vpop.f32.mrb[0].mxu0
    %v1192 = vpop.f32.mrb[0].mxu0
    %1193 = vdwg.mxu0
    %v1194 = vadd.f32 %v1189, %v54
    %vm1195 = vcmp.gt.f32.partialorder %v1194, 0.0
    %v1196 = vmin.f32 %v1194, 0.0
    %v1197 = vmul.f32 %v1196, 1.442695
    %v1198 = vpow.pop %v1197
    %v1199 = vsub.f32 %v1198, 1.0
    %v1200 = vsel %vm1195, %v1194, %v1199
    %v1201 = vpack.c.bf16 %v1200, %v1200
    %v1203 = vsel %vm207, %v1201, 0
    %1205 = vmatprep.subr.bf16.mxu0 0
    %1206 = vmatpush1.bf16.msra.mxu0 %v203
    %1207 = vmatprep.subr.bf16.mxu0 0
    %1208 = vmatpush1.bf16.msra.mxu0 %v204
    %1209 = vmatprep.subr.bf16.mxu0 0
    %1210 = vmatpush1.bf16.msra.mxu0 0
    %1211 = vmatprep.subr.bf16.mxu0 0
    %1212 = vmatpush1.bf16.msra.mxu0 0
    %1213 = vmatprep.subr.bf16.mxu0 0
    %1214 = vmatpush1.bf16.msra.mxu0 0
    %1215 = vmatprep.subr.bf16.mxu0 0
    %1216 = vmatpush1.bf16.msra.mxu0 0
    %1217 = vmatprep.subr.bf16.mxu0 0
    %1218 = vmatpush1.bf16.msra.mxu0 0
    %1219 = vmatprep.subr.bf16.mxu0 0
    %1220 = vmatpush1.bf16.msra.mxu0 0
    %1221 = vmatprep.subr.bf16.mxu0 0
    %1222 = vmatpush1.bf16.msra.mxu0 0
    %1223 = vmatprep.subr.bf16.mxu0 0
    %1224 = vmatpush1.bf16.msra.mxu0 0
    %1225 = vmatprep.subr.bf16.mxu0 0
    %1226 = vmatpush1.bf16.msra.mxu0 0
    %1227 = vmatprep.subr.bf16.mxu0 0
    %1228 = vmatpush1.bf16.msra.mxu0 0
    %1229 = vmatprep.subr.bf16.mxu0 0
    %1230 = vmatpush1.bf16.msra.mxu0 0
    %1231 = vmatprep.subr.bf16.mxu0 0
    %1232 = vmatpush1.bf16.msra.mxu0 0
    %1233 = vmatprep.subr.bf16.mxu0 0
    %1234 = vmatpush1.bf16.msra.mxu0 0
    %1235 = vmatprep.subr.bf16.mxu0 0
    %1236 = vmatpush1.bf16.msra.mxu0 0
    %1237 = vmatprep.mubr.bf16.mxu0 0
    %1238 = vmatmul.mubr.bf16.gmra.mrb[0].mxu0 %v1203
    %v1239 = vpop.f32.mrb[0].mxu0
    %v1240 = vadd.f32 %v61, %v1239
    %v1241 = vpop.f32.mrb[0].mxu0
    %v1242 = vpop.f32.mrb[0].mxu0
    %v1243 = vpop.f32.mrb[0].mxu0
    %1244 = vdwg.mxu0
    %vm1245 = vcmp.gt.f32.partialorder %v1240, 0.0
    %v1246 = vmin.f32 %v1240, 0.0
    %v1247 = vmul.f32 %v1246, 1.442695
    %v1248 = vpow.pop %v1247
    %v1249 = vsub.f32 %v1248, 1.0
    %v1250 = vsel %vm1245, %v1240, %v1249
    %v1251 = vpack.c.bf16 %v1250, %v1250
    %v1253 = vsel %vm207, %v1251, 0
    %1255 = vmatprep.subr.bf16.mxu0 0
    %1256 = vmatpush1.bf16.msra.mxu0 %v266
    %1257 = vmatprep.subr.bf16.mxu0 0
    %1258 = vmatpush1.bf16.msra.mxu0 %v267
    %1259 = vmatprep.subr.bf16.mxu0 0
    %1260 = vmatpush1.bf16.msra.mxu0 0
    %1261 = vmatprep.subr.bf16.mxu0 0
    %1262 = vmatpush1.bf16.msra.mxu0 0
    %1263 = vmatprep.subr.bf16.mxu0 0
    %1264 = vmatpush1.bf16.msra.mxu0 0
    %1265 = vmatprep.subr.bf16.mxu0 0
    %1266 = vmatpush1.bf16.msra.mxu0 0
    %1267 = vmatprep.subr.bf16.mxu0 0
    %1268 = vmatpush1.bf16.msra.mxu0 0
    %1269 = vmatprep.subr.bf16.mxu0 0
    %1270 = vmatpush1.bf16.msra.mxu0 0
    %1271 = vmatprep.subr.bf16.mxu0 0
    %1272 = vmatpush1.bf16.msra.mxu0 0
    %1273 = vmatprep.subr.bf16.mxu0 0
    %1274 = vmatpush1.bf16.msra.mxu0 0
    %1275 = vmatprep.subr.bf16.mxu0 0
    %1276 = vmatpush1.bf16.msra.mxu0 0
    %1277 = vmatprep.subr.bf16.mxu0 0
    %1278 = vmatpush1.bf16.msra.mxu0 0
    %1279 = vmatprep.subr.bf16.mxu0 0
    %1280 = vmatpush1.bf16.msra.mxu0 0
    %1281 = vmatprep.subr.bf16.mxu0 0
    %1282 = vmatpush1.bf16.msra.mxu0 0
    %1283 = vmatprep.subr.bf16.mxu0 0
    %1284 = vmatpush1.bf16.msra.mxu0 0
    %1285 = vmatprep.subr.bf16.mxu0 0
    %1286 = vmatpush1.bf16.msra.mxu0 0
    %1287 = vmatprep.mubr.bf16.mxu0 0
    %1288 = vmatmul.mubr.bf16.gmra.mrb[0].mxu0 %v1253
    %v1289 = vpop.f32.mrb[0].mxu0
    %v1290 = vadd.f32 %v68, %v1289
    %v1291 = vpop.f32.mrb[0].mxu0
    %v1292 = vpop.f32.mrb[0].mxu0
    %v1293 = vpop.f32.mrb[0].mxu0
    %1294 = vdwg.mxu0
    %v1295 = vmul.f32 %v314, %v1105
    %v1296 = vadd.f32 %v905, %v1295
    %v1297 = vmul.f32 %v314, %v1290
    %v1298 = vadd.f32 %v912, %v1297
    %v1299 = vpack.c.bf16 %v1296, %v1296
    %v1300 = vpack.c.bf16 %v1298, %v1298
    %v1302 = vsel %vm93, %v1300, 0
    %1304 = vmatprep.subr.bf16.mxu0 0
    %1305 = vmatpush1.bf16.msra.mxu0 %v99
    %1306 = vmatprep.subr.bf16.mxu0 0
    %1307 = vmatpush1.bf16.msra.mxu0 0
    %1308 = vmatprep.subr.bf16.mxu0 0
    %1309 = vmatpush1.bf16.msra.mxu0 0
    %1310 = vmatprep.subr.bf16.mxu0 0
    %1311 = vmatpush1.bf16.msra.mxu0 0
    %1312 = vmatprep.subr.bf16.mxu0 0
    %1313 = vmatpush1.bf16.msra.mxu0 0
    %1314 = vmatprep.subr.bf16.mxu0 0
    %1315 = vmatpush1.bf16.msra.mxu0 0
    %1316 = vmatprep.subr.bf16.mxu0 0
    %1317 = vmatpush1.bf16.msra.mxu0 0
    %1318 = vmatprep.subr.bf16.mxu0 0
    %1319 = vmatpush1.bf16.msra.mxu0 0
    %1320 = vmatprep.subr.bf16.mxu0 0
    %1321 = vmatpush1.bf16.msra.mxu0 0
    %1322 = vmatprep.subr.bf16.mxu0 0
    %1323 = vmatpush1.bf16.msra.mxu0 0
    %1324 = vmatprep.subr.bf16.mxu0 0
    %1325 = vmatpush1.bf16.msra.mxu0 0
    %1326 = vmatprep.subr.bf16.mxu0 0
    %1327 = vmatpush1.bf16.msra.mxu0 0
    %1328 = vmatprep.subr.bf16.mxu0 0
    %1329 = vmatpush1.bf16.msra.mxu0 0
    %1330 = vmatprep.subr.bf16.mxu0 0
    %1331 = vmatpush1.bf16.msra.mxu0 0
    %1332 = vmatprep.subr.bf16.mxu0 0
    %1333 = vmatpush1.bf16.msra.mxu0 0
    %1334 = vmatprep.subr.bf16.mxu0 0
    %1335 = vmatpush1.bf16.msra.mxu0 0
    %1336 = vmatprep.mubr.bf16.mxu0 0
    %1337 = vmatmul.mubr.bf16.gmra.mrb[0].mxu0 %v1302
    %v1338 = vpop.f32.mrb[0].mxu0
    %v1339 = vadd.f32 0.0, %v1338
    %v1340 = vpop.f32.mrb[0].mxu0
    %v1341 = vpop.f32.mrb[0].mxu0
    %v1342 = vpop.f32.mrb[0].mxu0
    %1343 = vdwg.mxu0
    %v1345 = vsel %vm93, %v1299, 0
    %1347 = vmatprep.subr.bf16.mxu0 0
    %1348 = vmatpush1.bf16.msra.mxu0 %v145
    %1349 = vmatprep.subr.bf16.mxu0 0
    %1350 = vmatpush1.bf16.msra.mxu0 0
    %1351 = vmatprep.subr.bf16.mxu0 0
    %1352 = vmatpush1.bf16.msra.mxu0 0
    %1353 = vmatprep.subr.bf16.mxu0 0
    %1354 = vmatpush1.bf16.msra.mxu0 0
    %1355 = vmatprep.subr.bf16.mxu0 0
    %1356 = vmatpush1.bf16.msra.mxu0 0
    %1357 = vmatprep.subr.bf16.mxu0 0
    %1358 = vmatpush1.bf16.msra.mxu0 0
    %1359 = vmatprep.subr.bf16.mxu0 0
    %1360 = vmatpush1.bf16.msra.mxu0 0
    %1361 = vmatprep.subr.bf16.mxu0 0
    %1362 = vmatpush1.bf16.msra.mxu0 0
    %1363 = vmatprep.subr.bf16.mxu0 0
    %1364 = vmatpush1.bf16.msra.mxu0 0
    %1365 = vmatprep.subr.bf16.mxu0 0
    %1366 = vmatpush1.bf16.msra.mxu0 0
    %1367 = vmatprep.subr.bf16.mxu0 0
    %1368 = vmatpush1.bf16.msra.mxu0 0
    %1369 = vmatprep.subr.bf16.mxu0 0
    %1370 = vmatpush1.bf16.msra.mxu0 0
    %1371 = vmatprep.subr.bf16.mxu0 0
    %1372 = vmatpush1.bf16.msra.mxu0 0
    %1373 = vmatprep.subr.bf16.mxu0 0
    %1374 = vmatpush1.bf16.msra.mxu0 0
    %1375 = vmatprep.subr.bf16.mxu0 0
    %1376 = vmatpush1.bf16.msra.mxu0 0
    %1377 = vmatprep.subr.bf16.mxu0 0
    %1378 = vmatpush1.bf16.msra.mxu0 0
    %1379 = vmatprep.mubr.bf16.mxu0 0
    %1380 = vmatmul.mubr.bf16.gmra.mrb[0].mxu0 %v1345
    %v1381 = vpop.f32.mrb[0].mxu0
    %v1382 = vadd.f32 %v1339, %v1381
    %v1383 = vpop.f32.mrb[0].mxu0
    %v1384 = vpop.f32.mrb[0].mxu0
    %v1385 = vpop.f32.mrb[0].mxu0
    %1386 = vdwg.mxu0
    %v1387 = vadd.f32 %v1382, %v54
    %vm1388 = vcmp.gt.f32.partialorder %v1387, 0.0
    %v1389 = vmin.f32 %v1387, 0.0
    %v1390 = vmul.f32 %v1389, 1.442695
    %v1391 = vpow.pop %v1390
    %v1392 = vsub.f32 %v1391, 1.0
    %v1393 = vsel %vm1388, %v1387, %v1392
    %v1394 = vpack.c.bf16 %v1393, %v1393
    %v1396 = vsel %vm207, %v1394, 0
    %1398 = vmatprep.subr.bf16.mxu0 0
    %1399 = vmatpush1.bf16.msra.mxu0 %v203
    %1400 = vmatprep.subr.bf16.mxu0 0
    %1401 = vmatpush1.bf16.msra.mxu0 %v204
    %1402 = vmatprep.subr.bf16.mxu0 0
    %1403 = vmatpush1.bf16.msra.mxu0 0
    %1404 = vmatprep.subr.bf16.mxu0 0
    %1405 = vmatpush1.bf16.msra.mxu0 0
    %1406 = vmatprep.subr.bf16.mxu0 0
    %1407 = vmatpush1.bf16.msra.mxu0 0
    %1408 = vmatprep.subr.bf16.mxu0 0
    %1409 = vmatpush1.bf16.msra.mxu0 0
    %1410 = vmatprep.subr.bf16.mxu0 0
    %1411 = vmatpush1.bf16.msra.mxu0 0
    %1412 = vmatprep.subr.bf16.mxu0 0
    %1413 = vmatpush1.bf16.msra.mxu0 0
    %1414 = vmatprep.subr.bf16.mxu0 0
    %1415 = vmatpush1.bf16.msra.mxu0 0
    %1416 = vmatprep.subr.bf16.mxu0 0
    %1417 = vmatpush1.bf16.msra.mxu0 0
    %1418 = vmatprep.subr.bf16.mxu0 0
    %1419 = vmatpush1.bf16.msra.mxu0 0
    %1420 = vmatprep.subr.bf16.mxu0 0
    %1421 = vmatpush1.bf16.msra.mxu0 0
    %1422 = vmatprep.subr.bf16.mxu0 0
    %1423 = vmatpush1.bf16.msra.mxu0 0
    %1424 = vmatprep.subr.bf16.mxu0 0
    %1425 = vmatpush1.bf16.msra.mxu0 0
    %1426 = vmatprep.subr.bf16.mxu0 0
    %1427 = vmatpush1.bf16.msra.mxu0 0
    %1428 = vmatprep.subr.bf16.mxu0 0
    %1429 = vmatpush1.bf16.msra.mxu0 0
    %1430 = vmatprep.mubr.bf16.mxu0 0
    %1431 = vmatmul.mubr.bf16.gmra.mrb[0].mxu0 %v1396
    %v1432 = vpop.f32.mrb[0].mxu0
    %v1433 = vadd.f32 %v61, %v1432
    %v1434 = vpop.f32.mrb[0].mxu0
    %v1435 = vpop.f32.mrb[0].mxu0
    %v1436 = vpop.f32.mrb[0].mxu0
    %1437 = vdwg.mxu0
    %vm1438 = vcmp.gt.f32.partialorder %v1433, 0.0
    %v1439 = vmin.f32 %v1433, 0.0
    %v1440 = vmul.f32 %v1439, 1.442695
    %v1441 = vpow.pop %v1440
    %v1442 = vsub.f32 %v1441, 1.0
    %v1443 = vsel %vm1438, %v1433, %v1442
    %v1444 = vpack.c.bf16 %v1443, %v1443
    %v1446 = vsel %vm207, %v1444, 0
    %1448 = vmatprep.subr.bf16.mxu0 0
    %1449 = vmatpush1.bf16.msra.mxu0 %v266
    %1450 = vmatprep.subr.bf16.mxu0 0
    %1451 = vmatpush1.bf16.msra.mxu0 %v267
    %1452 = vmatprep.subr.bf16.mxu0 0
    %1453 = vmatpush1.bf16.msra.mxu0 0
    %1454 = vmatprep.subr.bf16.mxu0 0
    %1455 = vmatpush1.bf16.msra.mxu0 0
    %1456 = vmatprep.subr.bf16.mxu0 0
    %1457 = vmatpush1.bf16.msra.mxu0 0
    %1458 = vmatprep.subr.bf16.mxu0 0
    %1459 = vmatpush1.bf16.msra.mxu0 0
    %1460 = vmatprep.subr.bf16.mxu0 0
    %1461 = vmatpush1.bf16.msra.mxu0 0
    %1462 = vmatprep.subr.bf16.mxu0 0
    %1463 = vmatpush1.bf16.msra.mxu0 0
    %1464 = vmatprep.subr.bf16.mxu0 0
    %1465 = vmatpush1.bf16.msra.mxu0 0
    %1466 = vmatprep.subr.bf16.mxu0 0
    %1467 = vmatpush1.bf16.msra.mxu0 0
    %1468 = vmatprep.subr.bf16.mxu0 0
    %1469 = vmatpush1.bf16.msra.mxu0 0
    %1470 = vmatprep.subr.bf16.mxu0 0
    %1471 = vmatpush1.bf16.msra.mxu0 0
    %1472 = vmatprep.subr.bf16.mxu0 0
    %1473 = vmatpush1.bf16.msra.mxu0 0
    %1474 = vmatprep.subr.bf16.mxu0 0
    %1475 = vmatpush1.bf16.msra.mxu0 0
    %1476 = vmatprep.subr.bf16.mxu0 0
    %1477 = vmatpush1.bf16.msra.mxu0 0
    %1478 = vmatprep.subr.bf16.mxu0 0
    %1479 = vmatpush1.bf16.msra.mxu0 0
    %1480 = vmatprep.mubr.bf16.mxu0 0
    %1481 = vmatmul.mubr.bf16.gmra.mrb[0].mxu0 %v1446
    %v1482 = vpop.f32.mrb[0].mxu0
    %v1483 = vadd.f32 %v68, %v1482
    %v1484 = vpop.f32.mrb[0].mxu0
    %v1485 = vpop.f32.mrb[0].mxu0
    %v1486 = vpop.f32.mrb[0].mxu0
    %1487 = vdwg.mxu0
    %v1488 = vmul.f32 %v701, %v1298
    %v1489 = vadd.f32 %v905, %v1488
    %v1490 = vmul.f32 %v701, %v1483
    %v1491 = vadd.f32 %v912, %v1490
    %v1492 = vpack.c.bf16 %v1489, %v1489
    %v1493 = vpack.c.bf16 %v1491, %v1491
    %v1495 = vsel %vm93, %v1493, 0
    %1497 = vmatprep.subr.bf16.mxu0 0
    %1498 = vmatpush1.bf16.msra.mxu0 %v99
    %1499 = vmatprep.subr.bf16.mxu0 0
    %1500 = vmatpush1.bf16.msra.mxu0 0
    %1501 = vmatprep.subr.bf16.mxu0 0
    %1502 = vmatpush1.bf16.msra.mxu0 0
    %1503 = vmatprep.subr.bf16.mxu0 0
    %1504 = vmatpush1.bf16.msra.mxu0 0
    %1505 = vmatprep.subr.bf16.mxu0 0
    %1506 = vmatpush1.bf16.msra.mxu0 0
    %1507 = vmatprep.subr.bf16.mxu0 0
    %1508 = vmatpush1.bf16.msra.mxu0 0
    %1509 = vmatprep.subr.bf16.mxu0 0
    %1510 = vmatpush1.bf16.msra.mxu0 0
    %1511 = vmatprep.subr.bf16.mxu0 0
    %1512 = vmatpush1.bf16.msra.mxu0 0
    %1513 = vmatprep.subr.bf16.mxu0 0
    %1514 = vmatpush1.bf16.msra.mxu0 0
    %1515 = vmatprep.subr.bf16.mxu0 0
    %1516 = vmatpush1.bf16.msra.mxu0 0
    %1517 = vmatprep.subr.bf16.mxu0 0
    %1518 = vmatpush1.bf16.msra.mxu0 0
    %1519 = vmatprep.subr.bf16.mxu0 0
    %1520 = vmatpush1.bf16.msra.mxu0 0
    %1521 = vmatprep.subr.bf16.mxu0 0
    %1522 = vmatpush1.bf16.msra.mxu0 0
    %1523 = vmatprep.subr.bf16.mxu0 0
    %1524 = vmatpush1.bf16.msra.mxu0 0
    %1525 = vmatprep.subr.bf16.mxu0 0
    %1526 = vmatpush1.bf16.msra.mxu0 0
    %1527 = vmatprep.subr.bf16.mxu0 0
    %1528 = vmatpush1.bf16.msra.mxu0 0
    %1529 = vmatprep.mubr.bf16.mxu0 0
    %1530 = vmatmul.mubr.bf16.gmra.mrb[0].mxu0 %v1495
    %v1531 = vpop.f32.mrb[0].mxu0
    %v1532 = vadd.f32 0.0, %v1531
    %v1533 = vpop.f32.mrb[0].mxu0
    %v1534 = vpop.f32.mrb[0].mxu0
    %v1535 = vpop.f32.mrb[0].mxu0
    %1536 = vdwg.mxu0
    %v1538 = vsel %vm93, %v1492, 0
    %1540 = vmatprep.subr.bf16.mxu0 0
    %1541 = vmatpush1.bf16.msra.mxu0 %v145
    %1542 = vmatprep.subr.bf16.mxu0 0
    %1543 = vmatpush1.bf16.msra.mxu0 0
    %1544 = vmatprep.subr.bf16.mxu0 0
    %1545 = vmatpush1.bf16.msra.mxu0 0
    %1546 = vmatprep.subr.bf16.mxu0 0
    %1547 = vmatpush1.bf16.msra.mxu0 0
    %1548 = vmatprep.subr.bf16.mxu0 0
    %1549 = vmatpush1.bf16.msra.mxu0 0
    %1550 = vmatprep.subr.bf16.mxu0 0
    %1551 = vmatpush1.bf16.msra.mxu0 0
    %1552 = vmatprep.subr.bf16.mxu0 0
    %1553 = vmatpush1.bf16.msra.mxu0 0
    %1554 = vmatprep.subr.bf16.mxu0 0
    %1555 = vmatpush1.bf16.msra.mxu0 0
    %1556 = vmatprep.subr.bf16.mxu0 0
    %1557 = vmatpush1.bf16.msra.mxu0 0
    %1558 = vmatprep.subr.bf16.mxu0 0
    %1559 = vmatpush1.bf16.msra.mxu0 0
    %1560 = vmatprep.subr.bf16.mxu0 0
    %1561 = vmatpush1.bf16.msra.mxu0 0
    %1562 = vmatprep.subr.bf16.mxu0 0
    %1563 = vmatpush1.bf16.msra.mxu0 0
    %1564 = vmatprep.subr.bf16.mxu0 0
    %1565 = vmatpush1.bf16.msra.mxu0 0
    %1566 = vmatprep.subr.bf16.mxu0 0
    %1567 = vmatpush1.bf16.msra.mxu0 0
    %1568 = vmatprep.subr.bf16.mxu0 0
    %1569 = vmatpush1.bf16.msra.mxu0 0
    %1570 = vmatprep.subr.bf16.mxu0 0
    %1571 = vmatpush1.bf16.msra.mxu0 0
    %1572 = vmatprep.mubr.bf16.mxu0 0
    %1573 = vmatmul.mubr.bf16.gmra.mrb[0].mxu0 %v1538
    %v1574 = vpop.f32.mrb[0].mxu0
    %v1575 = vadd.f32 %v1532, %v1574
    %v1576 = vpop.f32.mrb[0].mxu0
    %v1577 = vpop.f32.mrb[0].mxu0
    %v1578 = vpop.f32.mrb[0].mxu0
    %1579 = vdwg.mxu0
    %v1580 = vadd.f32 %v1575, %v54
    %vm1581 = vcmp.gt.f32.partialorder %v1580, 0.0
    %v1582 = vmin.f32 %v1580, 0.0
    %v1583 = vmul.f32 %v1582, 1.442695
    %v1584 = vpow.pop %v1583
    %v1585 = vsub.f32 %v1584, 1.0
    %v1586 = vsel %vm1581, %v1580, %v1585
    %v1587 = vpack.c.bf16 %v1586, %v1586
    %v1589 = vsel %vm207, %v1587, 0
    %1591 = vmatprep.subr.bf16.mxu0 0
    %1592 = vmatpush1.bf16.msra.mxu0 %v203
    %1593 = vmatprep.subr.bf16.mxu0 0
    %1594 = vmatpush1.bf16.msra.mxu0 %v204
    %1595 = vmatprep.subr.bf16.mxu0 0
    %1596 = vmatpush1.bf16.msra.mxu0 0
    %1597 = vmatprep.subr.bf16.mxu0 0
    %1598 = vmatpush1.bf16.msra.mxu0 0
    %1599 = vmatprep.subr.bf16.mxu0 0
    %1600 = vmatpush1.bf16.msra.mxu0 0
    %1601 = vmatprep.subr.bf16.mxu0 0
    %1602 = vmatpush1.bf16.msra.mxu0 0
    %1603 = vmatprep.subr.bf16.mxu0 0
    %1604 = vmatpush1.bf16.msra.mxu0 0
    %1605 = vmatprep.subr.bf16.mxu0 0
    %1606 = vmatpush1.bf16.msra.mxu0 0
    %1607 = vmatprep.subr.bf16.mxu0 0
    %1608 = vmatpush1.bf16.msra.mxu0 0
    %1609 = vmatprep.subr.bf16.mxu0 0
    %1610 = vmatpush1.bf16.msra.mxu0 0
    %1611 = vmatprep.subr.bf16.mxu0 0
    %1612 = vmatpush1.bf16.msra.mxu0 0
    %1613 = vmatprep.subr.bf16.mxu0 0
    %1614 = vmatpush1.bf16.msra.mxu0 0
    %1615 = vmatprep.subr.bf16.mxu0 0
    %1616 = vmatpush1.bf16.msra.mxu0 0
    %1617 = vmatprep.subr.bf16.mxu0 0
    %1618 = vmatpush1.bf16.msra.mxu0 0
    %1619 = vmatprep.subr.bf16.mxu0 0
    %1620 = vmatpush1.bf16.msra.mxu0 0
    %1621 = vmatprep.subr.bf16.mxu0 0
    %1622 = vmatpush1.bf16.msra.mxu0 0
    %1623 = vmatprep.mubr.bf16.mxu0 0
    %1624 = vmatmul.mubr.bf16.gmra.mrb[0].mxu0 %v1589
    %v1625 = vpop.f32.mrb[0].mxu0
    %v1626 = vadd.f32 %v61, %v1625
    %v1627 = vpop.f32.mrb[0].mxu0
    %v1628 = vpop.f32.mrb[0].mxu0
    %v1629 = vpop.f32.mrb[0].mxu0
    %1630 = vdwg.mxu0
    %vm1631 = vcmp.gt.f32.partialorder %v1626, 0.0
    %v1632 = vmin.f32 %v1626, 0.0
    %v1633 = vmul.f32 %v1632, 1.442695
    %v1634 = vpow.pop %v1633
    %v1635 = vsub.f32 %v1634, 1.0
    %v1636 = vsel %vm1631, %v1626, %v1635
    %v1637 = vpack.c.bf16 %v1636, %v1636
    %v1639 = vsel %vm207, %v1637, 0
    %1641 = vmatprep.subr.bf16.mxu0 0
    %1642 = vmatpush1.bf16.msra.mxu0 %v266
    %1643 = vmatprep.subr.bf16.mxu0 0
    %1644 = vmatpush1.bf16.msra.mxu0 %v267
    %1645 = vmatprep.subr.bf16.mxu0 0
    %1646 = vmatpush1.bf16.msra.mxu0 0
    %1647 = vmatprep.subr.bf16.mxu0 0
    %1648 = vmatpush1.bf16.msra.mxu0 0
    %1649 = vmatprep.subr.bf16.mxu0 0
    %1650 = vmatpush1.bf16.msra.mxu0 0
    %1651 = vmatprep.subr.bf16.mxu0 0
    %1652 = vmatpush1.bf16.msra.mxu0 0
    %1653 = vmatprep.subr.bf16.mxu0 0
    %1654 = vmatpush1.bf16.msra.mxu0 0
    %1655 = vmatprep.subr.bf16.mxu0 0
    %1656 = vmatpush1.bf16.msra.mxu0 0
    %1657 = vmatprep.subr.bf16.mxu0 0
    %1658 = vmatpush1.bf16.msra.mxu0 0
    %1659 = vmatprep.subr.bf16.mxu0 0
    %1660 = vmatpush1.bf16.msra.mxu0 0
    %1661 = vmatprep.subr.bf16.mxu0 0
    %1662 = vmatpush1.bf16.msra.mxu0 0
    %1663 = vmatprep.subr.bf16.mxu0 0
    %1664 = vmatpush1.bf16.msra.mxu0 0
    %1665 = vmatprep.subr.bf16.mxu0 0
    %1666 = vmatpush1.bf16.msra.mxu0 0
    %1667 = vmatprep.subr.bf16.mxu0 0
    %1668 = vmatpush1.bf16.msra.mxu0 0
    %1669 = vmatprep.subr.bf16.mxu0 0
    %1670 = vmatpush1.bf16.msra.mxu0 0
    %1671 = vmatprep.subr.bf16.mxu0 0
    %1672 = vmatpush1.bf16.msra.mxu0 0
    %1673 = vmatprep.mubr.bf16.mxu0 0
    %1674 = vmatmul.mubr.bf16.gmra.mrb[0].mxu0 %v1639
    %v1675 = vpop.f32.mrb[0].mxu0
    %v1676 = vadd.f32 %v68, %v1675
    %v1677 = vpop.f32.mrb[0].mxu0
    %v1678 = vpop.f32.mrb[0].mxu0
    %v1679 = vpop.f32.mrb[0].mxu0
    %1680 = vdwg.mxu0
    %v1681 = vmul.f32 %v1105, 2.0
    %v1682 = vadd.f32 %v912, %v1681
    %v1683 = vmul.f32 %v1298, 2.0
    %v1684 = vadd.f32 %v1682, %v1683
    %v1685 = vadd.f32 %v1684, %v1491
    %v1686 = vmul.f32 %v903, %v1685
    %v1687 = vadd.f32 %v905, %v1686
    %v1688 = vmul.f32 %v1290, 2.0
    %v1689 = vadd.f32 %v1097, %v1688
    %v1690 = vmul.f32 %v1483, 2.0
    %v1691 = vadd.f32 %v1689, %v1690
    %v1692 = vadd.f32 %v1691, %v1676
    %v1693 = vmul.f32 %v903, %v1692
    %v1694 = vadd.f32 %v912, %v1693
    %v1695 = vpack.c.bf16 %v1687, %v1687
    %v1696 = vpack.c.bf16 %v1694, %v1694
    %v1698 = vsel %vm93, %v1696, 0
    %1700 = vmatprep.subr.bf16.mxu0 0
    %1701 = vmatpush1.bf16.msra.mxu0 %v99
    %1702 = vmatprep.subr.bf16.mxu0 0
    %1703 = vmatpush1.bf16.msra.mxu0 0
    %1704 = vmatprep.subr.bf16.mxu0 0
    %1705 = vmatpush1.bf16.msra.mxu0 0
    %1706 = vmatprep.subr.bf16.mxu0 0
    %1707 = vmatpush1.bf16.msra.mxu0 0
    %1708 = vmatprep.subr.bf16.mxu0 0
    %1709 = vmatpush1.bf16.msra.mxu0 0
    %1710 = vmatprep.subr.bf16.mxu0 0
    %1711 = vmatpush1.bf16.msra.mxu0 0
    %1712 = vmatprep.subr.bf16.mxu0 0
    %1713 = vmatpush1.bf16.msra.mxu0 0
    %1714 = vmatprep.subr.bf16.mxu0 0
    %1715 = vmatpush1.bf16.msra.mxu0 0
    %1716 = vmatprep.subr.bf16.mxu0 0
    %1717 = vmatpush1.bf16.msra.mxu0 0
    %1718 = vmatprep.subr.bf16.mxu0 0
    %1719 = vmatpush1.bf16.msra.mxu0 0
    %1720 = vmatprep.subr.bf16.mxu0 0
    %1721 = vmatpush1.bf16.msra.mxu0 0
    %1722 = vmatprep.subr.bf16.mxu0 0
    %1723 = vmatpush1.bf16.msra.mxu0 0
    %1724 = vmatprep.subr.bf16.mxu0 0
    %1725 = vmatpush1.bf16.msra.mxu0 0
    %1726 = vmatprep.subr.bf16.mxu0 0
    %1727 = vmatpush1.bf16.msra.mxu0 0
    %1728 = vmatprep.subr.bf16.mxu0 0
    %1729 = vmatpush1.bf16.msra.mxu0 0
    %1730 = vmatprep.subr.bf16.mxu0 0
    %1731 = vmatpush1.bf16.msra.mxu0 0
    %1732 = vmatprep.mubr.bf16.mxu0 0
    %1733 = vmatmul.mubr.bf16.gmra.mrb[0].mxu0 %v1698
    %v1734 = vpop.f32.mrb[0].mxu0
    %v1735 = vadd.f32 0.0, %v1734
    %v1736 = vpop.f32.mrb[0].mxu0
    %v1737 = vpop.f32.mrb[0].mxu0
    %v1738 = vpop.f32.mrb[0].mxu0
    %1739 = vdwg.mxu0
    %v1741 = vsel %vm93, %v1695, 0
    %1743 = vmatprep.subr.bf16.mxu0 0
    %1744 = vmatpush1.bf16.msra.mxu0 %v145
    %1745 = vmatprep.subr.bf16.mxu0 0
    %1746 = vmatpush1.bf16.msra.mxu0 0
    %1747 = vmatprep.subr.bf16.mxu0 0
    %1748 = vmatpush1.bf16.msra.mxu0 0
    %1749 = vmatprep.subr.bf16.mxu0 0
    %1750 = vmatpush1.bf16.msra.mxu0 0
    %1751 = vmatprep.subr.bf16.mxu0 0
    %1752 = vmatpush1.bf16.msra.mxu0 0
    %1753 = vmatprep.subr.bf16.mxu0 0
    %1754 = vmatpush1.bf16.msra.mxu0 0
    %1755 = vmatprep.subr.bf16.mxu0 0
    %1756 = vmatpush1.bf16.msra.mxu0 0
    %1757 = vmatprep.subr.bf16.mxu0 0
    %1758 = vmatpush1.bf16.msra.mxu0 0
    %1759 = vmatprep.subr.bf16.mxu0 0
    %1760 = vmatpush1.bf16.msra.mxu0 0
    %1761 = vmatprep.subr.bf16.mxu0 0
    %1762 = vmatpush1.bf16.msra.mxu0 0
    %1763 = vmatprep.subr.bf16.mxu0 0
    %1764 = vmatpush1.bf16.msra.mxu0 0
    %1765 = vmatprep.subr.bf16.mxu0 0
    %1766 = vmatpush1.bf16.msra.mxu0 0
    %1767 = vmatprep.subr.bf16.mxu0 0
    %1768 = vmatpush1.bf16.msra.mxu0 0
    %1769 = vmatprep.subr.bf16.mxu0 0
    %1770 = vmatpush1.bf16.msra.mxu0 0
    %1771 = vmatprep.subr.bf16.mxu0 0
    %1772 = vmatpush1.bf16.msra.mxu0 0
    %1773 = vmatprep.subr.bf16.mxu0 0
    %1774 = vmatpush1.bf16.msra.mxu0 0
    %1775 = vmatprep.mubr.bf16.mxu0 0
    %1776 = vmatmul.mubr.bf16.gmra.mrb[0].mxu0 %v1741
    %v1777 = vpop.f32.mrb[0].mxu0
    %v1778 = vadd.f32 %v1735, %v1777
    %v1779 = vpop.f32.mrb[0].mxu0
    %v1780 = vpop.f32.mrb[0].mxu0
    %v1781 = vpop.f32.mrb[0].mxu0
    %1782 = vdwg.mxu0
    %v1783 = vadd.f32 %v1778, %v54
    %vm1784 = vcmp.gt.f32.partialorder %v1783, 0.0
    %v1785 = vmin.f32 %v1783, 0.0
    %v1786 = vmul.f32 %v1785, 1.442695
    %v1787 = vpow.pop %v1786
    %v1788 = vsub.f32 %v1787, 1.0
    %v1789 = vsel %vm1784, %v1783, %v1788
    %v1790 = vpack.c.bf16 %v1789, %v1789
    %v1792 = vsel %vm207, %v1790, 0
    %1794 = vmatprep.subr.bf16.mxu0 0
    %1795 = vmatpush1.bf16.msra.mxu0 %v203
    %1796 = vmatprep.subr.bf16.mxu0 0
    %1797 = vmatpush1.bf16.msra.mxu0 %v204
    %1798 = vmatprep.subr.bf16.mxu0 0
    %1799 = vmatpush1.bf16.msra.mxu0 0
    %1800 = vmatprep.subr.bf16.mxu0 0
    %1801 = vmatpush1.bf16.msra.mxu0 0
    %1802 = vmatprep.subr.bf16.mxu0 0
    %1803 = vmatpush1.bf16.msra.mxu0 0
    %1804 = vmatprep.subr.bf16.mxu0 0
    %1805 = vmatpush1.bf16.msra.mxu0 0
    %1806 = vmatprep.subr.bf16.mxu0 0
    %1807 = vmatpush1.bf16.msra.mxu0 0
    %1808 = vmatprep.subr.bf16.mxu0 0
    %1809 = vmatpush1.bf16.msra.mxu0 0
    %1810 = vmatprep.subr.bf16.mxu0 0
    %1811 = vmatpush1.bf16.msra.mxu0 0
    %1812 = vmatprep.subr.bf16.mxu0 0
    %1813 = vmatpush1.bf16.msra.mxu0 0
    %1814 = vmatprep.subr.bf16.mxu0 0
    %1815 = vmatpush1.bf16.msra.mxu0 0
    %1816 = vmatprep.subr.bf16.mxu0 0
    %1817 = vmatpush1.bf16.msra.mxu0 0
    %1818 = vmatprep.subr.bf16.mxu0 0
    %1819 = vmatpush1.bf16.msra.mxu0 0
    %1820 = vmatprep.subr.bf16.mxu0 0
    %1821 = vmatpush1.bf16.msra.mxu0 0
    %1822 = vmatprep.subr.bf16.mxu0 0
    %1823 = vmatpush1.bf16.msra.mxu0 0
    %1824 = vmatprep.subr.bf16.mxu0 0
    %1825 = vmatpush1.bf16.msra.mxu0 0
    %1826 = vmatprep.mubr.bf16.mxu0 0
    %1827 = vmatmul.mubr.bf16.gmra.mrb[0].mxu0 %v1792
    %v1828 = vpop.f32.mrb[0].mxu0
    %v1829 = vadd.f32 %v61, %v1828
    %v1830 = vpop.f32.mrb[0].mxu0
    %v1831 = vpop.f32.mrb[0].mxu0
    %v1832 = vpop.f32.mrb[0].mxu0
    %1833 = vdwg.mxu0
    %vm1834 = vcmp.gt.f32.partialorder %v1829, 0.0
    %v1835 = vmin.f32 %v1829, 0.0
    %v1836 = vmul.f32 %v1835, 1.442695
    %v1837 = vpow.pop %v1836
    %v1838 = vsub.f32 %v1837, 1.0
    %v1839 = vsel %vm1834, %v1829, %v1838
    %v1840 = vpack.c.bf16 %v1839, %v1839
    %v1842 = vsel %vm207, %v1840, 0
    %1844 = vmatprep.subr.bf16.mxu0 0
    %1845 = vmatpush1.bf16.msra.mxu0 %v266
    %1846 = vmatprep.subr.bf16.mxu0 0
    %1847 = vmatpush1.bf16.msra.mxu0 %v267
    %1848 = vmatprep.subr.bf16.mxu0 0
    %1849 = vmatpush1.bf16.msra.mxu0 0
    %1850 = vmatprep.subr.bf16.mxu0 0
    %1851 = vmatpush1.bf16.msra.mxu0 0
    %1852 = vmatprep.subr.bf16.mxu0 0
    %1853 = vmatpush1.bf16.msra.mxu0 0
    %1854 = vmatprep.subr.bf16.mxu0 0
    %1855 = vmatpush1.bf16.msra.mxu0 0
    %1856 = vmatprep.subr.bf16.mxu0 0
    %1857 = vmatpush1.bf16.msra.mxu0 0
    %1858 = vmatprep.subr.bf16.mxu0 0
    %1859 = vmatpush1.bf16.msra.mxu0 0
    %1860 = vmatprep.subr.bf16.mxu0 0
    %1861 = vmatpush1.bf16.msra.mxu0 0
    %1862 = vmatprep.subr.bf16.mxu0 0
    %1863 = vmatpush1.bf16.msra.mxu0 0
    %1864 = vmatprep.subr.bf16.mxu0 0
    %1865 = vmatpush1.bf16.msra.mxu0 0
    %1866 = vmatprep.subr.bf16.mxu0 0
    %1867 = vmatpush1.bf16.msra.mxu0 0
    %1868 = vmatprep.subr.bf16.mxu0 0
    %1869 = vmatpush1.bf16.msra.mxu0 0
    %1870 = vmatprep.subr.bf16.mxu0 0
    %1871 = vmatpush1.bf16.msra.mxu0 0
    %1872 = vmatprep.subr.bf16.mxu0 0
    %1873 = vmatpush1.bf16.msra.mxu0 0
    %1874 = vmatprep.subr.bf16.mxu0 0
    %1875 = vmatpush1.bf16.msra.mxu0 0
    %1876 = vmatprep.mubr.bf16.mxu0 0
    %1877 = vmatmul.mubr.bf16.gmra.mrb[0].mxu0 %v1842
    %v1878 = vpop.f32.mrb[0].mxu0
    %v1879 = vadd.f32 %v68, %v1878
    %v1880 = vpop.f32.mrb[0].mxu0
    %v1881 = vpop.f32.mrb[0].mxu0
    %v1882 = vpop.f32.mrb[0].mxu0
    %1883 = vdwg.mxu0
    %v1884 = vmul.f32 %v314, %v1694
    %v1885 = vadd.f32 %v1687, %v1884
    %v1886 = vmul.f32 %v314, %v1879
    %v1887 = vadd.f32 %v1694, %v1886
    %v1888 = vpack.c.bf16 %v1885, %v1885
    %v1889 = vpack.c.bf16 %v1887, %v1887
    %v1891 = vsel %vm93, %v1889, 0
    %1893 = vmatprep.subr.bf16.mxu0 0
    %1894 = vmatpush1.bf16.msra.mxu0 %v99
    %1895 = vmatprep.subr.bf16.mxu0 0
    %1896 = vmatpush1.bf16.msra.mxu0 0
    %1897 = vmatprep.subr.bf16.mxu0 0
    %1898 = vmatpush1.bf16.msra.mxu0 0
    %1899 = vmatprep.subr.bf16.mxu0 0
    %1900 = vmatpush1.bf16.msra.mxu0 0
    %1901 = vmatprep.subr.bf16.mxu0 0
    %1902 = vmatpush1.bf16.msra.mxu0 0
    %1903 = vmatprep.subr.bf16.mxu0 0
    %1904 = vmatpush1.bf16.msra.mxu0 0
    %1905 = vmatprep.subr.bf16.mxu0 0
    %1906 = vmatpush1.bf16.msra.mxu0 0
    %1907 = vmatprep.subr.bf16.mxu0 0
    %1908 = vmatpush1.bf16.msra.mxu0 0
    %1909 = vmatprep.subr.bf16.mxu0 0
    %1910 = vmatpush1.bf16.msra.mxu0 0
    %1911 = vmatprep.subr.bf16.mxu0 0
    %1912 = vmatpush1.bf16.msra.mxu0 0
    %1913 = vmatprep.subr.bf16.mxu0 0
    %1914 = vmatpush1.bf16.msra.mxu0 0
    %1915 = vmatprep.subr.bf16.mxu0 0
    %1916 = vmatpush1.bf16.msra.mxu0 0
    %1917 = vmatprep.subr.bf16.mxu0 0
    %1918 = vmatpush1.bf16.msra.mxu0 0
    %1919 = vmatprep.subr.bf16.mxu0 0
    %1920 = vmatpush1.bf16.msra.mxu0 0
    %1921 = vmatprep.subr.bf16.mxu0 0
    %1922 = vmatpush1.bf16.msra.mxu0 0
    %1923 = vmatprep.subr.bf16.mxu0 0
    %1924 = vmatpush1.bf16.msra.mxu0 0
    %1925 = vmatprep.mubr.bf16.mxu0 0
    %1926 = vmatmul.mubr.bf16.gmra.mrb[0].mxu0 %v1891
    %v1927 = vpop.f32.mrb[0].mxu0
    %v1928 = vadd.f32 0.0, %v1927
    %v1929 = vpop.f32.mrb[0].mxu0
    %v1930 = vpop.f32.mrb[0].mxu0
    %v1931 = vpop.f32.mrb[0].mxu0
    %1932 = vdwg.mxu0
    %v1934 = vsel %vm93, %v1888, 0
    %1936 = vmatprep.subr.bf16.mxu0 0
    %1937 = vmatpush1.bf16.msra.mxu0 %v145
    %1938 = vmatprep.subr.bf16.mxu0 0
    %1939 = vmatpush1.bf16.msra.mxu0 0
    %1940 = vmatprep.subr.bf16.mxu0 0
    %1941 = vmatpush1.bf16.msra.mxu0 0
    %1942 = vmatprep.subr.bf16.mxu0 0
    %1943 = vmatpush1.bf16.msra.mxu0 0
    %1944 = vmatprep.subr.bf16.mxu0 0
    %1945 = vmatpush1.bf16.msra.mxu0 0
    %1946 = vmatprep.subr.bf16.mxu0 0
    %1947 = vmatpush1.bf16.msra.mxu0 0
    %1948 = vmatprep.subr.bf16.mxu0 0
    %1949 = vmatpush1.bf16.msra.mxu0 0
    %1950 = vmatprep.subr.bf16.mxu0 0
    %1951 = vmatpush1.bf16.msra.mxu0 0
    %1952 = vmatprep.subr.bf16.mxu0 0
    %1953 = vmatpush1.bf16.msra.mxu0 0
    %1954 = vmatprep.subr.bf16.mxu0 0
    %1955 = vmatpush1.bf16.msra.mxu0 0
    %1956 = vmatprep.subr.bf16.mxu0 0
    %1957 = vmatpush1.bf16.msra.mxu0 0
    %1958 = vmatprep.subr.bf16.mxu0 0
    %1959 = vmatpush1.bf16.msra.mxu0 0
    %1960 = vmatprep.subr.bf16.mxu0 0
    %1961 = vmatpush1.bf16.msra.mxu0 0
    %1962 = vmatprep.subr.bf16.mxu0 0
    %1963 = vmatpush1.bf16.msra.mxu0 0
    %1964 = vmatprep.subr.bf16.mxu0 0
    %1965 = vmatpush1.bf16.msra.mxu0 0
    %1966 = vmatprep.subr.bf16.mxu0 0
    %1967 = vmatpush1.bf16.msra.mxu0 0
    %1968 = vmatprep.mubr.bf16.mxu0 0
    %1969 = vmatmul.mubr.bf16.gmra.mrb[0].mxu0 %v1934
    %v1970 = vpop.f32.mrb[0].mxu0
    %v1971 = vadd.f32 %v1928, %v1970
    %v1972 = vpop.f32.mrb[0].mxu0
    %v1973 = vpop.f32.mrb[0].mxu0
    %v1974 = vpop.f32.mrb[0].mxu0
    %1975 = vdwg.mxu0
    %v1976 = vadd.f32 %v1971, %v54
    %vm1977 = vcmp.gt.f32.partialorder %v1976, 0.0
    %v1978 = vmin.f32 %v1976, 0.0
    %v1979 = vmul.f32 %v1978, 1.442695
    %v1980 = vpow.pop %v1979
    %v1981 = vsub.f32 %v1980, 1.0
    %v1982 = vsel %vm1977, %v1976, %v1981
    %v1983 = vpack.c.bf16 %v1982, %v1982
    %v1985 = vsel %vm207, %v1983, 0
    %1987 = vmatprep.subr.bf16.mxu0 0
    %1988 = vmatpush1.bf16.msra.mxu0 %v203
    %1989 = vmatprep.subr.bf16.mxu0 0
    %1990 = vmatpush1.bf16.msra.mxu0 %v204
    %1991 = vmatprep.subr.bf16.mxu0 0
    %1992 = vmatpush1.bf16.msra.mxu0 0
    %1993 = vmatprep.subr.bf16.mxu0 0
    %1994 = vmatpush1.bf16.msra.mxu0 0
    %1995 = vmatprep.subr.bf16.mxu0 0
    %1996 = vmatpush1.bf16.msra.mxu0 0
    %1997 = vmatprep.subr.bf16.mxu0 0
    %1998 = vmatpush1.bf16.msra.mxu0 0
    %1999 = vmatprep.subr.bf16.mxu0 0
    %2000 = vmatpush1.bf16.msra.mxu0 0
    %2001 = vmatprep.subr.bf16.mxu0 0
    %2002 = vmatpush1.bf16.msra.mxu0 0
    %2003 = vmatprep.subr.bf16.mxu0 0
    %2004 = vmatpush1.bf16.msra.mxu0 0
    %2005 = vmatprep.subr.bf16.mxu0 0
    %2006 = vmatpush1.bf16.msra.mxu0 0
    %2007 = vmatprep.subr.bf16.mxu0 0
    %2008 = vmatpush1.bf16.msra.mxu0 0
    %2009 = vmatprep.subr.bf16.mxu0 0
    %2010 = vmatpush1.bf16.msra.mxu0 0
    %2011 = vmatprep.subr.bf16.mxu0 0
    %2012 = vmatpush1.bf16.msra.mxu0 0
    %2013 = vmatprep.subr.bf16.mxu0 0
    %2014 = vmatpush1.bf16.msra.mxu0 0
    %2015 = vmatprep.subr.bf16.mxu0 0
    %2016 = vmatpush1.bf16.msra.mxu0 0
    %2017 = vmatprep.subr.bf16.mxu0 0
    %2018 = vmatpush1.bf16.msra.mxu0 0
    %2019 = vmatprep.mubr.bf16.mxu0 0
    %2020 = vmatmul.mubr.bf16.gmra.mrb[0].mxu0 %v1985
    %v2021 = vpop.f32.mrb[0].mxu0
    %v2022 = vadd.f32 %v61, %v2021
    %v2023 = vpop.f32.mrb[0].mxu0
    %v2024 = vpop.f32.mrb[0].mxu0
    %v2025 = vpop.f32.mrb[0].mxu0
    %2026 = vdwg.mxu0
    %vm2027 = vcmp.gt.f32.partialorder %v2022, 0.0
    %v2028 = vmin.f32 %v2022, 0.0
    %v2029 = vmul.f32 %v2028, 1.442695
    %v2030 = vpow.pop %v2029
    %v2031 = vsub.f32 %v2030, 1.0
    %v2032 = vsel %vm2027, %v2022, %v2031
    %v2033 = vpack.c.bf16 %v2032, %v2032
    %v2035 = vsel %vm207, %v2033, 0
    %2037 = vmatprep.subr.bf16.mxu0 0
    %2038 = vmatpush1.bf16.msra.mxu0 %v266
    %2039 = vmatprep.subr.bf16.mxu0 0
    %2040 = vmatpush1.bf16.msra.mxu0 %v267
    %2041 = vmatprep.subr.bf16.mxu0 0
    %2042 = vmatpush1.bf16.msra.mxu0 0
    %2043 = vmatprep.subr.bf16.mxu0 0
    %2044 = vmatpush1.bf16.msra.mxu0 0
    %2045 = vmatprep.subr.bf16.mxu0 0
    %2046 = vmatpush1.bf16.msra.mxu0 0
    %2047 = vmatprep.subr.bf16.mxu0 0
    %2048 = vmatpush1.bf16.msra.mxu0 0
    %2049 = vmatprep.subr.bf16.mxu0 0
    %2050 = vmatpush1.bf16.msra.mxu0 0
    %2051 = vmatprep.subr.bf16.mxu0 0
    %2052 = vmatpush1.bf16.msra.mxu0 0
    %2053 = vmatprep.subr.bf16.mxu0 0
    %2054 = vmatpush1.bf16.msra.mxu0 0
    %2055 = vmatprep.subr.bf16.mxu0 0
    %2056 = vmatpush1.bf16.msra.mxu0 0
    %2057 = vmatprep.subr.bf16.mxu0 0
    %2058 = vmatpush1.bf16.msra.mxu0 0
    %2059 = vmatprep.subr.bf16.mxu0 0
    %2060 = vmatpush1.bf16.msra.mxu0 0
    %2061 = vmatprep.subr.bf16.mxu0 0
    %2062 = vmatpush1.bf16.msra.mxu0 0
    %2063 = vmatprep.subr.bf16.mxu0 0
    %2064 = vmatpush1.bf16.msra.mxu0 0
    %2065 = vmatprep.subr.bf16.mxu0 0
    %2066 = vmatpush1.bf16.msra.mxu0 0
    %2067 = vmatprep.subr.bf16.mxu0 0
    %2068 = vmatpush1.bf16.msra.mxu0 0
    %2069 = vmatprep.mubr.bf16.mxu0 0
    %2070 = vmatmul.mubr.bf16.gmra.mrb[0].mxu0 %v2035
    %v2071 = vpop.f32.mrb[0].mxu0
    %v2072 = vadd.f32 %v68, %v2071
    %v2073 = vpop.f32.mrb[0].mxu0
    %v2074 = vpop.f32.mrb[0].mxu0
    %v2075 = vpop.f32.mrb[0].mxu0
    %2076 = vdwg.mxu0
    %v2077 = vmul.f32 %v314, %v1887
    %v2078 = vadd.f32 %v1687, %v2077
    %v2079 = vmul.f32 %v314, %v2072
    %v2080 = vadd.f32 %v1694, %v2079
    %v2081 = vpack.c.bf16 %v2078, %v2078
    %v2082 = vpack.c.bf16 %v2080, %v2080
    %v2084 = vsel %vm93, %v2082, 0
    %2086 = vmatprep.subr.bf16.mxu0 0
    %2087 = vmatpush1.bf16.msra.mxu0 %v99
    %2088 = vmatprep.subr.bf16.mxu0 0
    %2089 = vmatpush1.bf16.msra.mxu0 0
    %2090 = vmatprep.subr.bf16.mxu0 0
    %2091 = vmatpush1.bf16.msra.mxu0 0
    %2092 = vmatprep.subr.bf16.mxu0 0
    %2093 = vmatpush1.bf16.msra.mxu0 0
    %2094 = vmatprep.subr.bf16.mxu0 0
    %2095 = vmatpush1.bf16.msra.mxu0 0
    %2096 = vmatprep.subr.bf16.mxu0 0
    %2097 = vmatpush1.bf16.msra.mxu0 0
    %2098 = vmatprep.subr.bf16.mxu0 0
    %2099 = vmatpush1.bf16.msra.mxu0 0
    %2100 = vmatprep.subr.bf16.mxu0 0
    %2101 = vmatpush1.bf16.msra.mxu0 0
    %2102 = vmatprep.subr.bf16.mxu0 0
    %2103 = vmatpush1.bf16.msra.mxu0 0
    %2104 = vmatprep.subr.bf16.mxu0 0
    %2105 = vmatpush1.bf16.msra.mxu0 0
    %2106 = vmatprep.subr.bf16.mxu0 0
    %2107 = vmatpush1.bf16.msra.mxu0 0
    %2108 = vmatprep.subr.bf16.mxu0 0
    %2109 = vmatpush1.bf16.msra.mxu0 0
    %2110 = vmatprep.subr.bf16.mxu0 0
    %2111 = vmatpush1.bf16.msra.mxu0 0
    %2112 = vmatprep.subr.bf16.mxu0 0
    %2113 = vmatpush1.bf16.msra.mxu0 0
    %2114 = vmatprep.subr.bf16.mxu0 0
    %2115 = vmatpush1.bf16.msra.mxu0 0
    %2116 = vmatprep.subr.bf16.mxu0 0
    %2117 = vmatpush1.bf16.msra.mxu0 0
    %2118 = vmatprep.mubr.bf16.mxu0 0
    %2119 = vmatmul.mubr.bf16.gmra.mrb[0].mxu0 %v2084
    %v2120 = vpop.f32.mrb[0].mxu0
    %v2121 = vadd.f32 0.0, %v2120
    %v2122 = vpop.f32.mrb[0].mxu0
    %v2123 = vpop.f32.mrb[0].mxu0
    %v2124 = vpop.f32.mrb[0].mxu0
    %2125 = vdwg.mxu0
    %v2127 = vsel %vm93, %v2081, 0
    %2129 = vmatprep.subr.bf16.mxu0 0
    %2130 = vmatpush1.bf16.msra.mxu0 %v145
    %2131 = vmatprep.subr.bf16.mxu0 0
    %2132 = vmatpush1.bf16.msra.mxu0 0
    %2133 = vmatprep.subr.bf16.mxu0 0
    %2134 = vmatpush1.bf16.msra.mxu0 0
    %2135 = vmatprep.subr.bf16.mxu0 0
    %2136 = vmatpush1.bf16.msra.mxu0 0
    %2137 = vmatprep.subr.bf16.mxu0 0
    %2138 = vmatpush1.bf16.msra.mxu0 0
    %2139 = vmatprep.subr.bf16.mxu0 0
    %2140 = vmatpush1.bf16.msra.mxu0 0
    %2141 = vmatprep.subr.bf16.mxu0 0
    %2142 = vmatpush1.bf16.msra.mxu0 0
    %2143 = vmatprep.subr.bf16.mxu0 0
    %2144 = vmatpush1.bf16.msra.mxu0 0
    %2145 = vmatprep.subr.bf16.mxu0 0
    %2146 = vmatpush1.bf16.msra.mxu0 0
    %2147 = vmatprep.subr.bf16.mxu0 0
    %2148 = vmatpush1.bf16.msra.mxu0 0
    %2149 = vmatprep.subr.bf16.mxu0 0
    %2150 = vmatpush1.bf16.msra.mxu0 0
    %2151 = vmatprep.subr.bf16.mxu0 0
    %2152 = vmatpush1.bf16.msra.mxu0 0
    %2153 = vmatprep.subr.bf16.mxu0 0
    %2154 = vmatpush1.bf16.msra.mxu0 0
    %2155 = vmatprep.subr.bf16.mxu0 0
    %2156 = vmatpush1.bf16.msra.mxu0 0
    %2157 = vmatprep.subr.bf16.mxu0 0
    %2158 = vmatpush1.bf16.msra.mxu0 0
    %2159 = vmatprep.subr.bf16.mxu0 0
    %2160 = vmatpush1.bf16.msra.mxu0 0
    %2161 = vmatprep.mubr.bf16.mxu0 0
    %2162 = vmatmul.mubr.bf16.gmra.mrb[0].mxu0 %v2127
    %v2163 = vpop.f32.mrb[0].mxu0
    %v2164 = vadd.f32 %v2121, %v2163
    %v2165 = vpop.f32.mrb[0].mxu0
    %v2166 = vpop.f32.mrb[0].mxu0
    %v2167 = vpop.f32.mrb[0].mxu0
    %2168 = vdwg.mxu0
    %v2169 = vadd.f32 %v2164, %v54
    %vm2170 = vcmp.gt.f32.partialorder %v2169, 0.0
    %v2171 = vmin.f32 %v2169, 0.0
    %v2172 = vmul.f32 %v2171, 1.442695
    %v2173 = vpow.pop %v2172
    %v2174 = vsub.f32 %v2173, 1.0
    %v2175 = vsel %vm2170, %v2169, %v2174
    %v2176 = vpack.c.bf16 %v2175, %v2175
    %v2178 = vsel %vm207, %v2176, 0
    %2180 = vmatprep.subr.bf16.mxu0 0
    %2181 = vmatpush1.bf16.msra.mxu0 %v203
    %2182 = vmatprep.subr.bf16.mxu0 0
    %2183 = vmatpush1.bf16.msra.mxu0 %v204
    %2184 = vmatprep.subr.bf16.mxu0 0
    %2185 = vmatpush1.bf16.msra.mxu0 0
    %2186 = vmatprep.subr.bf16.mxu0 0
    %2187 = vmatpush1.bf16.msra.mxu0 0
    %2188 = vmatprep.subr.bf16.mxu0 0
    %2189 = vmatpush1.bf16.msra.mxu0 0
    %2190 = vmatprep.subr.bf16.mxu0 0
    %2191 = vmatpush1.bf16.msra.mxu0 0
    %2192 = vmatprep.subr.bf16.mxu0 0
    %2193 = vmatpush1.bf16.msra.mxu0 0
    %2194 = vmatprep.subr.bf16.mxu0 0
    %2195 = vmatpush1.bf16.msra.mxu0 0
    %2196 = vmatprep.subr.bf16.mxu0 0
    %2197 = vmatpush1.bf16.msra.mxu0 0
    %2198 = vmatprep.subr.bf16.mxu0 0
    %2199 = vmatpush1.bf16.msra.mxu0 0
    %2200 = vmatprep.subr.bf16.mxu0 0
    %2201 = vmatpush1.bf16.msra.mxu0 0
    %2202 = vmatprep.subr.bf16.mxu0 0
    %2203 = vmatpush1.bf16.msra.mxu0 0
    %2204 = vmatprep.subr.bf16.mxu0 0
    %2205 = vmatpush1.bf16.msra.mxu0 0
    %2206 = vmatprep.subr.bf16.mxu0 0
    %2207 = vmatpush1.bf16.msra.mxu0 0
    %2208 = vmatprep.subr.bf16.mxu0 0
    %2209 = vmatpush1.bf16.msra.mxu0 0
    %2210 = vmatprep.subr.bf16.mxu0 0
    %2211 = vmatpush1.bf16.msra.mxu0 0
    %2212 = vmatprep.mubr.bf16.mxu0 0
    %2213 = vmatmul.mubr.bf16.gmra.mrb[0].mxu0 %v2178
    %v2214 = vpop.f32.mrb[0].mxu0
    %v2215 = vadd.f32 %v61, %v2214
    %v2216 = vpop.f32.mrb[0].mxu0
    %v2217 = vpop.f32.mrb[0].mxu0
    %v2218 = vpop.f32.mrb[0].mxu0
    %2219 = vdwg.mxu0
    %vm2220 = vcmp.gt.f32.partialorder %v2215, 0.0
    %v2221 = vmin.f32 %v2215, 0.0
    %v2222 = vmul.f32 %v2221, 1.442695
    %v2223 = vpow.pop %v2222
    %v2224 = vsub.f32 %v2223, 1.0
    %v2225 = vsel %vm2220, %v2215, %v2224
    %v2226 = vpack.c.bf16 %v2225, %v2225
    %v2228 = vsel %vm207, %v2226, 0
    %2230 = vmatprep.subr.bf16.mxu0 0
    %2231 = vmatpush1.bf16.msra.mxu0 %v266
    %2232 = vmatprep.subr.bf16.mxu0 0
    %2233 = vmatpush1.bf16.msra.mxu0 %v267
    %2234 = vmatprep.subr.bf16.mxu0 0
    %2235 = vmatpush1.bf16.msra.mxu0 0
    %2236 = vmatprep.subr.bf16.mxu0 0
    %2237 = vmatpush1.bf16.msra.mxu0 0
    %2238 = vmatprep.subr.bf16.mxu0 0
    %2239 = vmatpush1.bf16.msra.mxu0 0
    %2240 = vmatprep.subr.bf16.mxu0 0
    %2241 = vmatpush1.bf16.msra.mxu0 0
    %2242 = vmatprep.subr.bf16.mxu0 0
    %2243 = vmatpush1.bf16.msra.mxu0 0
    %2244 = vmatprep.subr.bf16.mxu0 0
    %2245 = vmatpush1.bf16.msra.mxu0 0
    %2246 = vmatprep.subr.bf16.mxu0 0
    %2247 = vmatpush1.bf16.msra.mxu0 0
    %2248 = vmatprep.subr.bf16.mxu0 0
    %2249 = vmatpush1.bf16.msra.mxu0 0
    %2250 = vmatprep.subr.bf16.mxu0 0
    %2251 = vmatpush1.bf16.msra.mxu0 0
    %2252 = vmatprep.subr.bf16.mxu0 0
    %2253 = vmatpush1.bf16.msra.mxu0 0
    %2254 = vmatprep.subr.bf16.mxu0 0
    %2255 = vmatpush1.bf16.msra.mxu0 0
    %2256 = vmatprep.subr.bf16.mxu0 0
    %2257 = vmatpush1.bf16.msra.mxu0 0
    %2258 = vmatprep.subr.bf16.mxu0 0
    %2259 = vmatpush1.bf16.msra.mxu0 0
    %2260 = vmatprep.subr.bf16.mxu0 0
    %2261 = vmatpush1.bf16.msra.mxu0 0
    %2262 = vmatprep.mubr.bf16.mxu0 0
    %2263 = vmatmul.mubr.bf16.gmra.mrb[0].mxu0 %v2228
    %v2264 = vpop.f32.mrb[0].mxu0
    %v2265 = vadd.f32 %v68, %v2264
    %v2266 = vpop.f32.mrb[0].mxu0
    %v2267 = vpop.f32.mrb[0].mxu0
    %v2268 = vpop.f32.mrb[0].mxu0
    %2269 = vdwg.mxu0
    %v2270 = vmul.f32 %v701, %v2080
    %v2271 = vadd.f32 %v1687, %v2270
    %v2272 = vmul.f32 %v701, %v2265
    %v2273 = vadd.f32 %v1694, %v2272
    %v2274 = vpack.c.bf16 %v2271, %v2271
    %v2275 = vpack.c.bf16 %v2273, %v2273
    %v2277 = vsel %vm93, %v2275, 0
    %2279 = vmatprep.subr.bf16.mxu0 0
    %2280 = vmatpush1.bf16.msra.mxu0 %v99
    %2281 = vmatprep.subr.bf16.mxu0 0
    %2282 = vmatpush1.bf16.msra.mxu0 0
    %2283 = vmatprep.subr.bf16.mxu0 0
    %2284 = vmatpush1.bf16.msra.mxu0 0
    %2285 = vmatprep.subr.bf16.mxu0 0
    %2286 = vmatpush1.bf16.msra.mxu0 0
    %2287 = vmatprep.subr.bf16.mxu0 0
    %2288 = vmatpush1.bf16.msra.mxu0 0
    %2289 = vmatprep.subr.bf16.mxu0 0
    %2290 = vmatpush1.bf16.msra.mxu0 0
    %2291 = vmatprep.subr.bf16.mxu0 0
    %2292 = vmatpush1.bf16.msra.mxu0 0
    %2293 = vmatprep.subr.bf16.mxu0 0
    %2294 = vmatpush1.bf16.msra.mxu0 0
    %2295 = vmatprep.subr.bf16.mxu0 0
    %2296 = vmatpush1.bf16.msra.mxu0 0
    %2297 = vmatprep.subr.bf16.mxu0 0
    %2298 = vmatpush1.bf16.msra.mxu0 0
    %2299 = vmatprep.subr.bf16.mxu0 0
    %2300 = vmatpush1.bf16.msra.mxu0 0
    %2301 = vmatprep.subr.bf16.mxu0 0
    %2302 = vmatpush1.bf16.msra.mxu0 0
    %2303 = vmatprep.subr.bf16.mxu0 0
    %2304 = vmatpush1.bf16.msra.mxu0 0
    %2305 = vmatprep.subr.bf16.mxu0 0
    %2306 = vmatpush1.bf16.msra.mxu0 0
    %2307 = vmatprep.subr.bf16.mxu0 0
    %2308 = vmatpush1.bf16.msra.mxu0 0
    %2309 = vmatprep.subr.bf16.mxu0 0
    %2310 = vmatpush1.bf16.msra.mxu0 0
    %2311 = vmatprep.mubr.bf16.mxu0 0
    %2312 = vmatmul.mubr.bf16.gmra.mrb[0].mxu0 %v2277
    %v2313 = vpop.f32.mrb[0].mxu0
    %v2314 = vadd.f32 0.0, %v2313
    %v2315 = vpop.f32.mrb[0].mxu0
    %v2316 = vpop.f32.mrb[0].mxu0
    %v2317 = vpop.f32.mrb[0].mxu0
    %2318 = vdwg.mxu0
    %v2320 = vsel %vm93, %v2274, 0
    %2322 = vmatprep.subr.bf16.mxu0 0
    %2323 = vmatpush1.bf16.msra.mxu0 %v145
    %2324 = vmatprep.subr.bf16.mxu0 0
    %2325 = vmatpush1.bf16.msra.mxu0 0
    %2326 = vmatprep.subr.bf16.mxu0 0
    %2327 = vmatpush1.bf16.msra.mxu0 0
    %2328 = vmatprep.subr.bf16.mxu0 0
    %2329 = vmatpush1.bf16.msra.mxu0 0
    %2330 = vmatprep.subr.bf16.mxu0 0
    %2331 = vmatpush1.bf16.msra.mxu0 0
    %2332 = vmatprep.subr.bf16.mxu0 0
    %2333 = vmatpush1.bf16.msra.mxu0 0
    %2334 = vmatprep.subr.bf16.mxu0 0
    %2335 = vmatpush1.bf16.msra.mxu0 0
    %2336 = vmatprep.subr.bf16.mxu0 0
    %2337 = vmatpush1.bf16.msra.mxu0 0
    %2338 = vmatprep.subr.bf16.mxu0 0
    %2339 = vmatpush1.bf16.msra.mxu0 0
    %2340 = vmatprep.subr.bf16.mxu0 0
    %2341 = vmatpush1.bf16.msra.mxu0 0
    %2342 = vmatprep.subr.bf16.mxu0 0
    %2343 = vmatpush1.bf16.msra.mxu0 0
    %2344 = vmatprep.subr.bf16.mxu0 0
    %2345 = vmatpush1.bf16.msra.mxu0 0
    %2346 = vmatprep.subr.bf16.mxu0 0
    %2347 = vmatpush1.bf16.msra.mxu0 0
    %2348 = vmatprep.subr.bf16.mxu0 0
    %2349 = vmatpush1.bf16.msra.mxu0 0
    %2350 = vmatprep.subr.bf16.mxu0 0
    %2351 = vmatpush1.bf16.msra.mxu0 0
    %2352 = vmatprep.subr.bf16.mxu0 0
    %2353 = vmatpush1.bf16.msra.mxu0 0
    %2354 = vmatprep.mubr.bf16.mxu0 0
    %2355 = vmatmul.mubr.bf16.gmra.mrb[0].mxu0 %v2320
    %v2356 = vpop.f32.mrb[0].mxu0
    %v2357 = vadd.f32 %v2314, %v2356
    %v2358 = vpop.f32.mrb[0].mxu0
    %v2359 = vpop.f32.mrb[0].mxu0
    %v2360 = vpop.f32.mrb[0].mxu0
    %2361 = vdwg.mxu0
    %v2362 = vadd.f32 %v2357, %v54
    %vm2363 = vcmp.gt.f32.partialorder %v2362, 0.0
    %v2364 = vmin.f32 %v2362, 0.0
    %v2365 = vmul.f32 %v2364, 1.442695
    %v2366 = vpow.pop %v2365
    %v2367 = vsub.f32 %v2366, 1.0
    %v2368 = vsel %vm2363, %v2362, %v2367
    %v2369 = vpack.c.bf16 %v2368, %v2368
    %v2371 = vsel %vm207, %v2369, 0
    %2373 = vmatprep.subr.bf16.mxu0 0
    %2374 = vmatpush1.bf16.msra.mxu0 %v203
    %2375 = vmatprep.subr.bf16.mxu0 0
    %2376 = vmatpush1.bf16.msra.mxu0 %v204
    %2377 = vmatprep.subr.bf16.mxu0 0
    %2378 = vmatpush1.bf16.msra.mxu0 0
    %2379 = vmatprep.subr.bf16.mxu0 0
    %2380 = vmatpush1.bf16.msra.mxu0 0
    %2381 = vmatprep.subr.bf16.mxu0 0
    %2382 = vmatpush1.bf16.msra.mxu0 0
    %2383 = vmatprep.subr.bf16.mxu0 0
    %2384 = vmatpush1.bf16.msra.mxu0 0
    %2385 = vmatprep.subr.bf16.mxu0 0
    %2386 = vmatpush1.bf16.msra.mxu0 0
    %2387 = vmatprep.subr.bf16.mxu0 0
    %2388 = vmatpush1.bf16.msra.mxu0 0
    %2389 = vmatprep.subr.bf16.mxu0 0
    %2390 = vmatpush1.bf16.msra.mxu0 0
    %2391 = vmatprep.subr.bf16.mxu0 0
    %2392 = vmatpush1.bf16.msra.mxu0 0
    %2393 = vmatprep.subr.bf16.mxu0 0
    %2394 = vmatpush1.bf16.msra.mxu0 0
    %2395 = vmatprep.subr.bf16.mxu0 0
    %2396 = vmatpush1.bf16.msra.mxu0 0
    %2397 = vmatprep.subr.bf16.mxu0 0
    %2398 = vmatpush1.bf16.msra.mxu0 0
    %2399 = vmatprep.subr.bf16.mxu0 0
    %2400 = vmatpush1.bf16.msra.mxu0 0
    %2401 = vmatprep.subr.bf16.mxu0 0
    %2402 = vmatpush1.bf16.msra.mxu0 0
    %2403 = vmatprep.subr.bf16.mxu0 0
    %2404 = vmatpush1.bf16.msra.mxu0 0
    %2405 = vmatprep.mubr.bf16.mxu0 0
    %2406 = vmatmul.mubr.bf16.gmra.mrb[0].mxu0 %v2371
    %v2407 = vpop.f32.mrb[0].mxu0
    %v2408 = vadd.f32 %v61, %v2407
    %v2409 = vpop.f32.mrb[0].mxu0
    %v2410 = vpop.f32.mrb[0].mxu0
    %v2411 = vpop.f32.mrb[0].mxu0
    %2412 = vdwg.mxu0
    %vm2413 = vcmp.gt.f32.partialorder %v2408, 0.0
    %v2414 = vmin.f32 %v2408, 0.0
    %v2415 = vmul.f32 %v2414, 1.442695
    %v2416 = vpow.pop %v2415
    %v2417 = vsub.f32 %v2416, 1.0
    %v2418 = vsel %vm2413, %v2408, %v2417
    %v2419 = vpack.c.bf16 %v2418, %v2418
    %v2421 = vsel %vm207, %v2419, 0
    %2423 = vmatprep.subr.bf16.mxu0 0
    %2424 = vmatpush1.bf16.msra.mxu0 %v266
    %2425 = vmatprep.subr.bf16.mxu0 0
    %2426 = vmatpush1.bf16.msra.mxu0 %v267
    %2427 = vmatprep.subr.bf16.mxu0 0
    %2428 = vmatpush1.bf16.msra.mxu0 0
    %2429 = vmatprep.subr.bf16.mxu0 0
    %2430 = vmatpush1.bf16.msra.mxu0 0
    %2431 = vmatprep.subr.bf16.mxu0 0
    %2432 = vmatpush1.bf16.msra.mxu0 0
    %2433 = vmatprep.subr.bf16.mxu0 0
    %2434 = vmatpush1.bf16.msra.mxu0 0
    %2435 = vmatprep.subr.bf16.mxu0 0
    %2436 = vmatpush1.bf16.msra.mxu0 0
    %2437 = vmatprep.subr.bf16.mxu0 0
    %2438 = vmatpush1.bf16.msra.mxu0 0
    %2439 = vmatprep.subr.bf16.mxu0 0
    %2440 = vmatpush1.bf16.msra.mxu0 0
    %2441 = vmatprep.subr.bf16.mxu0 0
    %2442 = vmatpush1.bf16.msra.mxu0 0
    %2443 = vmatprep.subr.bf16.mxu0 0
    %2444 = vmatpush1.bf16.msra.mxu0 0
    %2445 = vmatprep.subr.bf16.mxu0 0
    %2446 = vmatpush1.bf16.msra.mxu0 0
    %2447 = vmatprep.subr.bf16.mxu0 0
    %2448 = vmatpush1.bf16.msra.mxu0 0
    %2449 = vmatprep.subr.bf16.mxu0 0
    %2450 = vmatpush1.bf16.msra.mxu0 0
    %2451 = vmatprep.subr.bf16.mxu0 0
    %2452 = vmatpush1.bf16.msra.mxu0 0
    %2453 = vmatprep.subr.bf16.mxu0 0
    %2454 = vmatpush1.bf16.msra.mxu0 0
    %2455 = vmatprep.mubr.bf16.mxu0 0
    %2456 = vmatmul.mubr.bf16.gmra.mrb[0].mxu0 %v2421
    %v2457 = vpop.f32.mrb[0].mxu0
    %v2458 = vadd.f32 %v68, %v2457
    %v2459 = vpop.f32.mrb[0].mxu0
    %v2460 = vpop.f32.mrb[0].mxu0
    %v2461 = vpop.f32.mrb[0].mxu0
    %2462 = vdwg.mxu0
    %v2463 = vmul.f32 %v1887, 2.0
    %v2464 = vadd.f32 %v1694, %v2463
    %v2465 = vmul.f32 %v2080, 2.0
    %v2466 = vadd.f32 %v2464, %v2465
    %v2467 = vadd.f32 %v2466, %v2273
    %v2468 = vmul.f32 %v903, %v2467
    %v2469 = vadd.f32 %v1687, %v2468
    %v2470 = vmul.f32 %v2072, 2.0
    %v2471 = vadd.f32 %v1879, %v2470
    %v2472 = vmul.f32 %v2265, 2.0
    %v2473 = vadd.f32 %v2471, %v2472
    %v2474 = vadd.f32 %v2473, %v2458
    %v2475 = vmul.f32 %v903, %v2474
    %v2476 = vadd.f32 %v1694, %v2475
    %v2477 = vpack.c.bf16 %v2469, %v2469
    %v2478 = vpack.c.bf16 %v2476, %v2476
    %v2480 = vsel %vm93, %v2478, 0
    %2482 = vmatprep.subr.bf16.mxu0 0
    %2483 = vmatpush1.bf16.msra.mxu0 %v99
    %2484 = vmatprep.subr.bf16.mxu0 0
    %2485 = vmatpush1.bf16.msra.mxu0 0
    %2486 = vmatprep.subr.bf16.mxu0 0
    %2487 = vmatpush1.bf16.msra.mxu0 0
    %2488 = vmatprep.subr.bf16.mxu0 0
    %2489 = vmatpush1.bf16.msra.mxu0 0
    %2490 = vmatprep.subr.bf16.mxu0 0
    %2491 = vmatpush1.bf16.msra.mxu0 0
    %2492 = vmatprep.subr.bf16.mxu0 0
    %2493 = vmatpush1.bf16.msra.mxu0 0
    %2494 = vmatprep.subr.bf16.mxu0 0
    %2495 = vmatpush1.bf16.msra.mxu0 0
    %2496 = vmatprep.subr.bf16.mxu0 0
    %2497 = vmatpush1.bf16.msra.mxu0 0
    %2498 = vmatprep.subr.bf16.mxu0 0
    %2499 = vmatpush1.bf16.msra.mxu0 0
    %2500 = vmatprep.subr.bf16.mxu0 0
    %2501 = vmatpush1.bf16.msra.mxu0 0
    %2502 = vmatprep.subr.bf16.mxu0 0
    %2503 = vmatpush1.bf16.msra.mxu0 0
    %2504 = vmatprep.subr.bf16.mxu0 0
    %2505 = vmatpush1.bf16.msra.mxu0 0
    %2506 = vmatprep.subr.bf16.mxu0 0
    %2507 = vmatpush1.bf16.msra.mxu0 0
    %2508 = vmatprep.subr.bf16.mxu0 0
    %2509 = vmatpush1.bf16.msra.mxu0 0
    %2510 = vmatprep.subr.bf16.mxu0 0
    %2511 = vmatpush1.bf16.msra.mxu0 0
    %2512 = vmatprep.subr.bf16.mxu0 0
    %2513 = vmatpush1.bf16.msra.mxu0 0
    %2514 = vmatprep.mubr.bf16.mxu0 0
    %2515 = vmatmul.mubr.bf16.gmra.mrb[0].mxu0 %v2480
    %v2516 = vpop.f32.mrb[0].mxu0
    %v2517 = vadd.f32 0.0, %v2516
    %v2518 = vpop.f32.mrb[0].mxu0
    %v2519 = vpop.f32.mrb[0].mxu0
    %v2520 = vpop.f32.mrb[0].mxu0
    %2521 = vdwg.mxu0
    %v2523 = vsel %vm93, %v2477, 0
    %2525 = vmatprep.subr.bf16.mxu0 0
    %2526 = vmatpush1.bf16.msra.mxu0 %v145
    %2527 = vmatprep.subr.bf16.mxu0 0
    %2528 = vmatpush1.bf16.msra.mxu0 0
    %2529 = vmatprep.subr.bf16.mxu0 0
    %2530 = vmatpush1.bf16.msra.mxu0 0
    %2531 = vmatprep.subr.bf16.mxu0 0
    %2532 = vmatpush1.bf16.msra.mxu0 0
    %2533 = vmatprep.subr.bf16.mxu0 0
    %2534 = vmatpush1.bf16.msra.mxu0 0
    %2535 = vmatprep.subr.bf16.mxu0 0
    %2536 = vmatpush1.bf16.msra.mxu0 0
    %2537 = vmatprep.subr.bf16.mxu0 0
    %2538 = vmatpush1.bf16.msra.mxu0 0
    %2539 = vmatprep.subr.bf16.mxu0 0
    %2540 = vmatpush1.bf16.msra.mxu0 0
    %2541 = vmatprep.subr.bf16.mxu0 0
    %2542 = vmatpush1.bf16.msra.mxu0 0
    %2543 = vmatprep.subr.bf16.mxu0 0
    %2544 = vmatpush1.bf16.msra.mxu0 0
    %2545 = vmatprep.subr.bf16.mxu0 0
    %2546 = vmatpush1.bf16.msra.mxu0 0
    %2547 = vmatprep.subr.bf16.mxu0 0
    %2548 = vmatpush1.bf16.msra.mxu0 0
    %2549 = vmatprep.subr.bf16.mxu0 0
    %2550 = vmatpush1.bf16.msra.mxu0 0
    %2551 = vmatprep.subr.bf16.mxu0 0
    %2552 = vmatpush1.bf16.msra.mxu0 0
    %2553 = vmatprep.subr.bf16.mxu0 0
    %2554 = vmatpush1.bf16.msra.mxu0 0
    %2555 = vmatprep.subr.bf16.mxu0 0
    %2556 = vmatpush1.bf16.msra.mxu0 0
    %2557 = vmatprep.mubr.bf16.mxu0 0
    %2558 = vmatmul.mubr.bf16.gmra.mrb[0].mxu0 %v2523
    %v2559 = vpop.f32.mrb[0].mxu0
    %v2560 = vadd.f32 %v2517, %v2559
    %v2561 = vpop.f32.mrb[0].mxu0
    %v2562 = vpop.f32.mrb[0].mxu0
    %v2563 = vpop.f32.mrb[0].mxu0
    %2564 = vdwg.mxu0
    %v2565 = vadd.f32 %v2560, %v54
    %vm2566 = vcmp.gt.f32.partialorder %v2565, 0.0
    %v2567 = vmin.f32 %v2565, 0.0
    %v2568 = vmul.f32 %v2567, 1.442695
    %v2569 = vpow.pop %v2568
    %v2570 = vsub.f32 %v2569, 1.0
    %v2571 = vsel %vm2566, %v2565, %v2570
    %v2572 = vpack.c.bf16 %v2571, %v2571
    %v2574 = vsel %vm207, %v2572, 0
    %2576 = vmatprep.subr.bf16.mxu0 0
    %2577 = vmatpush1.bf16.msra.mxu0 %v203
    %2578 = vmatprep.subr.bf16.mxu0 0
    %2579 = vmatpush1.bf16.msra.mxu0 %v204
    %2580 = vmatprep.subr.bf16.mxu0 0
    %2581 = vmatpush1.bf16.msra.mxu0 0
    %2582 = vmatprep.subr.bf16.mxu0 0
    %2583 = vmatpush1.bf16.msra.mxu0 0
    %2584 = vmatprep.subr.bf16.mxu0 0
    %2585 = vmatpush1.bf16.msra.mxu0 0
    %2586 = vmatprep.subr.bf16.mxu0 0
    %2587 = vmatpush1.bf16.msra.mxu0 0
    %2588 = vmatprep.subr.bf16.mxu0 0
    %2589 = vmatpush1.bf16.msra.mxu0 0
    %2590 = vmatprep.subr.bf16.mxu0 0
    %2591 = vmatpush1.bf16.msra.mxu0 0
    %2592 = vmatprep.subr.bf16.mxu0 0
    %2593 = vmatpush1.bf16.msra.mxu0 0
    %2594 = vmatprep.subr.bf16.mxu0 0
    %2595 = vmatpush1.bf16.msra.mxu0 0
    %2596 = vmatprep.subr.bf16.mxu0 0
    %2597 = vmatpush1.bf16.msra.mxu0 0
    %2598 = vmatprep.subr.bf16.mxu0 0
    %2599 = vmatpush1.bf16.msra.mxu0 0
    %2600 = vmatprep.subr.bf16.mxu0 0
    %2601 = vmatpush1.bf16.msra.mxu0 0
    %2602 = vmatprep.subr.bf16.mxu0 0
    %2603 = vmatpush1.bf16.msra.mxu0 0
    %2604 = vmatprep.subr.bf16.mxu0 0
    %2605 = vmatpush1.bf16.msra.mxu0 0
    %2606 = vmatprep.subr.bf16.mxu0 0
    %2607 = vmatpush1.bf16.msra.mxu0 0
    %2608 = vmatprep.mubr.bf16.mxu0 0
    %2609 = vmatmul.mubr.bf16.gmra.mrb[0].mxu0 %v2574
    %v2610 = vpop.f32.mrb[0].mxu0
    %v2611 = vadd.f32 %v61, %v2610
    %v2612 = vpop.f32.mrb[0].mxu0
    %v2613 = vpop.f32.mrb[0].mxu0
    %v2614 = vpop.f32.mrb[0].mxu0
    %2615 = vdwg.mxu0
    %vm2616 = vcmp.gt.f32.partialorder %v2611, 0.0
    %v2617 = vmin.f32 %v2611, 0.0
    %v2618 = vmul.f32 %v2617, 1.442695
    %v2619 = vpow.pop %v2618
    %v2620 = vsub.f32 %v2619, 1.0
    %v2621 = vsel %vm2616, %v2611, %v2620
    %v2622 = vpack.c.bf16 %v2621, %v2621
    %v2624 = vsel %vm207, %v2622, 0
    %2626 = vmatprep.subr.bf16.mxu0 0
    %2627 = vmatpush1.bf16.msra.mxu0 %v266
    %2628 = vmatprep.subr.bf16.mxu0 0
    %2629 = vmatpush1.bf16.msra.mxu0 %v267
    %2630 = vmatprep.subr.bf16.mxu0 0
    %2631 = vmatpush1.bf16.msra.mxu0 0
    %2632 = vmatprep.subr.bf16.mxu0 0
    %2633 = vmatpush1.bf16.msra.mxu0 0
    %2634 = vmatprep.subr.bf16.mxu0 0
    %2635 = vmatpush1.bf16.msra.mxu0 0
    %2636 = vmatprep.subr.bf16.mxu0 0
    %2637 = vmatpush1.bf16.msra.mxu0 0
    %2638 = vmatprep.subr.bf16.mxu0 0
    %2639 = vmatpush1.bf16.msra.mxu0 0
    %2640 = vmatprep.subr.bf16.mxu0 0
    %2641 = vmatpush1.bf16.msra.mxu0 0
    %2642 = vmatprep.subr.bf16.mxu0 0
    %2643 = vmatpush1.bf16.msra.mxu0 0
    %2644 = vmatprep.subr.bf16.mxu0 0
    %2645 = vmatpush1.bf16.msra.mxu0 0
    %2646 = vmatprep.subr.bf16.mxu0 0
    %2647 = vmatpush1.bf16.msra.mxu0 0
    %2648 = vmatprep.subr.bf16.mxu0 0
    %2649 = vmatpush1.bf16.msra.mxu0 0
    %2650 = vmatprep.subr.bf16.mxu0 0
    %2651 = vmatpush1.bf16.msra.mxu0 0
    %2652 = vmatprep.subr.bf16.mxu0 0
    %2653 = vmatpush1.bf16.msra.mxu0 0
    %2654 = vmatprep.subr.bf16.mxu0 0
    %2655 = vmatpush1.bf16.msra.mxu0 0
    %2656 = vmatprep.subr.bf16.mxu0 0
    %2657 = vmatpush1.bf16.msra.mxu0 0
    %2658 = vmatprep.mubr.bf16.mxu0 0
    %2659 = vmatmul.mubr.bf16.gmra.mrb[0].mxu0 %v2624
    %v2660 = vpop.f32.mrb[0].mxu0
    %v2661 = vadd.f32 %v68, %v2660
    %v2662 = vpop.f32.mrb[0].mxu0
    %v2663 = vpop.f32.mrb[0].mxu0
    %v2664 = vpop.f32.mrb[0].mxu0
    %2665 = vdwg.mxu0
    %v2666 = vmul.f32 %v314, %v2476
    %v2667 = vadd.f32 %v2469, %v2666
    %v2668 = vmul.f32 %v314, %v2661
    %v2669 = vadd.f32 %v2476, %v2668
    %v2670 = vpack.c.bf16 %v2667, %v2667
    %v2671 = vpack.c.bf16 %v2669, %v2669
    %v2673 = vsel %vm93, %v2671, 0
    %2675 = vmatprep.subr.bf16.mxu0 0
    %2676 = vmatpush1.bf16.msra.mxu0 %v99
    %2677 = vmatprep.subr.bf16.mxu0 0
    %2678 = vmatpush1.bf16.msra.mxu0 0
    %2679 = vmatprep.subr.bf16.mxu0 0
    %2680 = vmatpush1.bf16.msra.mxu0 0
    %2681 = vmatprep.subr.bf16.mxu0 0
    %2682 = vmatpush1.bf16.msra.mxu0 0
    %2683 = vmatprep.subr.bf16.mxu0 0
    %2684 = vmatpush1.bf16.msra.mxu0 0
    %2685 = vmatprep.subr.bf16.mxu0 0
    %2686 = vmatpush1.bf16.msra.mxu0 0
    %2687 = vmatprep.subr.bf16.mxu0 0
    %2688 = vmatpush1.bf16.msra.mxu0 0
    %2689 = vmatprep.subr.bf16.mxu0 0
    %2690 = vmatpush1.bf16.msra.mxu0 0
    %2691 = vmatprep.subr.bf16.mxu0 0
    %2692 = vmatpush1.bf16.msra.mxu0 0
    %2693 = vmatprep.subr.bf16.mxu0 0
    %2694 = vmatpush1.bf16.msra.mxu0 0
    %2695 = vmatprep.subr.bf16.mxu0 0
    %2696 = vmatpush1.bf16.msra.mxu0 0
    %2697 = vmatprep.subr.bf16.mxu0 0
    %2698 = vmatpush1.bf16.msra.mxu0 0
    %2699 = vmatprep.subr.bf16.mxu0 0
    %2700 = vmatpush1.bf16.msra.mxu0 0
    %2701 = vmatprep.subr.bf16.mxu0 0
    %2702 = vmatpush1.bf16.msra.mxu0 0
    %2703 = vmatprep.subr.bf16.mxu0 0
    %2704 = vmatpush1.bf16.msra.mxu0 0
    %2705 = vmatprep.subr.bf16.mxu0 0
    %2706 = vmatpush1.bf16.msra.mxu0 0
    %2707 = vmatprep.mubr.bf16.mxu0 0
    %2708 = vmatmul.mubr.bf16.gmra.mrb[0].mxu0 %v2673
    %v2709 = vpop.f32.mrb[0].mxu0
    %v2710 = vadd.f32 0.0, %v2709
    %v2711 = vpop.f32.mrb[0].mxu0
    %v2712 = vpop.f32.mrb[0].mxu0
    %v2713 = vpop.f32.mrb[0].mxu0
    %2714 = vdwg.mxu0
    %v2716 = vsel %vm93, %v2670, 0
    %2718 = vmatprep.subr.bf16.mxu0 0
    %2719 = vmatpush1.bf16.msra.mxu0 %v145
    %2720 = vmatprep.subr.bf16.mxu0 0
    %2721 = vmatpush1.bf16.msra.mxu0 0
    %2722 = vmatprep.subr.bf16.mxu0 0
    %2723 = vmatpush1.bf16.msra.mxu0 0
    %2724 = vmatprep.subr.bf16.mxu0 0
    %2725 = vmatpush1.bf16.msra.mxu0 0
    %2726 = vmatprep.subr.bf16.mxu0 0
    %2727 = vmatpush1.bf16.msra.mxu0 0
    %2728 = vmatprep.subr.bf16.mxu0 0
    %2729 = vmatpush1.bf16.msra.mxu0 0
    %2730 = vmatprep.subr.bf16.mxu0 0
    %2731 = vmatpush1.bf16.msra.mxu0 0
    %2732 = vmatprep.subr.bf16.mxu0 0
    %2733 = vmatpush1.bf16.msra.mxu0 0
    %2734 = vmatprep.subr.bf16.mxu0 0
    %2735 = vmatpush1.bf16.msra.mxu0 0
    %2736 = vmatprep.subr.bf16.mxu0 0
    %2737 = vmatpush1.bf16.msra.mxu0 0
    %2738 = vmatprep.subr.bf16.mxu0 0
    %2739 = vmatpush1.bf16.msra.mxu0 0
    %2740 = vmatprep.subr.bf16.mxu0 0
    %2741 = vmatpush1.bf16.msra.mxu0 0
    %2742 = vmatprep.subr.bf16.mxu0 0
    %2743 = vmatpush1.bf16.msra.mxu0 0
    %2744 = vmatprep.subr.bf16.mxu0 0
    %2745 = vmatpush1.bf16.msra.mxu0 0
    %2746 = vmatprep.subr.bf16.mxu0 0
    %2747 = vmatpush1.bf16.msra.mxu0 0
    %2748 = vmatprep.subr.bf16.mxu0 0
    %2749 = vmatpush1.bf16.msra.mxu0 0
    %2750 = vmatprep.mubr.bf16.mxu0 0
    %2751 = vmatmul.mubr.bf16.gmra.mrb[0].mxu0 %v2716
    %v2752 = vpop.f32.mrb[0].mxu0
    %v2753 = vadd.f32 %v2710, %v2752
    %v2754 = vpop.f32.mrb[0].mxu0
    %v2755 = vpop.f32.mrb[0].mxu0
    %v2756 = vpop.f32.mrb[0].mxu0
    %2757 = vdwg.mxu0
    %v2758 = vadd.f32 %v2753, %v54
    %vm2759 = vcmp.gt.f32.partialorder %v2758, 0.0
    %v2760 = vmin.f32 %v2758, 0.0
    %v2761 = vmul.f32 %v2760, 1.442695
    %v2762 = vpow.pop %v2761
    %v2763 = vsub.f32 %v2762, 1.0
    %v2764 = vsel %vm2759, %v2758, %v2763
    %v2765 = vpack.c.bf16 %v2764, %v2764
    %v2767 = vsel %vm207, %v2765, 0
    %2769 = vmatprep.subr.bf16.mxu0 0
    %2770 = vmatpush1.bf16.msra.mxu0 %v203
    %2771 = vmatprep.subr.bf16.mxu0 0
    %2772 = vmatpush1.bf16.msra.mxu0 %v204
    %2773 = vmatprep.subr.bf16.mxu0 0
    %2774 = vmatpush1.bf16.msra.mxu0 0
    %2775 = vmatprep.subr.bf16.mxu0 0
    %2776 = vmatpush1.bf16.msra.mxu0 0
    %2777 = vmatprep.subr.bf16.mxu0 0
    %2778 = vmatpush1.bf16.msra.mxu0 0
    %2779 = vmatprep.subr.bf16.mxu0 0
    %2780 = vmatpush1.bf16.msra.mxu0 0
    %2781 = vmatprep.subr.bf16.mxu0 0
    %2782 = vmatpush1.bf16.msra.mxu0 0
    %2783 = vmatprep.subr.bf16.mxu0 0
    %2784 = vmatpush1.bf16.msra.mxu0 0
    %2785 = vmatprep.subr.bf16.mxu0 0
    %2786 = vmatpush1.bf16.msra.mxu0 0
    %2787 = vmatprep.subr.bf16.mxu0 0
    %2788 = vmatpush1.bf16.msra.mxu0 0
    %2789 = vmatprep.subr.bf16.mxu0 0
    %2790 = vmatpush1.bf16.msra.mxu0 0
    %2791 = vmatprep.subr.bf16.mxu0 0
    %2792 = vmatpush1.bf16.msra.mxu0 0
    %2793 = vmatprep.subr.bf16.mxu0 0
    %2794 = vmatpush1.bf16.msra.mxu0 0
    %2795 = vmatprep.subr.bf16.mxu0 0
    %2796 = vmatpush1.bf16.msra.mxu0 0
    %2797 = vmatprep.subr.bf16.mxu0 0
    %2798 = vmatpush1.bf16.msra.mxu0 0
    %2799 = vmatprep.subr.bf16.mxu0 0
    %2800 = vmatpush1.bf16.msra.mxu0 0
    %2801 = vmatprep.mubr.bf16.mxu0 0
    %2802 = vmatmul.mubr.bf16.gmra.mrb[0].mxu0 %v2767
    %v2803 = vpop.f32.mrb[0].mxu0
    %v2804 = vadd.f32 %v61, %v2803
    %v2805 = vpop.f32.mrb[0].mxu0
    %v2806 = vpop.f32.mrb[0].mxu0
    %v2807 = vpop.f32.mrb[0].mxu0
    %2808 = vdwg.mxu0
    %vm2809 = vcmp.gt.f32.partialorder %v2804, 0.0
    %v2810 = vmin.f32 %v2804, 0.0
    %v2811 = vmul.f32 %v2810, 1.442695
    %v2812 = vpow.pop %v2811
    %v2813 = vsub.f32 %v2812, 1.0
    %v2814 = vsel %vm2809, %v2804, %v2813
    %v2815 = vpack.c.bf16 %v2814, %v2814
    %v2817 = vsel %vm207, %v2815, 0
    %2819 = vmatprep.subr.bf16.mxu0 0
    %2820 = vmatpush1.bf16.msra.mxu0 %v266
    %2821 = vmatprep.subr.bf16.mxu0 0
    %2822 = vmatpush1.bf16.msra.mxu0 %v267
    %2823 = vmatprep.subr.bf16.mxu0 0
    %2824 = vmatpush1.bf16.msra.mxu0 0
    %2825 = vmatprep.subr.bf16.mxu0 0
    %2826 = vmatpush1.bf16.msra.mxu0 0
    %2827 = vmatprep.subr.bf16.mxu0 0
    %2828 = vmatpush1.bf16.msra.mxu0 0
    %2829 = vmatprep.subr.bf16.mxu0 0
    %2830 = vmatpush1.bf16.msra.mxu0 0
    %2831 = vmatprep.subr.bf16.mxu0 0
    %2832 = vmatpush1.bf16.msra.mxu0 0
    %2833 = vmatprep.subr.bf16.mxu0 0
    %2834 = vmatpush1.bf16.msra.mxu0 0
    %2835 = vmatprep.subr.bf16.mxu0 0
    %2836 = vmatpush1.bf16.msra.mxu0 0
    %2837 = vmatprep.subr.bf16.mxu0 0
    %2838 = vmatpush1.bf16.msra.mxu0 0
    %2839 = vmatprep.subr.bf16.mxu0 0
    %2840 = vmatpush1.bf16.msra.mxu0 0
    %2841 = vmatprep.subr.bf16.mxu0 0
    %2842 = vmatpush1.bf16.msra.mxu0 0
    %2843 = vmatprep.subr.bf16.mxu0 0
    %2844 = vmatpush1.bf16.msra.mxu0 0
    %2845 = vmatprep.subr.bf16.mxu0 0
    %2846 = vmatpush1.bf16.msra.mxu0 0
    %2847 = vmatprep.subr.bf16.mxu0 0
    %2848 = vmatpush1.bf16.msra.mxu0 0
    %2849 = vmatprep.subr.bf16.mxu0 0
    %2850 = vmatpush1.bf16.msra.mxu0 0
    %2851 = vmatprep.mubr.bf16.mxu0 0
    %2852 = vmatmul.mubr.bf16.gmra.mrb[0].mxu0 %v2817
    %v2853 = vpop.f32.mrb[0].mxu0
    %v2854 = vadd.f32 %v68, %v2853
    %v2855 = vpop.f32.mrb[0].mxu0
    %v2856 = vpop.f32.mrb[0].mxu0
    %v2857 = vpop.f32.mrb[0].mxu0
    %2858 = vdwg.mxu0
    %v2859 = vmul.f32 %v314, %v2669
    %v2860 = vadd.f32 %v2469, %v2859
    %v2861 = vmul.f32 %v314, %v2854
    %v2862 = vadd.f32 %v2476, %v2861
    %v2863 = vpack.c.bf16 %v2860, %v2860
    %v2864 = vpack.c.bf16 %v2862, %v2862
    %v2866 = vsel %vm93, %v2864, 0
    %2868 = vmatprep.subr.bf16.mxu0 0
    %2869 = vmatpush1.bf16.msra.mxu0 %v99
    %2870 = vmatprep.subr.bf16.mxu0 0
    %2871 = vmatpush1.bf16.msra.mxu0 0
    %2872 = vmatprep.subr.bf16.mxu0 0
    %2873 = vmatpush1.bf16.msra.mxu0 0
    %2874 = vmatprep.subr.bf16.mxu0 0
    %2875 = vmatpush1.bf16.msra.mxu0 0
    %2876 = vmatprep.subr.bf16.mxu0 0
    %2877 = vmatpush1.bf16.msra.mxu0 0
    %2878 = vmatprep.subr.bf16.mxu0 0
    %2879 = vmatpush1.bf16.msra.mxu0 0
    %2880 = vmatprep.subr.bf16.mxu0 0
    %2881 = vmatpush1.bf16.msra.mxu0 0
    %2882 = vmatprep.subr.bf16.mxu0 0
    %2883 = vmatpush1.bf16.msra.mxu0 0
    %2884 = vmatprep.subr.bf16.mxu0 0
    %2885 = vmatpush1.bf16.msra.mxu0 0
    %2886 = vmatprep.subr.bf16.mxu0 0
    %2887 = vmatpush1.bf16.msra.mxu0 0
    %2888 = vmatprep.subr.bf16.mxu0 0
    %2889 = vmatpush1.bf16.msra.mxu0 0
    %2890 = vmatprep.subr.bf16.mxu0 0
    %2891 = vmatpush1.bf16.msra.mxu0 0
    %2892 = vmatprep.subr.bf16.mxu0 0
    %2893 = vmatpush1.bf16.msra.mxu0 0
    %2894 = vmatprep.subr.bf16.mxu0 0
    %2895 = vmatpush1.bf16.msra.mxu0 0
    %2896 = vmatprep.subr.bf16.mxu0 0
    %2897 = vmatpush1.bf16.msra.mxu0 0
    %2898 = vmatprep.subr.bf16.mxu0 0
    %2899 = vmatpush1.bf16.msra.mxu0 0
    %2900 = vmatprep.mubr.bf16.mxu0 0
    %2901 = vmatmul.mubr.bf16.gmra.mrb[0].mxu0 %v2866
    %v2902 = vpop.f32.mrb[0].mxu0
    %v2903 = vadd.f32 0.0, %v2902
    %v2904 = vpop.f32.mrb[0].mxu0
    %v2905 = vpop.f32.mrb[0].mxu0
    %v2906 = vpop.f32.mrb[0].mxu0
    %2907 = vdwg.mxu0
    %v2909 = vsel %vm93, %v2863, 0
    %2911 = vmatprep.subr.bf16.mxu0 0
    %2912 = vmatpush1.bf16.msra.mxu0 %v145
    %2913 = vmatprep.subr.bf16.mxu0 0
    %2914 = vmatpush1.bf16.msra.mxu0 0
    %2915 = vmatprep.subr.bf16.mxu0 0
    %2916 = vmatpush1.bf16.msra.mxu0 0
    %2917 = vmatprep.subr.bf16.mxu0 0
    %2918 = vmatpush1.bf16.msra.mxu0 0
    %2919 = vmatprep.subr.bf16.mxu0 0
    %2920 = vmatpush1.bf16.msra.mxu0 0
    %2921 = vmatprep.subr.bf16.mxu0 0
    %2922 = vmatpush1.bf16.msra.mxu0 0
    %2923 = vmatprep.subr.bf16.mxu0 0
    %2924 = vmatpush1.bf16.msra.mxu0 0
    %2925 = vmatprep.subr.bf16.mxu0 0
    %2926 = vmatpush1.bf16.msra.mxu0 0
    %2927 = vmatprep.subr.bf16.mxu0 0
    %2928 = vmatpush1.bf16.msra.mxu0 0
    %2929 = vmatprep.subr.bf16.mxu0 0
    %2930 = vmatpush1.bf16.msra.mxu0 0
    %2931 = vmatprep.subr.bf16.mxu0 0
    %2932 = vmatpush1.bf16.msra.mxu0 0
    %2933 = vmatprep.subr.bf16.mxu0 0
    %2934 = vmatpush1.bf16.msra.mxu0 0
    %2935 = vmatprep.subr.bf16.mxu0 0
    %2936 = vmatpush1.bf16.msra.mxu0 0
    %2937 = vmatprep.subr.bf16.mxu0 0
    %2938 = vmatpush1.bf16.msra.mxu0 0
    %2939 = vmatprep.subr.bf16.mxu0 0
    %2940 = vmatpush1.bf16.msra.mxu0 0
    %2941 = vmatprep.subr.bf16.mxu0 0
    %2942 = vmatpush1.bf16.msra.mxu0 0
    %2943 = vmatprep.mubr.bf16.mxu0 0
    %2944 = vmatmul.mubr.bf16.gmra.mrb[0].mxu0 %v2909
    %v2945 = vpop.f32.mrb[0].mxu0
    %v2946 = vadd.f32 %v2903, %v2945
    %v2947 = vpop.f32.mrb[0].mxu0
    %v2948 = vpop.f32.mrb[0].mxu0
    %v2949 = vpop.f32.mrb[0].mxu0
    %2950 = vdwg.mxu0
    %v2951 = vadd.f32 %v2946, %v54
    %vm2952 = vcmp.gt.f32.partialorder %v2951, 0.0
    %v2953 = vmin.f32 %v2951, 0.0
    %v2954 = vmul.f32 %v2953, 1.442695
    %v2955 = vpow.pop %v2954
    %v2956 = vsub.f32 %v2955, 1.0
    %v2957 = vsel %vm2952, %v2951, %v2956
    %v2958 = vpack.c.bf16 %v2957, %v2957
    %v2960 = vsel %vm207, %v2958, 0
    %2962 = vmatprep.subr.bf16.mxu0 0
    %2963 = vmatpush1.bf16.msra.mxu0 %v203
    %2964 = vmatprep.subr.bf16.mxu0 0
    %2965 = vmatpush1.bf16.msra.mxu0 %v204
    %2966 = vmatprep.subr.bf16.mxu0 0
    %2967 = vmatpush1.bf16.msra.mxu0 0
    %2968 = vmatprep.subr.bf16.mxu0 0
    %2969 = vmatpush1.bf16.msra.mxu0 0
    %2970 = vmatprep.subr.bf16.mxu0 0
    %2971 = vmatpush1.bf16.msra.mxu0 0
    %2972 = vmatprep.subr.bf16.mxu0 0
    %2973 = vmatpush1.bf16.msra.mxu0 0
    %2974 = vmatprep.subr.bf16.mxu0 0
    %2975 = vmatpush1.bf16.msra.mxu0 0
    %2976 = vmatprep.subr.bf16.mxu0 0
    %2977 = vmatpush1.bf16.msra.mxu0 0
    %2978 = vmatprep.subr.bf16.mxu0 0
    %2979 = vmatpush1.bf16.msra.mxu0 0
    %2980 = vmatprep.subr.bf16.mxu0 0
    %2981 = vmatpush1.bf16.msra.mxu0 0
    %2982 = vmatprep.subr.bf16.mxu0 0
    %2983 = vmatpush1.bf16.msra.mxu0 0
    %2984 = vmatprep.subr.bf16.mxu0 0
    %2985 = vmatpush1.bf16.msra.mxu0 0
    %2986 = vmatprep.subr.bf16.mxu0 0
    %2987 = vmatpush1.bf16.msra.mxu0 0
    %2988 = vmatprep.subr.bf16.mxu0 0
    %2989 = vmatpush1.bf16.msra.mxu0 0
    %2990 = vmatprep.subr.bf16.mxu0 0
    %2991 = vmatpush1.bf16.msra.mxu0 0
    %2992 = vmatprep.subr.bf16.mxu0 0
    %2993 = vmatpush1.bf16.msra.mxu0 0
    %2994 = vmatprep.mubr.bf16.mxu0 0
    %2995 = vmatmul.mubr.bf16.gmra.mrb[0].mxu0 %v2960
    %v2996 = vpop.f32.mrb[0].mxu0
    %v2997 = vadd.f32 %v61, %v2996
    %v2998 = vpop.f32.mrb[0].mxu0
    %v2999 = vpop.f32.mrb[0].mxu0
    %v3000 = vpop.f32.mrb[0].mxu0
    %3001 = vdwg.mxu0
    %vm3002 = vcmp.gt.f32.partialorder %v2997, 0.0
    %v3003 = vmin.f32 %v2997, 0.0
    %v3004 = vmul.f32 %v3003, 1.442695
    %v3005 = vpow.pop %v3004
    %v3006 = vsub.f32 %v3005, 1.0
    %v3007 = vsel %vm3002, %v2997, %v3006
    %v3008 = vpack.c.bf16 %v3007, %v3007
    %v3010 = vsel %vm207, %v3008, 0
    %3012 = vmatprep.subr.bf16.mxu0 0
    %3013 = vmatpush1.bf16.msra.mxu0 %v266
    %3014 = vmatprep.subr.bf16.mxu0 0
    %3015 = vmatpush1.bf16.msra.mxu0 %v267
    %3016 = vmatprep.subr.bf16.mxu0 0
    %3017 = vmatpush1.bf16.msra.mxu0 0
    %3018 = vmatprep.subr.bf16.mxu0 0
    %3019 = vmatpush1.bf16.msra.mxu0 0
    %3020 = vmatprep.subr.bf16.mxu0 0
    %3021 = vmatpush1.bf16.msra.mxu0 0
    %3022 = vmatprep.subr.bf16.mxu0 0
    %3023 = vmatpush1.bf16.msra.mxu0 0
    %3024 = vmatprep.subr.bf16.mxu0 0
    %3025 = vmatpush1.bf16.msra.mxu0 0
    %3026 = vmatprep.subr.bf16.mxu0 0
    %3027 = vmatpush1.bf16.msra.mxu0 0
    %3028 = vmatprep.subr.bf16.mxu0 0
    %3029 = vmatpush1.bf16.msra.mxu0 0
    %3030 = vmatprep.subr.bf16.mxu0 0
    %3031 = vmatpush1.bf16.msra.mxu0 0
    %3032 = vmatprep.subr.bf16.mxu0 0
    %3033 = vmatpush1.bf16.msra.mxu0 0
    %3034 = vmatprep.subr.bf16.mxu0 0
    %3035 = vmatpush1.bf16.msra.mxu0 0
    %3036 = vmatprep.subr.bf16.mxu0 0
    %3037 = vmatpush1.bf16.msra.mxu0 0
    %3038 = vmatprep.subr.bf16.mxu0 0
    %3039 = vmatpush1.bf16.msra.mxu0 0
    %3040 = vmatprep.subr.bf16.mxu0 0
    %3041 = vmatpush1.bf16.msra.mxu0 0
    %3042 = vmatprep.subr.bf16.mxu0 0
    %3043 = vmatpush1.bf16.msra.mxu0 0
    %3044 = vmatprep.mubr.bf16.mxu0 0
    %3045 = vmatmul.mubr.bf16.gmra.mrb[0].mxu0 %v3010
    %v3046 = vpop.f32.mrb[0].mxu0
    %v3047 = vadd.f32 %v68, %v3046
    %v3048 = vpop.f32.mrb[0].mxu0
    %v3049 = vpop.f32.mrb[0].mxu0
    %v3050 = vpop.f32.mrb[0].mxu0
    %3051 = vdwg.mxu0
    %v3052 = vmul.f32 %v701, %v2862
    %v3053 = vadd.f32 %v2469, %v3052
    %v3054 = vmul.f32 %v701, %v3047
    %v3055 = vadd.f32 %v2476, %v3054
    %v3056 = vpack.c.bf16 %v3053, %v3053
    %v3057 = vpack.c.bf16 %v3055, %v3055
    %v3059 = vsel %vm93, %v3057, 0
    %3061 = vmatprep.subr.bf16.mxu0 0
    %3062 = vmatpush1.bf16.msra.mxu0 %v99
    %3063 = vmatprep.subr.bf16.mxu0 0
    %3064 = vmatpush1.bf16.msra.mxu0 0
    %3065 = vmatprep.subr.bf16.mxu0 0
    %3066 = vmatpush1.bf16.msra.mxu0 0
    %3067 = vmatprep.subr.bf16.mxu0 0
    %3068 = vmatpush1.bf16.msra.mxu0 0
    %3069 = vmatprep.subr.bf16.mxu0 0
    %3070 = vmatpush1.bf16.msra.mxu0 0
    %3071 = vmatprep.subr.bf16.mxu0 0
    %3072 = vmatpush1.bf16.msra.mxu0 0
    %3073 = vmatprep.subr.bf16.mxu0 0
    %3074 = vmatpush1.bf16.msra.mxu0 0
    %3075 = vmatprep.subr.bf16.mxu0 0
    %3076 = vmatpush1.bf16.msra.mxu0 0
    %3077 = vmatprep.subr.bf16.mxu0 0
    %3078 = vmatpush1.bf16.msra.mxu0 0
    %3079 = vmatprep.subr.bf16.mxu0 0
    %3080 = vmatpush1.bf16.msra.mxu0 0
    %3081 = vmatprep.subr.bf16.mxu0 0
    %3082 = vmatpush1.bf16.msra.mxu0 0
    %3083 = vmatprep.subr.bf16.mxu0 0
    %3084 = vmatpush1.bf16.msra.mxu0 0
    %3085 = vmatprep.subr.bf16.mxu0 0
    %3086 = vmatpush1.bf16.msra.mxu0 0
    %3087 = vmatprep.subr.bf16.mxu0 0
    %3088 = vmatpush1.bf16.msra.mxu0 0
    %3089 = vmatprep.subr.bf16.mxu0 0
    %3090 = vmatpush1.bf16.msra.mxu0 0
    %3091 = vmatprep.subr.bf16.mxu0 0
    %3092 = vmatpush1.bf16.msra.mxu0 0
    %3093 = vmatprep.mubr.bf16.mxu0 0
    %3094 = vmatmul.mubr.bf16.gmra.mrb[0].mxu0 %v3059
    %v3095 = vpop.f32.mrb[0].mxu0
    %v3096 = vadd.f32 0.0, %v3095
    %v3097 = vpop.f32.mrb[0].mxu0
    %v3098 = vpop.f32.mrb[0].mxu0
    %v3099 = vpop.f32.mrb[0].mxu0
    %3100 = vdwg.mxu0
    %v3102 = vsel %vm93, %v3056, 0
    %3104 = vmatprep.subr.bf16.mxu0 0
    %3105 = vmatpush1.bf16.msra.mxu0 %v145
    %3106 = vmatprep.subr.bf16.mxu0 0
    %3107 = vmatpush1.bf16.msra.mxu0 0
    %3108 = vmatprep.subr.bf16.mxu0 0
    %3109 = vmatpush1.bf16.msra.mxu0 0
    %3110 = vmatprep.subr.bf16.mxu0 0
    %3111 = vmatpush1.bf16.msra.mxu0 0
    %3112 = vmatprep.subr.bf16.mxu0 0
    %3113 = vmatpush1.bf16.msra.mxu0 0
    %3114 = vmatprep.subr.bf16.mxu0 0
    %3115 = vmatpush1.bf16.msra.mxu0 0
    %3116 = vmatprep.subr.bf16.mxu0 0
    %3117 = vmatpush1.bf16.msra.mxu0 0
    %3118 = vmatprep.subr.bf16.mxu0 0
    %3119 = vmatpush1.bf16.msra.mxu0 0
    %3120 = vmatprep.subr.bf16.mxu0 0
    %3121 = vmatpush1.bf16.msra.mxu0 0
    %3122 = vmatprep.subr.bf16.mxu0 0
    %3123 = vmatpush1.bf16.msra.mxu0 0
    %3124 = vmatprep.subr.bf16.mxu0 0
    %3125 = vmatpush1.bf16.msra.mxu0 0
    %3126 = vmatprep.subr.bf16.mxu0 0
    %3127 = vmatpush1.bf16.msra.mxu0 0
    %3128 = vmatprep.subr.bf16.mxu0 0
    %3129 = vmatpush1.bf16.msra.mxu0 0
    %3130 = vmatprep.subr.bf16.mxu0 0
    %3131 = vmatpush1.bf16.msra.mxu0 0
    %3132 = vmatprep.subr.bf16.mxu0 0
    %3133 = vmatpush1.bf16.msra.mxu0 0
    %3134 = vmatprep.subr.bf16.mxu0 0
    %3135 = vmatpush1.bf16.msra.mxu0 0
    %3136 = vmatprep.mubr.bf16.mxu0 0
    %3137 = vmatmul.mubr.bf16.gmra.mrb[0].mxu0 %v3102
    %v3138 = vpop.f32.mrb[0].mxu0
    %v3139 = vadd.f32 %v3096, %v3138
    %v3140 = vpop.f32.mrb[0].mxu0
    %v3141 = vpop.f32.mrb[0].mxu0
    %v3142 = vpop.f32.mrb[0].mxu0
    %3143 = vdwg.mxu0
    %v3144 = vadd.f32 %v3139, %v54
    %vm3145 = vcmp.gt.f32.partialorder %v3144, 0.0
    %v3146 = vmin.f32 %v3144, 0.0
    %v3147 = vmul.f32 %v3146, 1.442695
    %v3148 = vpow.pop %v3147
    %v3149 = vsub.f32 %v3148, 1.0
    %v3150 = vsel %vm3145, %v3144, %v3149
    %v3151 = vpack.c.bf16 %v3150, %v3150
    %v3153 = vsel %vm207, %v3151, 0
    %3155 = vmatprep.subr.bf16.mxu0 0
    %3156 = vmatpush1.bf16.msra.mxu0 %v203
    %3157 = vmatprep.subr.bf16.mxu0 0
    %3158 = vmatpush1.bf16.msra.mxu0 %v204
    %3159 = vmatprep.subr.bf16.mxu0 0
    %3160 = vmatpush1.bf16.msra.mxu0 0
    %3161 = vmatprep.subr.bf16.mxu0 0
    %3162 = vmatpush1.bf16.msra.mxu0 0
    %3163 = vmatprep.subr.bf16.mxu0 0
    %3164 = vmatpush1.bf16.msra.mxu0 0
    %3165 = vmatprep.subr.bf16.mxu0 0
    %3166 = vmatpush1.bf16.msra.mxu0 0
    %3167 = vmatprep.subr.bf16.mxu0 0
    %3168 = vmatpush1.bf16.msra.mxu0 0
    %3169 = vmatprep.subr.bf16.mxu0 0
    %3170 = vmatpush1.bf16.msra.mxu0 0
    %3171 = vmatprep.subr.bf16.mxu0 0
    %3172 = vmatpush1.bf16.msra.mxu0 0
    %3173 = vmatprep.subr.bf16.mxu0 0
    %3174 = vmatpush1.bf16.msra.mxu0 0
    %3175 = vmatprep.subr.bf16.mxu0 0
    %3176 = vmatpush1.bf16.msra.mxu0 0
    %3177 = vmatprep.subr.bf16.mxu0 0
    %3178 = vmatpush1.bf16.msra.mxu0 0
    %3179 = vmatprep.subr.bf16.mxu0 0
    %3180 = vmatpush1.bf16.msra.mxu0 0
    %3181 = vmatprep.subr.bf16.mxu0 0
    %3182 = vmatpush1.bf16.msra.mxu0 0
    %3183 = vmatprep.subr.bf16.mxu0 0
    %3184 = vmatpush1.bf16.msra.mxu0 0
    %3185 = vmatprep.subr.bf16.mxu0 0
    %3186 = vmatpush1.bf16.msra.mxu0 0
    %3187 = vmatprep.mubr.bf16.mxu0 0
    %3188 = vmatmul.mubr.bf16.gmra.mrb[0].mxu0 %v3153
    %v3189 = vpop.f32.mrb[0].mxu0
    %v3190 = vadd.f32 %v61, %v3189
    %v3191 = vpop.f32.mrb[0].mxu0
    %v3192 = vpop.f32.mrb[0].mxu0
    %v3193 = vpop.f32.mrb[0].mxu0
    %3194 = vdwg.mxu0
    %vm3195 = vcmp.gt.f32.partialorder %v3190, 0.0
    %v3196 = vmin.f32 %v3190, 0.0
    %v3197 = vmul.f32 %v3196, 1.442695
    %v3198 = vpow.pop %v3197
    %v3199 = vsub.f32 %v3198, 1.0
    %v3200 = vsel %vm3195, %v3190, %v3199
    %v3201 = vpack.c.bf16 %v3200, %v3200
    %v3203 = vsel %vm207, %v3201, 0
    %3205 = vmatprep.subr.bf16.mxu0 0
    %3206 = vmatpush1.bf16.msra.mxu0 %v266
    %3207 = vmatprep.subr.bf16.mxu0 0
    %3208 = vmatpush1.bf16.msra.mxu0 %v267
    %3209 = vmatprep.subr.bf16.mxu0 0
    %3210 = vmatpush1.bf16.msra.mxu0 0
    %3211 = vmatprep.subr.bf16.mxu0 0
    %3212 = vmatpush1.bf16.msra.mxu0 0
    %3213 = vmatprep.subr.bf16.mxu0 0
    %3214 = vmatpush1.bf16.msra.mxu0 0
    %3215 = vmatprep.subr.bf16.mxu0 0
    %3216 = vmatpush1.bf16.msra.mxu0 0
    %3217 = vmatprep.subr.bf16.mxu0 0
    %3218 = vmatpush1.bf16.msra.mxu0 0
    %3219 = vmatprep.subr.bf16.mxu0 0
    %3220 = vmatpush1.bf16.msra.mxu0 0
    %3221 = vmatprep.subr.bf16.mxu0 0
    %3222 = vmatpush1.bf16.msra.mxu0 0
    %3223 = vmatprep.subr.bf16.mxu0 0
    %3224 = vmatpush1.bf16.msra.mxu0 0
    %3225 = vmatprep.subr.bf16.mxu0 0
    %3226 = vmatpush1.bf16.msra.mxu0 0
    %3227 = vmatprep.subr.bf16.mxu0 0
    %3228 = vmatpush1.bf16.msra.mxu0 0
    %3229 = vmatprep.subr.bf16.mxu0 0
    %3230 = vmatpush1.bf16.msra.mxu0 0
    %3231 = vmatprep.subr.bf16.mxu0 0
    %3232 = vmatpush1.bf16.msra.mxu0 0
    %3233 = vmatprep.subr.bf16.mxu0 0
    %3234 = vmatpush1.bf16.msra.mxu0 0
    %3235 = vmatprep.subr.bf16.mxu0 0
    %3236 = vmatpush1.bf16.msra.mxu0 0
    %3237 = vmatprep.mubr.bf16.mxu0 0
    %3238 = vmatmul.mubr.bf16.gmra.mrb[0].mxu0 %v3203
    %v3239 = vpop.f32.mrb[0].mxu0
    %v3240 = vadd.f32 %v68, %v3239
    %v3241 = vpop.f32.mrb[0].mxu0
    %v3242 = vpop.f32.mrb[0].mxu0
    %v3243 = vpop.f32.mrb[0].mxu0
    %3244 = vdwg.mxu0
    %v3245 = vmul.f32 %v2669, 2.0
    %v3246 = vadd.f32 %v2476, %v3245
    %v3247 = vmul.f32 %v2862, 2.0
    %v3248 = vadd.f32 %v3246, %v3247
    %v3249 = vadd.f32 %v3248, %v3055
    %v3250 = vmul.f32 %v903, %v3249
    %v3251 = vadd.f32 %v2469, %v3250
    %v3252 = vmul.f32 %v2854, 2.0
    %v3253 = vadd.f32 %v2661, %v3252
    %v3254 = vmul.f32 %v3047, 2.0
    %v3255 = vadd.f32 %v3253, %v3254
    %v3256 = vadd.f32 %v3255, %v3240
    %v3257 = vmul.f32 %v903, %v3256
    %v3258 = vadd.f32 %v2476, %v3257
    %v3259 = vpack.c.bf16 %v3251, %v3251
    %v3260 = vpack.c.bf16 %v3258, %v3258
    %v3262 = vsel %vm93, %v3260, 0
    %3264 = vmatprep.subr.bf16.mxu0 0
    %3265 = vmatpush1.bf16.msra.mxu0 %v99
    %3266 = vmatprep.subr.bf16.mxu0 0
    %3267 = vmatpush1.bf16.msra.mxu0 0
    %3268 = vmatprep.subr.bf16.mxu0 0
    %3269 = vmatpush1.bf16.msra.mxu0 0
    %3270 = vmatprep.subr.bf16.mxu0 0
    %3271 = vmatpush1.bf16.msra.mxu0 0
    %3272 = vmatprep.subr.bf16.mxu0 0
    %3273 = vmatpush1.bf16.msra.mxu0 0
    %3274 = vmatprep.subr.bf16.mxu0 0
    %3275 = vmatpush1.bf16.msra.mxu0 0
    %3276 = vmatprep.subr.bf16.mxu0 0
    %3277 = vmatpush1.bf16.msra.mxu0 0
    %3278 = vmatprep.subr.bf16.mxu0 0
    %3279 = vmatpush1.bf16.msra.mxu0 0
    %3280 = vmatprep.subr.bf16.mxu0 0
    %3281 = vmatpush1.bf16.msra.mxu0 0
    %3282 = vmatprep.subr.bf16.mxu0 0
    %3283 = vmatpush1.bf16.msra.mxu0 0
    %3284 = vmatprep.subr.bf16.mxu0 0
    %3285 = vmatpush1.bf16.msra.mxu0 0
    %3286 = vmatprep.subr.bf16.mxu0 0
    %3287 = vmatpush1.bf16.msra.mxu0 0
    %3288 = vmatprep.subr.bf16.mxu0 0
    %3289 = vmatpush1.bf16.msra.mxu0 0
    %3290 = vmatprep.subr.bf16.mxu0 0
    %3291 = vmatpush1.bf16.msra.mxu0 0
    %3292 = vmatprep.subr.bf16.mxu0 0
    %3293 = vmatpush1.bf16.msra.mxu0 0
    %3294 = vmatprep.subr.bf16.mxu0 0
    %3295 = vmatpush1.bf16.msra.mxu0 0
    %3296 = vmatprep.mubr.bf16.mxu0 0
    %3297 = vmatmul.mubr.bf16.gmra.mrb[0].mxu0 %v3262
    %v3298 = vpop.f32.mrb[0].mxu0
    %v3299 = vadd.f32 0.0, %v3298
    %v3300 = vpop.f32.mrb[0].mxu0
    %v3301 = vpop.f32.mrb[0].mxu0
    %v3302 = vpop.f32.mrb[0].mxu0
    %3303 = vdwg.mxu0
    %v3305 = vsel %vm93, %v3259, 0
    %3307 = vmatprep.subr.bf16.mxu0 0
    %3308 = vmatpush1.bf16.msra.mxu0 %v145
    %3309 = vmatprep.subr.bf16.mxu0 0
    %3310 = vmatpush1.bf16.msra.mxu0 0
    %3311 = vmatprep.subr.bf16.mxu0 0
    %3312 = vmatpush1.bf16.msra.mxu0 0
    %3313 = vmatprep.subr.bf16.mxu0 0
    %3314 = vmatpush1.bf16.msra.mxu0 0
    %3315 = vmatprep.subr.bf16.mxu0 0
    %3316 = vmatpush1.bf16.msra.mxu0 0
    %3317 = vmatprep.subr.bf16.mxu0 0
    %3318 = vmatpush1.bf16.msra.mxu0 0
    %3319 = vmatprep.subr.bf16.mxu0 0
    %3320 = vmatpush1.bf16.msra.mxu0 0
    %3321 = vmatprep.subr.bf16.mxu0 0
    %3322 = vmatpush1.bf16.msra.mxu0 0
    %3323 = vmatprep.subr.bf16.mxu0 0
    %3324 = vmatpush1.bf16.msra.mxu0 0
    %3325 = vmatprep.subr.bf16.mxu0 0
    %3326 = vmatpush1.bf16.msra.mxu0 0
    %3327 = vmatprep.subr.bf16.mxu0 0
    %3328 = vmatpush1.bf16.msra.mxu0 0
    %3329 = vmatprep.subr.bf16.mxu0 0
    %3330 = vmatpush1.bf16.msra.mxu0 0
    %3331 = vmatprep.subr.bf16.mxu0 0
    %3332 = vmatpush1.bf16.msra.mxu0 0
    %3333 = vmatprep.subr.bf16.mxu0 0
    %3334 = vmatpush1.bf16.msra.mxu0 0
    %3335 = vmatprep.subr.bf16.mxu0 0
    %3336 = vmatpush1.bf16.msra.mxu0 0
    %3337 = vmatprep.subr.bf16.mxu0 0
    %3338 = vmatpush1.bf16.msra.mxu0 0
    %3339 = vmatprep.mubr.bf16.mxu0 0
    %3340 = vmatmul.mubr.bf16.gmra.mrb[0].mxu0 %v3305
    %v3341 = vpop.f32.mrb[0].mxu0
    %v3342 = vadd.f32 %v3299, %v3341
    %v3343 = vpop.f32.mrb[0].mxu0
    %v3344 = vpop.f32.mrb[0].mxu0
    %v3345 = vpop.f32.mrb[0].mxu0
    %3346 = vdwg.mxu0
    %v3347 = vadd.f32 %v3342, %v54
    %vm3348 = vcmp.gt.f32.partialorder %v3347, 0.0
    %v3349 = vmin.f32 %v3347, 0.0
    %v3350 = vmul.f32 %v3349, 1.442695
    %v3351 = vpow.pop %v3350
    %v3352 = vsub.f32 %v3351, 1.0
    %v3353 = vsel %vm3348, %v3347, %v3352
    %v3354 = vpack.c.bf16 %v3353, %v3353
    %v3356 = vsel %vm207, %v3354, 0
    %3358 = vmatprep.subr.bf16.mxu0 0
    %3359 = vmatpush1.bf16.msra.mxu0 %v203
    %3360 = vmatprep.subr.bf16.mxu0 0
    %3361 = vmatpush1.bf16.msra.mxu0 %v204
    %3362 = vmatprep.subr.bf16.mxu0 0
    %3363 = vmatpush1.bf16.msra.mxu0 0
    %3364 = vmatprep.subr.bf16.mxu0 0
    %3365 = vmatpush1.bf16.msra.mxu0 0
    %3366 = vmatprep.subr.bf16.mxu0 0
    %3367 = vmatpush1.bf16.msra.mxu0 0
    %3368 = vmatprep.subr.bf16.mxu0 0
    %3369 = vmatpush1.bf16.msra.mxu0 0
    %3370 = vmatprep.subr.bf16.mxu0 0
    %3371 = vmatpush1.bf16.msra.mxu0 0
    %3372 = vmatprep.subr.bf16.mxu0 0
    %3373 = vmatpush1.bf16.msra.mxu0 0
    %3374 = vmatprep.subr.bf16.mxu0 0
    %3375 = vmatpush1.bf16.msra.mxu0 0
    %3376 = vmatprep.subr.bf16.mxu0 0
    %3377 = vmatpush1.bf16.msra.mxu0 0
    %3378 = vmatprep.subr.bf16.mxu0 0
    %3379 = vmatpush1.bf16.msra.mxu0 0
    %3380 = vmatprep.subr.bf16.mxu0 0
    %3381 = vmatpush1.bf16.msra.mxu0 0
    %3382 = vmatprep.subr.bf16.mxu0 0
    %3383 = vmatpush1.bf16.msra.mxu0 0
    %3384 = vmatprep.subr.bf16.mxu0 0
    %3385 = vmatpush1.bf16.msra.mxu0 0
    %3386 = vmatprep.subr.bf16.mxu0 0
    %3387 = vmatpush1.bf16.msra.mxu0 0
    %3388 = vmatprep.subr.bf16.mxu0 0
    %3389 = vmatpush1.bf16.msra.mxu0 0
    %3390 = vmatprep.mubr.bf16.mxu0 0
    %3391 = vmatmul.mubr.bf16.gmra.mrb[0].mxu0 %v3356
    %v3392 = vpop.f32.mrb[0].mxu0
    %v3393 = vadd.f32 %v61, %v3392
    %v3394 = vpop.f32.mrb[0].mxu0
    %v3395 = vpop.f32.mrb[0].mxu0
    %v3396 = vpop.f32.mrb[0].mxu0
    %3397 = vdwg.mxu0
    %vm3398 = vcmp.gt.f32.partialorder %v3393, 0.0
    %v3399 = vmin.f32 %v3393, 0.0
    %v3400 = vmul.f32 %v3399, 1.442695
    %v3401 = vpow.pop %v3400
    %v3402 = vsub.f32 %v3401, 1.0
    %v3403 = vsel %vm3398, %v3393, %v3402
    %v3404 = vpack.c.bf16 %v3403, %v3403
    %v3406 = vsel %vm207, %v3404, 0
    %3408 = vmatprep.subr.bf16.mxu0 0
    %3409 = vmatpush1.bf16.msra.mxu0 %v266
    %3410 = vmatprep.subr.bf16.mxu0 0
    %3411 = vmatpush1.bf16.msra.mxu0 %v267
    %3412 = vmatprep.subr.bf16.mxu0 0
    %3413 = vmatpush1.bf16.msra.mxu0 0
    %3414 = vmatprep.subr.bf16.mxu0 0
    %3415 = vmatpush1.bf16.msra.mxu0 0
    %3416 = vmatprep.subr.bf16.mxu0 0
    %3417 = vmatpush1.bf16.msra.mxu0 0
    %3418 = vmatprep.subr.bf16.mxu0 0
    %3419 = vmatpush1.bf16.msra.mxu0 0
    %3420 = vmatprep.subr.bf16.mxu0 0
    %3421 = vmatpush1.bf16.msra.mxu0 0
    %3422 = vmatprep.subr.bf16.mxu0 0
    %3423 = vmatpush1.bf16.msra.mxu0 0
    %3424 = vmatprep.subr.bf16.mxu0 0
    %3425 = vmatpush1.bf16.msra.mxu0 0
    %3426 = vmatprep.subr.bf16.mxu0 0
    %3427 = vmatpush1.bf16.msra.mxu0 0
    %3428 = vmatprep.subr.bf16.mxu0 0
    %3429 = vmatpush1.bf16.msra.mxu0 0
    %3430 = vmatprep.subr.bf16.mxu0 0
    %3431 = vmatpush1.bf16.msra.mxu0 0
    %3432 = vmatprep.subr.bf16.mxu0 0
    %3433 = vmatpush1.bf16.msra.mxu0 0
    %3434 = vmatprep.subr.bf16.mxu0 0
    %3435 = vmatpush1.bf16.msra.mxu0 0
    %3436 = vmatprep.subr.bf16.mxu0 0
    %3437 = vmatpush1.bf16.msra.mxu0 0
    %3438 = vmatprep.subr.bf16.mxu0 0
    %3439 = vmatpush1.bf16.msra.mxu0 0
    %3440 = vmatprep.mubr.bf16.mxu0 0
    %3441 = vmatmul.mubr.bf16.gmra.mrb[0].mxu0 %v3406
    %v3442 = vpop.f32.mrb[0].mxu0
    %v3443 = vadd.f32 %v68, %v3442
    %v3444 = vpop.f32.mrb[0].mxu0
    %v3445 = vpop.f32.mrb[0].mxu0
    %v3446 = vpop.f32.mrb[0].mxu0
    %3447 = vdwg.mxu0
    %v3448 = vmul.f32 %v314, %v3258
    %v3449 = vadd.f32 %v3251, %v3448
    %v3450 = vmul.f32 %v314, %v3443
    %v3451 = vadd.f32 %v3258, %v3450
    %v3452 = vpack.c.bf16 %v3449, %v3449
    %v3453 = vpack.c.bf16 %v3451, %v3451
    %v3455 = vsel %vm93, %v3453, 0
    %3457 = vmatprep.subr.bf16.mxu0 0
    %3458 = vmatpush1.bf16.msra.mxu0 %v99
    %3459 = vmatprep.subr.bf16.mxu0 0
    %3460 = vmatpush1.bf16.msra.mxu0 0
    %3461 = vmatprep.subr.bf16.mxu0 0
    %3462 = vmatpush1.bf16.msra.mxu0 0
    %3463 = vmatprep.subr.bf16.mxu0 0
    %3464 = vmatpush1.bf16.msra.mxu0 0
    %3465 = vmatprep.subr.bf16.mxu0 0
    %3466 = vmatpush1.bf16.msra.mxu0 0
    %3467 = vmatprep.subr.bf16.mxu0 0
    %3468 = vmatpush1.bf16.msra.mxu0 0
    %3469 = vmatprep.subr.bf16.mxu0 0
    %3470 = vmatpush1.bf16.msra.mxu0 0
    %3471 = vmatprep.subr.bf16.mxu0 0
    %3472 = vmatpush1.bf16.msra.mxu0 0
    %3473 = vmatprep.subr.bf16.mxu0 0
    %3474 = vmatpush1.bf16.msra.mxu0 0
    %3475 = vmatprep.subr.bf16.mxu0 0
    %3476 = vmatpush1.bf16.msra.mxu0 0
    %3477 = vmatprep.subr.bf16.mxu0 0
    %3478 = vmatpush1.bf16.msra.mxu0 0
    %3479 = vmatprep.subr.bf16.mxu0 0
    %3480 = vmatpush1.bf16.msra.mxu0 0
    %3481 = vmatprep.subr.bf16.mxu0 0
    %3482 = vmatpush1.bf16.msra.mxu0 0
    %3483 = vmatprep.subr.bf16.mxu0 0
    %3484 = vmatpush1.bf16.msra.mxu0 0
    %3485 = vmatprep.subr.bf16.mxu0 0
    %3486 = vmatpush1.bf16.msra.mxu0 0
    %3487 = vmatprep.subr.bf16.mxu0 0
    %3488 = vmatpush1.bf16.msra.mxu0 0
    %3489 = vmatprep.mubr.bf16.mxu0 0
    %3490 = vmatmul.mubr.bf16.gmra.mrb[0].mxu0 %v3455
    %v3491 = vpop.f32.mrb[0].mxu0
    %v3492 = vadd.f32 0.0, %v3491
    %v3493 = vpop.f32.mrb[0].mxu0
    %v3494 = vpop.f32.mrb[0].mxu0
    %v3495 = vpop.f32.mrb[0].mxu0
    %3496 = vdwg.mxu0
    %v3498 = vsel %vm93, %v3452, 0
    %3500 = vmatprep.subr.bf16.mxu0 0
    %3501 = vmatpush1.bf16.msra.mxu0 %v145
    %3502 = vmatprep.subr.bf16.mxu0 0
    %3503 = vmatpush1.bf16.msra.mxu0 0
    %3504 = vmatprep.subr.bf16.mxu0 0
    %3505 = vmatpush1.bf16.msra.mxu0 0
    %3506 = vmatprep.subr.bf16.mxu0 0
    %3507 = vmatpush1.bf16.msra.mxu0 0
    %3508 = vmatprep.subr.bf16.mxu0 0
    %3509 = vmatpush1.bf16.msra.mxu0 0
    %3510 = vmatprep.subr.bf16.mxu0 0
    %3511 = vmatpush1.bf16.msra.mxu0 0
    %3512 = vmatprep.subr.bf16.mxu0 0
    %3513 = vmatpush1.bf16.msra.mxu0 0
    %3514 = vmatprep.subr.bf16.mxu0 0
    %3515 = vmatpush1.bf16.msra.mxu0 0
    %3516 = vmatprep.subr.bf16.mxu0 0
    %3517 = vmatpush1.bf16.msra.mxu0 0
    %3518 = vmatprep.subr.bf16.mxu0 0
    %3519 = vmatpush1.bf16.msra.mxu0 0
    %3520 = vmatprep.subr.bf16.mxu0 0
    %3521 = vmatpush1.bf16.msra.mxu0 0
    %3522 = vmatprep.subr.bf16.mxu0 0
    %3523 = vmatpush1.bf16.msra.mxu0 0
    %3524 = vmatprep.subr.bf16.mxu0 0
    %3525 = vmatpush1.bf16.msra.mxu0 0
    %3526 = vmatprep.subr.bf16.mxu0 0
    %3527 = vmatpush1.bf16.msra.mxu0 0
    %3528 = vmatprep.subr.bf16.mxu0 0
    %3529 = vmatpush1.bf16.msra.mxu0 0
    %3530 = vmatprep.subr.bf16.mxu0 0
    %3531 = vmatpush1.bf16.msra.mxu0 0
    %3532 = vmatprep.mubr.bf16.mxu0 0
    %3533 = vmatmul.mubr.bf16.gmra.mrb[0].mxu0 %v3498
    %v3534 = vpop.f32.mrb[0].mxu0
    %v3535 = vadd.f32 %v3492, %v3534
    %v3536 = vpop.f32.mrb[0].mxu0
    %v3537 = vpop.f32.mrb[0].mxu0
    %v3538 = vpop.f32.mrb[0].mxu0
    %3539 = vdwg.mxu0
    %v3540 = vadd.f32 %v3535, %v54
    %vm3541 = vcmp.gt.f32.partialorder %v3540, 0.0
    %v3542 = vmin.f32 %v3540, 0.0
    %v3543 = vmul.f32 %v3542, 1.442695
    %v3544 = vpow.pop %v3543
    %v3545 = vsub.f32 %v3544, 1.0
    %v3546 = vsel %vm3541, %v3540, %v3545
    %v3547 = vpack.c.bf16 %v3546, %v3546
    %v3549 = vsel %vm207, %v3547, 0
    %3551 = vmatprep.subr.bf16.mxu0 0
    %3552 = vmatpush1.bf16.msra.mxu0 %v203
    %3553 = vmatprep.subr.bf16.mxu0 0
    %3554 = vmatpush1.bf16.msra.mxu0 %v204
    %3555 = vmatprep.subr.bf16.mxu0 0
    %3556 = vmatpush1.bf16.msra.mxu0 0
    %3557 = vmatprep.subr.bf16.mxu0 0
    %3558 = vmatpush1.bf16.msra.mxu0 0
    %3559 = vmatprep.subr.bf16.mxu0 0
    %3560 = vmatpush1.bf16.msra.mxu0 0
    %3561 = vmatprep.subr.bf16.mxu0 0
    %3562 = vmatpush1.bf16.msra.mxu0 0
    %3563 = vmatprep.subr.bf16.mxu0 0
    %3564 = vmatpush1.bf16.msra.mxu0 0
    %3565 = vmatprep.subr.bf16.mxu0 0
    %3566 = vmatpush1.bf16.msra.mxu0 0
    %3567 = vmatprep.subr.bf16.mxu0 0
    %3568 = vmatpush1.bf16.msra.mxu0 0
    %3569 = vmatprep.subr.bf16.mxu0 0
    %3570 = vmatpush1.bf16.msra.mxu0 0
    %3571 = vmatprep.subr.bf16.mxu0 0
    %3572 = vmatpush1.bf16.msra.mxu0 0
    %3573 = vmatprep.subr.bf16.mxu0 0
    %3574 = vmatpush1.bf16.msra.mxu0 0
    %3575 = vmatprep.subr.bf16.mxu0 0
    %3576 = vmatpush1.bf16.msra.mxu0 0
    %3577 = vmatprep.subr.bf16.mxu0 0
    %3578 = vmatpush1.bf16.msra.mxu0 0
    %3579 = vmatprep.subr.bf16.mxu0 0
    %3580 = vmatpush1.bf16.msra.mxu0 0
    %3581 = vmatprep.subr.bf16.mxu0 0
    %3582 = vmatpush1.bf16.msra.mxu0 0
    %3583 = vmatprep.mubr.bf16.mxu0 0
    %3584 = vmatmul.mubr.bf16.gmra.mrb[0].mxu0 %v3549
    %v3585 = vpop.f32.mrb[0].mxu0
    %v3586 = vadd.f32 %v61, %v3585
    %v3587 = vpop.f32.mrb[0].mxu0
    %v3588 = vpop.f32.mrb[0].mxu0
    %v3589 = vpop.f32.mrb[0].mxu0
    %3590 = vdwg.mxu0
    %vm3591 = vcmp.gt.f32.partialorder %v3586, 0.0
    %v3592 = vmin.f32 %v3586, 0.0
    %v3593 = vmul.f32 %v3592, 1.442695
    %v3594 = vpow.pop %v3593
    %v3595 = vsub.f32 %v3594, 1.0
    %v3596 = vsel %vm3591, %v3586, %v3595
    %v3597 = vpack.c.bf16 %v3596, %v3596
    %v3599 = vsel %vm207, %v3597, 0
    %3601 = vmatprep.subr.bf16.mxu0 0
    %3602 = vmatpush1.bf16.msra.mxu0 %v266
    %3603 = vmatprep.subr.bf16.mxu0 0
    %3604 = vmatpush1.bf16.msra.mxu0 %v267
    %3605 = vmatprep.subr.bf16.mxu0 0
    %3606 = vmatpush1.bf16.msra.mxu0 0
    %3607 = vmatprep.subr.bf16.mxu0 0
    %3608 = vmatpush1.bf16.msra.mxu0 0
    %3609 = vmatprep.subr.bf16.mxu0 0
    %3610 = vmatpush1.bf16.msra.mxu0 0
    %3611 = vmatprep.subr.bf16.mxu0 0
    %3612 = vmatpush1.bf16.msra.mxu0 0
    %3613 = vmatprep.subr.bf16.mxu0 0
    %3614 = vmatpush1.bf16.msra.mxu0 0
    %3615 = vmatprep.subr.bf16.mxu0 0
    %3616 = vmatpush1.bf16.msra.mxu0 0
    %3617 = vmatprep.subr.bf16.mxu0 0
    %3618 = vmatpush1.bf16.msra.mxu0 0
    %3619 = vmatprep.subr.bf16.mxu0 0
    %3620 = vmatpush1.bf16.msra.mxu0 0
    %3621 = vmatprep.subr.bf16.mxu0 0
    %3622 = vmatpush1.bf16.msra.mxu0 0
    %3623 = vmatprep.subr.bf16.mxu0 0
    %3624 = vmatpush1.bf16.msra.mxu0 0
    %3625 = vmatprep.subr.bf16.mxu0 0
    %3626 = vmatpush1.bf16.msra.mxu0 0
    %3627 = vmatprep.subr.bf16.mxu0 0
    %3628 = vmatpush1.bf16.msra.mxu0 0
    %3629 = vmatprep.subr.bf16.mxu0 0
    %3630 = vmatpush1.bf16.msra.mxu0 0
    %3631 = vmatprep.subr.bf16.mxu0 0
    %3632 = vmatpush1.bf16.msra.mxu0 0
    %3633 = vmatprep.mubr.bf16.mxu0 0
    %3634 = vmatmul.mubr.bf16.gmra.mrb[0].mxu0 %v3599
    %v3635 = vpop.f32.mrb[0].mxu0
    %v3636 = vadd.f32 %v68, %v3635
    %v3637 = vpop.f32.mrb[0].mxu0
    %v3638 = vpop.f32.mrb[0].mxu0
    %v3639 = vpop.f32.mrb[0].mxu0
    %3640 = vdwg.mxu0
    %v3641 = vmul.f32 %v314, %v3451
    %v3642 = vadd.f32 %v3251, %v3641
    %v3643 = vmul.f32 %v314, %v3636
    %v3644 = vadd.f32 %v3258, %v3643
    %v3645 = vpack.c.bf16 %v3642, %v3642
    %v3646 = vpack.c.bf16 %v3644, %v3644
    %v3648 = vsel %vm93, %v3646, 0
    %3650 = vmatprep.subr.bf16.mxu0 0
    %3651 = vmatpush1.bf16.msra.mxu0 %v99
    %3652 = vmatprep.subr.bf16.mxu0 0
    %3653 = vmatpush1.bf16.msra.mxu0 0
    %3654 = vmatprep.subr.bf16.mxu0 0
    %3655 = vmatpush1.bf16.msra.mxu0 0
    %3656 = vmatprep.subr.bf16.mxu0 0
    %3657 = vmatpush1.bf16.msra.mxu0 0
    %3658 = vmatprep.subr.bf16.mxu0 0
    %3659 = vmatpush1.bf16.msra.mxu0 0
    %3660 = vmatprep.subr.bf16.mxu0 0
    %3661 = vmatpush1.bf16.msra.mxu0 0
    %3662 = vmatprep.subr.bf16.mxu0 0
    %3663 = vmatpush1.bf16.msra.mxu0 0
    %3664 = vmatprep.subr.bf16.mxu0 0
    %3665 = vmatpush1.bf16.msra.mxu0 0
    %3666 = vmatprep.subr.bf16.mxu0 0
    %3667 = vmatpush1.bf16.msra.mxu0 0
    %3668 = vmatprep.subr.bf16.mxu0 0
    %3669 = vmatpush1.bf16.msra.mxu0 0
    %3670 = vmatprep.subr.bf16.mxu0 0
    %3671 = vmatpush1.bf16.msra.mxu0 0
    %3672 = vmatprep.subr.bf16.mxu0 0
    %3673 = vmatpush1.bf16.msra.mxu0 0
    %3674 = vmatprep.subr.bf16.mxu0 0
    %3675 = vmatpush1.bf16.msra.mxu0 0
    %3676 = vmatprep.subr.bf16.mxu0 0
    %3677 = vmatpush1.bf16.msra.mxu0 0
    %3678 = vmatprep.subr.bf16.mxu0 0
    %3679 = vmatpush1.bf16.msra.mxu0 0
    %3680 = vmatprep.subr.bf16.mxu0 0
    %3681 = vmatpush1.bf16.msra.mxu0 0
    %3682 = vmatprep.mubr.bf16.mxu0 0
    %3683 = vmatmul.mubr.bf16.gmra.mrb[0].mxu0 %v3648
    %v3684 = vpop.f32.mrb[0].mxu0
    %v3685 = vadd.f32 0.0, %v3684
    %v3686 = vpop.f32.mrb[0].mxu0
    %v3687 = vpop.f32.mrb[0].mxu0
    %v3688 = vpop.f32.mrb[0].mxu0
    %3689 = vdwg.mxu0
    %v3691 = vsel %vm93, %v3645, 0
    %3693 = vmatprep.subr.bf16.mxu0 0
    %3694 = vmatpush1.bf16.msra.mxu0 %v145
    %3695 = vmatprep.subr.bf16.mxu0 0
    %3696 = vmatpush1.bf16.msra.mxu0 0
    %3697 = vmatprep.subr.bf16.mxu0 0
    %3698 = vmatpush1.bf16.msra.mxu0 0
    %3699 = vmatprep.subr.bf16.mxu0 0
    %3700 = vmatpush1.bf16.msra.mxu0 0
    %3701 = vmatprep.subr.bf16.mxu0 0
    %3702 = vmatpush1.bf16.msra.mxu0 0
    %3703 = vmatprep.subr.bf16.mxu0 0
    %3704 = vmatpush1.bf16.msra.mxu0 0
    %3705 = vmatprep.subr.bf16.mxu0 0
    %3706 = vmatpush1.bf16.msra.mxu0 0
    %3707 = vmatprep.subr.bf16.mxu0 0
    %3708 = vmatpush1.bf16.msra.mxu0 0
    %3709 = vmatprep.subr.bf16.mxu0 0
    %3710 = vmatpush1.bf16.msra.mxu0 0
    %3711 = vmatprep.subr.bf16.mxu0 0
    %3712 = vmatpush1.bf16.msra.mxu0 0
    %3713 = vmatprep.subr.bf16.mxu0 0
    %3714 = vmatpush1.bf16.msra.mxu0 0
    %3715 = vmatprep.subr.bf16.mxu0 0
    %3716 = vmatpush1.bf16.msra.mxu0 0
    %3717 = vmatprep.subr.bf16.mxu0 0
    %3718 = vmatpush1.bf16.msra.mxu0 0
    %3719 = vmatprep.subr.bf16.mxu0 0
    %3720 = vmatpush1.bf16.msra.mxu0 0
    %3721 = vmatprep.subr.bf16.mxu0 0
    %3722 = vmatpush1.bf16.msra.mxu0 0
    %3723 = vmatprep.subr.bf16.mxu0 0
    %3724 = vmatpush1.bf16.msra.mxu0 0
    %3725 = vmatprep.mubr.bf16.mxu0 0
    %3726 = vmatmul.mubr.bf16.gmra.mrb[0].mxu0 %v3691
    %v3727 = vpop.f32.mrb[0].mxu0
    %v3728 = vadd.f32 %v3685, %v3727
    %v3729 = vpop.f32.mrb[0].mxu0
    %v3730 = vpop.f32.mrb[0].mxu0
    %v3731 = vpop.f32.mrb[0].mxu0
    %3732 = vdwg.mxu0
    %v3733 = vadd.f32 %v3728, %v54
    %vm3734 = vcmp.gt.f32.partialorder %v3733, 0.0
    %v3735 = vmin.f32 %v3733, 0.0
    %v3736 = vmul.f32 %v3735, 1.442695
    %v3737 = vpow.pop %v3736
    %v3738 = vsub.f32 %v3737, 1.0
    %v3739 = vsel %vm3734, %v3733, %v3738
    %v3740 = vpack.c.bf16 %v3739, %v3739
    %v3742 = vsel %vm207, %v3740, 0
    %3744 = vmatprep.subr.bf16.mxu0 0
    %3745 = vmatpush1.bf16.msra.mxu0 %v203
    %3746 = vmatprep.subr.bf16.mxu0 0
    %3747 = vmatpush1.bf16.msra.mxu0 %v204
    %3748 = vmatprep.subr.bf16.mxu0 0
    %3749 = vmatpush1.bf16.msra.mxu0 0
    %3750 = vmatprep.subr.bf16.mxu0 0
    %3751 = vmatpush1.bf16.msra.mxu0 0
    %3752 = vmatprep.subr.bf16.mxu0 0
    %3753 = vmatpush1.bf16.msra.mxu0 0
    %3754 = vmatprep.subr.bf16.mxu0 0
    %3755 = vmatpush1.bf16.msra.mxu0 0
    %3756 = vmatprep.subr.bf16.mxu0 0
    %3757 = vmatpush1.bf16.msra.mxu0 0
    %3758 = vmatprep.subr.bf16.mxu0 0
    %3759 = vmatpush1.bf16.msra.mxu0 0
    %3760 = vmatprep.subr.bf16.mxu0 0
    %3761 = vmatpush1.bf16.msra.mxu0 0
    %3762 = vmatprep.subr.bf16.mxu0 0
    %3763 = vmatpush1.bf16.msra.mxu0 0
    %3764 = vmatprep.subr.bf16.mxu0 0
    %3765 = vmatpush1.bf16.msra.mxu0 0
    %3766 = vmatprep.subr.bf16.mxu0 0
    %3767 = vmatpush1.bf16.msra.mxu0 0
    %3768 = vmatprep.subr.bf16.mxu0 0
    %3769 = vmatpush1.bf16.msra.mxu0 0
    %3770 = vmatprep.subr.bf16.mxu0 0
    %3771 = vmatpush1.bf16.msra.mxu0 0
    %3772 = vmatprep.subr.bf16.mxu0 0
    %3773 = vmatpush1.bf16.msra.mxu0 0
    %3774 = vmatprep.subr.bf16.mxu0 0
    %3775 = vmatpush1.bf16.msra.mxu0 0
    %3776 = vmatprep.mubr.bf16.mxu0 0
    %3777 = vmatmul.mubr.bf16.gmra.mrb[0].mxu0 %v3742
    %v3778 = vpop.f32.mrb[0].mxu0
    %v3779 = vadd.f32 %v61, %v3778
    %v3780 = vpop.f32.mrb[0].mxu0
    %v3781 = vpop.f32.mrb[0].mxu0
    %v3782 = vpop.f32.mrb[0].mxu0
    %3783 = vdwg.mxu0
    %vm3784 = vcmp.gt.f32.partialorder %v3779, 0.0
    %v3785 = vmin.f32 %v3779, 0.0
    %v3786 = vmul.f32 %v3785, 1.442695
    %v3787 = vpow.pop %v3786
    %v3788 = vsub.f32 %v3787, 1.0
    %v3789 = vsel %vm3784, %v3779, %v3788
    %v3790 = vpack.c.bf16 %v3789, %v3789
    %v3792 = vsel %vm207, %v3790, 0
    %3794 = vmatprep.subr.bf16.mxu0 0
    %3795 = vmatpush1.bf16.msra.mxu0 %v266
    %3796 = vmatprep.subr.bf16.mxu0 0
    %3797 = vmatpush1.bf16.msra.mxu0 %v267
    %3798 = vmatprep.subr.bf16.mxu0 0
    %3799 = vmatpush1.bf16.msra.mxu0 0
    %3800 = vmatprep.subr.bf16.mxu0 0
    %3801 = vmatpush1.bf16.msra.mxu0 0
    %3802 = vmatprep.subr.bf16.mxu0 0
    %3803 = vmatpush1.bf16.msra.mxu0 0
    %3804 = vmatprep.subr.bf16.mxu0 0
    %3805 = vmatpush1.bf16.msra.mxu0 0
    %3806 = vmatprep.subr.bf16.mxu0 0
    %3807 = vmatpush1.bf16.msra.mxu0 0
    %3808 = vmatprep.subr.bf16.mxu0 0
    %3809 = vmatpush1.bf16.msra.mxu0 0
    %3810 = vmatprep.subr.bf16.mxu0 0
    %3811 = vmatpush1.bf16.msra.mxu0 0
    %3812 = vmatprep.subr.bf16.mxu0 0
    %3813 = vmatpush1.bf16.msra.mxu0 0
    %3814 = vmatprep.subr.bf16.mxu0 0
    %3815 = vmatpush1.bf16.msra.mxu0 0
    %3816 = vmatprep.subr.bf16.mxu0 0
    %3817 = vmatpush1.bf16.msra.mxu0 0
    %3818 = vmatprep.subr.bf16.mxu0 0
    %3819 = vmatpush1.bf16.msra.mxu0 0
    %3820 = vmatprep.subr.bf16.mxu0 0
    %3821 = vmatpush1.bf16.msra.mxu0 0
    %3822 = vmatprep.subr.bf16.mxu0 0
    %3823 = vmatpush1.bf16.msra.mxu0 0
    %3824 = vmatprep.subr.bf16.mxu0 0
    %3825 = vmatpush1.bf16.msra.mxu0 0
    %3826 = vmatprep.mubr.bf16.mxu0 0
    %3827 = vmatmul.mubr.bf16.gmra.mrb[0].mxu0 %v3792
    %v3828 = vpop.f32.mrb[0].mxu0
    %v3829 = vadd.f32 %v68, %v3828
    %v3830 = vpop.f32.mrb[0].mxu0
    %v3831 = vpop.f32.mrb[0].mxu0
    %v3832 = vpop.f32.mrb[0].mxu0
    %3833 = vdwg.mxu0
    %v3834 = vmul.f32 %v701, %v3644
    %v3835 = vadd.f32 %v3251, %v3834
    %v3836 = vmul.f32 %v701, %v3829
    %v3837 = vadd.f32 %v3258, %v3836
    %v3838 = vpack.c.bf16 %v3835, %v3835
    %v3839 = vpack.c.bf16 %v3837, %v3837
    %v3841 = vsel %vm93, %v3839, 0
    %3843 = vmatprep.subr.bf16.mxu0 0
    %3844 = vmatpush1.bf16.msra.mxu0 %v99
    %3845 = vmatprep.subr.bf16.mxu0 0
    %3846 = vmatpush1.bf16.msra.mxu0 0
    %3847 = vmatprep.subr.bf16.mxu0 0
    %3848 = vmatpush1.bf16.msra.mxu0 0
    %3849 = vmatprep.subr.bf16.mxu0 0
    %3850 = vmatpush1.bf16.msra.mxu0 0
    %3851 = vmatprep.subr.bf16.mxu0 0
    %3852 = vmatpush1.bf16.msra.mxu0 0
    %3853 = vmatprep.subr.bf16.mxu0 0
    %3854 = vmatpush1.bf16.msra.mxu0 0
    %3855 = vmatprep.subr.bf16.mxu0 0
    %3856 = vmatpush1.bf16.msra.mxu0 0
    %3857 = vmatprep.subr.bf16.mxu0 0
    %3858 = vmatpush1.bf16.msra.mxu0 0
    %3859 = vmatprep.subr.bf16.mxu0 0
    %3860 = vmatpush1.bf16.msra.mxu0 0
    %3861 = vmatprep.subr.bf16.mxu0 0
    %3862 = vmatpush1.bf16.msra.mxu0 0
    %3863 = vmatprep.subr.bf16.mxu0 0
    %3864 = vmatpush1.bf16.msra.mxu0 0
    %3865 = vmatprep.subr.bf16.mxu0 0
    %3866 = vmatpush1.bf16.msra.mxu0 0
    %3867 = vmatprep.subr.bf16.mxu0 0
    %3868 = vmatpush1.bf16.msra.mxu0 0
    %3869 = vmatprep.subr.bf16.mxu0 0
    %3870 = vmatpush1.bf16.msra.mxu0 0
    %3871 = vmatprep.subr.bf16.mxu0 0
    %3872 = vmatpush1.bf16.msra.mxu0 0
    %3873 = vmatprep.subr.bf16.mxu0 0
    %3874 = vmatpush1.bf16.msra.mxu0 0
    %3875 = vmatprep.mubr.bf16.mxu0 0
    %3876 = vmatmul.mubr.bf16.gmra.mrb[0].mxu0 %v3841
    %v3877 = vpop.f32.mrb[0].mxu0
    %v3878 = vadd.f32 0.0, %v3877
    %v3879 = vpop.f32.mrb[0].mxu0
    %v3880 = vpop.f32.mrb[0].mxu0
    %v3881 = vpop.f32.mrb[0].mxu0
    %3882 = vdwg.mxu0
    %v3884 = vsel %vm93, %v3838, 0
    %3886 = vmatprep.subr.bf16.mxu0 0
    %3887 = vmatpush1.bf16.msra.mxu0 %v145
    %3888 = vmatprep.subr.bf16.mxu0 0
    %3889 = vmatpush1.bf16.msra.mxu0 0
    %3890 = vmatprep.subr.bf16.mxu0 0
    %3891 = vmatpush1.bf16.msra.mxu0 0
    %3892 = vmatprep.subr.bf16.mxu0 0
    %3893 = vmatpush1.bf16.msra.mxu0 0
    %3894 = vmatprep.subr.bf16.mxu0 0
    %3895 = vmatpush1.bf16.msra.mxu0 0
    %3896 = vmatprep.subr.bf16.mxu0 0
    %3897 = vmatpush1.bf16.msra.mxu0 0
    %3898 = vmatprep.subr.bf16.mxu0 0
    %3899 = vmatpush1.bf16.msra.mxu0 0
    %3900 = vmatprep.subr.bf16.mxu0 0
    %3901 = vmatpush1.bf16.msra.mxu0 0
    %3902 = vmatprep.subr.bf16.mxu0 0
    %3903 = vmatpush1.bf16.msra.mxu0 0
    %3904 = vmatprep.subr.bf16.mxu0 0
    %3905 = vmatpush1.bf16.msra.mxu0 0
    %3906 = vmatprep.subr.bf16.mxu0 0
    %3907 = vmatpush1.bf16.msra.mxu0 0
    %3908 = vmatprep.subr.bf16.mxu0 0
    %3909 = vmatpush1.bf16.msra.mxu0 0
    %3910 = vmatprep.subr.bf16.mxu0 0
    %3911 = vmatpush1.bf16.msra.mxu0 0
    %3912 = vmatprep.subr.bf16.mxu0 0
    %3913 = vmatpush1.bf16.msra.mxu0 0
    %3914 = vmatprep.subr.bf16.mxu0 0
    %3915 = vmatpush1.bf16.msra.mxu0 0
    %3916 = vmatprep.subr.bf16.mxu0 0
    %3917 = vmatpush1.bf16.msra.mxu0 0
    %3918 = vmatprep.mubr.bf16.mxu0 0
    %3919 = vmatmul.mubr.bf16.gmra.mrb[0].mxu0 %v3884
    %v3920 = vpop.f32.mrb[0].mxu0
    %v3921 = vadd.f32 %v3878, %v3920
    %v3922 = vpop.f32.mrb[0].mxu0
    %v3923 = vpop.f32.mrb[0].mxu0
    %v3924 = vpop.f32.mrb[0].mxu0
    %3925 = vdwg.mxu0
    %v3926 = vadd.f32 %v3921, %v54
    %vm3927 = vcmp.gt.f32.partialorder %v3926, 0.0
    %v3928 = vmin.f32 %v3926, 0.0
    %v3929 = vmul.f32 %v3928, 1.442695
    %v3930 = vpow.pop %v3929
    %v3931 = vsub.f32 %v3930, 1.0
    %v3932 = vsel %vm3927, %v3926, %v3931
    %v3933 = vpack.c.bf16 %v3932, %v3932
    %v3935 = vsel %vm207, %v3933, 0
    %3937 = vmatprep.subr.bf16.mxu0 0
    %3938 = vmatpush1.bf16.msra.mxu0 %v203
    %3939 = vmatprep.subr.bf16.mxu0 0
    %3940 = vmatpush1.bf16.msra.mxu0 %v204
    %3941 = vmatprep.subr.bf16.mxu0 0
    %3942 = vmatpush1.bf16.msra.mxu0 0
    %3943 = vmatprep.subr.bf16.mxu0 0
    %3944 = vmatpush1.bf16.msra.mxu0 0
    %3945 = vmatprep.subr.bf16.mxu0 0
    %3946 = vmatpush1.bf16.msra.mxu0 0
    %3947 = vmatprep.subr.bf16.mxu0 0
    %3948 = vmatpush1.bf16.msra.mxu0 0
    %3949 = vmatprep.subr.bf16.mxu0 0
    %3950 = vmatpush1.bf16.msra.mxu0 0
    %3951 = vmatprep.subr.bf16.mxu0 0
    %3952 = vmatpush1.bf16.msra.mxu0 0
    %3953 = vmatprep.subr.bf16.mxu0 0
    %3954 = vmatpush1.bf16.msra.mxu0 0
    %3955 = vmatprep.subr.bf16.mxu0 0
    %3956 = vmatpush1.bf16.msra.mxu0 0
    %3957 = vmatprep.subr.bf16.mxu0 0
    %3958 = vmatpush1.bf16.msra.mxu0 0
    %3959 = vmatprep.subr.bf16.mxu0 0
    %3960 = vmatpush1.bf16.msra.mxu0 0
    %3961 = vmatprep.subr.bf16.mxu0 0
    %3962 = vmatpush1.bf16.msra.mxu0 0
    %3963 = vmatprep.subr.bf16.mxu0 0
    %3964 = vmatpush1.bf16.msra.mxu0 0
    %3965 = vmatprep.subr.bf16.mxu0 0
    %3966 = vmatpush1.bf16.msra.mxu0 0
    %3967 = vmatprep.subr.bf16.mxu0 0
    %3968 = vmatpush1.bf16.msra.mxu0 0
    %3969 = vmatprep.mubr.bf16.mxu0 0
    %3970 = vmatmul.mubr.bf16.gmra.mrb[0].mxu0 %v3935
    %v3971 = vpop.f32.mrb[0].mxu0
    %v3972 = vadd.f32 %v61, %v3971
    %v3973 = vpop.f32.mrb[0].mxu0
    %v3974 = vpop.f32.mrb[0].mxu0
    %v3975 = vpop.f32.mrb[0].mxu0
    %3976 = vdwg.mxu0
    %vm3977 = vcmp.gt.f32.partialorder %v3972, 0.0
    %v3978 = vmin.f32 %v3972, 0.0
    %v3979 = vmul.f32 %v3978, 1.442695
    %v3980 = vpow.pop %v3979
    %v3981 = vsub.f32 %v3980, 1.0
    %v3982 = vsel %vm3977, %v3972, %v3981
    %v3983 = vpack.c.bf16 %v3982, %v3982
    %v3985 = vsel %vm207, %v3983, 0
    %3987 = vmatprep.subr.bf16.mxu0 0
    %3988 = vmatpush1.bf16.msra.mxu0 %v266
    %3989 = vmatprep.subr.bf16.mxu0 0
    %3990 = vmatpush1.bf16.msra.mxu0 %v267
    %3991 = vmatprep.subr.bf16.mxu0 0
    %3992 = vmatpush1.bf16.msra.mxu0 0
    %3993 = vmatprep.subr.bf16.mxu0 0
    %3994 = vmatpush1.bf16.msra.mxu0 0
    %3995 = vmatprep.subr.bf16.mxu0 0
    %3996 = vmatpush1.bf16.msra.mxu0 0
    %3997 = vmatprep.subr.bf16.mxu0 0
    %3998 = vmatpush1.bf16.msra.mxu0 0
    %3999 = vmatprep.subr.bf16.mxu0 0
    %4000 = vmatpush1.bf16.msra.mxu0 0
    %4001 = vmatprep.subr.bf16.mxu0 0
    %4002 = vmatpush1.bf16.msra.mxu0 0
    %4003 = vmatprep.subr.bf16.mxu0 0
    %4004 = vmatpush1.bf16.msra.mxu0 0
    %4005 = vmatprep.subr.bf16.mxu0 0
    %4006 = vmatpush1.bf16.msra.mxu0 0
    %4007 = vmatprep.subr.bf16.mxu0 0
    %4008 = vmatpush1.bf16.msra.mxu0 0
    %4009 = vmatprep.subr.bf16.mxu0 0
    %4010 = vmatpush1.bf16.msra.mxu0 0
    %4011 = vmatprep.subr.bf16.mxu0 0
    %4012 = vmatpush1.bf16.msra.mxu0 0
    %4013 = vmatprep.subr.bf16.mxu0 0
    %4014 = vmatpush1.bf16.msra.mxu0 0
    %4015 = vmatprep.subr.bf16.mxu0 0
    %4016 = vmatpush1.bf16.msra.mxu0 0
    %4017 = vmatprep.subr.bf16.mxu0 0
    %4018 = vmatpush1.bf16.msra.mxu0 0
    %4019 = vmatprep.mubr.bf16.mxu0 0
    %4020 = vmatmul.mubr.bf16.gmra.mrb[0].mxu0 %v3985
    %v4021 = vpop.f32.mrb[0].mxu0
    %v4022 = vadd.f32 %v68, %v4021
    %v4023 = vpop.f32.mrb[0].mxu0
    %v4024 = vpop.f32.mrb[0].mxu0
    %v4025 = vpop.f32.mrb[0].mxu0
    %4026 = vdwg.mxu0
    %v4027 = vmul.f32 %v3451, 2.0
    %v4028 = vadd.f32 %v3258, %v4027
    %v4029 = vmul.f32 %v3644, 2.0
    %v4030 = vadd.f32 %v4028, %v4029
    %v4031 = vadd.f32 %v4030, %v3837
    %v4032 = vmul.f32 %v903, %v4031
    %v4033 = vadd.f32 %v3251, %v4032
    %v4034 = vmul.f32 %v3636, 2.0
    %v4035 = vadd.f32 %v3443, %v4034
    %v4036 = vmul.f32 %v3829, 2.0
    %v4037 = vadd.f32 %v4035, %v4036
    %v4038 = vadd.f32 %v4037, %v4022
    %v4039 = vmul.f32 %v903, %v4038
    %v4040 = vadd.f32 %v3258, %v4039
    %v4041 = vpack.c.bf16 %v4033, %v4033
    %v4042 = vpack.c.bf16 %v4040, %v4040
    %v4044 = vsel %vm93, %v4042, 0
    %4046 = vmatprep.subr.bf16.mxu0 0
    %4047 = vmatpush1.bf16.msra.mxu0 %v99
    %4048 = vmatprep.subr.bf16.mxu0 0
    %4049 = vmatpush1.bf16.msra.mxu0 0
    %4050 = vmatprep.subr.bf16.mxu0 0
    %4051 = vmatpush1.bf16.msra.mxu0 0
    %4052 = vmatprep.subr.bf16.mxu0 0
    %4053 = vmatpush1.bf16.msra.mxu0 0
    %4054 = vmatprep.subr.bf16.mxu0 0
    %4055 = vmatpush1.bf16.msra.mxu0 0
    %4056 = vmatprep.subr.bf16.mxu0 0
    %4057 = vmatpush1.bf16.msra.mxu0 0
    %4058 = vmatprep.subr.bf16.mxu0 0
    %4059 = vmatpush1.bf16.msra.mxu0 0
    %4060 = vmatprep.subr.bf16.mxu0 0
    %4061 = vmatpush1.bf16.msra.mxu0 0
    %4062 = vmatprep.subr.bf16.mxu0 0
    %4063 = vmatpush1.bf16.msra.mxu0 0
    %4064 = vmatprep.subr.bf16.mxu0 0
    %4065 = vmatpush1.bf16.msra.mxu0 0
    %4066 = vmatprep.subr.bf16.mxu0 0
    %4067 = vmatpush1.bf16.msra.mxu0 0
    %4068 = vmatprep.subr.bf16.mxu0 0
    %4069 = vmatpush1.bf16.msra.mxu0 0
    %4070 = vmatprep.subr.bf16.mxu0 0
    %4071 = vmatpush1.bf16.msra.mxu0 0
    %4072 = vmatprep.subr.bf16.mxu0 0
    %4073 = vmatpush1.bf16.msra.mxu0 0
    %4074 = vmatprep.subr.bf16.mxu0 0
    %4075 = vmatpush1.bf16.msra.mxu0 0
    %4076 = vmatprep.subr.bf16.mxu0 0
    %4077 = vmatpush1.bf16.msra.mxu0 0
    %4078 = vmatprep.mubr.bf16.mxu0 0
    %4079 = vmatmul.mubr.bf16.gmra.mrb[0].mxu0 %v4044
    %v4080 = vpop.f32.mrb[0].mxu0
    %v4081 = vadd.f32 0.0, %v4080
    %v4082 = vpop.f32.mrb[0].mxu0
    %v4083 = vpop.f32.mrb[0].mxu0
    %v4084 = vpop.f32.mrb[0].mxu0
    %4085 = vdwg.mxu0
    %v4087 = vsel %vm93, %v4041, 0
    %4089 = vmatprep.subr.bf16.mxu0 0
    %4090 = vmatpush1.bf16.msra.mxu0 %v145
    %4091 = vmatprep.subr.bf16.mxu0 0
    %4092 = vmatpush1.bf16.msra.mxu0 0
    %4093 = vmatprep.subr.bf16.mxu0 0
    %4094 = vmatpush1.bf16.msra.mxu0 0
    %4095 = vmatprep.subr.bf16.mxu0 0
    %4096 = vmatpush1.bf16.msra.mxu0 0
    %4097 = vmatprep.subr.bf16.mxu0 0
    %4098 = vmatpush1.bf16.msra.mxu0 0
    %4099 = vmatprep.subr.bf16.mxu0 0
    %4100 = vmatpush1.bf16.msra.mxu0 0
    %4101 = vmatprep.subr.bf16.mxu0 0
    %4102 = vmatpush1.bf16.msra.mxu0 0
    %4103 = vmatprep.subr.bf16.mxu0 0
    %4104 = vmatpush1.bf16.msra.mxu0 0
    %4105 = vmatprep.subr.bf16.mxu0 0
    %4106 = vmatpush1.bf16.msra.mxu0 0
    %4107 = vmatprep.subr.bf16.mxu0 0
    %4108 = vmatpush1.bf16.msra.mxu0 0
    %4109 = vmatprep.subr.bf16.mxu0 0
    %4110 = vmatpush1.bf16.msra.mxu0 0
    %4111 = vmatprep.subr.bf16.mxu0 0
    %4112 = vmatpush1.bf16.msra.mxu0 0
    %4113 = vmatprep.subr.bf16.mxu0 0
    %4114 = vmatpush1.bf16.msra.mxu0 0
    %4115 = vmatprep.subr.bf16.mxu0 0
    %4116 = vmatpush1.bf16.msra.mxu0 0
    %4117 = vmatprep.subr.bf16.mxu0 0
    %4118 = vmatpush1.bf16.msra.mxu0 0
    %4119 = vmatprep.subr.bf16.mxu0 0
    %4120 = vmatpush1.bf16.msra.mxu0 0
    %4121 = vmatprep.mubr.bf16.mxu0 0
    %4122 = vmatmul.mubr.bf16.gmra.mrb[0].mxu0 %v4087
    %v4123 = vpop.f32.mrb[0].mxu0
    %v4124 = vadd.f32 %v4081, %v4123
    %v4125 = vpop.f32.mrb[0].mxu0
    %v4126 = vpop.f32.mrb[0].mxu0
    %v4127 = vpop.f32.mrb[0].mxu0
    %4128 = vdwg.mxu0
    %v4129 = vadd.f32 %v4124, %v54
    %vm4130 = vcmp.gt.f32.partialorder %v4129, 0.0
    %v4131 = vmin.f32 %v4129, 0.0
    %v4132 = vmul.f32 %v4131, 1.442695
    %v4133 = vpow.pop %v4132
    %v4134 = vsub.f32 %v4133, 1.0
    %v4135 = vsel %vm4130, %v4129, %v4134
    %v4136 = vpack.c.bf16 %v4135, %v4135
    %v4138 = vsel %vm207, %v4136, 0
    %4140 = vmatprep.subr.bf16.mxu0 0
    %4141 = vmatpush1.bf16.msra.mxu0 %v203
    %4142 = vmatprep.subr.bf16.mxu0 0
    %4143 = vmatpush1.bf16.msra.mxu0 %v204
    %4144 = vmatprep.subr.bf16.mxu0 0
    %4145 = vmatpush1.bf16.msra.mxu0 0
    %4146 = vmatprep.subr.bf16.mxu0 0
    %4147 = vmatpush1.bf16.msra.mxu0 0
    %4148 = vmatprep.subr.bf16.mxu0 0
    %4149 = vmatpush1.bf16.msra.mxu0 0
    %4150 = vmatprep.subr.bf16.mxu0 0
    %4151 = vmatpush1.bf16.msra.mxu0 0
    %4152 = vmatprep.subr.bf16.mxu0 0
    %4153 = vmatpush1.bf16.msra.mxu0 0
    %4154 = vmatprep.subr.bf16.mxu0 0
    %4155 = vmatpush1.bf16.msra.mxu0 0
    %4156 = vmatprep.subr.bf16.mxu0 0
    %4157 = vmatpush1.bf16.msra.mxu0 0
    %4158 = vmatprep.subr.bf16.mxu0 0
    %4159 = vmatpush1.bf16.msra.mxu0 0
    %4160 = vmatprep.subr.bf16.mxu0 0
    %4161 = vmatpush1.bf16.msra.mxu0 0
    %4162 = vmatprep.subr.bf16.mxu0 0
    %4163 = vmatpush1.bf16.msra.mxu0 0
    %4164 = vmatprep.subr.bf16.mxu0 0
    %4165 = vmatpush1.bf16.msra.mxu0 0
    %4166 = vmatprep.subr.bf16.mxu0 0
    %4167 = vmatpush1.bf16.msra.mxu0 0
    %4168 = vmatprep.subr.bf16.mxu0 0
    %4169 = vmatpush1.bf16.msra.mxu0 0
    %4170 = vmatprep.subr.bf16.mxu0 0
    %4171 = vmatpush1.bf16.msra.mxu0 0
    %4172 = vmatprep.mubr.bf16.mxu0 0
    %4173 = vmatmul.mubr.bf16.gmra.mrb[0].mxu0 %v4138
    %v4174 = vpop.f32.mrb[0].mxu0
    %v4175 = vadd.f32 %v61, %v4174
    %v4176 = vpop.f32.mrb[0].mxu0
    %v4177 = vpop.f32.mrb[0].mxu0
    %v4178 = vpop.f32.mrb[0].mxu0
    %4179 = vdwg.mxu0
    %vm4180 = vcmp.gt.f32.partialorder %v4175, 0.0
    %v4181 = vmin.f32 %v4175, 0.0
    %v4182 = vmul.f32 %v4181, 1.442695
    %v4183 = vpow.pop %v4182
    %v4184 = vsub.f32 %v4183, 1.0
    %v4185 = vsel %vm4180, %v4175, %v4184
    %v4186 = vpack.c.bf16 %v4185, %v4185
    %v4188 = vsel %vm207, %v4186, 0
    %4190 = vmatprep.subr.bf16.mxu0 0
    %4191 = vmatpush1.bf16.msra.mxu0 %v266
    %4192 = vmatprep.subr.bf16.mxu0 0
    %4193 = vmatpush1.bf16.msra.mxu0 %v267
    %4194 = vmatprep.subr.bf16.mxu0 0
    %4195 = vmatpush1.bf16.msra.mxu0 0
    %4196 = vmatprep.subr.bf16.mxu0 0
    %4197 = vmatpush1.bf16.msra.mxu0 0
    %4198 = vmatprep.subr.bf16.mxu0 0
    %4199 = vmatpush1.bf16.msra.mxu0 0
    %4200 = vmatprep.subr.bf16.mxu0 0
    %4201 = vmatpush1.bf16.msra.mxu0 0
    %4202 = vmatprep.subr.bf16.mxu0 0
    %4203 = vmatpush1.bf16.msra.mxu0 0
    %4204 = vmatprep.subr.bf16.mxu0 0
    %4205 = vmatpush1.bf16.msra.mxu0 0
    %4206 = vmatprep.subr.bf16.mxu0 0
    %4207 = vmatpush1.bf16.msra.mxu0 0
    %4208 = vmatprep.subr.bf16.mxu0 0
    %4209 = vmatpush1.bf16.msra.mxu0 0
    %4210 = vmatprep.subr.bf16.mxu0 0
    %4211 = vmatpush1.bf16.msra.mxu0 0
    %4212 = vmatprep.subr.bf16.mxu0 0
    %4213 = vmatpush1.bf16.msra.mxu0 0
    %4214 = vmatprep.subr.bf16.mxu0 0
    %4215 = vmatpush1.bf16.msra.mxu0 0
    %4216 = vmatprep.subr.bf16.mxu0 0
    %4217 = vmatpush1.bf16.msra.mxu0 0
    %4218 = vmatprep.subr.bf16.mxu0 0
    %4219 = vmatpush1.bf16.msra.mxu0 0
    %4220 = vmatprep.subr.bf16.mxu0 0
    %4221 = vmatpush1.bf16.msra.mxu0 0
    %4222 = vmatprep.mubr.bf16.mxu0 0
    %4223 = vmatmul.mubr.bf16.gmra.mrb[0].mxu0 %v4188
    %v4224 = vpop.f32.mrb[0].mxu0
    %v4225 = vadd.f32 %v68, %v4224
    %v4226 = vpop.f32.mrb[0].mxu0
    %v4227 = vpop.f32.mrb[0].mxu0
    %v4228 = vpop.f32.mrb[0].mxu0
    %4229 = vdwg.mxu0
    %v4230 = vmul.f32 %v314, %v4040
    %v4231 = vadd.f32 %v4033, %v4230
    %v4232 = vmul.f32 %v314, %v4225
    %v4233 = vadd.f32 %v4040, %v4232
    %v4234 = vpack.c.bf16 %v4231, %v4231
    %v4235 = vpack.c.bf16 %v4233, %v4233
    %v4237 = vsel %vm93, %v4235, 0
    %4239 = vmatprep.subr.bf16.mxu0 0
    %4240 = vmatpush1.bf16.msra.mxu0 %v99
    %4241 = vmatprep.subr.bf16.mxu0 0
    %4242 = vmatpush1.bf16.msra.mxu0 0
    %4243 = vmatprep.subr.bf16.mxu0 0
    %4244 = vmatpush1.bf16.msra.mxu0 0
    %4245 = vmatprep.subr.bf16.mxu0 0
    %4246 = vmatpush1.bf16.msra.mxu0 0
    %4247 = vmatprep.subr.bf16.mxu0 0
    %4248 = vmatpush1.bf16.msra.mxu0 0
    %4249 = vmatprep.subr.bf16.mxu0 0
    %4250 = vmatpush1.bf16.msra.mxu0 0
    %4251 = vmatprep.subr.bf16.mxu0 0
    %4252 = vmatpush1.bf16.msra.mxu0 0
    %4253 = vmatprep.subr.bf16.mxu0 0
    %4254 = vmatpush1.bf16.msra.mxu0 0
    %4255 = vmatprep.subr.bf16.mxu0 0
    %4256 = vmatpush1.bf16.msra.mxu0 0
    %4257 = vmatprep.subr.bf16.mxu0 0
    %4258 = vmatpush1.bf16.msra.mxu0 0
    %4259 = vmatprep.subr.bf16.mxu0 0
    %4260 = vmatpush1.bf16.msra.mxu0 0
    %4261 = vmatprep.subr.bf16.mxu0 0
    %4262 = vmatpush1.bf16.msra.mxu0 0
    %4263 = vmatprep.subr.bf16.mxu0 0
    %4264 = vmatpush1.bf16.msra.mxu0 0
    %4265 = vmatprep.subr.bf16.mxu0 0
    %4266 = vmatpush1.bf16.msra.mxu0 0
    %4267 = vmatprep.subr.bf16.mxu0 0
    %4268 = vmatpush1.bf16.msra.mxu0 0
    %4269 = vmatprep.subr.bf16.mxu0 0
    %4270 = vmatpush1.bf16.msra.mxu0 0
    %4271 = vmatprep.mubr.bf16.mxu0 0
    %4272 = vmatmul.mubr.bf16.gmra.mrb[0].mxu0 %v4237
    %v4273 = vpop.f32.mrb[0].mxu0
    %v4274 = vadd.f32 0.0, %v4273
    %v4275 = vpop.f32.mrb[0].mxu0
    %v4276 = vpop.f32.mrb[0].mxu0
    %v4277 = vpop.f32.mrb[0].mxu0
    %4278 = vdwg.mxu0
    %v4280 = vsel %vm93, %v4234, 0
    %4282 = vmatprep.subr.bf16.mxu0 0
    %4283 = vmatpush1.bf16.msra.mxu0 %v145
    %4284 = vmatprep.subr.bf16.mxu0 0
    %4285 = vmatpush1.bf16.msra.mxu0 0
    %4286 = vmatprep.subr.bf16.mxu0 0
    %4287 = vmatpush1.bf16.msra.mxu0 0
    %4288 = vmatprep.subr.bf16.mxu0 0
    %4289 = vmatpush1.bf16.msra.mxu0 0
    %4290 = vmatprep.subr.bf16.mxu0 0
    %4291 = vmatpush1.bf16.msra.mxu0 0
    %4292 = vmatprep.subr.bf16.mxu0 0
    %4293 = vmatpush1.bf16.msra.mxu0 0
    %4294 = vmatprep.subr.bf16.mxu0 0
    %4295 = vmatpush1.bf16.msra.mxu0 0
    %4296 = vmatprep.subr.bf16.mxu0 0
    %4297 = vmatpush1.bf16.msra.mxu0 0
    %4298 = vmatprep.subr.bf16.mxu0 0
    %4299 = vmatpush1.bf16.msra.mxu0 0
    %4300 = vmatprep.subr.bf16.mxu0 0
    %4301 = vmatpush1.bf16.msra.mxu0 0
    %4302 = vmatprep.subr.bf16.mxu0 0
    %4303 = vmatpush1.bf16.msra.mxu0 0
    %4304 = vmatprep.subr.bf16.mxu0 0
    %4305 = vmatpush1.bf16.msra.mxu0 0
    %4306 = vmatprep.subr.bf16.mxu0 0
    %4307 = vmatpush1.bf16.msra.mxu0 0
    %4308 = vmatprep.subr.bf16.mxu0 0
    %4309 = vmatpush1.bf16.msra.mxu0 0
    %4310 = vmatprep.subr.bf16.mxu0 0
    %4311 = vmatpush1.bf16.msra.mxu0 0
    %4312 = vmatprep.subr.bf16.mxu0 0
    %4313 = vmatpush1.bf16.msra.mxu0 0
    %4314 = vmatprep.mubr.bf16.mxu0 0
    %4315 = vmatmul.mubr.bf16.gmra.mrb[0].mxu0 %v4280
    %v4316 = vpop.f32.mrb[0].mxu0
    %v4317 = vadd.f32 %v4274, %v4316
    %v4318 = vpop.f32.mrb[0].mxu0
    %v4319 = vpop.f32.mrb[0].mxu0
    %v4320 = vpop.f32.mrb[0].mxu0
    %4321 = vdwg.mxu0
    %v4322 = vadd.f32 %v4317, %v54
    %vm4323 = vcmp.gt.f32.partialorder %v4322, 0.0
    %v4324 = vmin.f32 %v4322, 0.0
    %v4325 = vmul.f32 %v4324, 1.442695
    %v4326 = vpow.pop %v4325
    %v4327 = vsub.f32 %v4326, 1.0
    %v4328 = vsel %vm4323, %v4322, %v4327
    %v4329 = vpack.c.bf16 %v4328, %v4328
    %v4331 = vsel %vm207, %v4329, 0
    %4333 = vmatprep.subr.bf16.mxu0 0
    %4334 = vmatpush1.bf16.msra.mxu0 %v203
    %4335 = vmatprep.subr.bf16.mxu0 0
    %4336 = vmatpush1.bf16.msra.mxu0 %v204
    %4337 = vmatprep.subr.bf16.mxu0 0
    %4338 = vmatpush1.bf16.msra.mxu0 0
    %4339 = vmatprep.subr.bf16.mxu0 0
    %4340 = vmatpush1.bf16.msra.mxu0 0
    %4341 = vmatprep.subr.bf16.mxu0 0
    %4342 = vmatpush1.bf16.msra.mxu0 0
    %4343 = vmatprep.subr.bf16.mxu0 0
    %4344 = vmatpush1.bf16.msra.mxu0 0
    %4345 = vmatprep.subr.bf16.mxu0 0
    %4346 = vmatpush1.bf16.msra.mxu0 0
    %4347 = vmatprep.subr.bf16.mxu0 0
    %4348 = vmatpush1.bf16.msra.mxu0 0
    %4349 = vmatprep.subr.bf16.mxu0 0
    %4350 = vmatpush1.bf16.msra.mxu0 0
    %4351 = vmatprep.subr.bf16.mxu0 0
    %4352 = vmatpush1.bf16.msra.mxu0 0
    %4353 = vmatprep.subr.bf16.mxu0 0
    %4354 = vmatpush1.bf16.msra.mxu0 0
    %4355 = vmatprep.subr.bf16.mxu0 0
    %4356 = vmatpush1.bf16.msra.mxu0 0
    %4357 = vmatprep.subr.bf16.mxu0 0
    %4358 = vmatpush1.bf16.msra.mxu0 0
    %4359 = vmatprep.subr.bf16.mxu0 0
    %4360 = vmatpush1.bf16.msra.mxu0 0
    %4361 = vmatprep.subr.bf16.mxu0 0
    %4362 = vmatpush1.bf16.msra.mxu0 0
    %4363 = vmatprep.subr.bf16.mxu0 0
    %4364 = vmatpush1.bf16.msra.mxu0 0
    %4365 = vmatprep.mubr.bf16.mxu0 0
    %4366 = vmatmul.mubr.bf16.gmra.mrb[0].mxu0 %v4331
    %v4367 = vpop.f32.mrb[0].mxu0
    %v4368 = vadd.f32 %v61, %v4367
    %v4369 = vpop.f32.mrb[0].mxu0
    %v4370 = vpop.f32.mrb[0].mxu0
    %v4371 = vpop.f32.mrb[0].mxu0
    %4372 = vdwg.mxu0
    %vm4373 = vcmp.gt.f32.partialorder %v4368, 0.0
    %v4374 = vmin.f32 %v4368, 0.0
    %v4375 = vmul.f32 %v4374, 1.442695
    %v4376 = vpow.pop %v4375
    %v4377 = vsub.f32 %v4376, 1.0
    %v4378 = vsel %vm4373, %v4368, %v4377
    %v4379 = vpack.c.bf16 %v4378, %v4378
    %v4381 = vsel %vm207, %v4379, 0
    %4383 = vmatprep.subr.bf16.mxu0 0
    %4384 = vmatpush1.bf16.msra.mxu0 %v266
    %4385 = vmatprep.subr.bf16.mxu0 0
    %4386 = vmatpush1.bf16.msra.mxu0 %v267
    %4387 = vmatprep.subr.bf16.mxu0 0
    %4388 = vmatpush1.bf16.msra.mxu0 0
    %4389 = vmatprep.subr.bf16.mxu0 0
    %4390 = vmatpush1.bf16.msra.mxu0 0
    %4391 = vmatprep.subr.bf16.mxu0 0
    %4392 = vmatpush1.bf16.msra.mxu0 0
    %4393 = vmatprep.subr.bf16.mxu0 0
    %4394 = vmatpush1.bf16.msra.mxu0 0
    %4395 = vmatprep.subr.bf16.mxu0 0
    %4396 = vmatpush1.bf16.msra.mxu0 0
    %4397 = vmatprep.subr.bf16.mxu0 0
    %4398 = vmatpush1.bf16.msra.mxu0 0
    %4399 = vmatprep.subr.bf16.mxu0 0
    %4400 = vmatpush1.bf16.msra.mxu0 0
    %4401 = vmatprep.subr.bf16.mxu0 0
    %4402 = vmatpush1.bf16.msra.mxu0 0
    %4403 = vmatprep.subr.bf16.mxu0 0
    %4404 = vmatpush1.bf16.msra.mxu0 0
    %4405 = vmatprep.subr.bf16.mxu0 0
    %4406 = vmatpush1.bf16.msra.mxu0 0
    %4407 = vmatprep.subr.bf16.mxu0 0
    %4408 = vmatpush1.bf16.msra.mxu0 0
    %4409 = vmatprep.subr.bf16.mxu0 0
    %4410 = vmatpush1.bf16.msra.mxu0 0
    %4411 = vmatprep.subr.bf16.mxu0 0
    %4412 = vmatpush1.bf16.msra.mxu0 0
    %4413 = vmatprep.subr.bf16.mxu0 0
    %4414 = vmatpush1.bf16.msra.mxu0 0
    %4415 = vmatprep.mubr.bf16.mxu0 0
    %4416 = vmatmul.mubr.bf16.gmra.mrb[0].mxu0 %v4381
    %v4417 = vpop.f32.mrb[0].mxu0
    %v4418 = vadd.f32 %v68, %v4417
    %v4419 = vpop.f32.mrb[0].mxu0
    %v4420 = vpop.f32.mrb[0].mxu0
    %v4421 = vpop.f32.mrb[0].mxu0
    %4422 = vdwg.mxu0
    %v4423 = vmul.f32 %v314, %v4233
    %v4424 = vadd.f32 %v4033, %v4423
    %v4425 = vmul.f32 %v314, %v4418
    %v4426 = vadd.f32 %v4040, %v4425
    %v4427 = vpack.c.bf16 %v4424, %v4424
    %v4428 = vpack.c.bf16 %v4426, %v4426
    %v4430 = vsel %vm93, %v4428, 0
    %4432 = vmatprep.subr.bf16.mxu0 0
    %4433 = vmatpush1.bf16.msra.mxu0 %v99
    %4434 = vmatprep.subr.bf16.mxu0 0
    %4435 = vmatpush1.bf16.msra.mxu0 0
    %4436 = vmatprep.subr.bf16.mxu0 0
    %4437 = vmatpush1.bf16.msra.mxu0 0
    %4438 = vmatprep.subr.bf16.mxu0 0
    %4439 = vmatpush1.bf16.msra.mxu0 0
    %4440 = vmatprep.subr.bf16.mxu0 0
    %4441 = vmatpush1.bf16.msra.mxu0 0
    %4442 = vmatprep.subr.bf16.mxu0 0
    %4443 = vmatpush1.bf16.msra.mxu0 0
    %4444 = vmatprep.subr.bf16.mxu0 0
    %4445 = vmatpush1.bf16.msra.mxu0 0
    %4446 = vmatprep.subr.bf16.mxu0 0
    %4447 = vmatpush1.bf16.msra.mxu0 0
    %4448 = vmatprep.subr.bf16.mxu0 0
    %4449 = vmatpush1.bf16.msra.mxu0 0
    %4450 = vmatprep.subr.bf16.mxu0 0
    %4451 = vmatpush1.bf16.msra.mxu0 0
    %4452 = vmatprep.subr.bf16.mxu0 0
    %4453 = vmatpush1.bf16.msra.mxu0 0
    %4454 = vmatprep.subr.bf16.mxu0 0
    %4455 = vmatpush1.bf16.msra.mxu0 0
    %4456 = vmatprep.subr.bf16.mxu0 0
    %4457 = vmatpush1.bf16.msra.mxu0 0
    %4458 = vmatprep.subr.bf16.mxu0 0
    %4459 = vmatpush1.bf16.msra.mxu0 0
    %4460 = vmatprep.subr.bf16.mxu0 0
    %4461 = vmatpush1.bf16.msra.mxu0 0
    %4462 = vmatprep.subr.bf16.mxu0 0
    %4463 = vmatpush1.bf16.msra.mxu0 0
    %4464 = vmatprep.mubr.bf16.mxu0 0
    %4465 = vmatmul.mubr.bf16.gmra.mrb[0].mxu0 %v4430
    %v4466 = vpop.f32.mrb[0].mxu0
    %v4467 = vadd.f32 0.0, %v4466
    %v4468 = vpop.f32.mrb[0].mxu0
    %v4469 = vpop.f32.mrb[0].mxu0
    %v4470 = vpop.f32.mrb[0].mxu0
    %4471 = vdwg.mxu0
    %v4473 = vsel %vm93, %v4427, 0
    %4475 = vmatprep.subr.bf16.mxu0 0
    %4476 = vmatpush1.bf16.msra.mxu0 %v145
    %4477 = vmatprep.subr.bf16.mxu0 0
    %4478 = vmatpush1.bf16.msra.mxu0 0
    %4479 = vmatprep.subr.bf16.mxu0 0
    %4480 = vmatpush1.bf16.msra.mxu0 0
    %4481 = vmatprep.subr.bf16.mxu0 0
    %4482 = vmatpush1.bf16.msra.mxu0 0
    %4483 = vmatprep.subr.bf16.mxu0 0
    %4484 = vmatpush1.bf16.msra.mxu0 0
    %4485 = vmatprep.subr.bf16.mxu0 0
    %4486 = vmatpush1.bf16.msra.mxu0 0
    %4487 = vmatprep.subr.bf16.mxu0 0
    %4488 = vmatpush1.bf16.msra.mxu0 0
    %4489 = vmatprep.subr.bf16.mxu0 0
    %4490 = vmatpush1.bf16.msra.mxu0 0
    %4491 = vmatprep.subr.bf16.mxu0 0
    %4492 = vmatpush1.bf16.msra.mxu0 0
    %4493 = vmatprep.subr.bf16.mxu0 0
    %4494 = vmatpush1.bf16.msra.mxu0 0
    %4495 = vmatprep.subr.bf16.mxu0 0
    %4496 = vmatpush1.bf16.msra.mxu0 0
    %4497 = vmatprep.subr.bf16.mxu0 0
    %4498 = vmatpush1.bf16.msra.mxu0 0
    %4499 = vmatprep.subr.bf16.mxu0 0
    %4500 = vmatpush1.bf16.msra.mxu0 0
    %4501 = vmatprep.subr.bf16.mxu0 0
    %4502 = vmatpush1.bf16.msra.mxu0 0
    %4503 = vmatprep.subr.bf16.mxu0 0
    %4504 = vmatpush1.bf16.msra.mxu0 0
    %4505 = vmatprep.subr.bf16.mxu0 0
    %4506 = vmatpush1.bf16.msra.mxu0 0
    %4507 = vmatprep.mubr.bf16.mxu0 0
    %4508 = vmatmul.mubr.bf16.gmra.mrb[0].mxu0 %v4473
    %v4509 = vpop.f32.mrb[0].mxu0
    %v4510 = vadd.f32 %v4467, %v4509
    %v4511 = vpop.f32.mrb[0].mxu0
    %v4512 = vpop.f32.mrb[0].mxu0
    %v4513 = vpop.f32.mrb[0].mxu0
    %4514 = vdwg.mxu0
    %v4515 = vadd.f32 %v4510, %v54
    %vm4516 = vcmp.gt.f32.partialorder %v4515, 0.0
    %v4517 = vmin.f32 %v4515, 0.0
    %v4518 = vmul.f32 %v4517, 1.442695
    %v4519 = vpow.pop %v4518
    %v4520 = vsub.f32 %v4519, 1.0
    %v4521 = vsel %vm4516, %v4515, %v4520
    %v4522 = vpack.c.bf16 %v4521, %v4521
    %v4524 = vsel %vm207, %v4522, 0
    %4526 = vmatprep.subr.bf16.mxu0 0
    %4527 = vmatpush1.bf16.msra.mxu0 %v203
    %4528 = vmatprep.subr.bf16.mxu0 0
    %4529 = vmatpush1.bf16.msra.mxu0 %v204
    %4530 = vmatprep.subr.bf16.mxu0 0
    %4531 = vmatpush1.bf16.msra.mxu0 0
    %4532 = vmatprep.subr.bf16.mxu0 0
    %4533 = vmatpush1.bf16.msra.mxu0 0
    %4534 = vmatprep.subr.bf16.mxu0 0
    %4535 = vmatpush1.bf16.msra.mxu0 0
    %4536 = vmatprep.subr.bf16.mxu0 0
    %4537 = vmatpush1.bf16.msra.mxu0 0
    %4538 = vmatprep.subr.bf16.mxu0 0
    %4539 = vmatpush1.bf16.msra.mxu0 0
    %4540 = vmatprep.subr.bf16.mxu0 0
    %4541 = vmatpush1.bf16.msra.mxu0 0
    %4542 = vmatprep.subr.bf16.mxu0 0
    %4543 = vmatpush1.bf16.msra.mxu0 0
    %4544 = vmatprep.subr.bf16.mxu0 0
    %4545 = vmatpush1.bf16.msra.mxu0 0
    %4546 = vmatprep.subr.bf16.mxu0 0
    %4547 = vmatpush1.bf16.msra.mxu0 0
    %4548 = vmatprep.subr.bf16.mxu0 0
    %4549 = vmatpush1.bf16.msra.mxu0 0
    %4550 = vmatprep.subr.bf16.mxu0 0
    %4551 = vmatpush1.bf16.msra.mxu0 0
    %4552 = vmatprep.subr.bf16.mxu0 0
    %4553 = vmatpush1.bf16.msra.mxu0 0
    %4554 = vmatprep.subr.bf16.mxu0 0
    %4555 = vmatpush1.bf16.msra.mxu0 0
    %4556 = vmatprep.subr.bf16.mxu0 0
    %4557 = vmatpush1.bf16.msra.mxu0 0
    %4558 = vmatprep.mubr.bf16.mxu0 0
    %4559 = vmatmul.mubr.bf16.gmra.mrb[0].mxu0 %v4524
    %v4560 = vpop.f32.mrb[0].mxu0
    %v4561 = vadd.f32 %v61, %v4560
    %v4562 = vpop.f32.mrb[0].mxu0
    %v4563 = vpop.f32.mrb[0].mxu0
    %v4564 = vpop.f32.mrb[0].mxu0
    %4565 = vdwg.mxu0
    %vm4566 = vcmp.gt.f32.partialorder %v4561, 0.0
    %v4567 = vmin.f32 %v4561, 0.0
    %v4568 = vmul.f32 %v4567, 1.442695
    %v4569 = vpow.pop %v4568
    %v4570 = vsub.f32 %v4569, 1.0
    %v4571 = vsel %vm4566, %v4561, %v4570
    %v4572 = vpack.c.bf16 %v4571, %v4571
    %v4574 = vsel %vm207, %v4572, 0
    %4576 = vmatprep.subr.bf16.mxu0 0
    %4577 = vmatpush1.bf16.msra.mxu0 %v266
    %4578 = vmatprep.subr.bf16.mxu0 0
    %4579 = vmatpush1.bf16.msra.mxu0 %v267
    %4580 = vmatprep.subr.bf16.mxu0 0
    %4581 = vmatpush1.bf16.msra.mxu0 0
    %4582 = vmatprep.subr.bf16.mxu0 0
    %4583 = vmatpush1.bf16.msra.mxu0 0
    %4584 = vmatprep.subr.bf16.mxu0 0
    %4585 = vmatpush1.bf16.msra.mxu0 0
    %4586 = vmatprep.subr.bf16.mxu0 0
    %4587 = vmatpush1.bf16.msra.mxu0 0
    %4588 = vmatprep.subr.bf16.mxu0 0
    %4589 = vmatpush1.bf16.msra.mxu0 0
    %4590 = vmatprep.subr.bf16.mxu0 0
    %4591 = vmatpush1.bf16.msra.mxu0 0
    %4592 = vmatprep.subr.bf16.mxu0 0
    %4593 = vmatpush1.bf16.msra.mxu0 0
    %4594 = vmatprep.subr.bf16.mxu0 0
    %4595 = vmatpush1.bf16.msra.mxu0 0
    %4596 = vmatprep.subr.bf16.mxu0 0
    %4597 = vmatpush1.bf16.msra.mxu0 0
    %4598 = vmatprep.subr.bf16.mxu0 0
    %4599 = vmatpush1.bf16.msra.mxu0 0
    %4600 = vmatprep.subr.bf16.mxu0 0
    %4601 = vmatpush1.bf16.msra.mxu0 0
    %4602 = vmatprep.subr.bf16.mxu0 0
    %4603 = vmatpush1.bf16.msra.mxu0 0
    %4604 = vmatprep.subr.bf16.mxu0 0
    %4605 = vmatpush1.bf16.msra.mxu0 0
    %4606 = vmatprep.subr.bf16.mxu0 0
    %4607 = vmatpush1.bf16.msra.mxu0 0
    %4608 = vmatprep.mubr.bf16.mxu0 0
    %4609 = vmatmul.mubr.bf16.gmra.mrb[0].mxu0 %v4574
    %v4610 = vpop.f32.mrb[0].mxu0
    %v4611 = vadd.f32 %v68, %v4610
    %v4612 = vpop.f32.mrb[0].mxu0
    %v4613 = vpop.f32.mrb[0].mxu0
    %v4614 = vpop.f32.mrb[0].mxu0
    %4615 = vdwg.mxu0
    %v4616 = vmul.f32 %v701, %v4426
    %v4617 = vadd.f32 %v4033, %v4616
    %v4618 = vmul.f32 %v701, %v4611
    %v4619 = vadd.f32 %v4040, %v4618
    %v4620 = vpack.c.bf16 %v4617, %v4617
    %v4621 = vpack.c.bf16 %v4619, %v4619
    %v4623 = vsel %vm93, %v4621, 0
    %4625 = vmatprep.subr.bf16.mxu0 0
    %4626 = vmatpush1.bf16.msra.mxu0 %v99
    %4627 = vmatprep.subr.bf16.mxu0 0
    %4628 = vmatpush1.bf16.msra.mxu0 0
    %4629 = vmatprep.subr.bf16.mxu0 0
    %4630 = vmatpush1.bf16.msra.mxu0 0
    %4631 = vmatprep.subr.bf16.mxu0 0
    %4632 = vmatpush1.bf16.msra.mxu0 0
    %4633 = vmatprep.subr.bf16.mxu0 0
    %4634 = vmatpush1.bf16.msra.mxu0 0
    %4635 = vmatprep.subr.bf16.mxu0 0
    %4636 = vmatpush1.bf16.msra.mxu0 0
    %4637 = vmatprep.subr.bf16.mxu0 0
    %4638 = vmatpush1.bf16.msra.mxu0 0
    %4639 = vmatprep.subr.bf16.mxu0 0
    %4640 = vmatpush1.bf16.msra.mxu0 0
    %4641 = vmatprep.subr.bf16.mxu0 0
    %4642 = vmatpush1.bf16.msra.mxu0 0
    %4643 = vmatprep.subr.bf16.mxu0 0
    %4644 = vmatpush1.bf16.msra.mxu0 0
    %4645 = vmatprep.subr.bf16.mxu0 0
    %4646 = vmatpush1.bf16.msra.mxu0 0
    %4647 = vmatprep.subr.bf16.mxu0 0
    %4648 = vmatpush1.bf16.msra.mxu0 0
    %4649 = vmatprep.subr.bf16.mxu0 0
    %4650 = vmatpush1.bf16.msra.mxu0 0
    %4651 = vmatprep.subr.bf16.mxu0 0
    %4652 = vmatpush1.bf16.msra.mxu0 0
    %4653 = vmatprep.subr.bf16.mxu0 0
    %4654 = vmatpush1.bf16.msra.mxu0 0
    %4655 = vmatprep.subr.bf16.mxu0 0
    %4656 = vmatpush1.bf16.msra.mxu0 0
    %4657 = vmatprep.mubr.bf16.mxu0 0
    %4658 = vmatmul.mubr.bf16.gmra.mrb[0].mxu0 %v4623
    %v4659 = vpop.f32.mrb[0].mxu0
    %v4660 = vadd.f32 0.0, %v4659
    %v4661 = vpop.f32.mrb[0].mxu0
    %v4662 = vpop.f32.mrb[0].mxu0
    %v4663 = vpop.f32.mrb[0].mxu0
    %4664 = vdwg.mxu0
    %v4666 = vsel %vm93, %v4620, 0
    %4668 = vmatprep.subr.bf16.mxu0 0
    %4669 = vmatpush1.bf16.msra.mxu0 %v145
    %4670 = vmatprep.subr.bf16.mxu0 0
    %4671 = vmatpush1.bf16.msra.mxu0 0
    %4672 = vmatprep.subr.bf16.mxu0 0
    %4673 = vmatpush1.bf16.msra.mxu0 0
    %4674 = vmatprep.subr.bf16.mxu0 0
    %4675 = vmatpush1.bf16.msra.mxu0 0
    %4676 = vmatprep.subr.bf16.mxu0 0
    %4677 = vmatpush1.bf16.msra.mxu0 0
    %4678 = vmatprep.subr.bf16.mxu0 0
    %4679 = vmatpush1.bf16.msra.mxu0 0
    %4680 = vmatprep.subr.bf16.mxu0 0
    %4681 = vmatpush1.bf16.msra.mxu0 0
    %4682 = vmatprep.subr.bf16.mxu0 0
    %4683 = vmatpush1.bf16.msra.mxu0 0
    %4684 = vmatprep.subr.bf16.mxu0 0
    %4685 = vmatpush1.bf16.msra.mxu0 0
    %4686 = vmatprep.subr.bf16.mxu0 0
    %4687 = vmatpush1.bf16.msra.mxu0 0
    %4688 = vmatprep.subr.bf16.mxu0 0
    %4689 = vmatpush1.bf16.msra.mxu0 0
    %4690 = vmatprep.subr.bf16.mxu0 0
    %4691 = vmatpush1.bf16.msra.mxu0 0
    %4692 = vmatprep.subr.bf16.mxu0 0
    %4693 = vmatpush1.bf16.msra.mxu0 0
    %4694 = vmatprep.subr.bf16.mxu0 0
    %4695 = vmatpush1.bf16.msra.mxu0 0
    %4696 = vmatprep.subr.bf16.mxu0 0
    %4697 = vmatpush1.bf16.msra.mxu0 0
    %4698 = vmatprep.subr.bf16.mxu0 0
    %4699 = vmatpush1.bf16.msra.mxu0 0
    %4700 = vmatprep.mubr.bf16.mxu0 0
    %4701 = vmatmul.mubr.bf16.gmra.mrb[0].mxu0 %v4666
    %v4702 = vpop.f32.mrb[0].mxu0
    %v4703 = vadd.f32 %v4660, %v4702
    %v4704 = vpop.f32.mrb[0].mxu0
    %v4705 = vpop.f32.mrb[0].mxu0
    %v4706 = vpop.f32.mrb[0].mxu0
    %4707 = vdwg.mxu0
    %v4708 = vadd.f32 %v4703, %v54
    %vm4709 = vcmp.gt.f32.partialorder %v4708, 0.0
    %v4710 = vmin.f32 %v4708, 0.0
    %v4711 = vmul.f32 %v4710, 1.442695
    %v4712 = vpow.pop %v4711
    %v4713 = vsub.f32 %v4712, 1.0
    %v4714 = vsel %vm4709, %v4708, %v4713
    %v4715 = vpack.c.bf16 %v4714, %v4714
    %v4717 = vsel %vm207, %v4715, 0
    %4719 = vmatprep.subr.bf16.mxu0 0
    %4720 = vmatpush1.bf16.msra.mxu0 %v203
    %4721 = vmatprep.subr.bf16.mxu0 0
    %4722 = vmatpush1.bf16.msra.mxu0 %v204
    %4723 = vmatprep.subr.bf16.mxu0 0
    %4724 = vmatpush1.bf16.msra.mxu0 0
    %4725 = vmatprep.subr.bf16.mxu0 0
    %4726 = vmatpush1.bf16.msra.mxu0 0
    %4727 = vmatprep.subr.bf16.mxu0 0
    %4728 = vmatpush1.bf16.msra.mxu0 0
    %4729 = vmatprep.subr.bf16.mxu0 0
    %4730 = vmatpush1.bf16.msra.mxu0 0
    %4731 = vmatprep.subr.bf16.mxu0 0
    %4732 = vmatpush1.bf16.msra.mxu0 0
    %4733 = vmatprep.subr.bf16.mxu0 0
    %4734 = vmatpush1.bf16.msra.mxu0 0
    %4735 = vmatprep.subr.bf16.mxu0 0
    %4736 = vmatpush1.bf16.msra.mxu0 0
    %4737 = vmatprep.subr.bf16.mxu0 0
    %4738 = vmatpush1.bf16.msra.mxu0 0
    %4739 = vmatprep.subr.bf16.mxu0 0
    %4740 = vmatpush1.bf16.msra.mxu0 0
    %4741 = vmatprep.subr.bf16.mxu0 0
    %4742 = vmatpush1.bf16.msra.mxu0 0
    %4743 = vmatprep.subr.bf16.mxu0 0
    %4744 = vmatpush1.bf16.msra.mxu0 0
    %4745 = vmatprep.subr.bf16.mxu0 0
    %4746 = vmatpush1.bf16.msra.mxu0 0
    %4747 = vmatprep.subr.bf16.mxu0 0
    %4748 = vmatpush1.bf16.msra.mxu0 0
    %4749 = vmatprep.subr.bf16.mxu0 0
    %4750 = vmatpush1.bf16.msra.mxu0 0
    %4751 = vmatprep.mubr.bf16.mxu0 0
    %4752 = vmatmul.mubr.bf16.gmra.mrb[0].mxu0 %v4717
    %v4753 = vpop.f32.mrb[0].mxu0
    %v4754 = vadd.f32 %v61, %v4753
    %v4755 = vpop.f32.mrb[0].mxu0
    %v4756 = vpop.f32.mrb[0].mxu0
    %v4757 = vpop.f32.mrb[0].mxu0
    %4758 = vdwg.mxu0
    %vm4759 = vcmp.gt.f32.partialorder %v4754, 0.0
    %v4760 = vmin.f32 %v4754, 0.0
    %v4761 = vmul.f32 %v4760, 1.442695
    %v4762 = vpow.pop %v4761
    %v4763 = vsub.f32 %v4762, 1.0
    %v4764 = vsel %vm4759, %v4754, %v4763
    %v4765 = vpack.c.bf16 %v4764, %v4764
    %v4767 = vsel %vm207, %v4765, 0
    %4769 = vmatprep.subr.bf16.mxu0 0
    %4770 = vmatpush1.bf16.msra.mxu0 %v266
    %4771 = vmatprep.subr.bf16.mxu0 0
    %4772 = vmatpush1.bf16.msra.mxu0 %v267
    %4773 = vmatprep.subr.bf16.mxu0 0
    %4774 = vmatpush1.bf16.msra.mxu0 0
    %4775 = vmatprep.subr.bf16.mxu0 0
    %4776 = vmatpush1.bf16.msra.mxu0 0
    %4777 = vmatprep.subr.bf16.mxu0 0
    %4778 = vmatpush1.bf16.msra.mxu0 0
    %4779 = vmatprep.subr.bf16.mxu0 0
    %4780 = vmatpush1.bf16.msra.mxu0 0
    %4781 = vmatprep.subr.bf16.mxu0 0
    %4782 = vmatpush1.bf16.msra.mxu0 0
    %4783 = vmatprep.subr.bf16.mxu0 0
    %4784 = vmatpush1.bf16.msra.mxu0 0
    %4785 = vmatprep.subr.bf16.mxu0 0
    %4786 = vmatpush1.bf16.msra.mxu0 0
    %4787 = vmatprep.subr.bf16.mxu0 0
    %4788 = vmatpush1.bf16.msra.mxu0 0
    %4789 = vmatprep.subr.bf16.mxu0 0
    %4790 = vmatpush1.bf16.msra.mxu0 0
    %4791 = vmatprep.subr.bf16.mxu0 0
    %4792 = vmatpush1.bf16.msra.mxu0 0
    %4793 = vmatprep.subr.bf16.mxu0 0
    %4794 = vmatpush1.bf16.msra.mxu0 0
    %4795 = vmatprep.subr.bf16.mxu0 0
    %4796 = vmatpush1.bf16.msra.mxu0 0
    %4797 = vmatprep.subr.bf16.mxu0 0
    %4798 = vmatpush1.bf16.msra.mxu0 0
    %4799 = vmatprep.subr.bf16.mxu0 0
    %4800 = vmatpush1.bf16.msra.mxu0 0
    %4801 = vmatprep.mubr.bf16.mxu0 0
    %4802 = vmatmul.mubr.bf16.gmra.mrb[0].mxu0 %v4767
    %v4803 = vpop.f32.mrb[0].mxu0
    %v4804 = vadd.f32 %v68, %v4803
    %v4805 = vpop.f32.mrb[0].mxu0
    %v4806 = vpop.f32.mrb[0].mxu0
    %v4807 = vpop.f32.mrb[0].mxu0
    %4808 = vdwg.mxu0
    %v4809 = vmul.f32 %v4233, 2.0
    %v4810 = vadd.f32 %v4040, %v4809
    %v4811 = vmul.f32 %v4426, 2.0
    %v4812 = vadd.f32 %v4810, %v4811
    %v4813 = vadd.f32 %v4812, %v4619
    %v4814 = vmul.f32 %v903, %v4813
    %v4815 = vadd.f32 %v4033, %v4814
    %v4816 = vmul.f32 %v4418, 2.0
    %v4817 = vadd.f32 %v4225, %v4816
    %v4818 = vmul.f32 %v4611, 2.0
    %v4819 = vadd.f32 %v4817, %v4818
    %v4820 = vadd.f32 %v4819, %v4804
    %v4821 = vmul.f32 %v903, %v4820
    %v4822 = vadd.f32 %v4040, %v4821
    %v4823 = vpack.c.bf16 %v4815, %v4815
    %v4824 = vpack.c.bf16 %v4822, %v4822
    %v4826 = vsel %vm93, %v4824, 0
    %4828 = vmatprep.subr.bf16.mxu0 0
    %4829 = vmatpush1.bf16.msra.mxu0 %v99
    %4830 = vmatprep.subr.bf16.mxu0 0
    %4831 = vmatpush1.bf16.msra.mxu0 0
    %4832 = vmatprep.subr.bf16.mxu0 0
    %4833 = vmatpush1.bf16.msra.mxu0 0
    %4834 = vmatprep.subr.bf16.mxu0 0
    %4835 = vmatpush1.bf16.msra.mxu0 0
    %4836 = vmatprep.subr.bf16.mxu0 0
    %4837 = vmatpush1.bf16.msra.mxu0 0
    %4838 = vmatprep.subr.bf16.mxu0 0
    %4839 = vmatpush1.bf16.msra.mxu0 0
    %4840 = vmatprep.subr.bf16.mxu0 0
    %4841 = vmatpush1.bf16.msra.mxu0 0
    %4842 = vmatprep.subr.bf16.mxu0 0
    %4843 = vmatpush1.bf16.msra.mxu0 0
    %4844 = vmatprep.subr.bf16.mxu0 0
    %4845 = vmatpush1.bf16.msra.mxu0 0
    %4846 = vmatprep.subr.bf16.mxu0 0
    %4847 = vmatpush1.bf16.msra.mxu0 0
    %4848 = vmatprep.subr.bf16.mxu0 0
    %4849 = vmatpush1.bf16.msra.mxu0 0
    %4850 = vmatprep.subr.bf16.mxu0 0
    %4851 = vmatpush1.bf16.msra.mxu0 0
    %4852 = vmatprep.subr.bf16.mxu0 0
    %4853 = vmatpush1.bf16.msra.mxu0 0
    %4854 = vmatprep.subr.bf16.mxu0 0
    %4855 = vmatpush1.bf16.msra.mxu0 0
    %4856 = vmatprep.subr.bf16.mxu0 0
    %4857 = vmatpush1.bf16.msra.mxu0 0
    %4858 = vmatprep.subr.bf16.mxu0 0
    %4859 = vmatpush1.bf16.msra.mxu0 0
    %4860 = vmatprep.mubr.bf16.mxu0 0
    %4861 = vmatmul.mubr.bf16.gmra.mrb[0].mxu0 %v4826
    %v4862 = vpop.f32.mrb[0].mxu0
    %v4863 = vadd.f32 0.0, %v4862
    %v4864 = vpop.f32.mrb[0].mxu0
    %v4865 = vpop.f32.mrb[0].mxu0
    %v4866 = vpop.f32.mrb[0].mxu0
    %4867 = vdwg.mxu0
    %v4869 = vsel %vm93, %v4823, 0
    %4871 = vmatprep.subr.bf16.mxu0 0
    %4872 = vmatpush1.bf16.msra.mxu0 %v145
    %4873 = vmatprep.subr.bf16.mxu0 0
    %4874 = vmatpush1.bf16.msra.mxu0 0
    %4875 = vmatprep.subr.bf16.mxu0 0
    %4876 = vmatpush1.bf16.msra.mxu0 0
    %4877 = vmatprep.subr.bf16.mxu0 0
    %4878 = vmatpush1.bf16.msra.mxu0 0
    %4879 = vmatprep.subr.bf16.mxu0 0
    %4880 = vmatpush1.bf16.msra.mxu0 0
    %4881 = vmatprep.subr.bf16.mxu0 0
    %4882 = vmatpush1.bf16.msra.mxu0 0
    %4883 = vmatprep.subr.bf16.mxu0 0
    %4884 = vmatpush1.bf16.msra.mxu0 0
    %4885 = vmatprep.subr.bf16.mxu0 0
    %4886 = vmatpush1.bf16.msra.mxu0 0
    %4887 = vmatprep.subr.bf16.mxu0 0
    %4888 = vmatpush1.bf16.msra.mxu0 0
    %4889 = vmatprep.subr.bf16.mxu0 0
    %4890 = vmatpush1.bf16.msra.mxu0 0
    %4891 = vmatprep.subr.bf16.mxu0 0
    %4892 = vmatpush1.bf16.msra.mxu0 0
    %4893 = vmatprep.subr.bf16.mxu0 0
    %4894 = vmatpush1.bf16.msra.mxu0 0
    %4895 = vmatprep.subr.bf16.mxu0 0
    %4896 = vmatpush1.bf16.msra.mxu0 0
    %4897 = vmatprep.subr.bf16.mxu0 0
    %4898 = vmatpush1.bf16.msra.mxu0 0
    %4899 = vmatprep.subr.bf16.mxu0 0
    %4900 = vmatpush1.bf16.msra.mxu0 0
    %4901 = vmatprep.subr.bf16.mxu0 0
    %4902 = vmatpush1.bf16.msra.mxu0 0
    %4903 = vmatprep.mubr.bf16.mxu0 0
    %4904 = vmatmul.mubr.bf16.gmra.mrb[0].mxu0 %v4869
    %v4905 = vpop.f32.mrb[0].mxu0
    %v4906 = vadd.f32 %v4863, %v4905
    %v4907 = vpop.f32.mrb[0].mxu0
    %v4908 = vpop.f32.mrb[0].mxu0
    %v4909 = vpop.f32.mrb[0].mxu0
    %4910 = vdwg.mxu0
    %v4911 = vadd.f32 %v4906, %v54
    %vm4912 = vcmp.gt.f32.partialorder %v4911, 0.0
    %v4913 = vmin.f32 %v4911, 0.0
    %v4914 = vmul.f32 %v4913, 1.442695
    %v4915 = vpow.pop %v4914
    %v4916 = vsub.f32 %v4915, 1.0
    %v4917 = vsel %vm4912, %v4911, %v4916
    %v4918 = vpack.c.bf16 %v4917, %v4917
    %v4920 = vsel %vm207, %v4918, 0
    %4922 = vmatprep.subr.bf16.mxu0 0
    %4923 = vmatpush1.bf16.msra.mxu0 %v203
    %4924 = vmatprep.subr.bf16.mxu0 0
    %4925 = vmatpush1.bf16.msra.mxu0 %v204
    %4926 = vmatprep.subr.bf16.mxu0 0
    %4927 = vmatpush1.bf16.msra.mxu0 0
    %4928 = vmatprep.subr.bf16.mxu0 0
    %4929 = vmatpush1.bf16.msra.mxu0 0
    %4930 = vmatprep.subr.bf16.mxu0 0
    %4931 = vmatpush1.bf16.msra.mxu0 0
    %4932 = vmatprep.subr.bf16.mxu0 0
    %4933 = vmatpush1.bf16.msra.mxu0 0
    %4934 = vmatprep.subr.bf16.mxu0 0
    %4935 = vmatpush1.bf16.msra.mxu0 0
    %4936 = vmatprep.subr.bf16.mxu0 0
    %4937 = vmatpush1.bf16.msra.mxu0 0
    %4938 = vmatprep.subr.bf16.mxu0 0
    %4939 = vmatpush1.bf16.msra.mxu0 0
    %4940 = vmatprep.subr.bf16.mxu0 0
    %4941 = vmatpush1.bf16.msra.mxu0 0
    %4942 = vmatprep.subr.bf16.mxu0 0
    %4943 = vmatpush1.bf16.msra.mxu0 0
    %4944 = vmatprep.subr.bf16.mxu0 0
    %4945 = vmatpush1.bf16.msra.mxu0 0
    %4946 = vmatprep.subr.bf16.mxu0 0
    %4947 = vmatpush1.bf16.msra.mxu0 0
    %4948 = vmatprep.subr.bf16.mxu0 0
    %4949 = vmatpush1.bf16.msra.mxu0 0
    %4950 = vmatprep.subr.bf16.mxu0 0
    %4951 = vmatpush1.bf16.msra.mxu0 0
    %4952 = vmatprep.subr.bf16.mxu0 0
    %4953 = vmatpush1.bf16.msra.mxu0 0
    %4954 = vmatprep.mubr.bf16.mxu0 0
    %4955 = vmatmul.mubr.bf16.gmra.mrb[0].mxu0 %v4920
    %v4956 = vpop.f32.mrb[0].mxu0
    %v4957 = vadd.f32 %v61, %v4956
    %v4958 = vpop.f32.mrb[0].mxu0
    %v4959 = vpop.f32.mrb[0].mxu0
    %v4960 = vpop.f32.mrb[0].mxu0
    %4961 = vdwg.mxu0
    %vm4962 = vcmp.gt.f32.partialorder %v4957, 0.0
    %v4963 = vmin.f32 %v4957, 0.0
    %v4964 = vmul.f32 %v4963, 1.442695
    %v4965 = vpow.pop %v4964
    %v4966 = vsub.f32 %v4965, 1.0
    %v4967 = vsel %vm4962, %v4957, %v4966
    %v4968 = vpack.c.bf16 %v4967, %v4967
    %v4970 = vsel %vm207, %v4968, 0
    %4972 = vmatprep.subr.bf16.mxu0 0
    %4973 = vmatpush1.bf16.msra.mxu0 %v266
    %4974 = vmatprep.subr.bf16.mxu0 0
    %4975 = vmatpush1.bf16.msra.mxu0 %v267
    %4976 = vmatprep.subr.bf16.mxu0 0
    %4977 = vmatpush1.bf16.msra.mxu0 0
    %4978 = vmatprep.subr.bf16.mxu0 0
    %4979 = vmatpush1.bf16.msra.mxu0 0
    %4980 = vmatprep.subr.bf16.mxu0 0
    %4981 = vmatpush1.bf16.msra.mxu0 0
    %4982 = vmatprep.subr.bf16.mxu0 0
    %4983 = vmatpush1.bf16.msra.mxu0 0
    %4984 = vmatprep.subr.bf16.mxu0 0
    %4985 = vmatpush1.bf16.msra.mxu0 0
    %4986 = vmatprep.subr.bf16.mxu0 0
    %4987 = vmatpush1.bf16.msra.mxu0 0
    %4988 = vmatprep.subr.bf16.mxu0 0
    %4989 = vmatpush1.bf16.msra.mxu0 0
    %4990 = vmatprep.subr.bf16.mxu0 0
    %4991 = vmatpush1.bf16.msra.mxu0 0
    %4992 = vmatprep.subr.bf16.mxu0 0
    %4993 = vmatpush1.bf16.msra.mxu0 0
    %4994 = vmatprep.subr.bf16.mxu0 0
    %4995 = vmatpush1.bf16.msra.mxu0 0
    %4996 = vmatprep.subr.bf16.mxu0 0
    %4997 = vmatpush1.bf16.msra.mxu0 0
    %4998 = vmatprep.subr.bf16.mxu0 0
    %4999 = vmatpush1.bf16.msra.mxu0 0
    %5000 = vmatprep.subr.bf16.mxu0 0
    %5001 = vmatpush1.bf16.msra.mxu0 0
    %5002 = vmatprep.subr.bf16.mxu0 0
    %5003 = vmatpush1.bf16.msra.mxu0 0
    %5004 = vmatprep.mubr.bf16.mxu0 0
    %5005 = vmatmul.mubr.bf16.gmra.mrb[0].mxu0 %v4970
    %v5006 = vpop.f32.mrb[0].mxu0
    %v5007 = vadd.f32 %v68, %v5006
    %v5008 = vpop.f32.mrb[0].mxu0
    %v5009 = vpop.f32.mrb[0].mxu0
    %v5010 = vpop.f32.mrb[0].mxu0
    %5011 = vdwg.mxu0
    %v5012 = vmul.f32 %v314, %v4822
    %v5013 = vadd.f32 %v4815, %v5012
    %v5014 = vmul.f32 %v314, %v5007
    %v5015 = vadd.f32 %v4822, %v5014
    %v5016 = vpack.c.bf16 %v5013, %v5013
    %v5017 = vpack.c.bf16 %v5015, %v5015
    %v5019 = vsel %vm93, %v5017, 0
    %5021 = vmatprep.subr.bf16.mxu0 0
    %5022 = vmatpush1.bf16.msra.mxu0 %v99
    %5023 = vmatprep.subr.bf16.mxu0 0
    %5024 = vmatpush1.bf16.msra.mxu0 0
    %5025 = vmatprep.subr.bf16.mxu0 0
    %5026 = vmatpush1.bf16.msra.mxu0 0
    %5027 = vmatprep.subr.bf16.mxu0 0
    %5028 = vmatpush1.bf16.msra.mxu0 0
    %5029 = vmatprep.subr.bf16.mxu0 0
    %5030 = vmatpush1.bf16.msra.mxu0 0
    %5031 = vmatprep.subr.bf16.mxu0 0
    %5032 = vmatpush1.bf16.msra.mxu0 0
    %5033 = vmatprep.subr.bf16.mxu0 0
    %5034 = vmatpush1.bf16.msra.mxu0 0
    %5035 = vmatprep.subr.bf16.mxu0 0
    %5036 = vmatpush1.bf16.msra.mxu0 0
    %5037 = vmatprep.subr.bf16.mxu0 0
    %5038 = vmatpush1.bf16.msra.mxu0 0
    %5039 = vmatprep.subr.bf16.mxu0 0
    %5040 = vmatpush1.bf16.msra.mxu0 0
    %5041 = vmatprep.subr.bf16.mxu0 0
    %5042 = vmatpush1.bf16.msra.mxu0 0
    %5043 = vmatprep.subr.bf16.mxu0 0
    %5044 = vmatpush1.bf16.msra.mxu0 0
    %5045 = vmatprep.subr.bf16.mxu0 0
    %5046 = vmatpush1.bf16.msra.mxu0 0
    %5047 = vmatprep.subr.bf16.mxu0 0
    %5048 = vmatpush1.bf16.msra.mxu0 0
    %5049 = vmatprep.subr.bf16.mxu0 0
    %5050 = vmatpush1.bf16.msra.mxu0 0
    %5051 = vmatprep.subr.bf16.mxu0 0
    %5052 = vmatpush1.bf16.msra.mxu0 0
    %5053 = vmatprep.mubr.bf16.mxu0 0
    %5054 = vmatmul.mubr.bf16.gmra.mrb[0].mxu0 %v5019
    %v5055 = vpop.f32.mrb[0].mxu0
    %v5056 = vadd.f32 0.0, %v5055
    %v5057 = vpop.f32.mrb[0].mxu0
    %v5058 = vpop.f32.mrb[0].mxu0
    %v5059 = vpop.f32.mrb[0].mxu0
    %5060 = vdwg.mxu0
    %v5062 = vsel %vm93, %v5016, 0
    %5064 = vmatprep.subr.bf16.mxu0 0
    %5065 = vmatpush1.bf16.msra.mxu0 %v145
    %5066 = vmatprep.subr.bf16.mxu0 0
    %5067 = vmatpush1.bf16.msra.mxu0 0
    %5068 = vmatprep.subr.bf16.mxu0 0
    %5069 = vmatpush1.bf16.msra.mxu0 0
    %5070 = vmatprep.subr.bf16.mxu0 0
    %5071 = vmatpush1.bf16.msra.mxu0 0
    %5072 = vmatprep.subr.bf16.mxu0 0
    %5073 = vmatpush1.bf16.msra.mxu0 0
    %5074 = vmatprep.subr.bf16.mxu0 0
    %5075 = vmatpush1.bf16.msra.mxu0 0
    %5076 = vmatprep.subr.bf16.mxu0 0
    %5077 = vmatpush1.bf16.msra.mxu0 0
    %5078 = vmatprep.subr.bf16.mxu0 0
    %5079 = vmatpush1.bf16.msra.mxu0 0
    %5080 = vmatprep.subr.bf16.mxu0 0
    %5081 = vmatpush1.bf16.msra.mxu0 0
    %5082 = vmatprep.subr.bf16.mxu0 0
    %5083 = vmatpush1.bf16.msra.mxu0 0
    %5084 = vmatprep.subr.bf16.mxu0 0
    %5085 = vmatpush1.bf16.msra.mxu0 0
    %5086 = vmatprep.subr.bf16.mxu0 0
    %5087 = vmatpush1.bf16.msra.mxu0 0
    %5088 = vmatprep.subr.bf16.mxu0 0
    %5089 = vmatpush1.bf16.msra.mxu0 0
    %5090 = vmatprep.subr.bf16.mxu0 0
    %5091 = vmatpush1.bf16.msra.mxu0 0
    %5092 = vmatprep.subr.bf16.mxu0 0
    %5093 = vmatpush1.bf16.msra.mxu0 0
    %5094 = vmatprep.subr.bf16.mxu0 0
    %5095 = vmatpush1.bf16.msra.mxu0 0
    %5096 = vmatprep.mubr.bf16.mxu0 0
    %5097 = vmatmul.mubr.bf16.gmra.mrb[0].mxu0 %v5062
    %v5098 = vpop.f32.mrb[0].mxu0
    %v5099 = vadd.f32 %v5056, %v5098
    %v5100 = vpop.f32.mrb[0].mxu0
    %v5101 = vpop.f32.mrb[0].mxu0
    %v5102 = vpop.f32.mrb[0].mxu0
    %5103 = vdwg.mxu0
    %v5104 = vadd.f32 %v5099, %v54
    %vm5105 = vcmp.gt.f32.partialorder %v5104, 0.0
    %v5106 = vmin.f32 %v5104, 0.0
    %v5107 = vmul.f32 %v5106, 1.442695
    %v5108 = vpow.pop %v5107
    %v5109 = vsub.f32 %v5108, 1.0
    %v5110 = vsel %vm5105, %v5104, %v5109
    %v5111 = vpack.c.bf16 %v5110, %v5110
    %v5113 = vsel %vm207, %v5111, 0
    %5115 = vmatprep.subr.bf16.mxu0 0
    %5116 = vmatpush1.bf16.msra.mxu0 %v203
    %5117 = vmatprep.subr.bf16.mxu0 0
    %5118 = vmatpush1.bf16.msra.mxu0 %v204
    %5119 = vmatprep.subr.bf16.mxu0 0
    %5120 = vmatpush1.bf16.msra.mxu0 0
    %5121 = vmatprep.subr.bf16.mxu0 0
    %5122 = vmatpush1.bf16.msra.mxu0 0
    %5123 = vmatprep.subr.bf16.mxu0 0
    %5124 = vmatpush1.bf16.msra.mxu0 0
    %5125 = vmatprep.subr.bf16.mxu0 0
    %5126 = vmatpush1.bf16.msra.mxu0 0
    %5127 = vmatprep.subr.bf16.mxu0 0
    %5128 = vmatpush1.bf16.msra.mxu0 0
    %5129 = vmatprep.subr.bf16.mxu0 0
    %5130 = vmatpush1.bf16.msra.mxu0 0
    %5131 = vmatprep.subr.bf16.mxu0 0
    %5132 = vmatpush1.bf16.msra.mxu0 0
    %5133 = vmatprep.subr.bf16.mxu0 0
    %5134 = vmatpush1.bf16.msra.mxu0 0
    %5135 = vmatprep.subr.bf16.mxu0 0
    %5136 = vmatpush1.bf16.msra.mxu0 0
    %5137 = vmatprep.subr.bf16.mxu0 0
    %5138 = vmatpush1.bf16.msra.mxu0 0
    %5139 = vmatprep.subr.bf16.mxu0 0
    %5140 = vmatpush1.bf16.msra.mxu0 0
    %5141 = vmatprep.subr.bf16.mxu0 0
    %5142 = vmatpush1.bf16.msra.mxu0 0
    %5143 = vmatprep.subr.bf16.mxu0 0
    %5144 = vmatpush1.bf16.msra.mxu0 0
    %5145 = vmatprep.subr.bf16.mxu0 0
    %5146 = vmatpush1.bf16.msra.mxu0 0
    %5147 = vmatprep.mubr.bf16.mxu0 0
    %5148 = vmatmul.mubr.bf16.gmra.mrb[0].mxu0 %v5113
    %v5149 = vpop.f32.mrb[0].mxu0
    %v5150 = vadd.f32 %v61, %v5149
    %v5151 = vpop.f32.mrb[0].mxu0
    %v5152 = vpop.f32.mrb[0].mxu0
    %v5153 = vpop.f32.mrb[0].mxu0
    %5154 = vdwg.mxu0
    %vm5155 = vcmp.gt.f32.partialorder %v5150, 0.0
    %v5156 = vmin.f32 %v5150, 0.0
    %v5157 = vmul.f32 %v5156, 1.442695
    %v5158 = vpow.pop %v5157
    %v5159 = vsub.f32 %v5158, 1.0
    %v5160 = vsel %vm5155, %v5150, %v5159
    %v5161 = vpack.c.bf16 %v5160, %v5160
    %v5163 = vsel %vm207, %v5161, 0
    %5165 = vmatprep.subr.bf16.mxu0 0
    %5166 = vmatpush1.bf16.msra.mxu0 %v266
    %5167 = vmatprep.subr.bf16.mxu0 0
    %5168 = vmatpush1.bf16.msra.mxu0 %v267
    %5169 = vmatprep.subr.bf16.mxu0 0
    %5170 = vmatpush1.bf16.msra.mxu0 0
    %5171 = vmatprep.subr.bf16.mxu0 0
    %5172 = vmatpush1.bf16.msra.mxu0 0
    %5173 = vmatprep.subr.bf16.mxu0 0
    %5174 = vmatpush1.bf16.msra.mxu0 0
    %5175 = vmatprep.subr.bf16.mxu0 0
    %5176 = vmatpush1.bf16.msra.mxu0 0
    %5177 = vmatprep.subr.bf16.mxu0 0
    %5178 = vmatpush1.bf16.msra.mxu0 0
    %5179 = vmatprep.subr.bf16.mxu0 0
    %5180 = vmatpush1.bf16.msra.mxu0 0
    %5181 = vmatprep.subr.bf16.mxu0 0
    %5182 = vmatpush1.bf16.msra.mxu0 0
    %5183 = vmatprep.subr.bf16.mxu0 0
    %5184 = vmatpush1.bf16.msra.mxu0 0
    %5185 = vmatprep.subr.bf16.mxu0 0
    %5186 = vmatpush1.bf16.msra.mxu0 0
    %5187 = vmatprep.subr.bf16.mxu0 0
    %5188 = vmatpush1.bf16.msra.mxu0 0
    %5189 = vmatprep.subr.bf16.mxu0 0
    %5190 = vmatpush1.bf16.msra.mxu0 0
    %5191 = vmatprep.subr.bf16.mxu0 0
    %5192 = vmatpush1.bf16.msra.mxu0 0
    %5193 = vmatprep.subr.bf16.mxu0 0
    %5194 = vmatpush1.bf16.msra.mxu0 0
    %5195 = vmatprep.subr.bf16.mxu0 0
    %5196 = vmatpush1.bf16.msra.mxu0 0
    %5197 = vmatprep.mubr.bf16.mxu0 0
    %5198 = vmatmul.mubr.bf16.gmra.mrb[0].mxu0 %v5163
    %v5199 = vpop.f32.mrb[0].mxu0
    %v5200 = vadd.f32 %v68, %v5199
    %v5201 = vpop.f32.mrb[0].mxu0
    %v5202 = vpop.f32.mrb[0].mxu0
    %v5203 = vpop.f32.mrb[0].mxu0
    %5204 = vdwg.mxu0
    %v5205 = vmul.f32 %v314, %v5015
    %v5206 = vadd.f32 %v4815, %v5205
    %v5207 = vmul.f32 %v314, %v5200
    %v5208 = vadd.f32 %v4822, %v5207
    %v5209 = vpack.c.bf16 %v5206, %v5206
    %v5210 = vpack.c.bf16 %v5208, %v5208
    %v5212 = vsel %vm93, %v5210, 0
    %5214 = vmatprep.subr.bf16.mxu0 0
    %5215 = vmatpush1.bf16.msra.mxu0 %v99
    %5216 = vmatprep.subr.bf16.mxu0 0
    %5217 = vmatpush1.bf16.msra.mxu0 0
    %5218 = vmatprep.subr.bf16.mxu0 0
    %5219 = vmatpush1.bf16.msra.mxu0 0
    %5220 = vmatprep.subr.bf16.mxu0 0
    %5221 = vmatpush1.bf16.msra.mxu0 0
    %5222 = vmatprep.subr.bf16.mxu0 0
    %5223 = vmatpush1.bf16.msra.mxu0 0
    %5224 = vmatprep.subr.bf16.mxu0 0
    %5225 = vmatpush1.bf16.msra.mxu0 0
    %5226 = vmatprep.subr.bf16.mxu0 0
    %5227 = vmatpush1.bf16.msra.mxu0 0
    %5228 = vmatprep.subr.bf16.mxu0 0
    %5229 = vmatpush1.bf16.msra.mxu0 0
    %5230 = vmatprep.subr.bf16.mxu0 0
    %5231 = vmatpush1.bf16.msra.mxu0 0
    %5232 = vmatprep.subr.bf16.mxu0 0
    %5233 = vmatpush1.bf16.msra.mxu0 0
    %5234 = vmatprep.subr.bf16.mxu0 0
    %5235 = vmatpush1.bf16.msra.mxu0 0
    %5236 = vmatprep.subr.bf16.mxu0 0
    %5237 = vmatpush1.bf16.msra.mxu0 0
    %5238 = vmatprep.subr.bf16.mxu0 0
    %5239 = vmatpush1.bf16.msra.mxu0 0
    %5240 = vmatprep.subr.bf16.mxu0 0
    %5241 = vmatpush1.bf16.msra.mxu0 0
    %5242 = vmatprep.subr.bf16.mxu0 0
    %5243 = vmatpush1.bf16.msra.mxu0 0
    %5244 = vmatprep.subr.bf16.mxu0 0
    %5245 = vmatpush1.bf16.msra.mxu0 0
    %5246 = vmatprep.mubr.bf16.mxu0 0
    %5247 = vmatmul.mubr.bf16.gmra.mrb[0].mxu0 %v5212
    %v5248 = vpop.f32.mrb[0].mxu0
    %v5249 = vadd.f32 0.0, %v5248
    %v5250 = vpop.f32.mrb[0].mxu0
    %v5251 = vpop.f32.mrb[0].mxu0
    %v5252 = vpop.f32.mrb[0].mxu0
    %5253 = vdwg.mxu0
    %v5255 = vsel %vm93, %v5209, 0
    %5257 = vmatprep.subr.bf16.mxu0 0
    %5258 = vmatpush1.bf16.msra.mxu0 %v145
    %5259 = vmatprep.subr.bf16.mxu0 0
    %5260 = vmatpush1.bf16.msra.mxu0 0
    %5261 = vmatprep.subr.bf16.mxu0 0
    %5262 = vmatpush1.bf16.msra.mxu0 0
    %5263 = vmatprep.subr.bf16.mxu0 0
    %5264 = vmatpush1.bf16.msra.mxu0 0
    %5265 = vmatprep.subr.bf16.mxu0 0
    %5266 = vmatpush1.bf16.msra.mxu0 0
    %5267 = vmatprep.subr.bf16.mxu0 0
    %5268 = vmatpush1.bf16.msra.mxu0 0
    %5269 = vmatprep.subr.bf16.mxu0 0
    %5270 = vmatpush1.bf16.msra.mxu0 0
    %5271 = vmatprep.subr.bf16.mxu0 0
    %5272 = vmatpush1.bf16.msra.mxu0 0
    %5273 = vmatprep.subr.bf16.mxu0 0
    %5274 = vmatpush1.bf16.msra.mxu0 0
    %5275 = vmatprep.subr.bf16.mxu0 0
    %5276 = vmatpush1.bf16.msra.mxu0 0
    %5277 = vmatprep.subr.bf16.mxu0 0
    %5278 = vmatpush1.bf16.msra.mxu0 0
    %5279 = vmatprep.subr.bf16.mxu0 0
    %5280 = vmatpush1.bf16.msra.mxu0 0
    %5281 = vmatprep.subr.bf16.mxu0 0
    %5282 = vmatpush1.bf16.msra.mxu0 0
    %5283 = vmatprep.subr.bf16.mxu0 0
    %5284 = vmatpush1.bf16.msra.mxu0 0
    %5285 = vmatprep.subr.bf16.mxu0 0
    %5286 = vmatpush1.bf16.msra.mxu0 0
    %5287 = vmatprep.subr.bf16.mxu0 0
    %5288 = vmatpush1.bf16.msra.mxu0 0
    %5289 = vmatprep.mubr.bf16.mxu0 0
    %5290 = vmatmul.mubr.bf16.gmra.mrb[0].mxu0 %v5255
    %v5291 = vpop.f32.mrb[0].mxu0
    %v5292 = vadd.f32 %v5249, %v5291
    %v5293 = vpop.f32.mrb[0].mxu0
    %v5294 = vpop.f32.mrb[0].mxu0
    %v5295 = vpop.f32.mrb[0].mxu0
    %5296 = vdwg.mxu0
    %v5297 = vadd.f32 %v5292, %v54
    %vm5298 = vcmp.gt.f32.partialorder %v5297, 0.0
    %v5299 = vmin.f32 %v5297, 0.0
    %v5300 = vmul.f32 %v5299, 1.442695
    %v5301 = vpow.pop %v5300
    %v5302 = vsub.f32 %v5301, 1.0
    %v5303 = vsel %vm5298, %v5297, %v5302
    %v5304 = vpack.c.bf16 %v5303, %v5303
    %v5306 = vsel %vm207, %v5304, 0
    %5308 = vmatprep.subr.bf16.mxu0 0
    %5309 = vmatpush1.bf16.msra.mxu0 %v203
    %5310 = vmatprep.subr.bf16.mxu0 0
    %5311 = vmatpush1.bf16.msra.mxu0 %v204
    %5312 = vmatprep.subr.bf16.mxu0 0
    %5313 = vmatpush1.bf16.msra.mxu0 0
    %5314 = vmatprep.subr.bf16.mxu0 0
    %5315 = vmatpush1.bf16.msra.mxu0 0
    %5316 = vmatprep.subr.bf16.mxu0 0
    %5317 = vmatpush1.bf16.msra.mxu0 0
    %5318 = vmatprep.subr.bf16.mxu0 0
    %5319 = vmatpush1.bf16.msra.mxu0 0
    %5320 = vmatprep.subr.bf16.mxu0 0
    %5321 = vmatpush1.bf16.msra.mxu0 0
    %5322 = vmatprep.subr.bf16.mxu0 0
    %5323 = vmatpush1.bf16.msra.mxu0 0
    %5324 = vmatprep.subr.bf16.mxu0 0
    %5325 = vmatpush1.bf16.msra.mxu0 0
    %5326 = vmatprep.subr.bf16.mxu0 0
    %5327 = vmatpush1.bf16.msra.mxu0 0
    %5328 = vmatprep.subr.bf16.mxu0 0
    %5329 = vmatpush1.bf16.msra.mxu0 0
    %5330 = vmatprep.subr.bf16.mxu0 0
    %5331 = vmatpush1.bf16.msra.mxu0 0
    %5332 = vmatprep.subr.bf16.mxu0 0
    %5333 = vmatpush1.bf16.msra.mxu0 0
    %5334 = vmatprep.subr.bf16.mxu0 0
    %5335 = vmatpush1.bf16.msra.mxu0 0
    %5336 = vmatprep.subr.bf16.mxu0 0
    %5337 = vmatpush1.bf16.msra.mxu0 0
    %5338 = vmatprep.subr.bf16.mxu0 0
    %5339 = vmatpush1.bf16.msra.mxu0 0
    %5340 = vmatprep.mubr.bf16.mxu0 0
    %5341 = vmatmul.mubr.bf16.gmra.mrb[0].mxu0 %v5306
    %v5342 = vpop.f32.mrb[0].mxu0
    %v5343 = vadd.f32 %v61, %v5342
    %v5344 = vpop.f32.mrb[0].mxu0
    %v5345 = vpop.f32.mrb[0].mxu0
    %v5346 = vpop.f32.mrb[0].mxu0
    %5347 = vdwg.mxu0
    %vm5348 = vcmp.gt.f32.partialorder %v5343, 0.0
    %v5349 = vmin.f32 %v5343, 0.0
    %v5350 = vmul.f32 %v5349, 1.442695
    %v5351 = vpow.pop %v5350
    %v5352 = vsub.f32 %v5351, 1.0
    %v5353 = vsel %vm5348, %v5343, %v5352
    %v5354 = vpack.c.bf16 %v5353, %v5353
    %v5356 = vsel %vm207, %v5354, 0
    %5358 = vmatprep.subr.bf16.mxu0 0
    %5359 = vmatpush1.bf16.msra.mxu0 %v266
    %5360 = vmatprep.subr.bf16.mxu0 0
    %5361 = vmatpush1.bf16.msra.mxu0 %v267
    %5362 = vmatprep.subr.bf16.mxu0 0
    %5363 = vmatpush1.bf16.msra.mxu0 0
    %5364 = vmatprep.subr.bf16.mxu0 0
    %5365 = vmatpush1.bf16.msra.mxu0 0
    %5366 = vmatprep.subr.bf16.mxu0 0
    %5367 = vmatpush1.bf16.msra.mxu0 0
    %5368 = vmatprep.subr.bf16.mxu0 0
    %5369 = vmatpush1.bf16.msra.mxu0 0
    %5370 = vmatprep.subr.bf16.mxu0 0
    %5371 = vmatpush1.bf16.msra.mxu0 0
    %5372 = vmatprep.subr.bf16.mxu0 0
    %5373 = vmatpush1.bf16.msra.mxu0 0
    %5374 = vmatprep.subr.bf16.mxu0 0
    %5375 = vmatpush1.bf16.msra.mxu0 0
    %5376 = vmatprep.subr.bf16.mxu0 0
    %5377 = vmatpush1.bf16.msra.mxu0 0
    %5378 = vmatprep.subr.bf16.mxu0 0
    %5379 = vmatpush1.bf16.msra.mxu0 0
    %5380 = vmatprep.subr.bf16.mxu0 0
    %5381 = vmatpush1.bf16.msra.mxu0 0
    %5382 = vmatprep.subr.bf16.mxu0 0
    %5383 = vmatpush1.bf16.msra.mxu0 0
    %5384 = vmatprep.subr.bf16.mxu0 0
    %5385 = vmatpush1.bf16.msra.mxu0 0
    %5386 = vmatprep.subr.bf16.mxu0 0
    %5387 = vmatpush1.bf16.msra.mxu0 0
    %5388 = vmatprep.subr.bf16.mxu0 0
    %5389 = vmatpush1.bf16.msra.mxu0 0
    %5390 = vmatprep.mubr.bf16.mxu0 0
    %5391 = vmatmul.mubr.bf16.gmra.mrb[0].mxu0 %v5356
    %v5392 = vpop.f32.mrb[0].mxu0
    %v5393 = vadd.f32 %v68, %v5392
    %v5394 = vpop.f32.mrb[0].mxu0
    %v5395 = vpop.f32.mrb[0].mxu0
    %v5396 = vpop.f32.mrb[0].mxu0
    %5397 = vdwg.mxu0
    %v5398 = vmul.f32 %v701, %v5208
    %v5399 = vadd.f32 %v4815, %v5398
    %v5400 = vmul.f32 %v701, %v5393
    %v5401 = vadd.f32 %v4822, %v5400
    %v5402 = vpack.c.bf16 %v5399, %v5399
    %v5403 = vpack.c.bf16 %v5401, %v5401
    %v5405 = vsel %vm93, %v5403, 0
    %5407 = vmatprep.subr.bf16.mxu0 0
    %5408 = vmatpush1.bf16.msra.mxu0 %v99
    %5409 = vmatprep.subr.bf16.mxu0 0
    %5410 = vmatpush1.bf16.msra.mxu0 0
    %5411 = vmatprep.subr.bf16.mxu0 0
    %5412 = vmatpush1.bf16.msra.mxu0 0
    %5413 = vmatprep.subr.bf16.mxu0 0
    %5414 = vmatpush1.bf16.msra.mxu0 0
    %5415 = vmatprep.subr.bf16.mxu0 0
    %5416 = vmatpush1.bf16.msra.mxu0 0
    %5417 = vmatprep.subr.bf16.mxu0 0
    %5418 = vmatpush1.bf16.msra.mxu0 0
    %5419 = vmatprep.subr.bf16.mxu0 0
    %5420 = vmatpush1.bf16.msra.mxu0 0
    %5421 = vmatprep.subr.bf16.mxu0 0
    %5422 = vmatpush1.bf16.msra.mxu0 0
    %5423 = vmatprep.subr.bf16.mxu0 0
    %5424 = vmatpush1.bf16.msra.mxu0 0
    %5425 = vmatprep.subr.bf16.mxu0 0
    %5426 = vmatpush1.bf16.msra.mxu0 0
    %5427 = vmatprep.subr.bf16.mxu0 0
    %5428 = vmatpush1.bf16.msra.mxu0 0
    %5429 = vmatprep.subr.bf16.mxu0 0
    %5430 = vmatpush1.bf16.msra.mxu0 0
    %5431 = vmatprep.subr.bf16.mxu0 0
    %5432 = vmatpush1.bf16.msra.mxu0 0
    %5433 = vmatprep.subr.bf16.mxu0 0
    %5434 = vmatpush1.bf16.msra.mxu0 0
    %5435 = vmatprep.subr.bf16.mxu0 0
    %5436 = vmatpush1.bf16.msra.mxu0 0
    %5437 = vmatprep.subr.bf16.mxu0 0
    %5438 = vmatpush1.bf16.msra.mxu0 0
    %5439 = vmatprep.mubr.bf16.mxu0 0
    %5440 = vmatmul.mubr.bf16.gmra.mrb[0].mxu0 %v5405
    %v5441 = vpop.f32.mrb[0].mxu0
    %v5442 = vadd.f32 0.0, %v5441
    %v5443 = vpop.f32.mrb[0].mxu0
    %v5444 = vpop.f32.mrb[0].mxu0
    %v5445 = vpop.f32.mrb[0].mxu0
    %5446 = vdwg.mxu0
    %v5448 = vsel %vm93, %v5402, 0
    %5450 = vmatprep.subr.bf16.mxu0 0
    %5451 = vmatpush1.bf16.msra.mxu0 %v145
    %5452 = vmatprep.subr.bf16.mxu0 0
    %5453 = vmatpush1.bf16.msra.mxu0 0
    %5454 = vmatprep.subr.bf16.mxu0 0
    %5455 = vmatpush1.bf16.msra.mxu0 0
    %5456 = vmatprep.subr.bf16.mxu0 0
    %5457 = vmatpush1.bf16.msra.mxu0 0
    %5458 = vmatprep.subr.bf16.mxu0 0
    %5459 = vmatpush1.bf16.msra.mxu0 0
    %5460 = vmatprep.subr.bf16.mxu0 0
    %5461 = vmatpush1.bf16.msra.mxu0 0
    %5462 = vmatprep.subr.bf16.mxu0 0
    %5463 = vmatpush1.bf16.msra.mxu0 0
    %5464 = vmatprep.subr.bf16.mxu0 0
    %5465 = vmatpush1.bf16.msra.mxu0 0
    %5466 = vmatprep.subr.bf16.mxu0 0
    %5467 = vmatpush1.bf16.msra.mxu0 0
    %5468 = vmatprep.subr.bf16.mxu0 0
    %5469 = vmatpush1.bf16.msra.mxu0 0
    %5470 = vmatprep.subr.bf16.mxu0 0
    %5471 = vmatpush1.bf16.msra.mxu0 0
    %5472 = vmatprep.subr.bf16.mxu0 0
    %5473 = vmatpush1.bf16.msra.mxu0 0
    %5474 = vmatprep.subr.bf16.mxu0 0
    %5475 = vmatpush1.bf16.msra.mxu0 0
    %5476 = vmatprep.subr.bf16.mxu0 0
    %5477 = vmatpush1.bf16.msra.mxu0 0
    %5478 = vmatprep.subr.bf16.mxu0 0
    %5479 = vmatpush1.bf16.msra.mxu0 0
    %5480 = vmatprep.subr.bf16.mxu0 0
    %5481 = vmatpush1.bf16.msra.mxu0 0
    %5482 = vmatprep.mubr.bf16.mxu0 0
    %5483 = vmatmul.mubr.bf16.gmra.mrb[0].mxu0 %v5448
    %v5484 = vpop.f32.mrb[0].mxu0
    %v5485 = vadd.f32 %v5442, %v5484
    %v5486 = vpop.f32.mrb[0].mxu0
    %v5487 = vpop.f32.mrb[0].mxu0
    %v5488 = vpop.f32.mrb[0].mxu0
    %5489 = vdwg.mxu0
    %v5490 = vadd.f32 %v5485, %v54
    %vm5491 = vcmp.gt.f32.partialorder %v5490, 0.0
    %v5492 = vmin.f32 %v5490, 0.0
    %v5493 = vmul.f32 %v5492, 1.442695
    %v5494 = vpow.pop %v5493
    %v5495 = vsub.f32 %v5494, 1.0
    %v5496 = vsel %vm5491, %v5490, %v5495
    %v5497 = vpack.c.bf16 %v5496, %v5496
    %v5499 = vsel %vm207, %v5497, 0
    %5501 = vmatprep.subr.bf16.mxu0 0
    %5502 = vmatpush1.bf16.msra.mxu0 %v203
    %5503 = vmatprep.subr.bf16.mxu0 0
    %5504 = vmatpush1.bf16.msra.mxu0 %v204
    %5505 = vmatprep.subr.bf16.mxu0 0
    %5506 = vmatpush1.bf16.msra.mxu0 0
    %5507 = vmatprep.subr.bf16.mxu0 0
    %5508 = vmatpush1.bf16.msra.mxu0 0
    %5509 = vmatprep.subr.bf16.mxu0 0
    %5510 = vmatpush1.bf16.msra.mxu0 0
    %5511 = vmatprep.subr.bf16.mxu0 0
    %5512 = vmatpush1.bf16.msra.mxu0 0
    %5513 = vmatprep.subr.bf16.mxu0 0
    %5514 = vmatpush1.bf16.msra.mxu0 0
    %5515 = vmatprep.subr.bf16.mxu0 0
    %5516 = vmatpush1.bf16.msra.mxu0 0
    %5517 = vmatprep.subr.bf16.mxu0 0
    %5518 = vmatpush1.bf16.msra.mxu0 0
    %5519 = vmatprep.subr.bf16.mxu0 0
    %5520 = vmatpush1.bf16.msra.mxu0 0
    %5521 = vmatprep.subr.bf16.mxu0 0
    %5522 = vmatpush1.bf16.msra.mxu0 0
    %5523 = vmatprep.subr.bf16.mxu0 0
    %5524 = vmatpush1.bf16.msra.mxu0 0
    %5525 = vmatprep.subr.bf16.mxu0 0
    %5526 = vmatpush1.bf16.msra.mxu0 0
    %5527 = vmatprep.subr.bf16.mxu0 0
    %5528 = vmatpush1.bf16.msra.mxu0 0
    %5529 = vmatprep.subr.bf16.mxu0 0
    %5530 = vmatpush1.bf16.msra.mxu0 0
    %5531 = vmatprep.subr.bf16.mxu0 0
    %5532 = vmatpush1.bf16.msra.mxu0 0
    %5533 = vmatprep.mubr.bf16.mxu0 0
    %5534 = vmatmul.mubr.bf16.gmra.mrb[0].mxu0 %v5499
    %v5535 = vpop.f32.mrb[0].mxu0
    %v5536 = vadd.f32 %v61, %v5535
    %v5537 = vpop.f32.mrb[0].mxu0
    %v5538 = vpop.f32.mrb[0].mxu0
    %v5539 = vpop.f32.mrb[0].mxu0
    %5540 = vdwg.mxu0
    %vm5541 = vcmp.gt.f32.partialorder %v5536, 0.0
    %v5542 = vmin.f32 %v5536, 0.0
    %v5543 = vmul.f32 %v5542, 1.442695
    %v5544 = vpow.pop %v5543
    %v5545 = vsub.f32 %v5544, 1.0
    %v5546 = vsel %vm5541, %v5536, %v5545
    %v5547 = vpack.c.bf16 %v5546, %v5546
    %v5549 = vsel %vm207, %v5547, 0
    %5551 = vmatprep.subr.bf16.mxu0 0
    %5552 = vmatpush1.bf16.msra.mxu0 %v266
    %5553 = vmatprep.subr.bf16.mxu0 0
    %5554 = vmatpush1.bf16.msra.mxu0 %v267
    %5555 = vmatprep.subr.bf16.mxu0 0
    %5556 = vmatpush1.bf16.msra.mxu0 0
    %5557 = vmatprep.subr.bf16.mxu0 0
    %5558 = vmatpush1.bf16.msra.mxu0 0
    %5559 = vmatprep.subr.bf16.mxu0 0
    %5560 = vmatpush1.bf16.msra.mxu0 0
    %5561 = vmatprep.subr.bf16.mxu0 0
    %5562 = vmatpush1.bf16.msra.mxu0 0
    %5563 = vmatprep.subr.bf16.mxu0 0
    %5564 = vmatpush1.bf16.msra.mxu0 0
    %5565 = vmatprep.subr.bf16.mxu0 0
    %5566 = vmatpush1.bf16.msra.mxu0 0
    %5567 = vmatprep.subr.bf16.mxu0 0
    %5568 = vmatpush1.bf16.msra.mxu0 0
    %5569 = vmatprep.subr.bf16.mxu0 0
    %5570 = vmatpush1.bf16.msra.mxu0 0
    %5571 = vmatprep.subr.bf16.mxu0 0
    %5572 = vmatpush1.bf16.msra.mxu0 0
    %5573 = vmatprep.subr.bf16.mxu0 0
    %5574 = vmatpush1.bf16.msra.mxu0 0
    %5575 = vmatprep.subr.bf16.mxu0 0
    %5576 = vmatpush1.bf16.msra.mxu0 0
    %5577 = vmatprep.subr.bf16.mxu0 0
    %5578 = vmatpush1.bf16.msra.mxu0 0
    %5579 = vmatprep.subr.bf16.mxu0 0
    %5580 = vmatpush1.bf16.msra.mxu0 0
    %5581 = vmatprep.subr.bf16.mxu0 0
    %5582 = vmatpush1.bf16.msra.mxu0 0
    %5583 = vmatprep.mubr.bf16.mxu0 0
    %5584 = vmatmul.mubr.bf16.gmra.mrb[0].mxu0 %v5549
    %v5585 = vpop.f32.mrb[0].mxu0
    %v5586 = vadd.f32 %v68, %v5585
    %v5587 = vpop.f32.mrb[0].mxu0
    %v5588 = vpop.f32.mrb[0].mxu0
    %v5589 = vpop.f32.mrb[0].mxu0
    %5590 = vdwg.mxu0
    %v5591 = vmul.f32 %v5015, 2.0
    %v5592 = vadd.f32 %v4822, %v5591
    %v5593 = vmul.f32 %v5208, 2.0
    %v5594 = vadd.f32 %v5592, %v5593
    %v5595 = vadd.f32 %v5594, %v5401
    %v5596 = vmul.f32 %v903, %v5595
    %v5597 = vadd.f32 %v4815, %v5596
    %v5598 = vmul.f32 %v5200, 2.0
    %v5599 = vadd.f32 %v5007, %v5598
    %v5600 = vmul.f32 %v5393, 2.0
    %v5601 = vadd.f32 %v5599, %v5600
    %v5602 = vadd.f32 %v5601, %v5586
    %v5603 = vmul.f32 %v903, %v5602
    %v5604 = vadd.f32 %v4822, %v5603
    %v5605 = vpack.c.bf16 %v5597, %v5597
    %v5606 = vpack.c.bf16 %v5604, %v5604
    %v5608 = vsel %vm93, %v5606, 0
    %5610 = vmatprep.subr.bf16.mxu0 0
    %5611 = vmatpush1.bf16.msra.mxu0 %v99
    %5612 = vmatprep.subr.bf16.mxu0 0
    %5613 = vmatpush1.bf16.msra.mxu0 0
    %5614 = vmatprep.subr.bf16.mxu0 0
    %5615 = vmatpush1.bf16.msra.mxu0 0
    %5616 = vmatprep.subr.bf16.mxu0 0
    %5617 = vmatpush1.bf16.msra.mxu0 0
    %5618 = vmatprep.subr.bf16.mxu0 0
    %5619 = vmatpush1.bf16.msra.mxu0 0
    %5620 = vmatprep.subr.bf16.mxu0 0
    %5621 = vmatpush1.bf16.msra.mxu0 0
    %5622 = vmatprep.subr.bf16.mxu0 0
    %5623 = vmatpush1.bf16.msra.mxu0 0
    %5624 = vmatprep.subr.bf16.mxu0 0
    %5625 = vmatpush1.bf16.msra.mxu0 0
    %5626 = vmatprep.subr.bf16.mxu0 0
    %5627 = vmatpush1.bf16.msra.mxu0 0
    %5628 = vmatprep.subr.bf16.mxu0 0
    %5629 = vmatpush1.bf16.msra.mxu0 0
    %5630 = vmatprep.subr.bf16.mxu0 0
    %5631 = vmatpush1.bf16.msra.mxu0 0
    %5632 = vmatprep.subr.bf16.mxu0 0
    %5633 = vmatpush1.bf16.msra.mxu0 0
    %5634 = vmatprep.subr.bf16.mxu0 0
    %5635 = vmatpush1.bf16.msra.mxu0 0
    %5636 = vmatprep.subr.bf16.mxu0 0
    %5637 = vmatpush1.bf16.msra.mxu0 0
    %5638 = vmatprep.subr.bf16.mxu0 0
    %5639 = vmatpush1.bf16.msra.mxu0 0
    %5640 = vmatprep.subr.bf16.mxu0 0
    %5641 = vmatpush1.bf16.msra.mxu0 0
    %5642 = vmatprep.mubr.bf16.mxu0 0
    %5643 = vmatmul.mubr.bf16.gmra.mrb[0].mxu0 %v5608
    %v5644 = vpop.f32.mrb[0].mxu0
    %v5645 = vadd.f32 0.0, %v5644
    %v5646 = vpop.f32.mrb[0].mxu0
    %v5647 = vpop.f32.mrb[0].mxu0
    %v5648 = vpop.f32.mrb[0].mxu0
    %5649 = vdwg.mxu0
    %v5651 = vsel %vm93, %v5605, 0
    %5653 = vmatprep.subr.bf16.mxu0 0
    %5654 = vmatpush1.bf16.msra.mxu0 %v145
    %5655 = vmatprep.subr.bf16.mxu0 0
    %5656 = vmatpush1.bf16.msra.mxu0 0
    %5657 = vmatprep.subr.bf16.mxu0 0
    %5658 = vmatpush1.bf16.msra.mxu0 0
    %5659 = vmatprep.subr.bf16.mxu0 0
    %5660 = vmatpush1.bf16.msra.mxu0 0
    %5661 = vmatprep.subr.bf16.mxu0 0
    %5662 = vmatpush1.bf16.msra.mxu0 0
    %5663 = vmatprep.subr.bf16.mxu0 0
    %5664 = vmatpush1.bf16.msra.mxu0 0
    %5665 = vmatprep.subr.bf16.mxu0 0
    %5666 = vmatpush1.bf16.msra.mxu0 0
    %5667 = vmatprep.subr.bf16.mxu0 0
    %5668 = vmatpush1.bf16.msra.mxu0 0
    %5669 = vmatprep.subr.bf16.mxu0 0
    %5670 = vmatpush1.bf16.msra.mxu0 0
    %5671 = vmatprep.subr.bf16.mxu0 0
    %5672 = vmatpush1.bf16.msra.mxu0 0
    %5673 = vmatprep.subr.bf16.mxu0 0
    %5674 = vmatpush1.bf16.msra.mxu0 0
    %5675 = vmatprep.subr.bf16.mxu0 0
    %5676 = vmatpush1.bf16.msra.mxu0 0
    %5677 = vmatprep.subr.bf16.mxu0 0
    %5678 = vmatpush1.bf16.msra.mxu0 0
    %5679 = vmatprep.subr.bf16.mxu0 0
    %5680 = vmatpush1.bf16.msra.mxu0 0
    %5681 = vmatprep.subr.bf16.mxu0 0
    %5682 = vmatpush1.bf16.msra.mxu0 0
    %5683 = vmatprep.subr.bf16.mxu0 0
    %5684 = vmatpush1.bf16.msra.mxu0 0
    %5685 = vmatprep.mubr.bf16.mxu0 0
    %5686 = vmatmul.mubr.bf16.gmra.mrb[0].mxu0 %v5651
    %v5687 = vpop.f32.mrb[0].mxu0
    %v5688 = vadd.f32 %v5645, %v5687
    %v5689 = vpop.f32.mrb[0].mxu0
    %v5690 = vpop.f32.mrb[0].mxu0
    %v5691 = vpop.f32.mrb[0].mxu0
    %5692 = vdwg.mxu0
    %v5693 = vadd.f32 %v5688, %v54
    %vm5694 = vcmp.gt.f32.partialorder %v5693, 0.0
    %v5695 = vmin.f32 %v5693, 0.0
    %v5696 = vmul.f32 %v5695, 1.442695
    %v5697 = vpow.pop %v5696
    %v5698 = vsub.f32 %v5697, 1.0
    %v5699 = vsel %vm5694, %v5693, %v5698
    %v5700 = vpack.c.bf16 %v5699, %v5699
    %v5702 = vsel %vm207, %v5700, 0
    %5704 = vmatprep.subr.bf16.mxu0 0
    %5705 = vmatpush1.bf16.msra.mxu0 %v203
    %5706 = vmatprep.subr.bf16.mxu0 0
    %5707 = vmatpush1.bf16.msra.mxu0 %v204
    %5708 = vmatprep.subr.bf16.mxu0 0
    %5709 = vmatpush1.bf16.msra.mxu0 0
    %5710 = vmatprep.subr.bf16.mxu0 0
    %5711 = vmatpush1.bf16.msra.mxu0 0
    %5712 = vmatprep.subr.bf16.mxu0 0
    %5713 = vmatpush1.bf16.msra.mxu0 0
    %5714 = vmatprep.subr.bf16.mxu0 0
    %5715 = vmatpush1.bf16.msra.mxu0 0
    %5716 = vmatprep.subr.bf16.mxu0 0
    %5717 = vmatpush1.bf16.msra.mxu0 0
    %5718 = vmatprep.subr.bf16.mxu0 0
    %5719 = vmatpush1.bf16.msra.mxu0 0
    %5720 = vmatprep.subr.bf16.mxu0 0
    %5721 = vmatpush1.bf16.msra.mxu0 0
    %5722 = vmatprep.subr.bf16.mxu0 0
    %5723 = vmatpush1.bf16.msra.mxu0 0
    %5724 = vmatprep.subr.bf16.mxu0 0
    %5725 = vmatpush1.bf16.msra.mxu0 0
    %5726 = vmatprep.subr.bf16.mxu0 0
    %5727 = vmatpush1.bf16.msra.mxu0 0
    %5728 = vmatprep.subr.bf16.mxu0 0
    %5729 = vmatpush1.bf16.msra.mxu0 0
    %5730 = vmatprep.subr.bf16.mxu0 0
    %5731 = vmatpush1.bf16.msra.mxu0 0
    %5732 = vmatprep.subr.bf16.mxu0 0
    %5733 = vmatpush1.bf16.msra.mxu0 0
    %5734 = vmatprep.subr.bf16.mxu0 0
    %5735 = vmatpush1.bf16.msra.mxu0 0
    %5736 = vmatprep.mubr.bf16.mxu0 0
    %5737 = vmatmul.mubr.bf16.gmra.mrb[0].mxu0 %v5702
    %v5738 = vpop.f32.mrb[0].mxu0
    %v5739 = vadd.f32 %v61, %v5738
    %v5740 = vpop.f32.mrb[0].mxu0
    %v5741 = vpop.f32.mrb[0].mxu0
    %v5742 = vpop.f32.mrb[0].mxu0
    %5743 = vdwg.mxu0
    %vm5744 = vcmp.gt.f32.partialorder %v5739, 0.0
    %v5745 = vmin.f32 %v5739, 0.0
    %v5746 = vmul.f32 %v5745, 1.442695
    %v5747 = vpow.pop %v5746
    %v5748 = vsub.f32 %v5747, 1.0
    %v5749 = vsel %vm5744, %v5739, %v5748
    %v5750 = vpack.c.bf16 %v5749, %v5749
    %v5752 = vsel %vm207, %v5750, 0
    %5754 = vmatprep.subr.bf16.mxu0 0
    %5755 = vmatpush1.bf16.msra.mxu0 %v266
    %5756 = vmatprep.subr.bf16.mxu0 0
    %5757 = vmatpush1.bf16.msra.mxu0 %v267
    %5758 = vmatprep.subr.bf16.mxu0 0
    %5759 = vmatpush1.bf16.msra.mxu0 0
    %5760 = vmatprep.subr.bf16.mxu0 0
    %5761 = vmatpush1.bf16.msra.mxu0 0
    %5762 = vmatprep.subr.bf16.mxu0 0
    %5763 = vmatpush1.bf16.msra.mxu0 0
    %5764 = vmatprep.subr.bf16.mxu0 0
    %5765 = vmatpush1.bf16.msra.mxu0 0
    %5766 = vmatprep.subr.bf16.mxu0 0
    %5767 = vmatpush1.bf16.msra.mxu0 0
    %5768 = vmatprep.subr.bf16.mxu0 0
    %5769 = vmatpush1.bf16.msra.mxu0 0
    %5770 = vmatprep.subr.bf16.mxu0 0
    %5771 = vmatpush1.bf16.msra.mxu0 0
    %5772 = vmatprep.subr.bf16.mxu0 0
    %5773 = vmatpush1.bf16.msra.mxu0 0
    %5774 = vmatprep.subr.bf16.mxu0 0
    %5775 = vmatpush1.bf16.msra.mxu0 0
    %5776 = vmatprep.subr.bf16.mxu0 0
    %5777 = vmatpush1.bf16.msra.mxu0 0
    %5778 = vmatprep.subr.bf16.mxu0 0
    %5779 = vmatpush1.bf16.msra.mxu0 0
    %5780 = vmatprep.subr.bf16.mxu0 0
    %5781 = vmatpush1.bf16.msra.mxu0 0
    %5782 = vmatprep.subr.bf16.mxu0 0
    %5783 = vmatpush1.bf16.msra.mxu0 0
    %5784 = vmatprep.subr.bf16.mxu0 0
    %5785 = vmatpush1.bf16.msra.mxu0 0
    %5786 = vmatprep.mubr.bf16.mxu0 0
    %5787 = vmatmul.mubr.bf16.gmra.mrb[0].mxu0 %v5752
    %v5788 = vpop.f32.mrb[0].mxu0
    %v5789 = vadd.f32 %v68, %v5788
    %v5790 = vpop.f32.mrb[0].mxu0
    %v5791 = vpop.f32.mrb[0].mxu0
    %v5792 = vpop.f32.mrb[0].mxu0
    %5793 = vdwg.mxu0
    %v5794 = vmul.f32 %v314, %v5604
    %v5795 = vadd.f32 %v5597, %v5794
    %v5796 = vmul.f32 %v314, %v5789
    %v5797 = vadd.f32 %v5604, %v5796
    %v5798 = vpack.c.bf16 %v5795, %v5795
    %v5799 = vpack.c.bf16 %v5797, %v5797
    %v5801 = vsel %vm93, %v5799, 0
    %5803 = vmatprep.subr.bf16.mxu0 0
    %5804 = vmatpush1.bf16.msra.mxu0 %v99
    %5805 = vmatprep.subr.bf16.mxu0 0
    %5806 = vmatpush1.bf16.msra.mxu0 0
    %5807 = vmatprep.subr.bf16.mxu0 0
    %5808 = vmatpush1.bf16.msra.mxu0 0
    %5809 = vmatprep.subr.bf16.mxu0 0
    %5810 = vmatpush1.bf16.msra.mxu0 0
    %5811 = vmatprep.subr.bf16.mxu0 0
    %5812 = vmatpush1.bf16.msra.mxu0 0
    %5813 = vmatprep.subr.bf16.mxu0 0
    %5814 = vmatpush1.bf16.msra.mxu0 0
    %5815 = vmatprep.subr.bf16.mxu0 0
    %5816 = vmatpush1.bf16.msra.mxu0 0
    %5817 = vmatprep.subr.bf16.mxu0 0
    %5818 = vmatpush1.bf16.msra.mxu0 0
    %5819 = vmatprep.subr.bf16.mxu0 0
    %5820 = vmatpush1.bf16.msra.mxu0 0
    %5821 = vmatprep.subr.bf16.mxu0 0
    %5822 = vmatpush1.bf16.msra.mxu0 0
    %5823 = vmatprep.subr.bf16.mxu0 0
    %5824 = vmatpush1.bf16.msra.mxu0 0
    %5825 = vmatprep.subr.bf16.mxu0 0
    %5826 = vmatpush1.bf16.msra.mxu0 0
    %5827 = vmatprep.subr.bf16.mxu0 0
    %5828 = vmatpush1.bf16.msra.mxu0 0
    %5829 = vmatprep.subr.bf16.mxu0 0
    %5830 = vmatpush1.bf16.msra.mxu0 0
    %5831 = vmatprep.subr.bf16.mxu0 0
    %5832 = vmatpush1.bf16.msra.mxu0 0
    %5833 = vmatprep.subr.bf16.mxu0 0
    %5834 = vmatpush1.bf16.msra.mxu0 0
    %5835 = vmatprep.mubr.bf16.mxu0 0
    %5836 = vmatmul.mubr.bf16.gmra.mrb[0].mxu0 %v5801
    %v5837 = vpop.f32.mrb[0].mxu0
    %v5838 = vadd.f32 0.0, %v5837
    %v5839 = vpop.f32.mrb[0].mxu0
    %v5840 = vpop.f32.mrb[0].mxu0
    %v5841 = vpop.f32.mrb[0].mxu0
    %5842 = vdwg.mxu0
    %v5844 = vsel %vm93, %v5798, 0
    %5846 = vmatprep.subr.bf16.mxu0 0
    %5847 = vmatpush1.bf16.msra.mxu0 %v145
    %5848 = vmatprep.subr.bf16.mxu0 0
    %5849 = vmatpush1.bf16.msra.mxu0 0
    %5850 = vmatprep.subr.bf16.mxu0 0
    %5851 = vmatpush1.bf16.msra.mxu0 0
    %5852 = vmatprep.subr.bf16.mxu0 0
    %5853 = vmatpush1.bf16.msra.mxu0 0
    %5854 = vmatprep.subr.bf16.mxu0 0
    %5855 = vmatpush1.bf16.msra.mxu0 0
    %5856 = vmatprep.subr.bf16.mxu0 0
    %5857 = vmatpush1.bf16.msra.mxu0 0
    %5858 = vmatprep.subr.bf16.mxu0 0
    %5859 = vmatpush1.bf16.msra.mxu0 0
    %5860 = vmatprep.subr.bf16.mxu0 0
    %5861 = vmatpush1.bf16.msra.mxu0 0
    %5862 = vmatprep.subr.bf16.mxu0 0
    %5863 = vmatpush1.bf16.msra.mxu0 0
    %5864 = vmatprep.subr.bf16.mxu0 0
    %5865 = vmatpush1.bf16.msra.mxu0 0
    %5866 = vmatprep.subr.bf16.mxu0 0
    %5867 = vmatpush1.bf16.msra.mxu0 0
    %5868 = vmatprep.subr.bf16.mxu0 0
    %5869 = vmatpush1.bf16.msra.mxu0 0
    %5870 = vmatprep.subr.bf16.mxu0 0
    %5871 = vmatpush1.bf16.msra.mxu0 0
    %5872 = vmatprep.subr.bf16.mxu0 0
    %5873 = vmatpush1.bf16.msra.mxu0 0
    %5874 = vmatprep.subr.bf16.mxu0 0
    %5875 = vmatpush1.bf16.msra.mxu0 0
    %5876 = vmatprep.subr.bf16.mxu0 0
    %5877 = vmatpush1.bf16.msra.mxu0 0
    %5878 = vmatprep.mubr.bf16.mxu0 0
    %5879 = vmatmul.mubr.bf16.gmra.mrb[0].mxu0 %v5844
    %v5880 = vpop.f32.mrb[0].mxu0
    %v5881 = vadd.f32 %v5838, %v5880
    %v5882 = vpop.f32.mrb[0].mxu0
    %v5883 = vpop.f32.mrb[0].mxu0
    %v5884 = vpop.f32.mrb[0].mxu0
    %5885 = vdwg.mxu0
    %v5886 = vadd.f32 %v5881, %v54
    %vm5887 = vcmp.gt.f32.partialorder %v5886, 0.0
    %v5888 = vmin.f32 %v5886, 0.0
    %v5889 = vmul.f32 %v5888, 1.442695
    %v5890 = vpow.pop %v5889
    %v5891 = vsub.f32 %v5890, 1.0
    %v5892 = vsel %vm5887, %v5886, %v5891
    %v5893 = vpack.c.bf16 %v5892, %v5892
    %v5895 = vsel %vm207, %v5893, 0
    %5897 = vmatprep.subr.bf16.mxu0 0
    %5898 = vmatpush1.bf16.msra.mxu0 %v203
    %5899 = vmatprep.subr.bf16.mxu0 0
    %5900 = vmatpush1.bf16.msra.mxu0 %v204
    %5901 = vmatprep.subr.bf16.mxu0 0
    %5902 = vmatpush1.bf16.msra.mxu0 0
    %5903 = vmatprep.subr.bf16.mxu0 0
    %5904 = vmatpush1.bf16.msra.mxu0 0
    %5905 = vmatprep.subr.bf16.mxu0 0
    %5906 = vmatpush1.bf16.msra.mxu0 0
    %5907 = vmatprep.subr.bf16.mxu0 0
    %5908 = vmatpush1.bf16.msra.mxu0 0
    %5909 = vmatprep.subr.bf16.mxu0 0
    %5910 = vmatpush1.bf16.msra.mxu0 0
    %5911 = vmatprep.subr.bf16.mxu0 0
    %5912 = vmatpush1.bf16.msra.mxu0 0
    %5913 = vmatprep.subr.bf16.mxu0 0
    %5914 = vmatpush1.bf16.msra.mxu0 0
    %5915 = vmatprep.subr.bf16.mxu0 0
    %5916 = vmatpush1.bf16.msra.mxu0 0
    %5917 = vmatprep.subr.bf16.mxu0 0
    %5918 = vmatpush1.bf16.msra.mxu0 0
    %5919 = vmatprep.subr.bf16.mxu0 0
    %5920 = vmatpush1.bf16.msra.mxu0 0
    %5921 = vmatprep.subr.bf16.mxu0 0
    %5922 = vmatpush1.bf16.msra.mxu0 0
    %5923 = vmatprep.subr.bf16.mxu0 0
    %5924 = vmatpush1.bf16.msra.mxu0 0
    %5925 = vmatprep.subr.bf16.mxu0 0
    %5926 = vmatpush1.bf16.msra.mxu0 0
    %5927 = vmatprep.subr.bf16.mxu0 0
    %5928 = vmatpush1.bf16.msra.mxu0 0
    %5929 = vmatprep.mubr.bf16.mxu0 0
    %5930 = vmatmul.mubr.bf16.gmra.mrb[0].mxu0 %v5895
    %v5931 = vpop.f32.mrb[0].mxu0
    %v5932 = vadd.f32 %v61, %v5931
    %v5933 = vpop.f32.mrb[0].mxu0
    %v5934 = vpop.f32.mrb[0].mxu0
    %v5935 = vpop.f32.mrb[0].mxu0
    %5936 = vdwg.mxu0
    %vm5937 = vcmp.gt.f32.partialorder %v5932, 0.0
    %v5938 = vmin.f32 %v5932, 0.0
    %v5939 = vmul.f32 %v5938, 1.442695
    %v5940 = vpow.pop %v5939
    %v5941 = vsub.f32 %v5940, 1.0
    %v5942 = vsel %vm5937, %v5932, %v5941
    %v5943 = vpack.c.bf16 %v5942, %v5942
    %v5945 = vsel %vm207, %v5943, 0
    %5947 = vmatprep.subr.bf16.mxu0 0
    %5948 = vmatpush1.bf16.msra.mxu0 %v266
    %5949 = vmatprep.subr.bf16.mxu0 0
    %5950 = vmatpush1.bf16.msra.mxu0 %v267
    %5951 = vmatprep.subr.bf16.mxu0 0
    %5952 = vmatpush1.bf16.msra.mxu0 0
    %5953 = vmatprep.subr.bf16.mxu0 0
    %5954 = vmatpush1.bf16.msra.mxu0 0
    %5955 = vmatprep.subr.bf16.mxu0 0
    %5956 = vmatpush1.bf16.msra.mxu0 0
    %5957 = vmatprep.subr.bf16.mxu0 0
    %5958 = vmatpush1.bf16.msra.mxu0 0
    %5959 = vmatprep.subr.bf16.mxu0 0
    %5960 = vmatpush1.bf16.msra.mxu0 0
    %5961 = vmatprep.subr.bf16.mxu0 0
    %5962 = vmatpush1.bf16.msra.mxu0 0
    %5963 = vmatprep.subr.bf16.mxu0 0
    %5964 = vmatpush1.bf16.msra.mxu0 0
    %5965 = vmatprep.subr.bf16.mxu0 0
    %5966 = vmatpush1.bf16.msra.mxu0 0
    %5967 = vmatprep.subr.bf16.mxu0 0
    %5968 = vmatpush1.bf16.msra.mxu0 0
    %5969 = vmatprep.subr.bf16.mxu0 0
    %5970 = vmatpush1.bf16.msra.mxu0 0
    %5971 = vmatprep.subr.bf16.mxu0 0
    %5972 = vmatpush1.bf16.msra.mxu0 0
    %5973 = vmatprep.subr.bf16.mxu0 0
    %5974 = vmatpush1.bf16.msra.mxu0 0
    %5975 = vmatprep.subr.bf16.mxu0 0
    %5976 = vmatpush1.bf16.msra.mxu0 0
    %5977 = vmatprep.subr.bf16.mxu0 0
    %5978 = vmatpush1.bf16.msra.mxu0 0
    %5979 = vmatprep.mubr.bf16.mxu0 0
    %5980 = vmatmul.mubr.bf16.gmra.mrb[0].mxu0 %v5945
    %v5981 = vpop.f32.mrb[0].mxu0
    %v5982 = vadd.f32 %v68, %v5981
    %v5983 = vpop.f32.mrb[0].mxu0
    %v5984 = vpop.f32.mrb[0].mxu0
    %v5985 = vpop.f32.mrb[0].mxu0
    %5986 = vdwg.mxu0
    %v5987 = vmul.f32 %v314, %v5797
    %v5988 = vadd.f32 %v5597, %v5987
    %v5989 = vmul.f32 %v314, %v5982
    %v5990 = vadd.f32 %v5604, %v5989
    %v5991 = vpack.c.bf16 %v5988, %v5988
    %v5992 = vpack.c.bf16 %v5990, %v5990
    %v5994 = vsel %vm93, %v5992, 0
    %5996 = vmatprep.subr.bf16.mxu0 0
    %5997 = vmatpush1.bf16.msra.mxu0 %v99
    %5998 = vmatprep.subr.bf16.mxu0 0
    %5999 = vmatpush1.bf16.msra.mxu0 0
    %6000 = vmatprep.subr.bf16.mxu0 0
    %6001 = vmatpush1.bf16.msra.mxu0 0
    %6002 = vmatprep.subr.bf16.mxu0 0
    %6003 = vmatpush1.bf16.msra.mxu0 0
    %6004 = vmatprep.subr.bf16.mxu0 0
    %6005 = vmatpush1.bf16.msra.mxu0 0
    %6006 = vmatprep.subr.bf16.mxu0 0
    %6007 = vmatpush1.bf16.msra.mxu0 0
    %6008 = vmatprep.subr.bf16.mxu0 0
    %6009 = vmatpush1.bf16.msra.mxu0 0
    %6010 = vmatprep.subr.bf16.mxu0 0
    %6011 = vmatpush1.bf16.msra.mxu0 0
    %6012 = vmatprep.subr.bf16.mxu0 0
    %6013 = vmatpush1.bf16.msra.mxu0 0
    %6014 = vmatprep.subr.bf16.mxu0 0
    %6015 = vmatpush1.bf16.msra.mxu0 0
    %6016 = vmatprep.subr.bf16.mxu0 0
    %6017 = vmatpush1.bf16.msra.mxu0 0
    %6018 = vmatprep.subr.bf16.mxu0 0
    %6019 = vmatpush1.bf16.msra.mxu0 0
    %6020 = vmatprep.subr.bf16.mxu0 0
    %6021 = vmatpush1.bf16.msra.mxu0 0
    %6022 = vmatprep.subr.bf16.mxu0 0
    %6023 = vmatpush1.bf16.msra.mxu0 0
    %6024 = vmatprep.subr.bf16.mxu0 0
    %6025 = vmatpush1.bf16.msra.mxu0 0
    %6026 = vmatprep.subr.bf16.mxu0 0
    %6027 = vmatpush1.bf16.msra.mxu0 0
    %6028 = vmatprep.mubr.bf16.mxu0 0
    %6029 = vmatmul.mubr.bf16.gmra.mrb[0].mxu0 %v5994
    %v6030 = vpop.f32.mrb[0].mxu0
    %v6031 = vadd.f32 0.0, %v6030
    %v6032 = vpop.f32.mrb[0].mxu0
    %v6033 = vpop.f32.mrb[0].mxu0
    %v6034 = vpop.f32.mrb[0].mxu0
    %6035 = vdwg.mxu0
    %v6037 = vsel %vm93, %v5991, 0
    %6039 = vmatprep.subr.bf16.mxu0 0
    %6040 = vmatpush1.bf16.msra.mxu0 %v145
    %6041 = vmatprep.subr.bf16.mxu0 0
    %6042 = vmatpush1.bf16.msra.mxu0 0
    %6043 = vmatprep.subr.bf16.mxu0 0
    %6044 = vmatpush1.bf16.msra.mxu0 0
    %6045 = vmatprep.subr.bf16.mxu0 0
    %6046 = vmatpush1.bf16.msra.mxu0 0
    %6047 = vmatprep.subr.bf16.mxu0 0
    %6048 = vmatpush1.bf16.msra.mxu0 0
    %6049 = vmatprep.subr.bf16.mxu0 0
    %6050 = vmatpush1.bf16.msra.mxu0 0
    %6051 = vmatprep.subr.bf16.mxu0 0
    %6052 = vmatpush1.bf16.msra.mxu0 0
    %6053 = vmatprep.subr.bf16.mxu0 0
    %6054 = vmatpush1.bf16.msra.mxu0 0
    %6055 = vmatprep.subr.bf16.mxu0 0
    %6056 = vmatpush1.bf16.msra.mxu0 0
    %6057 = vmatprep.subr.bf16.mxu0 0
    %6058 = vmatpush1.bf16.msra.mxu0 0
    %6059 = vmatprep.subr.bf16.mxu0 0
    %6060 = vmatpush1.bf16.msra.mxu0 0
    %6061 = vmatprep.subr.bf16.mxu0 0
    %6062 = vmatpush1.bf16.msra.mxu0 0
    %6063 = vmatprep.subr.bf16.mxu0 0
    %6064 = vmatpush1.bf16.msra.mxu0 0
    %6065 = vmatprep.subr.bf16.mxu0 0
    %6066 = vmatpush1.bf16.msra.mxu0 0
    %6067 = vmatprep.subr.bf16.mxu0 0
    %6068 = vmatpush1.bf16.msra.mxu0 0
    %6069 = vmatprep.subr.bf16.mxu0 0
    %6070 = vmatpush1.bf16.msra.mxu0 0
    %6071 = vmatprep.mubr.bf16.mxu0 0
    %6072 = vmatmul.mubr.bf16.gmra.mrb[0].mxu0 %v6037
    %v6073 = vpop.f32.mrb[0].mxu0
    %v6074 = vadd.f32 %v6031, %v6073
    %v6075 = vpop.f32.mrb[0].mxu0
    %v6076 = vpop.f32.mrb[0].mxu0
    %v6077 = vpop.f32.mrb[0].mxu0
    %6078 = vdwg.mxu0
    %v6079 = vadd.f32 %v6074, %v54
    %vm6080 = vcmp.gt.f32.partialorder %v6079, 0.0
    %v6081 = vmin.f32 %v6079, 0.0
    %v6082 = vmul.f32 %v6081, 1.442695
    %v6083 = vpow.pop %v6082
    %v6084 = vsub.f32 %v6083, 1.0
    %v6085 = vsel %vm6080, %v6079, %v6084
    %v6086 = vpack.c.bf16 %v6085, %v6085
    %v6088 = vsel %vm207, %v6086, 0
    %6090 = vmatprep.subr.bf16.mxu0 0
    %6091 = vmatpush1.bf16.msra.mxu0 %v203
    %6092 = vmatprep.subr.bf16.mxu0 0
    %6093 = vmatpush1.bf16.msra.mxu0 %v204
    %6094 = vmatprep.subr.bf16.mxu0 0
    %6095 = vmatpush1.bf16.msra.mxu0 0
    %6096 = vmatprep.subr.bf16.mxu0 0
    %6097 = vmatpush1.bf16.msra.mxu0 0
    %6098 = vmatprep.subr.bf16.mxu0 0
    %6099 = vmatpush1.bf16.msra.mxu0 0
    %6100 = vmatprep.subr.bf16.mxu0 0
    %6101 = vmatpush1.bf16.msra.mxu0 0
    %6102 = vmatprep.subr.bf16.mxu0 0
    %6103 = vmatpush1.bf16.msra.mxu0 0
    %6104 = vmatprep.subr.bf16.mxu0 0
    %6105 = vmatpush1.bf16.msra.mxu0 0
    %6106 = vmatprep.subr.bf16.mxu0 0
    %6107 = vmatpush1.bf16.msra.mxu0 0
    %6108 = vmatprep.subr.bf16.mxu0 0
    %6109 = vmatpush1.bf16.msra.mxu0 0
    %6110 = vmatprep.subr.bf16.mxu0 0
    %6111 = vmatpush1.bf16.msra.mxu0 0
    %6112 = vmatprep.subr.bf16.mxu0 0
    %6113 = vmatpush1.bf16.msra.mxu0 0
    %6114 = vmatprep.subr.bf16.mxu0 0
    %6115 = vmatpush1.bf16.msra.mxu0 0
    %6116 = vmatprep.subr.bf16.mxu0 0
    %6117 = vmatpush1.bf16.msra.mxu0 0
    %6118 = vmatprep.subr.bf16.mxu0 0
    %6119 = vmatpush1.bf16.msra.mxu0 0
    %6120 = vmatprep.subr.bf16.mxu0 0
    %6121 = vmatpush1.bf16.msra.mxu0 0
    %6122 = vmatprep.mubr.bf16.mxu0 0
    %6123 = vmatmul.mubr.bf16.gmra.mrb[0].mxu0 %v6088
    %v6124 = vpop.f32.mrb[0].mxu0
    %v6125 = vadd.f32 %v61, %v6124
    %v6126 = vpop.f32.mrb[0].mxu0
    %v6127 = vpop.f32.mrb[0].mxu0
    %v6128 = vpop.f32.mrb[0].mxu0
    %6129 = vdwg.mxu0
    %vm6130 = vcmp.gt.f32.partialorder %v6125, 0.0
    %v6131 = vmin.f32 %v6125, 0.0
    %v6132 = vmul.f32 %v6131, 1.442695
    %v6133 = vpow.pop %v6132
    %v6134 = vsub.f32 %v6133, 1.0
    %v6135 = vsel %vm6130, %v6125, %v6134
    %v6136 = vpack.c.bf16 %v6135, %v6135
    %v6138 = vsel %vm207, %v6136, 0
    %6140 = vmatprep.subr.bf16.mxu0 0
    %6141 = vmatpush1.bf16.msra.mxu0 %v266
    %6142 = vmatprep.subr.bf16.mxu0 0
    %6143 = vmatpush1.bf16.msra.mxu0 %v267
    %6144 = vmatprep.subr.bf16.mxu0 0
    %6145 = vmatpush1.bf16.msra.mxu0 0
    %6146 = vmatprep.subr.bf16.mxu0 0
    %6147 = vmatpush1.bf16.msra.mxu0 0
    %6148 = vmatprep.subr.bf16.mxu0 0
    %6149 = vmatpush1.bf16.msra.mxu0 0
    %6150 = vmatprep.subr.bf16.mxu0 0
    %6151 = vmatpush1.bf16.msra.mxu0 0
    %6152 = vmatprep.subr.bf16.mxu0 0
    %6153 = vmatpush1.bf16.msra.mxu0 0
    %6154 = vmatprep.subr.bf16.mxu0 0
    %6155 = vmatpush1.bf16.msra.mxu0 0
    %6156 = vmatprep.subr.bf16.mxu0 0
    %6157 = vmatpush1.bf16.msra.mxu0 0
    %6158 = vmatprep.subr.bf16.mxu0 0
    %6159 = vmatpush1.bf16.msra.mxu0 0
    %6160 = vmatprep.subr.bf16.mxu0 0
    %6161 = vmatpush1.bf16.msra.mxu0 0
    %6162 = vmatprep.subr.bf16.mxu0 0
    %6163 = vmatpush1.bf16.msra.mxu0 0
    %6164 = vmatprep.subr.bf16.mxu0 0
    %6165 = vmatpush1.bf16.msra.mxu0 0
    %6166 = vmatprep.subr.bf16.mxu0 0
    %6167 = vmatpush1.bf16.msra.mxu0 0
    %6168 = vmatprep.subr.bf16.mxu0 0
    %6169 = vmatpush1.bf16.msra.mxu0 0
    %6170 = vmatprep.subr.bf16.mxu0 0
    %6171 = vmatpush1.bf16.msra.mxu0 0
    %6172 = vmatprep.mubr.bf16.mxu0 0
    %6173 = vmatmul.mubr.bf16.gmra.mrb[0].mxu0 %v6138
    %v6174 = vpop.f32.mrb[0].mxu0
    %v6175 = vadd.f32 %v68, %v6174
    %v6176 = vpop.f32.mrb[0].mxu0
    %v6177 = vpop.f32.mrb[0].mxu0
    %v6178 = vpop.f32.mrb[0].mxu0
    %6179 = vdwg.mxu0
    %v6180 = vmul.f32 %v701, %v5990
    %v6181 = vadd.f32 %v5597, %v6180
    %v6182 = vmul.f32 %v701, %v6175
    %v6183 = vadd.f32 %v5604, %v6182
    %v6184 = vpack.c.bf16 %v6181, %v6181
    %v6185 = vpack.c.bf16 %v6183, %v6183
    %v6187 = vsel %vm93, %v6185, 0
    %6189 = vmatprep.subr.bf16.mxu0 0
    %6190 = vmatpush1.bf16.msra.mxu0 %v99
    %6191 = vmatprep.subr.bf16.mxu0 0
    %6192 = vmatpush1.bf16.msra.mxu0 0
    %6193 = vmatprep.subr.bf16.mxu0 0
    %6194 = vmatpush1.bf16.msra.mxu0 0
    %6195 = vmatprep.subr.bf16.mxu0 0
    %6196 = vmatpush1.bf16.msra.mxu0 0
    %6197 = vmatprep.subr.bf16.mxu0 0
    %6198 = vmatpush1.bf16.msra.mxu0 0
    %6199 = vmatprep.subr.bf16.mxu0 0
    %6200 = vmatpush1.bf16.msra.mxu0 0
    %6201 = vmatprep.subr.bf16.mxu0 0
    %6202 = vmatpush1.bf16.msra.mxu0 0
    %6203 = vmatprep.subr.bf16.mxu0 0
    %6204 = vmatpush1.bf16.msra.mxu0 0
    %6205 = vmatprep.subr.bf16.mxu0 0
    %6206 = vmatpush1.bf16.msra.mxu0 0
    %6207 = vmatprep.subr.bf16.mxu0 0
    %6208 = vmatpush1.bf16.msra.mxu0 0
    %6209 = vmatprep.subr.bf16.mxu0 0
    %6210 = vmatpush1.bf16.msra.mxu0 0
    %6211 = vmatprep.subr.bf16.mxu0 0
    %6212 = vmatpush1.bf16.msra.mxu0 0
    %6213 = vmatprep.subr.bf16.mxu0 0
    %6214 = vmatpush1.bf16.msra.mxu0 0
    %6215 = vmatprep.subr.bf16.mxu0 0
    %6216 = vmatpush1.bf16.msra.mxu0 0
    %6217 = vmatprep.subr.bf16.mxu0 0
    %6218 = vmatpush1.bf16.msra.mxu0 0
    %6219 = vmatprep.subr.bf16.mxu0 0
    %6220 = vmatpush1.bf16.msra.mxu0 0
    %6221 = vmatprep.mubr.bf16.mxu0 0
    %6222 = vmatmul.mubr.bf16.gmra.mrb[0].mxu0 %v6187
    %v6223 = vpop.f32.mrb[0].mxu0
    %v6224 = vadd.f32 0.0, %v6223
    %v6225 = vpop.f32.mrb[0].mxu0
    %v6226 = vpop.f32.mrb[0].mxu0
    %v6227 = vpop.f32.mrb[0].mxu0
    %6228 = vdwg.mxu0
    %v6230 = vsel %vm93, %v6184, 0
    %6232 = vmatprep.subr.bf16.mxu0 0
    %6233 = vmatpush1.bf16.msra.mxu0 %v145
    %6234 = vmatprep.subr.bf16.mxu0 0
    %6235 = vmatpush1.bf16.msra.mxu0 0
    %6236 = vmatprep.subr.bf16.mxu0 0
    %6237 = vmatpush1.bf16.msra.mxu0 0
    %6238 = vmatprep.subr.bf16.mxu0 0
    %6239 = vmatpush1.bf16.msra.mxu0 0
    %6240 = vmatprep.subr.bf16.mxu0 0
    %6241 = vmatpush1.bf16.msra.mxu0 0
    %6242 = vmatprep.subr.bf16.mxu0 0
    %6243 = vmatpush1.bf16.msra.mxu0 0
    %6244 = vmatprep.subr.bf16.mxu0 0
    %6245 = vmatpush1.bf16.msra.mxu0 0
    %6246 = vmatprep.subr.bf16.mxu0 0
    %6247 = vmatpush1.bf16.msra.mxu0 0
    %6248 = vmatprep.subr.bf16.mxu0 0
    %6249 = vmatpush1.bf16.msra.mxu0 0
    %6250 = vmatprep.subr.bf16.mxu0 0
    %6251 = vmatpush1.bf16.msra.mxu0 0
    %6252 = vmatprep.subr.bf16.mxu0 0
    %6253 = vmatpush1.bf16.msra.mxu0 0
    %6254 = vmatprep.subr.bf16.mxu0 0
    %6255 = vmatpush1.bf16.msra.mxu0 0
    %6256 = vmatprep.subr.bf16.mxu0 0
    %6257 = vmatpush1.bf16.msra.mxu0 0
    %6258 = vmatprep.subr.bf16.mxu0 0
    %6259 = vmatpush1.bf16.msra.mxu0 0
    %6260 = vmatprep.subr.bf16.mxu0 0
    %6261 = vmatpush1.bf16.msra.mxu0 0
    %6262 = vmatprep.subr.bf16.mxu0 0
    %6263 = vmatpush1.bf16.msra.mxu0 0
    %6264 = vmatprep.mubr.bf16.mxu0 0
    %6265 = vmatmul.mubr.bf16.gmra.mrb[0].mxu0 %v6230
    %v6266 = vpop.f32.mrb[0].mxu0
    %v6267 = vadd.f32 %v6224, %v6266
    %v6268 = vpop.f32.mrb[0].mxu0
    %v6269 = vpop.f32.mrb[0].mxu0
    %v6270 = vpop.f32.mrb[0].mxu0
    %6271 = vdwg.mxu0
    %v6272 = vadd.f32 %v6267, %v54
    %vm6273 = vcmp.gt.f32.partialorder %v6272, 0.0
    %v6274 = vmin.f32 %v6272, 0.0
    %v6275 = vmul.f32 %v6274, 1.442695
    %v6276 = vpow.pop %v6275
    %v6277 = vsub.f32 %v6276, 1.0
    %v6278 = vsel %vm6273, %v6272, %v6277
    %v6279 = vpack.c.bf16 %v6278, %v6278
    %v6281 = vsel %vm207, %v6279, 0
    %6283 = vmatprep.subr.bf16.mxu0 0
    %6284 = vmatpush1.bf16.msra.mxu0 %v203
    %6285 = vmatprep.subr.bf16.mxu0 0
    %6286 = vmatpush1.bf16.msra.mxu0 %v204
    %6287 = vmatprep.subr.bf16.mxu0 0
    %6288 = vmatpush1.bf16.msra.mxu0 0
    %6289 = vmatprep.subr.bf16.mxu0 0
    %6290 = vmatpush1.bf16.msra.mxu0 0
    %6291 = vmatprep.subr.bf16.mxu0 0
    %6292 = vmatpush1.bf16.msra.mxu0 0
    %6293 = vmatprep.subr.bf16.mxu0 0
    %6294 = vmatpush1.bf16.msra.mxu0 0
    %6295 = vmatprep.subr.bf16.mxu0 0
    %6296 = vmatpush1.bf16.msra.mxu0 0
    %6297 = vmatprep.subr.bf16.mxu0 0
    %6298 = vmatpush1.bf16.msra.mxu0 0
    %6299 = vmatprep.subr.bf16.mxu0 0
    %6300 = vmatpush1.bf16.msra.mxu0 0
    %6301 = vmatprep.subr.bf16.mxu0 0
    %6302 = vmatpush1.bf16.msra.mxu0 0
    %6303 = vmatprep.subr.bf16.mxu0 0
    %6304 = vmatpush1.bf16.msra.mxu0 0
    %6305 = vmatprep.subr.bf16.mxu0 0
    %6306 = vmatpush1.bf16.msra.mxu0 0
    %6307 = vmatprep.subr.bf16.mxu0 0
    %6308 = vmatpush1.bf16.msra.mxu0 0
    %6309 = vmatprep.subr.bf16.mxu0 0
    %6310 = vmatpush1.bf16.msra.mxu0 0
    %6311 = vmatprep.subr.bf16.mxu0 0
    %6312 = vmatpush1.bf16.msra.mxu0 0
    %6313 = vmatprep.subr.bf16.mxu0 0
    %6314 = vmatpush1.bf16.msra.mxu0 0
    %6315 = vmatprep.mubr.bf16.mxu0 0
    %6316 = vmatmul.mubr.bf16.gmra.mrb[0].mxu0 %v6281
    %v6317 = vpop.f32.mrb[0].mxu0
    %v6318 = vadd.f32 %v61, %v6317
    %v6319 = vpop.f32.mrb[0].mxu0
    %v6320 = vpop.f32.mrb[0].mxu0
    %v6321 = vpop.f32.mrb[0].mxu0
    %6322 = vdwg.mxu0
    %vm6323 = vcmp.gt.f32.partialorder %v6318, 0.0
    %v6324 = vmin.f32 %v6318, 0.0
    %v6325 = vmul.f32 %v6324, 1.442695
    %v6326 = vpow.pop %v6325
    %v6327 = vsub.f32 %v6326, 1.0
    %v6328 = vsel %vm6323, %v6318, %v6327
    %v6329 = vpack.c.bf16 %v6328, %v6328
    %v6331 = vsel %vm207, %v6329, 0
    %6333 = vmatprep.subr.bf16.mxu0 0
    %6334 = vmatpush1.bf16.msra.mxu0 %v266
    %6335 = vmatprep.subr.bf16.mxu0 0
    %6336 = vmatpush1.bf16.msra.mxu0 %v267
    %6337 = vmatprep.subr.bf16.mxu0 0
    %6338 = vmatpush1.bf16.msra.mxu0 0
    %6339 = vmatprep.subr.bf16.mxu0 0
    %6340 = vmatpush1.bf16.msra.mxu0 0
    %6341 = vmatprep.subr.bf16.mxu0 0
    %6342 = vmatpush1.bf16.msra.mxu0 0
    %6343 = vmatprep.subr.bf16.mxu0 0
    %6344 = vmatpush1.bf16.msra.mxu0 0
    %6345 = vmatprep.subr.bf16.mxu0 0
    %6346 = vmatpush1.bf16.msra.mxu0 0
    %6347 = vmatprep.subr.bf16.mxu0 0
    %6348 = vmatpush1.bf16.msra.mxu0 0
    %6349 = vmatprep.subr.bf16.mxu0 0
    %6350 = vmatpush1.bf16.msra.mxu0 0
    %6351 = vmatprep.subr.bf16.mxu0 0
    %6352 = vmatpush1.bf16.msra.mxu0 0
    %6353 = vmatprep.subr.bf16.mxu0 0
    %6354 = vmatpush1.bf16.msra.mxu0 0
    %6355 = vmatprep.subr.bf16.mxu0 0
    %6356 = vmatpush1.bf16.msra.mxu0 0
    %6357 = vmatprep.subr.bf16.mxu0 0
    %6358 = vmatpush1.bf16.msra.mxu0 0
    %6359 = vmatprep.subr.bf16.mxu0 0
    %6360 = vmatpush1.bf16.msra.mxu0 0
    %6361 = vmatprep.subr.bf16.mxu0 0
    %6362 = vmatpush1.bf16.msra.mxu0 0
    %6363 = vmatprep.subr.bf16.mxu0 0
    %6364 = vmatpush1.bf16.msra.mxu0 0
    %6365 = vmatprep.mubr.bf16.mxu0 0
    %6366 = vmatmul.mubr.bf16.gmra.mrb[0].mxu0 %v6331
    %v6367 = vpop.f32.mrb[0].mxu0
    %v6368 = vadd.f32 %v68, %v6367
    %v6369 = vpop.f32.mrb[0].mxu0
    %v6370 = vpop.f32.mrb[0].mxu0
    %v6371 = vpop.f32.mrb[0].mxu0
    %6372 = vdwg.mxu0
    %v6373 = vmul.f32 %v5797, 2.0
    %v6374 = vadd.f32 %v5604, %v6373
    %v6375 = vmul.f32 %v5990, 2.0
    %v6376 = vadd.f32 %v6374, %v6375
    %v6377 = vadd.f32 %v6376, %v6183
    %v6378 = vmul.f32 %v903, %v6377
    %v6379 = vadd.f32 %v5597, %v6378
    %v6380 = vmul.f32 %v5982, 2.0
    %v6381 = vadd.f32 %v5789, %v6380
    %v6382 = vmul.f32 %v6175, 2.0
    %v6383 = vadd.f32 %v6381, %v6382
    %v6384 = vadd.f32 %v6383, %v6368
    %v6385 = vmul.f32 %v903, %v6384
    %v6386 = vadd.f32 %v5604, %v6385
    %s6387 = smul.u32 %s77, 4
    %s6388 = scalar_lea.vmem %s9, %s6387
    %6389 = vst.msk [vmem:[%s6388] sm:$0xf] %vm73, %v6379
    %s6390 = scalar_lea.vmem %s10, %s6387
    %6391 = vst.msk [vmem:[%s6390] sm:$0xf] %vm73, %v6386
  $region38: #{tpu_custom_call.1} parent=0 // loop_footer
    %s81 = sadd.s32 1, %s77
  $region39: #{tpu_custom_call.1} parent=0 // loop_footer_branch
    %76 = sbr.rel target = $region35
  $region40: #{tpu_custom_call.1} parent=0 // loop_exit
    _
  // Predicated region
  $region41: #{tpu_custom_call.1} parent=0 // pred_check
    _
  $region42: #{tpu_custom_call.1} parent=0 // pred_check_branch
    %6393 = sbr.rel (0) target = $region44
  $region43: #{tpu_custom_call.1} parent=0 // pred_region
    _
  $region44: #{tpu_custom_call.1} parent=0 // pred_fallthru
    _
  // Predicated region
  $region45: #{tpu_custom_call.1} parent=0 // pred_check
    _
  $region46: #{tpu_custom_call.1} parent=0 // pred_check_branch
    %6395 = sbr.rel (0) target = $region48
  $region47: #{tpu_custom_call.1} parent=0 // pred_region
    _
  $region48: #{tpu_custom_call.1} parent=0 // pred_fallthru
    _
  // Predicated region
  $region49: #{tpu_custom_call.1} parent=0 // pred_check
    _
  $region50: #{tpu_custom_call.1} parent=0 // pred_check_branch
    %6397 = sbr.rel (0) target = $region52
  $region51: #{tpu_custom_call.1} parent=0 // pred_region
    _
  $region52: #{tpu_custom_call.1} parent=0 // pred_fallthru
    _
  // Predicated region
  $region53: #{tpu_custom_call.1} parent=0 // pred_check
    _
  $region54: #{tpu_custom_call.1} parent=0 // pred_check_branch
    %6399 = sbr.rel (0) target = $region56
  $region55: #{tpu_custom_call.1} parent=0 // pred_region
    _
  $region56: #{tpu_custom_call.1} parent=0 // pred_fallthru
    _

</llo_original>
